<compile_context>
chip_gen: v6e
topology: v6e:2x2x1
jax: 0.10.0
libtpu: 0.0.40
codegen_flags: <defaults>
</compile_context>

<pallas_src>
import numpy as np
import jax
import jax.numpy as jnp
from jax.experimental import pallas as pl
from jax.experimental.pallas import tpu as pltpu

WINDOW = 5
PAD = WINDOW // 2
SIGMA = 1.5
C1 = (0.01 * 1.0) ** 2
C2 = (0.03 * 1.0) ** 2
CENTER = 0.5  # exact-algebra centering constant (conditions [0,1] image inputs)


def _gaussian_kernel_1d(window, sigma):
    # Matches kornia.filters.get_gaussian_kernel1d(5, 1.5); the 2-D kernel is the
    # outer product (separable).
    x = np.arange(window, dtype=np.float64) - window // 2
    g = np.exp(-(x * x) / (2.0 * sigma * sigma))
    return g / g.sum()


G1D = _gaussian_kernel_1d(WINDOW, SIGMA)                  # (5,) float64
K5 = np.outer(G1D, G1D).astype(np.float32)                # (5,5) for the reference


def _reflect(p, n):
    # PyTorch / kornia 'reflect' (mirror without edge repeat).
    if p < 0:
        return -p
    if p >= n:
        return 2 * n - 2 - p
    return p


def _band_matrix(n):
    """(n, n) matrix M with M[o, i] = weight of input sample i on output sample o
    for the 5-tap Gaussian with reflect padding folded in."""
    m = np.zeros((n, n), dtype=np.float64)
    for o in range(n):
        for d in range(WINDOW):
            m[o, _reflect(o + d - PAD, n)] += G1D[d]
    return m.astype(np.float32)


def _split_bf16(m_np):
    """f32 matrix -> (hi, lo) bf16 pair with hi + lo ~= m (for 3-pass MXU matmul)."""
    mf = jnp.asarray(m_np, dtype=jnp.float32)
    hi = mf.astype(jnp.bfloat16)
    lo = (mf - hi.astype(jnp.float32)).astype(jnp.bfloat16)
    return hi, lo


def _vmem_limit_bytes():
    # Per-generation scoped-VMEM budget (feedback: v5e default scoped is 16 MiB,
    # v7x has 64 MiB physical / 32 MiB scoped default, v6e can afford big tiles).
    try:
        kind = jax.devices()[0].device_kind.lower()
    except Exception:
        kind = ""
    if "v5 lite" in kind or "v5lite" in kind or "v5e" in kind:
        return 12 << 20
    if "v6" in kind:
        return 64 << 20
    return 24 << 20  # v7x and unknown: stay well under the 32 MiB scoped default


def _make_ssim_kernel(TB, H, W):
    f32 = jnp.float32

    def kernel(x_ref, g_ref, vh_ref, vl_ref, hh_ref, hl_ref, out_ref):
        # Upcast + center (exact algebra: covariances are shift-invariant and the
        # means are re-shifted below).
        x = x_ref[...].astype(f32) - CENTER
        g = g_ref[...].astype(f32) - CENTER

        # Hoisted broadcasts of the constant band matrices (JAX does not CSE
        # broadcast_in_dim -- build once, reuse for all 5 maps x 3 passes).
        vh = jnp.broadcast_to(vh_ref[...], (TB, H, H))
        vl = jnp.broadcast_to(vl_ref[...], (TB, H, H))
        hh = jnp.broadcast_to(hh_ref[...], (TB, W, W))
        hl = jnp.broadcast_to(hl_ref[...], (TB, W, W))

        def split(m):
            hi = m.astype(jnp.bfloat16)
            lo = (m - hi.astype(f32)).astype(jnp.bfloat16)
            return hi, lo

        def hfilt(m):  # (TB,H,W) @ band(W,W) on the MXU, bf16x3 ~ f32 accuracy
            mh, ml = split(m)
            return (jnp.einsum("bhw,bwc->bhc", mh, hh, preferred_element_type=f32)
                    + jnp.einsum("bhw,bwc->bhc", ml, hh, preferred_element_type=f32)
                    + jnp.einsum("bhw,bwc->bhc", mh, hl, preferred_element_type=f32))

        def vfilt(m):  # band(H,H) @ (TB,H,W) on the MXU, bf16x3 ~ f32 accuracy
            mh, ml = split(m)
            return (jnp.einsum("boh,bhw->bow", vh, mh, preferred_element_type=f32)
                    + jnp.einsum("boh,bhw->bow", vh, ml, preferred_element_type=f32)
                    + jnp.einsum("boh,bhw->bow", vl, mh, preferred_element_type=f32))

        def filt(m):
            return vfilt(hfilt(m))

        # Hoisted pointwise products: 3 full-tile VPU muls total.
        mu1c = filt(x)
        mu2c = filt(g)
        m11c = filt(x * x)
        m22c = filt(g * g)
        m12c = filt(x * g)

        s1 = m11c - mu1c * mu1c
        s2 = m22c - mu2c * mu2c
        s12 = m12c - mu1c * mu2c
        mu1 = mu1c + CENTER
        mu2 = mu2c + CENTER

        mu1_sq = mu1 * mu1
        mu2_sq = mu2 * mu2
        mu1_mu2 = mu1 * mu2
        num = (2.0 * mu1_mu2 + C1) * (2.0 * s12 + C2)
        den = (mu1_sq + mu2_sq + C1) * (s1 + s2 + C2)   # strictly > 0
        loss_map = jnp.clip((1.0 - num / den) * 0.5, 0.0, 1.0)

        out_ref[...] = jnp.sum(loss_map).reshape(1, 1, 1)  # per-block partial sum

    return kernel


def ssim_loss(x, gt, loss_weight=1.0):
    """DSSIM loss matching SSIMLoss.forward (window=5, sigma=1.5, max_val=1.0)."""
    assert x.shape == gt.shape and x.ndim == 4
    N, C, H, W = x.shape
    assert H >= 3 and W >= 3, "reflect padding of 2 needs H, W >= 3"
    B = N * C

    # Free leading-dim reshape; no reflect-pad / pack HBM round trips.
    x3 = x.reshape(B, H, W)
    g3 = gt.reshape(B, H, W)

    # Gaussian band matrices with reflect borders folded in, split hi/lo bf16.
    vh, vl = _split_bf16(_band_matrix(H))        # left-multiply  (H, H)
    hh, hl = _split_bf16(_band_matrix(W).T)      # right-multiply (W, W)

    # ---- images per grid step, sized against the real in-kernel f32 working set
    vmem_limit = _vmem_limit_bytes()
    in_bytes = jnp.dtype(x.dtype).itemsize
    # ~18 live f32 (TB,H,W) intermediates + 2 inputs x 2 pipeline buffers
    # + broadcast bf16 band matrices.
    per_img = H * W * (18 * 4 + 2 * 2 * in_bytes) + (H * H + W * W) * 2 * 2
    if per_img > 0.6 * vmem_limit:
        # Single image exceeds the per-generation budget: raise the scoped limit.
        # TODO(synk): row-band tiling with a 4-row halo instead (esp. on v7x).
        vmem_limit = min(int(per_img / 0.6) + (4 << 20), 110 << 20)

    tb_cap = max(1, min(B, int((0.6 * vmem_limit) // per_img)))
    if B >= 2:
        tb_cap = min(tb_cap, (B + 1) // 2)   # >= 2 grid blocks -> both v7x cores busy
    TB = tb_cap
    for t in range(tb_cap, 0, -1):           # prefer a divisor of B (no padding)
        if B % t == 0:
            TB = t
            break
        if t <= max(1, tb_cap // 2):
            TB = tb_cap                      # pad instead of shrinking too far
            break
    num_blocks = pl.cdiv(B, TB)
    Bpad = num_blocks * TB
    if Bpad > B:
        padcfg = ((0, Bpad - B), (0, 0), (0, 0))
        x3 = jnp.pad(x3, padcfg)   # identical zero pairs -> exactly 0 loss
        g3 = jnp.pad(g3, padcfg)

    kernel = _make_ssim_kernel(TB, H, W)

    partial = pl.pallas_call(
        kernel,
        out_shape=jax.ShapeDtypeStruct((num_blocks, 1, 1), jnp.float32),
        grid_spec=pltpu.PrefetchScalarGridSpec(
            num_scalar_prefetch=0,
            grid=(num_blocks,),
            in_specs=[
                pl.BlockSpec((TB, H, W), lambda i: (i, 0, 0)),
                pl.BlockSpec((TB, H, W), lambda i: (i, 0, 0)),
                pl.BlockSpec((H, H), lambda i: (0, 0)),
                pl.BlockSpec((H, H), lambda i: (0, 0)),
                pl.BlockSpec((W, W), lambda i: (0, 0)),
                pl.BlockSpec((W, W), lambda i: (0, 0)),
            ],
            out_specs=pl.BlockSpec((1, 1, 1), lambda i: (i, 0, 0)),
        ),
        compiler_params=pltpu.CompilerParams(
            dimension_semantics=("parallel",),      # independent per-block partials
            vmem_limit_bytes=int(vmem_limit),
        ),
    )(x3, g3, vh, vl, hh, hl)

    # mean over (-1,-2,-3) then batch mean == global mean of the loss map.
    total = jnp.sum(partial)
    return (total / (N * C * H * W)) * loss_weight


def _ref_ssim_loss(x, gt, loss_weight=1.0):
    # Pure-JAX reference (depthwise lax.conv, f32, HIGHEST precision) for validation.
    N, C, H, W = x.shape
    kern = jnp.tile(jnp.asarray(K5)[None, None], (C, 1, 1, 1))  # (C,1,5,5) OIHW

    def filt(img):
        imgp = jnp.pad(img, ((0, 0), (0, 0), (PAD, PAD), (PAD, PAD)), mode="reflect")
        return jax.lax.conv_general_dilated(
            imgp, kern, (1, 1), "VALID",
            dimension_numbers=("NCHW", "OIHW", "NCHW"),
            feature_group_count=C,
            precision=jax.lax.Precision.HIGHEST)

    x = x.astype(jnp.float32)
    gt = gt.astype(jnp.float32)
    mu1, mu2 = filt(x), filt(gt)
    m11, m22, m12 = filt(x * x), filt(gt * gt), filt(x * gt)
    s1 = m11 - mu1 * mu1
    s2 = m22 - mu2 * mu2
    s12 = m12 - mu1 * mu2
    num = (2.0 * mu1 * mu2 + C1) * (2.0 * s12 + C2)
    den = (mu1 * mu1 + mu2 * mu2 + C1) * (s1 + s2 + C2)
    loss = jnp.clip((1.0 - num / den) * 0.5, 0.0, 1.0)
    return jnp.mean(jnp.mean(loss, axis=(-1, -2, -3))) * loss_weight


if __name__ == "__main__":
    key = jax.random.PRNGKey(0)
    k1, k2 = jax.random.split(key)
    N, C, H, W = 2, 4, 16, 16
    x = jax.random.uniform(k1, (N, C, H, W), dtype=jnp.float32)
    gt = jax.random.uniform(k2, (N, C, H, W), dtype=jnp.float32)

    out = jax.block_until_ready(ssim_loss(x, gt, loss_weight=1.0))
    ref = jax.block_until_ready(_ref_ssim_loss(x, gt, loss_weight=1.0))
    # bf16x3 MXU filtering is ~f32 accurate but not bit-identical to the f32 ref.
    np.testing.assert_allclose(np.asarray(out), np.asarray(ref), rtol=2e-5, atol=2e-6)

    print("KERNEL_OK")
</pallas_src>

<mosaic_0001>
module attributes {stable_mosaic.version = 11 : i64} {
  func.func @kernel(%arg0: i32, %arg1: memref<4x16x16xf32, #tpu.memory_space<vmem>>, %arg2: memref<4x16x16xf32, #tpu.memory_space<vmem>>, %arg3: memref<16x16xbf16, #tpu.memory_space<vmem>>, %arg4: memref<16x16xbf16, #tpu.memory_space<vmem>>, %arg5: memref<16x16xbf16, #tpu.memory_space<vmem>>, %arg6: memref<16x16xbf16, #tpu.memory_space<vmem>>, %arg7: memref<1x1x1xf32, #tpu.memory_space<vmem>>) attributes {dimension_semantics = [#tpu.dimension_semantics<parallel>], iteration_bounds = array<i64: 2>, scalar_prefetch = 0 : i64, scratch_operands = 0 : i64, tpu.core_type = #tpu.core_type<tc>, window_params = [{transform_indices = @transform_0, window_bounds = array<i64: 4, 16, 16>}, {transform_indices = @transform_1, window_bounds = array<i64: 4, 16, 16>}, {pipeline_mode = #tpu.pipeline_mode<synchronous>, transform_indices = @transform_2, window_bounds = array<i64: 16, 16>}, {pipeline_mode = #tpu.pipeline_mode<synchronous>, transform_indices = @transform_3, window_bounds = array<i64: 16, 16>}, {pipeline_mode = #tpu.pipeline_mode<synchronous>, transform_indices = @transform_4, window_bounds = array<i64: 16, 16>}, {pipeline_mode = #tpu.pipeline_mode<synchronous>, transform_indices = @transform_5, window_bounds = array<i64: 16, 16>}, {transform_indices = @transform_6, window_bounds = array<i64: 1, 1, 1>}]} {
    %c0 = arith.constant 0 : index
    %c0_0 = arith.constant 0 : index
    %c0_1 = arith.constant 0 : index
    %0 = vector.load %arg1[%c0, %c0_0, %c0_1] : memref<4x16x16xf32, #tpu.memory_space<vmem>>, vector<4x16x16xf32>
    %cst = arith.constant 5.000000e-01 : f32
    %1 = vector.broadcast %cst : f32 to vector<4x16x16xf32>
    %2 = arith.subf %0, %1 : vector<4x16x16xf32>
    %c0_2 = arith.constant 0 : index
    %c0_3 = arith.constant 0 : index
    %c0_4 = arith.constant 0 : index
    %3 = vector.load %arg2[%c0_2, %c0_3, %c0_4] : memref<4x16x16xf32, #tpu.memory_space<vmem>>, vector<4x16x16xf32>
    %cst_5 = arith.constant 5.000000e-01 : f32
    %4 = vector.broadcast %cst_5 : f32 to vector<4x16x16xf32>
    %5 = arith.subf %3, %4 : vector<4x16x16xf32>
    %c0_6 = arith.constant 0 : index
    %c0_7 = arith.constant 0 : index
    %6 = vector.load %arg3[%c0_6, %c0_7] : memref<16x16xbf16, #tpu.memory_space<vmem>>, vector<16x16xbf16>
    %7 = vector.shape_cast %6 : vector<16x16xbf16> to vector<1x16x16xbf16>
    %8 = vector.broadcast %7 : vector<1x16x16xbf16> to vector<4x16x16xbf16>
    %c0_8 = arith.constant 0 : index
    %c0_9 = arith.constant 0 : index
    %9 = vector.load %arg4[%c0_8, %c0_9] : memref<16x16xbf16, #tpu.memory_space<vmem>>, vector<16x16xbf16>
    %10 = vector.shape_cast %9 : vector<16x16xbf16> to vector<1x16x16xbf16>
    %11 = vector.broadcast %10 : vector<1x16x16xbf16> to vector<4x16x16xbf16>
    %c0_10 = arith.constant 0 : index
    %c0_11 = arith.constant 0 : index
    %12 = vector.load %arg5[%c0_10, %c0_11] : memref<16x16xbf16, #tpu.memory_space<vmem>>, vector<16x16xbf16>
    %13 = vector.shape_cast %12 : vector<16x16xbf16> to vector<1x16x16xbf16>
    %14 = vector.broadcast %13 : vector<1x16x16xbf16> to vector<4x16x16xbf16>
    %c0_12 = arith.constant 0 : index
    %c0_13 = arith.constant 0 : index
    %15 = vector.load %arg6[%c0_12, %c0_13] : memref<16x16xbf16, #tpu.memory_space<vmem>>, vector<16x16xbf16>
    %16 = vector.shape_cast %15 : vector<16x16xbf16> to vector<1x16x16xbf16>
    %17 = vector.broadcast %16 : vector<1x16x16xbf16> to vector<4x16x16xbf16>
    %18 = arith.truncf %2 : vector<4x16x16xf32> to vector<4x16x16xbf16>
    %19 = arith.extf %18 : vector<4x16x16xbf16> to vector<4x16x16xf32>
    %20 = arith.subf %2, %19 : vector<4x16x16xf32>
    %21 = arith.truncf %20 : vector<4x16x16xf32> to vector<4x16x16xbf16>
    "tpu.trace_start"() <{level = 10 : i32, message = "bhw,bwc->bhc"}> : () -> ()
    %cst_14 = arith.constant dense<0.000000e+00> : vector<4x16x16xf32>
    %22 = tpu.matmul %18, %14, %cst_14 {dimension_numbers = #tpu.dot_dimension_numbers<[2], [1], [1], [2], [0, 0, 0, 1, 1, 2], [0], [0]>} : vector<4x16x16xbf16>, vector<4x16x16xbf16>, vector<4x16x16xf32> -> vector<4x16x16xf32>
    %cst_15 = arith.constant dense<0.000000e+00> : vector<4x16x16xf32>
    %23 = tpu.matmul %21, %14, %cst_15 {dimension_numbers = #tpu.dot_dimension_numbers<[2], [1], [1], [2], [0, 0, 0, 1, 1, 2], [0], [0]>} : vector<4x16x16xbf16>, vector<4x16x16xbf16>, vector<4x16x16xf32> -> vector<4x16x16xf32>
    "tpu.trace_stop"() : () -> ()
    %24 = arith.addf %22, %23 : vector<4x16x16xf32>
    "tpu.trace_start"() <{level = 10 : i32, message = "bhw,bwc->bhc"}> : () -> ()
    %cst_16 = arith.constant dense<0.000000e+00> : vector<4x16x16xf32>
    %25 = tpu.matmul %18, %17, %cst_16 {dimension_numbers = #tpu.dot_dimension_numbers<[2], [1], [1], [2], [0, 0, 0, 1, 1, 2], [0], [0]>} : vector<4x16x16xbf16>, vector<4x16x16xbf16>, vector<4x16x16xf32> -> vector<4x16x16xf32>
    "tpu.trace_stop"() : () -> ()
    %26 = arith.addf %24, %25 : vector<4x16x16xf32>
    %27 = arith.truncf %26 : vector<4x16x16xf32> to vector<4x16x16xbf16>
    %28 = arith.extf %27 : vector<4x16x16xbf16> to vector<4x16x16xf32>
    %29 = arith.subf %26, %28 : vector<4x16x16xf32>
    %30 = arith.truncf %29 : vector<4x16x16xf32> to vector<4x16x16xbf16>
    "tpu.trace_start"() <{level = 10 : i32, message = "boh,bhw->bow"}> : () -> ()
    %cst_17 = arith.constant dense<0.000000e+00> : vector<4x16x16xf32>
    %31 = tpu.matmul %8, %27, %cst_17 {dimension_numbers = #tpu.dot_dimension_numbers<[2], [1], [1], [2], [0, 0, 0, 1, 1, 2], [0], [0]>} : vector<4x16x16xbf16>, vector<4x16x16xbf16>, vector<4x16x16xf32> -> vector<4x16x16xf32>
    %cst_18 = arith.constant dense<0.000000e+00> : vector<4x16x16xf32>
    %32 = tpu.matmul %8, %30, %cst_18 {dimension_numbers = #tpu.dot_dimension_numbers<[2], [1], [1], [2], [0, 0, 0, 1, 1, 2], [0], [0]>} : vector<4x16x16xbf16>, vector<4x16x16xbf16>, vector<4x16x16xf32> -> vector<4x16x16xf32>
    "tpu.trace_stop"() : () -> ()
    %33 = arith.addf %31, %32 : vector<4x16x16xf32>
    "tpu.trace_start"() <{level = 10 : i32, message = "boh,bhw->bow"}> : () -> ()
    %cst_19 = arith.constant dense<0.000000e+00> : vector<4x16x16xf32>
    %34 = tpu.matmul %11, %27, %cst_19 {dimension_numbers = #tpu.dot_dimension_numbers<[2], [1], [1], [2], [0, 0, 0, 1, 1, 2], [0], [0]>} : vector<4x16x16xbf16>, vector<4x16x16xbf16>, vector<4x16x16xf32> -> vector<4x16x16xf32>
    "tpu.trace_stop"() : () -> ()
    %35 = arith.addf %33, %34 : vector<4x16x16xf32>
    %36 = arith.truncf %5 : vector<4x16x16xf32> to vector<4x16x16xbf16>
    %37 = arith.extf %36 : vector<4x16x16xbf16> to vector<4x16x16xf32>
    %38 = arith.subf %5, %37 : vector<4x16x16xf32>
    %39 = arith.truncf %38 : vector<4x16x16xf32> to vector<4x16x16xbf16>
    "tpu.trace_start"() <{level = 10 : i32, message = "bhw,bwc->bhc"}> : () -> ()
    %cst_20 = arith.constant dense<0.000000e+00> : vector<4x16x16xf32>
    %40 = tpu.matmul %36, %14, %cst_20 {dimension_numbers = #tpu.dot_dimension_numbers<[2], [1], [1], [2], [0, 0, 0, 1, 1, 2], [0], [0]>} : vector<4x16x16xbf16>, vector<4x16x16xbf16>, vector<4x16x16xf32> -> vector<4x16x16xf32>
    %cst_21 = arith.constant dense<0.000000e+00> : vector<4x16x16xf32>
    %41 = tpu.matmul %39, %14, %cst_21 {dimension_numbers = #tpu.dot_dimension_numbers<[2], [1], [1], [2], [0, 0, 0, 1, 1, 2], [0], [0]>} : vector<4x16x16xbf16>, vector<4x16x16xbf16>, vector<4x16x16xf32> -> vector<4x16x16xf32>
    "tpu.trace_stop"() : () -> ()
    %42 = arith.addf %40, %41 : vector<4x16x16xf32>
    "tpu.trace_start"() <{level = 10 : i32, message = "bhw,bwc->bhc"}> : () -> ()
    %cst_22 = arith.constant dense<0.000000e+00> : vector<4x16x16xf32>
    %43 = tpu.matmul %36, %17, %cst_22 {dimension_numbers = #tpu.dot_dimension_numbers<[2], [1], [1], [2], [0, 0, 0, 1, 1, 2], [0], [0]>} : vector<4x16x16xbf16>, vector<4x16x16xbf16>, vector<4x16x16xf32> -> vector<4x16x16xf32>
    "tpu.trace_stop"() : () -> ()
    %44 = arith.addf %42, %43 : vector<4x16x16xf32>
    %45 = arith.truncf %44 : vector<4x16x16xf32> to vector<4x16x16xbf16>
    %46 = arith.extf %45 : vector<4x16x16xbf16> to vector<4x16x16xf32>
    %47 = arith.subf %44, %46 : vector<4x16x16xf32>
    %48 = arith.truncf %47 : vector<4x16x16xf32> to vector<4x16x16xbf16>
    "tpu.trace_start"() <{level = 10 : i32, message = "boh,bhw->bow"}> : () -> ()
    %cst_23 = arith.constant dense<0.000000e+00> : vector<4x16x16xf32>
    %49 = tpu.matmul %8, %45, %cst_23 {dimension_numbers = #tpu.dot_dimension_numbers<[2], [1], [1], [2], [0, 0, 0, 1, 1, 2], [0], [0]>} : vector<4x16x16xbf16>, vector<4x16x16xbf16>, vector<4x16x16xf32> -> vector<4x16x16xf32>
    %cst_24 = arith.constant dense<0.000000e+00> : vector<4x16x16xf32>
    %50 = tpu.matmul %8, %48, %cst_24 {dimension_numbers = #tpu.dot_dimension_numbers<[2], [1], [1], [2], [0, 0, 0, 1, 1, 2], [0], [0]>} : vector<4x16x16xbf16>, vector<4x16x16xbf16>, vector<4x16x16xf32> -> vector<4x16x16xf32>
    "tpu.trace_stop"() : () -> ()
    %51 = arith.addf %49, %50 : vector<4x16x16xf32>
    "tpu.trace_start"() <{level = 10 : i32, message = "boh,bhw->bow"}> : () -> ()
    %cst_25 = arith.constant dense<0.000000e+00> : vector<4x16x16xf32>
    %52 = tpu.matmul %11, %45, %cst_25 {dimension_numbers = #tpu.dot_dimension_numbers<[2], [1], [1], [2], [0, 0, 0, 1, 1, 2], [0], [0]>} : vector<4x16x16xbf16>, vector<4x16x16xbf16>, vector<4x16x16xf32> -> vector<4x16x16xf32>
    "tpu.trace_stop"() : () -> ()
    %53 = arith.addf %51, %52 : vector<4x16x16xf32>
    %54 = arith.mulf %2, %2 : vector<4x16x16xf32>
    %55 = arith.truncf %54 : vector<4x16x16xf32> to vector<4x16x16xbf16>
    %56 = arith.extf %55 : vector<4x16x16xbf16> to vector<4x16x16xf32>
    %57 = arith.subf %54, %56 : vector<4x16x16xf32>
    %58 = arith.truncf %57 : vector<4x16x16xf32> to vector<4x16x16xbf16>
    "tpu.trace_start"() <{level = 10 : i32, message = "bhw,bwc->bhc"}> : () -> ()
    %cst_26 = arith.constant dense<0.000000e+00> : vector<4x16x16xf32>
    %59 = tpu.matmul %55, %14, %cst_26 {dimension_numbers = #tpu.dot_dimension_numbers<[2], [1], [1], [2], [0, 0, 0, 1, 1, 2], [0], [0]>} : vector<4x16x16xbf16>, vector<4x16x16xbf16>, vector<4x16x16xf32> -> vector<4x16x16xf32>
    %cst_27 = arith.constant dense<0.000000e+00> : vector<4x16x16xf32>
    %60 = tpu.matmul %58, %14, %cst_27 {dimension_numbers = #tpu.dot_dimension_numbers<[2], [1], [1], [2], [0, 0, 0, 1, 1, 2], [0], [0]>} : vector<4x16x16xbf16>, vector<4x16x16xbf16>, vector<4x16x16xf32> -> vector<4x16x16xf32>
    "tpu.trace_stop"() : () -> ()
    %61 = arith.addf %59, %60 : vector<4x16x16xf32>
    "tpu.trace_start"() <{level = 10 : i32, message = "bhw,bwc->bhc"}> : () -> ()
    %cst_28 = arith.constant dense<0.000000e+00> : vector<4x16x16xf32>
    %62 = tpu.matmul %55, %17, %cst_28 {dimension_numbers = #tpu.dot_dimension_numbers<[2], [1], [1], [2], [0, 0, 0, 1, 1, 2], [0], [0]>} : vector<4x16x16xbf16>, vector<4x16x16xbf16>, vector<4x16x16xf32> -> vector<4x16x16xf32>
    "tpu.trace_stop"() : () -> ()
    %63 = arith.addf %61, %62 : vector<4x16x16xf32>
    %64 = arith.truncf %63 : vector<4x16x16xf32> to vector<4x16x16xbf16>
    %65 = arith.extf %64 : vector<4x16x16xbf16> to vector<4x16x16xf32>
    %66 = arith.subf %63, %65 : vector<4x16x16xf32>
    %67 = arith.truncf %66 : vector<4x16x16xf32> to vector<4x16x16xbf16>
    "tpu.trace_start"() <{level = 10 : i32, message = "boh,bhw->bow"}> : () -> ()
    %cst_29 = arith.constant dense<0.000000e+00> : vector<4x16x16xf32>
    %68 = tpu.matmul %8, %64, %cst_29 {dimension_numbers = #tpu.dot_dimension_numbers<[2], [1], [1], [2], [0, 0, 0, 1, 1, 2], [0], [0]>} : vector<4x16x16xbf16>, vector<4x16x16xbf16>, vector<4x16x16xf32> -> vector<4x16x16xf32>
    %cst_30 = arith.constant dense<0.000000e+00> : vector<4x16x16xf32>
    %69 = tpu.matmul %8, %67, %cst_30 {dimension_numbers = #tpu.dot_dimension_numbers<[2], [1], [1], [2], [0, 0, 0, 1, 1, 2], [0], [0]>} : vector<4x16x16xbf16>, vector<4x16x16xbf16>, vector<4x16x16xf32> -> vector<4x16x16xf32>
    "tpu.trace_stop"() : () -> ()
    %70 = arith.addf %68, %69 : vector<4x16x16xf32>
    "tpu.trace_start"() <{level = 10 : i32, message = "boh,bhw->bow"}> : () -> ()
    %cst_31 = arith.constant dense<0.000000e+00> : vector<4x16x16xf32>
    %71 = tpu.matmul %11, %64, %cst_31 {dimension_numbers = #tpu.dot_dimension_numbers<[2], [1], [1], [2], [0, 0, 0, 1, 1, 2], [0], [0]>} : vector<4x16x16xbf16>, vector<4x16x16xbf16>, vector<4x16x16xf32> -> vector<4x16x16xf32>
    "tpu.trace_stop"() : () -> ()
    %72 = arith.addf %70, %71 : vector<4x16x16xf32>
    %73 = arith.mulf %5, %5 : vector<4x16x16xf32>
    %74 = arith.truncf %73 : vector<4x16x16xf32> to vector<4x16x16xbf16>
    %75 = arith.extf %74 : vector<4x16x16xbf16> to vector<4x16x16xf32>
    %76 = arith.subf %73, %75 : vector<4x16x16xf32>
    %77 = arith.truncf %76 : vector<4x16x16xf32> to vector<4x16x16xbf16>
    "tpu.trace_start"() <{level = 10 : i32, message = "bhw,bwc->bhc"}> : () -> ()
    %cst_32 = arith.constant dense<0.000000e+00> : vector<4x16x16xf32>
    %78 = tpu.matmul %74, %14, %cst_32 {dimension_numbers = #tpu.dot_dimension_numbers<[2], [1], [1], [2], [0, 0, 0, 1, 1, 2], [0], [0]>} : vector<4x16x16xbf16>, vector<4x16x16xbf16>, vector<4x16x16xf32> -> vector<4x16x16xf32>
    %cst_33 = arith.constant dense<0.000000e+00> : vector<4x16x16xf32>
    %79 = tpu.matmul %77, %14, %cst_33 {dimension_numbers = #tpu.dot_dimension_numbers<[2], [1], [1], [2], [0, 0, 0, 1, 1, 2], [0], [0]>} : vector<4x16x16xbf16>, vector<4x16x16xbf16>, vector<4x16x16xf32> -> vector<4x16x16xf32>
    "tpu.trace_stop"() : () -> ()
    %80 = arith.addf %78, %79 : vector<4x16x16xf32>
    "tpu.trace_start"() <{level = 10 : i32, message = "bhw,bwc->bhc"}> : () -> ()
    %cst_34 = arith.constant dense<0.000000e+00> : vector<4x16x16xf32>
    %81 = tpu.matmul %74, %17, %cst_34 {dimension_numbers = #tpu.dot_dimension_numbers<[2], [1], [1], [2], [0, 0, 0, 1, 1, 2], [0], [0]>} : vector<4x16x16xbf16>, vector<4x16x16xbf16>, vector<4x16x16xf32> -> vector<4x16x16xf32>
    "tpu.trace_stop"() : () -> ()
    %82 = arith.addf %80, %81 : vector<4x16x16xf32>
    %83 = arith.truncf %82 : vector<4x16x16xf32> to vector<4x16x16xbf16>
    %84 = arith.extf %83 : vector<4x16x16xbf16> to vector<4x16x16xf32>
    %85 = arith.subf %82, %84 : vector<4x16x16xf32>
    %86 = arith.truncf %85 : vector<4x16x16xf32> to vector<4x16x16xbf16>
    "tpu.trace_start"() <{level = 10 : i32, message = "boh,bhw->bow"}> : () -> ()
    %cst_35 = arith.constant dense<0.000000e+00> : vector<4x16x16xf32>
    %87 = tpu.matmul %8, %83, %cst_35 {dimension_numbers = #tpu.dot_dimension_numbers<[2], [1], [1], [2], [0, 0, 0, 1, 1, 2], [0], [0]>} : vector<4x16x16xbf16>, vector<4x16x16xbf16>, vector<4x16x16xf32> -> vector<4x16x16xf32>
    %cst_36 = arith.constant dense<0.000000e+00> : vector<4x16x16xf32>
    %88 = tpu.matmul %8, %86, %cst_36 {dimension_numbers = #tpu.dot_dimension_numbers<[2], [1], [1], [2], [0, 0, 0, 1, 1, 2], [0], [0]>} : vector<4x16x16xbf16>, vector<4x16x16xbf16>, vector<4x16x16xf32> -> vector<4x16x16xf32>
    "tpu.trace_stop"() : () -> ()
    %89 = arith.addf %87, %88 : vector<4x16x16xf32>
    "tpu.trace_start"() <{level = 10 : i32, message = "boh,bhw->bow"}> : () -> ()
    %cst_37 = arith.constant dense<0.000000e+00> : vector<4x16x16xf32>
    %90 = tpu.matmul %11, %83, %cst_37 {dimension_numbers = #tpu.dot_dimension_numbers<[2], [1], [1], [2], [0, 0, 0, 1, 1, 2], [0], [0]>} : vector<4x16x16xbf16>, vector<4x16x16xbf16>, vector<4x16x16xf32> -> vector<4x16x16xf32>
    "tpu.trace_stop"() : () -> ()
    %91 = arith.addf %89, %90 : vector<4x16x16xf32>
    %92 = arith.mulf %2, %5 : vector<4x16x16xf32>
    %93 = arith.truncf %92 : vector<4x16x16xf32> to vector<4x16x16xbf16>
    %94 = arith.extf %93 : vector<4x16x16xbf16> to vector<4x16x16xf32>
    %95 = arith.subf %92, %94 : vector<4x16x16xf32>
    %96 = arith.truncf %95 : vector<4x16x16xf32> to vector<4x16x16xbf16>
    "tpu.trace_start"() <{level = 10 : i32, message = "bhw,bwc->bhc"}> : () -> ()
    %cst_38 = arith.constant dense<0.000000e+00> : vector<4x16x16xf32>
    %97 = tpu.matmul %93, %14, %cst_38 {dimension_numbers = #tpu.dot_dimension_numbers<[2], [1], [1], [2], [0, 0, 0, 1, 1, 2], [0], [0]>} : vector<4x16x16xbf16>, vector<4x16x16xbf16>, vector<4x16x16xf32> -> vector<4x16x16xf32>
    %cst_39 = arith.constant dense<0.000000e+00> : vector<4x16x16xf32>
    %98 = tpu.matmul %96, %14, %cst_39 {dimension_numbers = #tpu.dot_dimension_numbers<[2], [1], [1], [2], [0, 0, 0, 1, 1, 2], [0], [0]>} : vector<4x16x16xbf16>, vector<4x16x16xbf16>, vector<4x16x16xf32> -> vector<4x16x16xf32>
    "tpu.trace_stop"() : () -> ()
    %99 = arith.addf %97, %98 : vector<4x16x16xf32>
    "tpu.trace_start"() <{level = 10 : i32, message = "bhw,bwc->bhc"}> : () -> ()
    %cst_40 = arith.constant dense<0.000000e+00> : vector<4x16x16xf32>
    %100 = tpu.matmul %93, %17, %cst_40 {dimension_numbers = #tpu.dot_dimension_numbers<[2], [1], [1], [2], [0, 0, 0, 1, 1, 2], [0], [0]>} : vector<4x16x16xbf16>, vector<4x16x16xbf16>, vector<4x16x16xf32> -> vector<4x16x16xf32>
    "tpu.trace_stop"() : () -> ()
    %101 = arith.addf %99, %100 : vector<4x16x16xf32>
    %102 = arith.truncf %101 : vector<4x16x16xf32> to vector<4x16x16xbf16>
    %103 = arith.extf %102 : vector<4x16x16xbf16> to vector<4x16x16xf32>
    %104 = arith.subf %101, %103 : vector<4x16x16xf32>
    %105 = arith.truncf %104 : vector<4x16x16xf32> to vector<4x16x16xbf16>
    "tpu.trace_start"() <{level = 10 : i32, message = "boh,bhw->bow"}> : () -> ()
    %cst_41 = arith.constant dense<0.000000e+00> : vector<4x16x16xf32>
    %106 = tpu.matmul %8, %102, %cst_41 {dimension_numbers = #tpu.dot_dimension_numbers<[2], [1], [1], [2], [0, 0, 0, 1, 1, 2], [0], [0]>} : vector<4x16x16xbf16>, vector<4x16x16xbf16>, vector<4x16x16xf32> -> vector<4x16x16xf32>
    %cst_42 = arith.constant dense<0.000000e+00> : vector<4x16x16xf32>
    %107 = tpu.matmul %8, %105, %cst_42 {dimension_numbers = #tpu.dot_dimension_numbers<[2], [1], [1], [2], [0, 0, 0, 1, 1, 2], [0], [0]>} : vector<4x16x16xbf16>, vector<4x16x16xbf16>, vector<4x16x16xf32> -> vector<4x16x16xf32>
    "tpu.trace_stop"() : () -> ()
    %108 = arith.addf %106, %107 : vector<4x16x16xf32>
    "tpu.trace_start"() <{level = 10 : i32, message = "boh,bhw->bow"}> : () -> ()
    %cst_43 = arith.constant dense<0.000000e+00> : vector<4x16x16xf32>
    %109 = tpu.matmul %11, %102, %cst_43 {dimension_numbers = #tpu.dot_dimension_numbers<[2], [1], [1], [2], [0, 0, 0, 1, 1, 2], [0], [0]>} : vector<4x16x16xbf16>, vector<4x16x16xbf16>, vector<4x16x16xf32> -> vector<4x16x16xf32>
    "tpu.trace_stop"() : () -> ()
    %110 = arith.addf %108, %109 : vector<4x16x16xf32>
    %111 = arith.mulf %35, %35 : vector<4x16x16xf32>
    %112 = arith.subf %72, %111 : vector<4x16x16xf32>
    %113 = arith.mulf %53, %53 : vector<4x16x16xf32>
    %114 = arith.subf %91, %113 : vector<4x16x16xf32>
    %115 = arith.mulf %35, %53 : vector<4x16x16xf32>
    %116 = arith.subf %110, %115 : vector<4x16x16xf32>
    %cst_44 = arith.constant 5.000000e-01 : f32
    %117 = vector.broadcast %cst_44 : f32 to vector<4x16x16xf32>
    %118 = arith.addf %35, %117 : vector<4x16x16xf32>
    %cst_45 = arith.constant 5.000000e-01 : f32
    %119 = vector.broadcast %cst_45 : f32 to vector<4x16x16xf32>
    %120 = arith.addf %53, %119 : vector<4x16x16xf32>
    %121 = arith.mulf %118, %118 : vector<4x16x16xf32>
    %122 = arith.mulf %120, %120 : vector<4x16x16xf32>
    %123 = arith.mulf %118, %120 : vector<4x16x16xf32>
    %cst_46 = arith.constant 2.000000e+00 : f32
    %124 = vector.broadcast %cst_46 : f32 to vector<4x16x16xf32>
    %125 = arith.mulf %124, %123 : vector<4x16x16xf32>
    %cst_47 = arith.constant 9.99999974E-5 : f32
    %126 = vector.broadcast %cst_47 : f32 to vector<4x16x16xf32>
    %127 = arith.addf %125, %126 : vector<4x16x16xf32>
    %cst_48 = arith.constant 2.000000e+00 : f32
    %128 = vector.broadcast %cst_48 : f32 to vector<4x16x16xf32>
    %129 = arith.mulf %128, %116 : vector<4x16x16xf32>
    %cst_49 = arith.constant 8.99999984E-4 : f32
    %130 = vector.broadcast %cst_49 : f32 to vector<4x16x16xf32>
    %131 = arith.addf %129, %130 : vector<4x16x16xf32>
    %132 = arith.mulf %127, %131 : vector<4x16x16xf32>
    %133 = arith.addf %121, %122 : vector<4x16x16xf32>
    %cst_50 = arith.constant 9.99999974E-5 : f32
    %134 = vector.broadcast %cst_50 : f32 to vector<4x16x16xf32>
    %135 = arith.addf %133, %134 : vector<4x16x16xf32>
    %136 = arith.addf %112, %114 : vector<4x16x16xf32>
    %cst_51 = arith.constant 8.99999984E-4 : f32
    %137 = vector.broadcast %cst_51 : f32 to vector<4x16x16xf32>
    %138 = arith.addf %136, %137 : vector<4x16x16xf32>
    %139 = arith.mulf %135, %138 : vector<4x16x16xf32>
    %140 = arith.divf %132, %139 : vector<4x16x16xf32>
    %cst_52 = arith.constant 1.000000e+00 : f32
    %141 = vector.broadcast %cst_52 : f32 to vector<4x16x16xf32>
    %142 = arith.subf %141, %140 : vector<4x16x16xf32>
    %cst_53 = arith.constant 5.000000e-01 : f32
    %143 = vector.broadcast %cst_53 : f32 to vector<4x16x16xf32>
    %144 = arith.mulf %142, %143 : vector<4x16x16xf32>
    %cst_54 = arith.constant 0.000000e+00 : f32
    %cst_55 = arith.constant 1.000000e+00 : f32
    %145 = vector.broadcast %cst_54 : f32 to vector<4x16x16xf32>
    %146 = arith.maximumf %145, %144 : vector<4x16x16xf32>
    %147 = vector.broadcast %cst_55 : f32 to vector<4x16x16xf32>
    %148 = arith.minimumf %147, %146 : vector<4x16x16xf32>
    %149 = vector.shape_cast %148 : vector<4x16x16xf32> to vector<1x4x16x16xf32>
    %cst_56 = arith.constant dense<0.000000e+00> : vector<1xf32>
    %150 = vector.multi_reduction <add>, %149, %cst_56 [1, 2, 3] : vector<1x4x16x16xf32> to vector<1xf32>
    %151 = vector.shape_cast %150 : vector<1xf32> to vector<1x1x1x1xf32>
    %152 = vector.extract %151[0, 0, 0, 0] : f32 from vector<1x1x1x1xf32>
    %153 = vector.broadcast %152 : f32 to vector<1x1x1xf32>
    %c0_57 = arith.constant 0 : index
    %c0_58 = arith.constant 0 : index
    %c0_59 = arith.constant 0 : index
    %154 = vector.load %arg7[%c0_57, %c0_58, %c0_59] : memref<1x1x1xf32, #tpu.memory_space<vmem>>, vector<1x1x1xf32>
    tpu.vector_store %arg7[%c0_57, %c0_58, %c0_59], %153 {strides = array<i32>} : memref<1x1x1xf32, #tpu.memory_space<vmem>>, vector<1x1x1xf32>,
    return
  }
  func.func @transform_0(%arg0: i32) -> (i32, i32, i32) {
    %c0_i32 = arith.constant 0 : i32
    %c0_i32_0 = arith.constant 0 : i32
    %c0_i32_1 = arith.constant 0 : i32
    return %arg0, %c0_i32, %c0_i32_0 : i32, i32, i32
  }
  func.func @transform_1(%arg0: i32) -> (i32, i32, i32) {
    %c0_i32 = arith.constant 0 : i32
    %c0_i32_0 = arith.constant 0 : i32
    %c0_i32_1 = arith.constant 0 : i32
    return %arg0, %c0_i32, %c0_i32_0 : i32, i32, i32
  }
  func.func @transform_2(%arg0: i32) -> (i32, i32) {
    %c0_i32 = arith.constant 0 : i32
    %c0_i32_0 = arith.constant 0 : i32
    %c0_i32_1 = arith.constant 0 : i32
    return %c0_i32, %c0_i32_0 : i32, i32
  }
  func.func @transform_3(%arg0: i32) -> (i32, i32) {
    %c0_i32 = arith.constant 0 : i32
    %c0_i32_0 = arith.constant 0 : i32
    %c0_i32_1 = arith.constant 0 : i32
    return %c0_i32, %c0_i32_0 : i32, i32
  }
  func.func @transform_4(%arg0: i32) -> (i32, i32) {
    %c0_i32 = arith.constant 0 : i32
    %c0_i32_0 = arith.constant 0 : i32
    %c0_i32_1 = arith.constant 0 : i32
    return %c0_i32, %c0_i32_0 : i32, i32
  }
  func.func @transform_5(%arg0: i32) -> (i32, i32) {
    %c0_i32 = arith.constant 0 : i32
    %c0_i32_0 = arith.constant 0 : i32
    %c0_i32_1 = arith.constant 0 : i32
    return %c0_i32, %c0_i32_0 : i32, i32
  }
  func.func @transform_6(%arg0: i32) -> (i32, i32, i32) {
    %c0_i32 = arith.constant 0 : i32
    %c0_i32_0 = arith.constant 0 : i32
    %c0_i32_1 = arith.constant 0 : i32
    return %arg0, %c0_i32, %c0_i32_0 : i32, i32, i32
  }
}

</mosaic_0001>

<llo_original>
// kernel: tpu_custom_call.1
$region0: #{tpu_custom_call.1}
  #allocation0 [shape = 'u32[]', space=smem, size = 0x4, offset = 0x4, fixed_abs, tag = 'smem constant byte address 0x4 - core index']
  #allocation1 [shape = 'u32[144,128]{1,0:T(1,128)}', space=vmem, size = 0x12000, scoped, tag = 'internal scratch']
  %s0 = inlined_call_operand.hbm [shape: f32[8,16,16], index: 0, kind: input, shape index: {}]
  %s1 = inlined_call_operand.hbm [shape: f32[8,16,16], index: 1, kind: input, shape index: {}]
  %s2 = inlined_call_operand.hbm [shape: bf16[16,16], index: 2, kind: input, shape index: {}]
  %s3 = inlined_call_operand.hbm [shape: bf16[16,16], index: 3, kind: input, shape index: {}]
  %s4 = inlined_call_operand.hbm [shape: bf16[16,16], index: 4, kind: input, shape index: {}]
  %s5 = inlined_call_operand.vmem [shape: bf16[16,16], index: 5, kind: input, shape index: {}]
  %s6 = inlined_call_operand.vmem [shape: f32[2,1,1], index: 6, kind: output, shape index: {}]
  %s7 = sld [smem:[#allocation0]]
  $region77: #{tpu_custom_call.1} parent=0
    _
  %s9 = ssub.s32 1, %s7
  %s10 = scalar_select 0, %s9, %s7
  $region1: #{tpu_custom_call.1} parent=0
    #allocation2 [shape = 'u8[65536]{0}', space=vmem, size = 0x10000, scoped, tag = 'input window, operand 0']
    #allocation3 [shape = 's32[2]{0}', space=sflag, size = 0x8, scoped, tag = 'scoped memory for tpu_custom_call.1']
    #allocation4 [shape = 'u8[65536]{0}', space=vmem, size = 0x10000, scoped, tag = 'input window, operand 1']
    #allocation5 [shape = 's32[2]{0}', space=sflag, size = 0x8, scoped, tag = 'scoped memory for tpu_custom_call.1']
    #allocation6 [shape = 'u8[4096]{0}', space=vmem, size = 0x1000, scoped, tag = 'input window, operand 2, single buffered']
    #allocation7 [shape = 'u8[4096]{0}', space=vmem, size = 0x1000, scoped, tag = 'input window, operand 3, single buffered']
    #allocation8 [shape = 's32[1]{0}', space=sflag, size = 0x4, scoped, tag = 'scoped memory for tpu_custom_call.1']
    #allocation9 [shape = 'u8[4096]{0}', space=vmem, size = 0x1000, scoped, tag = 'input window, operand 4, single buffered']
    %11 = vsyncpa [#allocation3], 0
    %s12 = scalar_lea.sflag [#allocation3], 1
    %13 = vsyncpa %s12, 0
    %14 = vsyncpa [#allocation5], 0
    %s15 = scalar_lea.sflag [#allocation5], 1
    %16 = vsyncpa %s15, 0
    %17 = vsyncpa [#allocation8], 0
    loop: start=0, step=1, limit=4
    $region2: #{tpu_custom_call.1} parent=1 // loop_pre_header
      _
    $region3: #{tpu_custom_call.1} parent=1 // loop_header
      %s19 = sphi 0, %s23
      %p20 = scmp.ge.s32.totalorder %s19, 4
      %s29 = sphi 0, %s31
      %s32 = sphi 0, %s29
      %s33 = sphi 0, %s32
      %s49 = sphi 0, %s33
      %s55 = sphi 0, %s57
      %s58 = sphi 0, %s55
      %s59 = sphi 0, %s58
      %s75 = sphi 0, %s59
      %s79 = sphi 0, %s79
      %s81 = sphi 0, %s79
      %s82 = sphi 0, %s81
      %s96 = sphi 0, %s82
      %s100 = sphi 0, %s100
      %s102 = sphi 0, %s100
      %s103 = sphi 0, %s102
      %s117 = sphi 0, %s103
      %s121 = sphi 0, %s121
      %s123 = sphi 0, %s121
      %s124 = sphi 0, %s123
      %s138 = sphi 0, %s124
      %s142 = sphi 0, %s142
      %s144 = sphi 0, %s142
      %s145 = sphi 0, %s144
      %s159 = sphi 0, %s145
      %s165 = sphi 0, %s167
      %s168 = sphi 0, %s165
      %s169 = sphi 0, %s168
      %s185 = sphi 0, %s169
    $region4: #{tpu_custom_call.1} parent=1 // loop_header_branch
      %22 = sbr.rel (%p20) target = $region8
    $region5: #{tpu_custom_call.1} parent=1 // loop_body
      %s24 = ssub.s32 %s19, 1
      %s25 = ssub.s32 %s19, 2
      %s26 = sadd.s32 %s19, 1
      %s27 = ssub.s32 %s19, %s26
      %p28 = scmp.eq.s32.totalorder %s27, 0
      %s30 = sadd.s32 %s29, 1
      %s31 = scalar_select %p28, %s29, %s30
      %p34 = pneg %p28
      %p35 = scmp.eq.s32.totalorder %s19, 1
      %p36 = por %p34, %p35
      %p37 = scmp.ne.s32.totalorder %s29, %s32
      %p38 = scmp.eq.s32.totalorder %s19, 0
      %p39 = por %p37, %p38
      %p40 = scmp.ne.s32.totalorder %s29, %s32
      %p41 = scmp.eq.s32.totalorder %s24, 1
      %p42 = por %p40, %p41
      %p43 = scmp.ne.s32.totalorder %s32, %s33
      %p44 = scmp.eq.s32.totalorder %s24, 0
      %p45 = por %p43, %p44
      %p46 = scmp.ne.s32.totalorder %s32, %s33
      %p47 = scmp.eq.s32.totalorder %s25, 1
      %p48 = por %p46, %p47
      %p50 = scmp.ne.s32.totalorder %s33, %s49
      %p51 = scmp.eq.s32.totalorder %s25, 0
      %p52 = por %p50, %p51
      %s53 = ssub.s32 %s19, %s26
      %p54 = scmp.eq.s32.totalorder %s53, 0
      %s56 = sadd.s32 %s55, 1
      %s57 = scalar_select %p54, %s55, %s56
      %p60 = pneg %p54
      %p61 = scmp.eq.s32.totalorder %s19, 1
      %p62 = por %p60, %p61
      %p63 = scmp.ne.s32.totalorder %s55, %s58
      %p64 = scmp.eq.s32.totalorder %s19, 0
      %p65 = por %p63, %p64
      %p66 = scmp.ne.s32.totalorder %s55, %s58
      %p67 = scmp.eq.s32.totalorder %s24, 1
      %p68 = por %p66, %p67
      %p69 = scmp.ne.s32.totalorder %s58, %s59
      %p70 = scmp.eq.s32.totalorder %s24, 0
      %p71 = por %p69, %p70
      %p72 = scmp.ne.s32.totalorder %s58, %s59
      %p73 = scmp.eq.s32.totalorder %s25, 1
      %p74 = por %p72, %p73
      %p76 = scmp.ne.s32.totalorder %s59, %s75
      %p77 = scmp.eq.s32.totalorder %s25, 0
      %p78 = por %p76, %p77
      %s80 = sadd.s32 %s79, 1
      %p83 = scmp.eq.s32.totalorder %s19, 1
      %p84 = scmp.ne.s32.totalorder %s79, %s81
      %p85 = scmp.eq.s32.totalorder %s19, 0
      %p86 = por %p84, %p85
      %p87 = scmp.ne.s32.totalorder %s79, %s81
      %p88 = scmp.eq.s32.totalorder %s24, 1
      %p89 = por %p87, %p88
      %p90 = scmp.ne.s32.totalorder %s81, %s82
      %p91 = scmp.eq.s32.totalorder %s24, 0
      %p92 = por %p90, %p91
      %p93 = scmp.ne.s32.totalorder %s81, %s82
      %p94 = scmp.eq.s32.totalorder %s25, 1
      %p95 = por %p93, %p94
      %p97 = scmp.ne.s32.totalorder %s82, %s96
      %p98 = scmp.eq.s32.totalorder %s25, 0
      %p99 = por %p97, %p98
      %s101 = sadd.s32 %s100, 1
      %p104 = scmp.eq.s32.totalorder %s19, 1
      %p105 = scmp.ne.s32.totalorder %s100, %s102
      %p106 = scmp.eq.s32.totalorder %s19, 0
      %p107 = por %p105, %p106
      %p108 = scmp.ne.s32.totalorder %s100, %s102
      %p109 = scmp.eq.s32.totalorder %s24, 1
      %p110 = por %p108, %p109
      %p111 = scmp.ne.s32.totalorder %s102, %s103
      %p112 = scmp.eq.s32.totalorder %s24, 0
      %p113 = por %p111, %p112
      %p114 = scmp.ne.s32.totalorder %s102, %s103
      %p115 = scmp.eq.s32.totalorder %s25, 1
      %p116 = por %p114, %p115
      %p118 = scmp.ne.s32.totalorder %s103, %s117
      %p119 = scmp.eq.s32.totalorder %s25, 0
      %p120 = por %p118, %p119
      %s122 = sadd.s32 %s121, 1
      %p125 = scmp.eq.s32.totalorder %s19, 1
      %p126 = scmp.ne.s32.totalorder %s121, %s123
      %p127 = scmp.eq.s32.totalorder %s19, 0
      %p128 = por %p126, %p127
      %p129 = scmp.ne.s32.totalorder %s121, %s123
      %p130 = scmp.eq.s32.totalorder %s24, 1
      %p131 = por %p129, %p130
      %p132 = scmp.ne.s32.totalorder %s123, %s124
      %p133 = scmp.eq.s32.totalorder %s24, 0
      %p134 = por %p132, %p133
      %p135 = scmp.ne.s32.totalorder %s123, %s124
      %p136 = scmp.eq.s32.totalorder %s25, 1
      %p137 = por %p135, %p136
      %p139 = scmp.ne.s32.totalorder %s124, %s138
      %p140 = scmp.eq.s32.totalorder %s25, 0
      %p141 = por %p139, %p140
      %s143 = sadd.s32 %s142, 1
      %p146 = scmp.eq.s32.totalorder %s19, 1
      %p147 = scmp.ne.s32.totalorder %s142, %s144
      %p148 = scmp.eq.s32.totalorder %s19, 0
      %p149 = por %p147, %p148
      %p150 = scmp.ne.s32.totalorder %s142, %s144
      %p151 = scmp.eq.s32.totalorder %s24, 1
      %p152 = por %p150, %p151
      %p153 = scmp.ne.s32.totalorder %s144, %s145
      %p154 = scmp.eq.s32.totalorder %s24, 0
      %p155 = por %p153, %p154
      %p156 = scmp.ne.s32.totalorder %s144, %s145
      %p157 = scmp.eq.s32.totalorder %s25, 1
      %p158 = por %p156, %p157
      %p160 = scmp.ne.s32.totalorder %s145, %s159
      %p161 = scmp.eq.s32.totalorder %s25, 0
      %p162 = por %p160, %p161
      %s163 = ssub.s32 %s19, %s26
      %p164 = scmp.eq.s32.totalorder %s163, 0
      %s166 = sadd.s32 %s165, 1
      %s167 = scalar_select %p164, %s165, %s166
      %p170 = pneg %p164
      %p171 = scmp.eq.s32.totalorder %s19, 1
      %p172 = por %p170, %p171
      %p173 = scmp.ne.s32.totalorder %s165, %s168
      %p174 = scmp.eq.s32.totalorder %s19, 0
      %p175 = por %p173, %p174
      %p176 = scmp.ne.s32.totalorder %s165, %s168
      %p177 = scmp.eq.s32.totalorder %s24, 1
      %p178 = por %p176, %p177
      %p179 = scmp.ne.s32.totalorder %s168, %s169
      %p180 = scmp.eq.s32.totalorder %s24, 0
      %p181 = por %p179, %p180
      %p182 = scmp.ne.s32.totalorder %s168, %s169
      %p183 = scmp.eq.s32.totalorder %s25, 1
      %p184 = por %p182, %p183
      %p186 = scmp.ne.s32.totalorder %s169, %s185
      %p187 = scmp.eq.s32.totalorder %s25, 0
      %p188 = por %p186, %p187
      %p189 = scmp.le.s32.totalorder 1, %s19
      %p190 = scmp.lt.s32.totalorder %s19, 3
      %p191 = pnand %p189, %p190
      %p192 = pneg %p191
      // Predicated region
      $region9: #{tpu_custom_call.1} parent=5 // pred_check
        _
      $region10: #{tpu_custom_call.1} parent=5 // pred_check_branch
        %194 = sbr.rel (%p191) target = $region12
      $region11: #{tpu_custom_call.1} parent=5 // pred_region
        %s195 = ssub.s32 %s19, 1
        // Predicated region
        $region13: #{tpu_custom_call.1} parent=11 // pred_check
          %p196 = pneg %p92
        $region14: #{tpu_custom_call.1} parent=11 // pred_check_branch
          %198 = sbr.rel (%p196) target = $region16
        $region15: #{tpu_custom_call.1} parent=11 // pred_region
          %s200 = ssub.s32 128, 128
          %201 = vsyncadd [#allocation5], %s200
          %s202 = sshll.u32 [#allocation6], 4
          %s203 = int_to_ptr.vmem [resolvable:$true] %s202
          %208 = dma.hbm_to_vmem [thread:$0]  %s2, 128, %s203, [#allocation5], 64, 64, 4
        $region16: #{tpu_custom_call.1} parent=11 // pred_fallthru
          _
        // Predicated region
        $region17: #{tpu_custom_call.1} parent=11 // pred_check
          %p209 = pneg %p113
        $region18: #{tpu_custom_call.1} parent=11 // pred_check_branch
          %211 = sbr.rel (%p209) target = $region20
        $region19: #{tpu_custom_call.1} parent=11 // pred_region
          %s213 = ssub.s32 128, 128
          %214 = vsyncadd [#allocation8], %s213
          %s215 = sshll.u32 [#allocation7], 4
          %s216 = int_to_ptr.vmem [resolvable:$true] %s215
          %221 = dma.hbm_to_vmem [thread:$0]  %s3, 128, %s216, [#allocation8], 64, 64, 4
        $region20: #{tpu_custom_call.1} parent=11 // pred_fallthru
          _
        // Predicated region
        $region21: #{tpu_custom_call.1} parent=11 // pred_check
          %p222 = pneg %p134
        $region22: #{tpu_custom_call.1} parent=11 // pred_check_branch
          %224 = sbr.rel (%p222) target = $region24
        $region23: #{tpu_custom_call.1} parent=11 // pred_region
          %s226 = ssub.s32 128, 128
          %227 = vsyncadd [#allocation8], %s226
          %s228 = sshll.u32 [#allocation9], 4
          %s229 = int_to_ptr.vmem [resolvable:$true] %s228
          %234 = dma.hbm_to_vmem [thread:$0]  %s4, 128, %s229, [#allocation8], 64, 64, 4
        $region24: #{tpu_custom_call.1} parent=11 // pred_fallthru
          _
        // Predicated region
        $region25: #{tpu_custom_call.1} parent=11 // pred_check
          %p235 = pneg %p155
        $region26: #{tpu_custom_call.1} parent=11 // pred_check_branch
          %237 = sbr.rel (%p235) target = $region28
        $region27: #{tpu_custom_call.1} parent=11 // pred_region
          _
        $region28: #{tpu_custom_call.1} parent=11 // pred_fallthru
          _
      $region12: #{tpu_custom_call.1} parent=5 // pred_fallthru
        _
      %p238 = scmp.lt.s32.totalorder %s19, 2
      // Predicated region
      $region29: #{tpu_custom_call.1} parent=5 // pred_check
        %p239 = pneg %p238
      $region30: #{tpu_custom_call.1} parent=5 // pred_check_branch
        %241 = sbr.rel (%p239) target = $region32
      $region31: #{tpu_custom_call.1} parent=5 // pred_region
        // Predicated region
        $region33: #{tpu_custom_call.1} parent=31 // pred_check
          %p242 = pneg %p39
        $region34: #{tpu_custom_call.1} parent=31 // pred_check_branch
          %244 = sbr.rel (%p242) target = $region36
        $region35: #{tpu_custom_call.1} parent=31 // pred_region
          %s245 = sand.u32 %s29, 1
          %s246 = scalar_lea.sflag [#allocation3], %s245
          %s247 = sand.u32 %s29, 1
          %s248 = smul.addr %s247, 64
          %s249 = scalar_lea.vmem [#allocation2], %s248
          %s250 = smul.u32 4, %s19
          %s252 = ssub.s32 1024, 1024
          %253 = vsyncadd %s246, %s252
          %s254 = smul.addr %s250, 2
          %s255 = smul.addr %s254, 128
          %s256 = scalar_lea.hbm %s0, %s255
          %s257 = sshll.u32 %s249, 4
          %s258 = int_to_ptr.vmem [resolvable:$true] %s257
          %263 = dma.hbm_to_vmem [thread:$0]  %s256, 1024, %s258, %s246, 128, 128, 8
        $region36: #{tpu_custom_call.1} parent=31 // pred_fallthru
          _
        // Predicated region
        $region37: #{tpu_custom_call.1} parent=31 // pred_check
          %p264 = pneg %p65
        $region38: #{tpu_custom_call.1} parent=31 // pred_check_branch
          %266 = sbr.rel (%p264) target = $region40
        $region39: #{tpu_custom_call.1} parent=31 // pred_region
          %s267 = sand.u32 %s19, 1
          %s268 = scalar_lea.sflag [#allocation5], %s267
          %s269 = sand.u32 %s55, 1
          %s270 = smul.addr %s269, 64
          %s271 = scalar_lea.vmem [#allocation4], %s270
          %s272 = smul.u32 4, %s19
          %s274 = ssub.s32 1024, 1024
          %275 = vsyncadd %s268, %s274
          %s276 = smul.addr %s272, 2
          %s277 = smul.addr %s276, 128
          %s278 = scalar_lea.hbm %s1, %s277
          %s279 = sshll.u32 %s271, 4
          %s280 = int_to_ptr.vmem [resolvable:$true] %s279
          %285 = dma.hbm_to_vmem [thread:$0]  %s278, 1024, %s280, %s268, 128, 128, 8
        $region40: #{tpu_custom_call.1} parent=31 // pred_fallthru
          _
      $region32: #{tpu_custom_call.1} parent=5 // pred_fallthru
        _
      %p286 = scmp.le.s32.totalorder 1, %s19
      %p287 = scmp.lt.s32.totalorder %s19, 3
      %p288 = pnand %p286, %p287
      %p289 = pneg %p288
      // Predicated region
      $region41: #{tpu_custom_call.1} parent=5 // pred_check
        _
      $region42: #{tpu_custom_call.1} parent=5 // pred_check_branch
        %291 = sbr.rel (%p288) target = $region44
      $region43: #{tpu_custom_call.1} parent=5 // pred_region
        %s292 = ssub.s32 %s19, 1
        %s293 = sand.u32 %s32, 1
        %s294 = scalar_lea.sflag [#allocation3], %s293
        %s295 = sand.u32 %s32, 1
        %s296 = smul.addr %s295, 64
        %s297 = scalar_lea.vmem [#allocation2], %s296
        // Predicated region
        $region45: #{tpu_custom_call.1} parent=43 // pred_check
          %p298 = pneg %p45
        $region46: #{tpu_custom_call.1} parent=43 // pred_check_branch
          %300 = sbr.rel (%p298) target = $region48
        $region47: #{tpu_custom_call.1} parent=43 // pred_region
          %301 = dma.done %s294, 1024
        $region48: #{tpu_custom_call.1} parent=43 // pred_fallthru
          _
        %s302 = sand.u32 %s24, 1
        %s303 = scalar_lea.sflag [#allocation5], %s302
        %s304 = sand.u32 %s58, 1
        %s305 = smul.addr %s304, 64
        %s306 = scalar_lea.vmem [#allocation4], %s305
        // Predicated region
        $region49: #{tpu_custom_call.1} parent=43 // pred_check
          %p307 = pneg %p71
        $region50: #{tpu_custom_call.1} parent=43 // pred_check_branch
          %309 = sbr.rel (%p307) target = $region52
        $region51: #{tpu_custom_call.1} parent=43 // pred_region
          %310 = dma.done %s303, 1024
        $region52: #{tpu_custom_call.1} parent=43 // pred_fallthru
          _
        // Predicated region
        $region53: #{tpu_custom_call.1} parent=43 // pred_check
          %p311 = pneg %p92
        $region54: #{tpu_custom_call.1} parent=43 // pred_check_branch
          %313 = sbr.rel (%p311) target = $region56
        $region55: #{tpu_custom_call.1} parent=43 // pred_region
          %314 = dma.done [#allocation5], 128
        $region56: #{tpu_custom_call.1} parent=43 // pred_fallthru
          _
        // Predicated region
        $region57: #{tpu_custom_call.1} parent=43 // pred_check
          %p315 = pneg %p113
        $region58: #{tpu_custom_call.1} parent=43 // pred_check_branch
          %317 = sbr.rel (%p315) target = $region60
        $region59: #{tpu_custom_call.1} parent=43 // pred_region
          %318 = dma.done [#allocation8], 128
        $region60: #{tpu_custom_call.1} parent=43 // pred_fallthru
          _
        // Predicated region
        $region61: #{tpu_custom_call.1} parent=43 // pred_check
          %p319 = pneg %p134
        $region62: #{tpu_custom_call.1} parent=43 // pred_check_branch
          %321 = sbr.rel (%p319) target = $region64
        $region63: #{tpu_custom_call.1} parent=43 // pred_region
          %322 = dma.done [#allocation8], 128
        $region64: #{tpu_custom_call.1} parent=43 // pred_fallthru
          _
        %s323 = sand.u32 %s32, 1
        %s324 = scalar_lea.sflag [#allocation3], %s323
        %s325 = sand.u32 %s32, 1
        %s326 = smul.addr %s325, 64
        %s327 = scalar_lea.vmem [#allocation2], %s326
        %p328 = pneg %p45
        %p329 = pneg %p42
        %s330 = sand.u32 %s24, 1
        %s331 = scalar_lea.sflag [#allocation5], %s330
        %s332 = sand.u32 %s58, 1
        %s333 = smul.addr %s332, 64
        %s334 = scalar_lea.vmem [#allocation4], %s333
        %p335 = pneg %p71
        %p336 = pneg %p68
        %p337 = pneg %p92
        %p338 = pneg %p89
        %p339 = pneg %p113
        %p340 = pneg %p110
        %p341 = pneg %p134
        %p342 = pneg %p131
        %p343 = pneg %p155
        %p344 = pneg %p152
        %p345 = pneg %p181
        %p346 = pneg %p178
        %p347 = scmp.lt.s32.totalorder %s24, 1
        %s348 = scalar_select %p347, %s24, 1
        %s349 = scalar_lea.vmem %s6, %s348
        %s350 = smul.u32 4, %s24
        %s351 = smul.u32 4, %s24
        %p352 = scmp.lt.s32.totalorder %s24, 1
        %s353 = scalar_select %p352, %s24, 1
        %s354 = scalar_lea.vmem %s6, %s353
        %v356 = vld [vmem:[%s297] sm:$0xff]
        %v357 = vld [vmem:[%s297 + $0x8] sm:$0xff]
        %v358 = vld [vmem:[%s297 + $0x10] sm:$0xff]
        %v359 = vld [vmem:[%s297 + $0x18] sm:$0xff]
        %v360 = vld [vmem:[%s297 + $0x20] sm:$0xff]
        %v361 = vld [vmem:[%s297 + $0x28] sm:$0xff]
        %v362 = vld [vmem:[%s297 + $0x30] sm:$0xff]
        %v363 = vld [vmem:[%s297 + $0x38] sm:$0xff]
        %v364 = vsub.f32 %v356, 0.5
        %v365 = vsub.f32 %v357, 0.5
        %v366 = vsub.f32 %v358, 0.5
        %v367 = vsub.f32 %v359, 0.5
        %v368 = vsub.f32 %v360, 0.5
        %v369 = vsub.f32 %v361, 0.5
        %v370 = vsub.f32 %v362, 0.5
        %v371 = vsub.f32 %v363, 0.5
        %v372 = vld [vmem:[%s306] sm:$0xff]
        %v373 = vld [vmem:[%s306 + $0x8] sm:$0xff]
        %v374 = vld [vmem:[%s306 + $0x10] sm:$0xff]
        %v375 = vld [vmem:[%s306 + $0x18] sm:$0xff]
        %v376 = vld [vmem:[%s306 + $0x20] sm:$0xff]
        %v377 = vld [vmem:[%s306 + $0x28] sm:$0xff]
        %v378 = vld [vmem:[%s306 + $0x30] sm:$0xff]
        %v379 = vld [vmem:[%s306 + $0x38] sm:$0xff]
        %v380 = vsub.f32 %v372, 0.5
        %v381 = vsub.f32 %v373, 0.5
        %v382 = vsub.f32 %v374, 0.5
        %v383 = vsub.f32 %v375, 0.5
        %v384 = vsub.f32 %v376, 0.5
        %v385 = vsub.f32 %v377, 0.5
        %v386 = vsub.f32 %v378, 0.5
        %v387 = vsub.f32 %v379, 0.5
        %v388 = vld [vmem:[#allocation6] sm:$0xf]
        %v389 = vld [vmem:[#allocation6 + $0x4] sm:$0xf]
        %v390 = vld [vmem:[#allocation7] sm:$0xf]
        %v391 = vld [vmem:[#allocation7 + $0x4] sm:$0xf]
        %v392 = vld [vmem:[#allocation9] sm:$0xf]
        %v393 = vld [vmem:[#allocation9 + $0x4] sm:$0xf]
        %v394 = vld [vmem:[%s5] sm:$0xf]
        %v395 = vld [vmem:[%s5 + $0x4] sm:$0xf]
        %v396 = vpack.c.bf16 %v365, %v364
        %v397 = vpack.c.bf16 %v367, %v366
        %v398 = vpack.c.bf16 %v369, %v368
        %v399 = vpack.c.bf16 %v371, %v370
        %v400 = vunpack.c.l.bf16 %v396
        %v401 = vunpack.c.h.bf16 %v396
        %v402 = vunpack.c.l.bf16 %v397
        %v403 = vunpack.c.h.bf16 %v397
        %v404 = vunpack.c.l.bf16 %v398
        %v405 = vunpack.c.h.bf16 %v398
        %v406 = vunpack.c.l.bf16 %v399
        %v407 = vunpack.c.h.bf16 %v399
        %v408 = vsub.f32 %v364, %v400
        %v409 = vsub.f32 %v365, %v401
        %v410 = vsub.f32 %v366, %v402
        %v411 = vsub.f32 %v367, %v403
        %v412 = vsub.f32 %v368, %v404
        %v413 = vsub.f32 %v369, %v405
        %v414 = vsub.f32 %v370, %v406
        %v415 = vsub.f32 %v371, %v407
        %v416 = vpack.c.bf16 %v409, %v408
        %v417 = vpack.c.bf16 %v411, %v410
        %v418 = vpack.c.bf16 %v413, %v412
        %v419 = vpack.c.bf16 %v415, %v414
        %v422 = vunpack.c.l.b16 %v392
        %v423 = vunpack.c.l.b16 %v393
        %v424 = vpack.c.b16 %v423, %v422
        %vm426 = vcmask 130048
        %v428 = vsel %vm426, %v416, 0
        %430 = vmatprep.subr.bf16.mxu0 0
        %431 = vmatpush1.bf16.msra.mxu0 0
        %432 = vmatprep.subr.bf16.mxu0 0
        %433 = vmatpush1.bf16.msra.mxu0 0
        %434 = vmatprep.subr.bf16.mxu0 0
        %435 = vmatpush1.bf16.msra.mxu0 0
        %436 = vmatprep.subr.bf16.mxu0 0
        %437 = vmatpush1.bf16.msra.mxu0 0
        %438 = vmatprep.subr.bf16.mxu0 0
        %439 = vmatpush1.bf16.msra.mxu0 0
        %440 = vmatprep.subr.bf16.mxu0 0
        %441 = vmatpush1.bf16.msra.mxu0 0
        %442 = vmatprep.subr.bf16.mxu0 0
        %443 = vmatpush1.bf16.msra.mxu0 0
        %444 = vmatprep.subr.bf16.mxu0 0
        %445 = vmatpush1.bf16.msra.mxu0 %v424
        %446 = vmatprep.subr.bf16.mxu0 0
        %447 = vmatpush2.bf16.msra.mxu0 0
        %448 = vmatprep.subr.bf16.mxu0 0
        %449 = vmatpush2.bf16.msra.mxu0 0
        %450 = vmatprep.subr.bf16.mxu0 0
        %451 = vmatpush2.bf16.msra.mxu0 0
        %452 = vmatprep.subr.bf16.mxu0 0
        %453 = vmatpush2.bf16.msra.mxu0 0
        %454 = vmatprep.subr.bf16.mxu0 0
        %455 = vmatpush2.bf16.msra.mxu0 0
        %456 = vmatprep.subr.bf16.mxu0 0
        %457 = vmatpush2.bf16.msra.mxu0 0
        %458 = vmatprep.subr.bf16.mxu0 0
        %459 = vmatpush2.bf16.msra.mxu0 0
        %460 = vmatprep.subr.bf16.mxu0 0
        %461 = vmatpush2.bf16.msra.mxu0 0
        %462 = vmatprep.mubr.bf16.mxu0 0
        %463 = vmatmul.mubr.bf16.gmra.mxu0 %v428
        %v464 = vpop.f32.mrf.mxu0
        %v465 = vadd.f32 0.0, %v464
        %v466 = vpop.f32.mrf.mxu0
        %v467 = vpop.f32.mrf.mxu0
        %v468 = vadd.f32 0.0, %v467
        %v469 = vpop.f32.mrf.mxu0
        %470 = vdwg.mxu0
        %v472 = vsel %vm426, %v417, 0
        %474 = vmatprep.subr.bf16.mxu0 0
        %475 = vmatpush1.bf16.msra.mxu0 0
        %476 = vmatprep.subr.bf16.mxu0 0
        %477 = vmatpush1.bf16.msra.mxu0 0
        %478 = vmatprep.subr.bf16.mxu0 0
        %479 = vmatpush1.bf16.msra.mxu0 0
        %480 = vmatprep.subr.bf16.mxu0 0
        %481 = vmatpush1.bf16.msra.mxu0 0
        %482 = vmatprep.subr.bf16.mxu0 0
        %483 = vmatpush1.bf16.msra.mxu0 0
        %484 = vmatprep.subr.bf16.mxu0 0
        %485 = vmatpush1.bf16.msra.mxu0 0
        %486 = vmatprep.subr.bf16.mxu0 0
        %487 = vmatpush1.bf16.msra.mxu0 0
        %488 = vmatprep.subr.bf16.mxu0 0
        %489 = vmatpush1.bf16.msra.mxu0 %v424
        %490 = vmatprep.subr.bf16.mxu0 0
        %491 = vmatpush2.bf16.msra.mxu0 0
        %492 = vmatprep.subr.bf16.mxu0 0
        %493 = vmatpush2.bf16.msra.mxu0 0
        %494 = vmatprep.subr.bf16.mxu0 0
        %495 = vmatpush2.bf16.msra.mxu0 0
        %496 = vmatprep.subr.bf16.mxu0 0
        %497 = vmatpush2.bf16.msra.mxu0 0
        %498 = vmatprep.subr.bf16.mxu0 0
        %499 = vmatpush2.bf16.msra.mxu0 0
        %500 = vmatprep.subr.bf16.mxu0 0
        %501 = vmatpush2.bf16.msra.mxu0 0
        %502 = vmatprep.subr.bf16.mxu0 0
        %503 = vmatpush2.bf16.msra.mxu0 0
        %504 = vmatprep.subr.bf16.mxu0 0
        %505 = vmatpush2.bf16.msra.mxu0 0
        %506 = vmatprep.mubr.bf16.mxu0 0
        %507 = vmatmul.mubr.bf16.gmra.mxu0 %v472
        %v508 = vpop.f32.mrf.mxu0
        %v509 = vadd.f32 0.0, %v508
        %v510 = vpop.f32.mrf.mxu0
        %v511 = vpop.f32.mrf.mxu0
        %v512 = vadd.f32 0.0, %v511
        %v513 = vpop.f32.mrf.mxu0
        %514 = vdwg.mxu0
        %v516 = vsel %vm426, %v418, 0
        %518 = vmatprep.subr.bf16.mxu0 0
        %519 = vmatpush1.bf16.msra.mxu0 0
        %520 = vmatprep.subr.bf16.mxu0 0
        %521 = vmatpush1.bf16.msra.mxu0 0
        %522 = vmatprep.subr.bf16.mxu0 0
        %523 = vmatpush1.bf16.msra.mxu0 0
        %524 = vmatprep.subr.bf16.mxu0 0
        %525 = vmatpush1.bf16.msra.mxu0 0
        %526 = vmatprep.subr.bf16.mxu0 0
        %527 = vmatpush1.bf16.msra.mxu0 0
        %528 = vmatprep.subr.bf16.mxu0 0
        %529 = vmatpush1.bf16.msra.mxu0 0
        %530 = vmatprep.subr.bf16.mxu0 0
        %531 = vmatpush1.bf16.msra.mxu0 0
        %532 = vmatprep.subr.bf16.mxu0 0
        %533 = vmatpush1.bf16.msra.mxu0 %v424
        %534 = vmatprep.subr.bf16.mxu0 0
        %535 = vmatpush2.bf16.msra.mxu0 0
        %536 = vmatprep.subr.bf16.mxu0 0
        %537 = vmatpush2.bf16.msra.mxu0 0
        %538 = vmatprep.subr.bf16.mxu0 0
        %539 = vmatpush2.bf16.msra.mxu0 0
        %540 = vmatprep.subr.bf16.mxu0 0
        %541 = vmatpush2.bf16.msra.mxu0 0
        %542 = vmatprep.subr.bf16.mxu0 0
        %543 = vmatpush2.bf16.msra.mxu0 0
        %544 = vmatprep.subr.bf16.mxu0 0
        %545 = vmatpush2.bf16.msra.mxu0 0
        %546 = vmatprep.subr.bf16.mxu0 0
        %547 = vmatpush2.bf16.msra.mxu0 0
        %548 = vmatprep.subr.bf16.mxu0 0
        %549 = vmatpush2.bf16.msra.mxu0 0
        %550 = vmatprep.mubr.bf16.mxu0 0
        %551 = vmatmul.mubr.bf16.gmra.mxu0 %v516
        %v552 = vpop.f32.mrf.mxu0
        %v553 = vadd.f32 0.0, %v552
        %v554 = vpop.f32.mrf.mxu0
        %v555 = vpop.f32.mrf.mxu0
        %v556 = vadd.f32 0.0, %v555
        %v557 = vpop.f32.mrf.mxu0
        %558 = vdwg.mxu0
        %v560 = vsel %vm426, %v419, 0
        %562 = vmatprep.subr.bf16.mxu0 0
        %563 = vmatpush1.bf16.msra.mxu0 0
        %564 = vmatprep.subr.bf16.mxu0 0
        %565 = vmatpush1.bf16.msra.mxu0 0
        %566 = vmatprep.subr.bf16.mxu0 0
        %567 = vmatpush1.bf16.msra.mxu0 0
        %568 = vmatprep.subr.bf16.mxu0 0
        %569 = vmatpush1.bf16.msra.mxu0 0
        %570 = vmatprep.subr.bf16.mxu0 0
        %571 = vmatpush1.bf16.msra.mxu0 0
        %572 = vmatprep.subr.bf16.mxu0 0
        %573 = vmatpush1.bf16.msra.mxu0 0
        %574 = vmatprep.subr.bf16.mxu0 0
        %575 = vmatpush1.bf16.msra.mxu0 0
        %576 = vmatprep.subr.bf16.mxu0 0
        %577 = vmatpush1.bf16.msra.mxu0 %v424
        %578 = vmatprep.subr.bf16.mxu0 0
        %579 = vmatpush2.bf16.msra.mxu0 0
        %580 = vmatprep.subr.bf16.mxu0 0
        %581 = vmatpush2.bf16.msra.mxu0 0
        %582 = vmatprep.subr.bf16.mxu0 0
        %583 = vmatpush2.bf16.msra.mxu0 0
        %584 = vmatprep.subr.bf16.mxu0 0
        %585 = vmatpush2.bf16.msra.mxu0 0
        %586 = vmatprep.subr.bf16.mxu0 0
        %587 = vmatpush2.bf16.msra.mxu0 0
        %588 = vmatprep.subr.bf16.mxu0 0
        %589 = vmatpush2.bf16.msra.mxu0 0
        %590 = vmatprep.subr.bf16.mxu0 0
        %591 = vmatpush2.bf16.msra.mxu0 0
        %592 = vmatprep.subr.bf16.mxu0 0
        %593 = vmatpush2.bf16.msra.mxu0 0
        %594 = vmatprep.mubr.bf16.mxu0 0
        %595 = vmatmul.mubr.bf16.gmra.mxu0 %v560
        %v596 = vpop.f32.mrf.mxu0
        %v597 = vadd.f32 0.0, %v596
        %v598 = vpop.f32.mrf.mxu0
        %v599 = vpop.f32.mrf.mxu0
        %v600 = vadd.f32 0.0, %v599
        %v601 = vpop.f32.mrf.mxu0
        %602 = vdwg.mxu0
        %v604 = vsel %vm426, %v396, 0
        %606 = vmatprep.subr.bf16.mxu0 0
        %607 = vmatpush1.bf16.msra.mxu0 0
        %608 = vmatprep.subr.bf16.mxu0 0
        %609 = vmatpush1.bf16.msra.mxu0 0
        %610 = vmatprep.subr.bf16.mxu0 0
        %611 = vmatpush1.bf16.msra.mxu0 0
        %612 = vmatprep.subr.bf16.mxu0 0
        %613 = vmatpush1.bf16.msra.mxu0 0
        %614 = vmatprep.subr.bf16.mxu0 0
        %615 = vmatpush1.bf16.msra.mxu0 0
        %616 = vmatprep.subr.bf16.mxu0 0
        %617 = vmatpush1.bf16.msra.mxu0 0
        %618 = vmatprep.subr.bf16.mxu0 0
        %619 = vmatpush1.bf16.msra.mxu0 0
        %620 = vmatprep.subr.bf16.mxu0 0
        %621 = vmatpush1.bf16.msra.mxu0 %v424
        %622 = vmatprep.subr.bf16.mxu0 0
        %623 = vmatpush2.bf16.msra.mxu0 0
        %624 = vmatprep.subr.bf16.mxu0 0
        %625 = vmatpush2.bf16.msra.mxu0 0
        %626 = vmatprep.subr.bf16.mxu0 0
        %627 = vmatpush2.bf16.msra.mxu0 0
        %628 = vmatprep.subr.bf16.mxu0 0
        %629 = vmatpush2.bf16.msra.mxu0 0
        %630 = vmatprep.subr.bf16.mxu0 0
        %631 = vmatpush2.bf16.msra.mxu0 0
        %632 = vmatprep.subr.bf16.mxu0 0
        %633 = vmatpush2.bf16.msra.mxu0 0
        %634 = vmatprep.subr.bf16.mxu0 0
        %635 = vmatpush2.bf16.msra.mxu0 0
        %636 = vmatprep.subr.bf16.mxu0 0
        %637 = vmatpush2.bf16.msra.mxu0 0
        %638 = vmatprep.mubr.bf16.mxu0 0
        %639 = vmatmul.mubr.bf16.gmra.mxu0 %v604
        %v640 = vpop.f32.mrf.mxu0
        %v641 = vadd.f32 %v465, %v640
        %v642 = vpop.f32.mrf.mxu0
        %v643 = vpop.f32.mrf.mxu0
        %v644 = vadd.f32 %v468, %v643
        %v645 = vpop.f32.mrf.mxu0
        %646 = vdwg.mxu0
        %v648 = vsel %vm426, %v397, 0
        %650 = vmatprep.subr.bf16.mxu0 0
        %651 = vmatpush1.bf16.msra.mxu0 0
        %652 = vmatprep.subr.bf16.mxu0 0
        %653 = vmatpush1.bf16.msra.mxu0 0
        %654 = vmatprep.subr.bf16.mxu0 0
        %655 = vmatpush1.bf16.msra.mxu0 0
        %656 = vmatprep.subr.bf16.mxu0 0
        %657 = vmatpush1.bf16.msra.mxu0 0
        %658 = vmatprep.subr.bf16.mxu0 0
        %659 = vmatpush1.bf16.msra.mxu0 0
        %660 = vmatprep.subr.bf16.mxu0 0
        %661 = vmatpush1.bf16.msra.mxu0 0
        %662 = vmatprep.subr.bf16.mxu0 0
        %663 = vmatpush1.bf16.msra.mxu0 0
        %664 = vmatprep.subr.bf16.mxu0 0
        %665 = vmatpush1.bf16.msra.mxu0 %v424
        %666 = vmatprep.subr.bf16.mxu0 0
        %667 = vmatpush2.bf16.msra.mxu0 0
        %668 = vmatprep.subr.bf16.mxu0 0
        %669 = vmatpush2.bf16.msra.mxu0 0
        %670 = vmatprep.subr.bf16.mxu0 0
        %671 = vmatpush2.bf16.msra.mxu0 0
        %672 = vmatprep.subr.bf16.mxu0 0
        %673 = vmatpush2.bf16.msra.mxu0 0
        %674 = vmatprep.subr.bf16.mxu0 0
        %675 = vmatpush2.bf16.msra.mxu0 0
        %676 = vmatprep.subr.bf16.mxu0 0
        %677 = vmatpush2.bf16.msra.mxu0 0
        %678 = vmatprep.subr.bf16.mxu0 0
        %679 = vmatpush2.bf16.msra.mxu0 0
        %680 = vmatprep.subr.bf16.mxu0 0
        %681 = vmatpush2.bf16.msra.mxu0 0
        %682 = vmatprep.mubr.bf16.mxu0 0
        %683 = vmatmul.mubr.bf16.gmra.mxu0 %v648
        %v684 = vpop.f32.mrf.mxu0
        %v685 = vadd.f32 %v509, %v684
        %v686 = vpop.f32.mrf.mxu0
        %v687 = vpop.f32.mrf.mxu0
        %v688 = vadd.f32 %v512, %v687
        %v689 = vpop.f32.mrf.mxu0
        %690 = vdwg.mxu0
        %v692 = vsel %vm426, %v398, 0
        %694 = vmatprep.subr.bf16.mxu0 0
        %695 = vmatpush1.bf16.msra.mxu0 0
        %696 = vmatprep.subr.bf16.mxu0 0
        %697 = vmatpush1.bf16.msra.mxu0 0
        %698 = vmatprep.subr.bf16.mxu0 0
        %699 = vmatpush1.bf16.msra.mxu0 0
        %700 = vmatprep.subr.bf16.mxu0 0
        %701 = vmatpush1.bf16.msra.mxu0 0
        %702 = vmatprep.subr.bf16.mxu0 0
        %703 = vmatpush1.bf16.msra.mxu0 0
        %704 = vmatprep.subr.bf16.mxu0 0
        %705 = vmatpush1.bf16.msra.mxu0 0
        %706 = vmatprep.subr.bf16.mxu0 0
        %707 = vmatpush1.bf16.msra.mxu0 0
        %708 = vmatprep.subr.bf16.mxu0 0
        %709 = vmatpush1.bf16.msra.mxu0 %v424
        %710 = vmatprep.subr.bf16.mxu0 0
        %711 = vmatpush2.bf16.msra.mxu0 0
        %712 = vmatprep.subr.bf16.mxu0 0
        %713 = vmatpush2.bf16.msra.mxu0 0
        %714 = vmatprep.subr.bf16.mxu0 0
        %715 = vmatpush2.bf16.msra.mxu0 0
        %716 = vmatprep.subr.bf16.mxu0 0
        %717 = vmatpush2.bf16.msra.mxu0 0
        %718 = vmatprep.subr.bf16.mxu0 0
        %719 = vmatpush2.bf16.msra.mxu0 0
        %720 = vmatprep.subr.bf16.mxu0 0
        %721 = vmatpush2.bf16.msra.mxu0 0
        %722 = vmatprep.subr.bf16.mxu0 0
        %723 = vmatpush2.bf16.msra.mxu0 0
        %724 = vmatprep.subr.bf16.mxu0 0
        %725 = vmatpush2.bf16.msra.mxu0 0
        %726 = vmatprep.mubr.bf16.mxu0 0
        %727 = vmatmul.mubr.bf16.gmra.mxu0 %v692
        %v728 = vpop.f32.mrf.mxu0
        %v729 = vadd.f32 %v553, %v728
        %v730 = vpop.f32.mrf.mxu0
        %v731 = vpop.f32.mrf.mxu0
        %v732 = vadd.f32 %v556, %v731
        %v733 = vpop.f32.mrf.mxu0
        %734 = vdwg.mxu0
        %v736 = vsel %vm426, %v399, 0
        %738 = vmatprep.subr.bf16.mxu0 0
        %739 = vmatpush1.bf16.msra.mxu0 0
        %740 = vmatprep.subr.bf16.mxu0 0
        %741 = vmatpush1.bf16.msra.mxu0 0
        %742 = vmatprep.subr.bf16.mxu0 0
        %743 = vmatpush1.bf16.msra.mxu0 0
        %744 = vmatprep.subr.bf16.mxu0 0
        %745 = vmatpush1.bf16.msra.mxu0 0
        %746 = vmatprep.subr.bf16.mxu0 0
        %747 = vmatpush1.bf16.msra.mxu0 0
        %748 = vmatprep.subr.bf16.mxu0 0
        %749 = vmatpush1.bf16.msra.mxu0 0
        %750 = vmatprep.subr.bf16.mxu0 0
        %751 = vmatpush1.bf16.msra.mxu0 0
        %752 = vmatprep.subr.bf16.mxu0 0
        %753 = vmatpush1.bf16.msra.mxu0 %v424
        %754 = vmatprep.subr.bf16.mxu0 0
        %755 = vmatpush2.bf16.msra.mxu0 0
        %756 = vmatprep.subr.bf16.mxu0 0
        %757 = vmatpush2.bf16.msra.mxu0 0
        %758 = vmatprep.subr.bf16.mxu0 0
        %759 = vmatpush2.bf16.msra.mxu0 0
        %760 = vmatprep.subr.bf16.mxu0 0
        %761 = vmatpush2.bf16.msra.mxu0 0
        %762 = vmatprep.subr.bf16.mxu0 0
        %763 = vmatpush2.bf16.msra.mxu0 0
        %764 = vmatprep.subr.bf16.mxu0 0
        %765 = vmatpush2.bf16.msra.mxu0 0
        %766 = vmatprep.subr.bf16.mxu0 0
        %767 = vmatpush2.bf16.msra.mxu0 0
        %768 = vmatprep.subr.bf16.mxu0 0
        %769 = vmatpush2.bf16.msra.mxu0 0
        %770 = vmatprep.mubr.bf16.mxu0 0
        %771 = vmatmul.mubr.bf16.gmra.mxu0 %v736
        %v772 = vpop.f32.mrf.mxu0
        %v773 = vadd.f32 %v597, %v772
        %v774 = vpop.f32.mrf.mxu0
        %v775 = vpop.f32.mrf.mxu0
        %v776 = vadd.f32 %v600, %v775
        %v777 = vpop.f32.mrf.mxu0
        %778 = vdwg.mxu0
        %v781 = vunpack.c.l.b16 %v394
        %v782 = vunpack.c.l.b16 %v395
        %v783 = vpack.c.b16 %v782, %v781
        %785 = vmatprep.subr.bf16.mxu0 0
        %786 = vmatpush1.bf16.msra.mxu0 0
        %787 = vmatprep.subr.bf16.mxu0 0
        %788 = vmatpush1.bf16.msra.mxu0 0
        %789 = vmatprep.subr.bf16.mxu0 0
        %790 = vmatpush1.bf16.msra.mxu0 0
        %791 = vmatprep.subr.bf16.mxu0 0
        %792 = vmatpush1.bf16.msra.mxu0 0
        %793 = vmatprep.subr.bf16.mxu0 0
        %794 = vmatpush1.bf16.msra.mxu0 0
        %795 = vmatprep.subr.bf16.mxu0 0
        %796 = vmatpush1.bf16.msra.mxu0 0
        %797 = vmatprep.subr.bf16.mxu0 0
        %798 = vmatpush1.bf16.msra.mxu0 0
        %799 = vmatprep.subr.bf16.mxu0 0
        %800 = vmatpush1.bf16.msra.mxu0 %v783
        %801 = vmatprep.subr.bf16.mxu0 0
        %802 = vmatpush2.bf16.msra.mxu0 0
        %803 = vmatprep.subr.bf16.mxu0 0
        %804 = vmatpush2.bf16.msra.mxu0 0
        %805 = vmatprep.subr.bf16.mxu0 0
        %806 = vmatpush2.bf16.msra.mxu0 0
        %807 = vmatprep.subr.bf16.mxu0 0
        %808 = vmatpush2.bf16.msra.mxu0 0
        %809 = vmatprep.subr.bf16.mxu0 0
        %810 = vmatpush2.bf16.msra.mxu0 0
        %811 = vmatprep.subr.bf16.mxu0 0
        %812 = vmatpush2.bf16.msra.mxu0 0
        %813 = vmatprep.subr.bf16.mxu0 0
        %814 = vmatpush2.bf16.msra.mxu0 0
        %815 = vmatprep.subr.bf16.mxu0 0
        %816 = vmatpush2.bf16.msra.mxu0 0
        %817 = vmatprep.mubr.bf16.mxu0 0
        %818 = vmatmul.mubr.bf16.gmra.mxu0 %v604
        %v819 = vpop.f32.mrf.mxu0
        %v820 = vadd.f32 0.0, %v819
        %v821 = vpop.f32.mrf.mxu0
        %v822 = vpop.f32.mrf.mxu0
        %v823 = vadd.f32 0.0, %v822
        %v824 = vpop.f32.mrf.mxu0
        %825 = vdwg.mxu0
        %826 = vmatprep.subr.bf16.mxu0 0
        %827 = vmatpush1.bf16.msra.mxu0 0
        %828 = vmatprep.subr.bf16.mxu0 0
        %829 = vmatpush1.bf16.msra.mxu0 0
        %830 = vmatprep.subr.bf16.mxu0 0
        %831 = vmatpush1.bf16.msra.mxu0 0
        %832 = vmatprep.subr.bf16.mxu0 0
        %833 = vmatpush1.bf16.msra.mxu0 0
        %834 = vmatprep.subr.bf16.mxu0 0
        %835 = vmatpush1.bf16.msra.mxu0 0
        %836 = vmatprep.subr.bf16.mxu0 0
        %837 = vmatpush1.bf16.msra.mxu0 0
        %838 = vmatprep.subr.bf16.mxu0 0
        %839 = vmatpush1.bf16.msra.mxu0 0
        %840 = vmatprep.subr.bf16.mxu0 0
        %841 = vmatpush1.bf16.msra.mxu0 %v783
        %842 = vmatprep.subr.bf16.mxu0 0
        %843 = vmatpush2.bf16.msra.mxu0 0
        %844 = vmatprep.subr.bf16.mxu0 0
        %845 = vmatpush2.bf16.msra.mxu0 0
        %846 = vmatprep.subr.bf16.mxu0 0
        %847 = vmatpush2.bf16.msra.mxu0 0
        %848 = vmatprep.subr.bf16.mxu0 0
        %849 = vmatpush2.bf16.msra.mxu0 0
        %850 = vmatprep.subr.bf16.mxu0 0
        %851 = vmatpush2.bf16.msra.mxu0 0
        %852 = vmatprep.subr.bf16.mxu0 0
        %853 = vmatpush2.bf16.msra.mxu0 0
        %854 = vmatprep.subr.bf16.mxu0 0
        %855 = vmatpush2.bf16.msra.mxu0 0
        %856 = vmatprep.subr.bf16.mxu0 0
        %857 = vmatpush2.bf16.msra.mxu0 0
        %858 = vmatprep.mubr.bf16.mxu0 0
        %859 = vmatmul.mubr.bf16.gmra.mxu0 %v648
        %v860 = vpop.f32.mrf.mxu0
        %v861 = vadd.f32 0.0, %v860
        %v862 = vpop.f32.mrf.mxu0
        %v863 = vpop.f32.mrf.mxu0
        %v864 = vadd.f32 0.0, %v863
        %v865 = vpop.f32.mrf.mxu0
        %866 = vdwg.mxu0
        %867 = vmatprep.subr.bf16.mxu0 0
        %868 = vmatpush1.bf16.msra.mxu0 0
        %869 = vmatprep.subr.bf16.mxu0 0
        %870 = vmatpush1.bf16.msra.mxu0 0
        %871 = vmatprep.subr.bf16.mxu0 0
        %872 = vmatpush1.bf16.msra.mxu0 0
        %873 = vmatprep.subr.bf16.mxu0 0
        %874 = vmatpush1.bf16.msra.mxu0 0
        %875 = vmatprep.subr.bf16.mxu0 0
        %876 = vmatpush1.bf16.msra.mxu0 0
        %877 = vmatprep.subr.bf16.mxu0 0
        %878 = vmatpush1.bf16.msra.mxu0 0
        %879 = vmatprep.subr.bf16.mxu0 0
        %880 = vmatpush1.bf16.msra.mxu0 0
        %881 = vmatprep.subr.bf16.mxu0 0
        %882 = vmatpush1.bf16.msra.mxu0 %v783
        %883 = vmatprep.subr.bf16.mxu0 0
        %884 = vmatpush2.bf16.msra.mxu0 0
        %885 = vmatprep.subr.bf16.mxu0 0
        %886 = vmatpush2.bf16.msra.mxu0 0
        %887 = vmatprep.subr.bf16.mxu0 0
        %888 = vmatpush2.bf16.msra.mxu0 0
        %889 = vmatprep.subr.bf16.mxu0 0
        %890 = vmatpush2.bf16.msra.mxu0 0
        %891 = vmatprep.subr.bf16.mxu0 0
        %892 = vmatpush2.bf16.msra.mxu0 0
        %893 = vmatprep.subr.bf16.mxu0 0
        %894 = vmatpush2.bf16.msra.mxu0 0
        %895 = vmatprep.subr.bf16.mxu0 0
        %896 = vmatpush2.bf16.msra.mxu0 0
        %897 = vmatprep.subr.bf16.mxu0 0
        %898 = vmatpush2.bf16.msra.mxu0 0
        %899 = vmatprep.mubr.bf16.mxu0 0
        %900 = vmatmul.mubr.bf16.gmra.mxu0 %v692
        %v901 = vpop.f32.mrf.mxu0
        %v902 = vadd.f32 0.0, %v901
        %v903 = vpop.f32.mrf.mxu0
        %v904 = vpop.f32.mrf.mxu0
        %v905 = vadd.f32 0.0, %v904
        %v906 = vpop.f32.mrf.mxu0
        %907 = vdwg.mxu0
        %908 = vmatprep.subr.bf16.mxu0 0
        %909 = vmatpush1.bf16.msra.mxu0 0
        %910 = vmatprep.subr.bf16.mxu0 0
        %911 = vmatpush1.bf16.msra.mxu0 0
        %912 = vmatprep.subr.bf16.mxu0 0
        %913 = vmatpush1.bf16.msra.mxu0 0
        %914 = vmatprep.subr.bf16.mxu0 0
        %915 = vmatpush1.bf16.msra.mxu0 0
        %916 = vmatprep.subr.bf16.mxu0 0
        %917 = vmatpush1.bf16.msra.mxu0 0
        %918 = vmatprep.subr.bf16.mxu0 0
        %919 = vmatpush1.bf16.msra.mxu0 0
        %920 = vmatprep.subr.bf16.mxu0 0
        %921 = vmatpush1.bf16.msra.mxu0 0
        %922 = vmatprep.subr.bf16.mxu0 0
        %923 = vmatpush1.bf16.msra.mxu0 %v783
        %924 = vmatprep.subr.bf16.mxu0 0
        %925 = vmatpush2.bf16.msra.mxu0 0
        %926 = vmatprep.subr.bf16.mxu0 0
        %927 = vmatpush2.bf16.msra.mxu0 0
        %928 = vmatprep.subr.bf16.mxu0 0
        %929 = vmatpush2.bf16.msra.mxu0 0
        %930 = vmatprep.subr.bf16.mxu0 0
        %931 = vmatpush2.bf16.msra.mxu0 0
        %932 = vmatprep.subr.bf16.mxu0 0
        %933 = vmatpush2.bf16.msra.mxu0 0
        %934 = vmatprep.subr.bf16.mxu0 0
        %935 = vmatpush2.bf16.msra.mxu0 0
        %936 = vmatprep.subr.bf16.mxu0 0
        %937 = vmatpush2.bf16.msra.mxu0 0
        %938 = vmatprep.subr.bf16.mxu0 0
        %939 = vmatpush2.bf16.msra.mxu0 0
        %940 = vmatprep.mubr.bf16.mxu0 0
        %941 = vmatmul.mubr.bf16.gmra.mxu0 %v736
        %v942 = vpop.f32.mrf.mxu0
        %v943 = vadd.f32 0.0, %v942
        %v944 = vpop.f32.mrf.mxu0
        %v945 = vpop.f32.mrf.mxu0
        %v946 = vadd.f32 0.0, %v945
        %v947 = vpop.f32.mrf.mxu0
        %948 = vdwg.mxu0
        %v949 = vadd.f32 %v641, %v820
        %v950 = vadd.f32 %v644, %v823
        %v951 = vadd.f32 %v685, %v861
        %v952 = vadd.f32 %v688, %v864
        %v953 = vadd.f32 %v729, %v902
        %v954 = vadd.f32 %v732, %v905
        %v955 = vadd.f32 %v773, %v943
        %v956 = vadd.f32 %v776, %v946
        %v957 = vpack.c.bf16 %v950, %v949
        %v958 = vpack.c.bf16 %v952, %v951
        %v959 = vpack.c.bf16 %v954, %v953
        %v960 = vpack.c.bf16 %v956, %v955
        %v961 = vunpack.c.l.bf16 %v957
        %v962 = vunpack.c.h.bf16 %v957
        %v963 = vunpack.c.l.bf16 %v958
        %v964 = vunpack.c.h.bf16 %v958
        %v965 = vunpack.c.l.bf16 %v959
        %v966 = vunpack.c.h.bf16 %v959
        %v967 = vunpack.c.l.bf16 %v960
        %v968 = vunpack.c.h.bf16 %v960
        %v969 = vsub.f32 %v949, %v961
        %v970 = vsub.f32 %v950, %v962
        %v971 = vsub.f32 %v951, %v963
        %v972 = vsub.f32 %v952, %v964
        %v973 = vsub.f32 %v953, %v965
        %v974 = vsub.f32 %v954, %v966
        %v975 = vsub.f32 %v955, %v967
        %v976 = vsub.f32 %v956, %v968
        %v977 = vpack.c.bf16 %v970, %v969
        %v978 = vpack.c.bf16 %v972, %v971
        %v979 = vpack.c.bf16 %v974, %v973
        %v980 = vpack.c.bf16 %v976, %v975
        %v983 = vunpack.c.l.b16 %v388
        %v984 = vunpack.c.l.b16 %v389
        %v985 = vpack.c.b16 %v984, %v983
        %v987 = vsel %vm426, %v985, 0
        %989 = vmatprep.subr.bf16.mxu0 0
        %990 = vmatpush1.bf16.msra.mxu0 0
        %991 = vmatprep.subr.bf16.mxu0 0
        %992 = vmatpush1.bf16.msra.mxu0 0
        %993 = vmatprep.subr.bf16.mxu0 0
        %994 = vmatpush1.bf16.msra.mxu0 0
        %995 = vmatprep.subr.bf16.mxu0 0
        %996 = vmatpush1.bf16.msra.mxu0 0
        %997 = vmatprep.subr.bf16.mxu0 0
        %998 = vmatpush1.bf16.msra.mxu0 0
        %999 = vmatprep.subr.bf16.mxu0 0
        %1000 = vmatpush1.bf16.msra.mxu0 0
        %1001 = vmatprep.subr.bf16.mxu0 0
        %1002 = vmatpush1.bf16.msra.mxu0 0
        %1003 = vmatprep.subr.bf16.mxu0 0
        %1004 = vmatpush1.bf16.msra.mxu0 %v977
        %1005 = vmatprep.subr.bf16.mxu0 0
        %1006 = vmatpush2.bf16.msra.mxu0 0
        %1007 = vmatprep.subr.bf16.mxu0 0
        %1008 = vmatpush2.bf16.msra.mxu0 0
        %1009 = vmatprep.subr.bf16.mxu0 0
        %1010 = vmatpush2.bf16.msra.mxu0 0
        %1011 = vmatprep.subr.bf16.mxu0 0
        %1012 = vmatpush2.bf16.msra.mxu0 0
        %1013 = vmatprep.subr.bf16.mxu0 0
        %1014 = vmatpush2.bf16.msra.mxu0 0
        %1015 = vmatprep.subr.bf16.mxu0 0
        %1016 = vmatpush2.bf16.msra.mxu0 0
        %1017 = vmatprep.subr.bf16.mxu0 0
        %1018 = vmatpush2.bf16.msra.mxu0 0
        %1019 = vmatprep.subr.bf16.mxu0 0
        %1020 = vmatpush2.bf16.msra.mxu0 0
        %1021 = vmatprep.mubr.bf16.mxu0 0
        %1022 = vmatmul.mubr.bf16.gmra.mxu0 %v987
        %v1023 = vpop.f32.mrf.mxu0
        %v1024 = vadd.f32 0.0, %v1023
        %v1025 = vpop.f32.mrf.mxu0
        %v1026 = vpop.f32.mrf.mxu0
        %v1027 = vadd.f32 0.0, %v1026
        %v1028 = vpop.f32.mrf.mxu0
        %1029 = vdwg.mxu0
        %1030 = vmatprep.subr.bf16.mxu0 0
        %1031 = vmatpush1.bf16.msra.mxu0 0
        %1032 = vmatprep.subr.bf16.mxu0 0
        %1033 = vmatpush1.bf16.msra.mxu0 0
        %1034 = vmatprep.subr.bf16.mxu0 0
        %1035 = vmatpush1.bf16.msra.mxu0 0
        %1036 = vmatprep.subr.bf16.mxu0 0
        %1037 = vmatpush1.bf16.msra.mxu0 0
        %1038 = vmatprep.subr.bf16.mxu0 0
        %1039 = vmatpush1.bf16.msra.mxu0 0
        %1040 = vmatprep.subr.bf16.mxu0 0
        %1041 = vmatpush1.bf16.msra.mxu0 0
        %1042 = vmatprep.subr.bf16.mxu0 0
        %1043 = vmatpush1.bf16.msra.mxu0 0
        %1044 = vmatprep.subr.bf16.mxu0 0
        %1045 = vmatpush1.bf16.msra.mxu0 %v978
        %1046 = vmatprep.subr.bf16.mxu0 0
        %1047 = vmatpush2.bf16.msra.mxu0 0
        %1048 = vmatprep.subr.bf16.mxu0 0
        %1049 = vmatpush2.bf16.msra.mxu0 0
        %1050 = vmatprep.subr.bf16.mxu0 0
        %1051 = vmatpush2.bf16.msra.mxu0 0
        %1052 = vmatprep.subr.bf16.mxu0 0
        %1053 = vmatpush2.bf16.msra.mxu0 0
        %1054 = vmatprep.subr.bf16.mxu0 0
        %1055 = vmatpush2.bf16.msra.mxu0 0
        %1056 = vmatprep.subr.bf16.mxu0 0
        %1057 = vmatpush2.bf16.msra.mxu0 0
        %1058 = vmatprep.subr.bf16.mxu0 0
        %1059 = vmatpush2.bf16.msra.mxu0 0
        %1060 = vmatprep.subr.bf16.mxu0 0
        %1061 = vmatpush2.bf16.msra.mxu0 0
        %1062 = vmatprep.mubr.bf16.mxu0 0
        %1063 = vmatmul.mubr.bf16.gmra.mxu0 %v987
        %v1064 = vpop.f32.mrf.mxu0
        %v1065 = vadd.f32 0.0, %v1064
        %v1066 = vpop.f32.mrf.mxu0
        %v1067 = vpop.f32.mrf.mxu0
        %v1068 = vadd.f32 0.0, %v1067
        %v1069 = vpop.f32.mrf.mxu0
        %1070 = vdwg.mxu0
        %1071 = vmatprep.subr.bf16.mxu0 0
        %1072 = vmatpush1.bf16.msra.mxu0 0
        %1073 = vmatprep.subr.bf16.mxu0 0
        %1074 = vmatpush1.bf16.msra.mxu0 0
        %1075 = vmatprep.subr.bf16.mxu0 0
        %1076 = vmatpush1.bf16.msra.mxu0 0
        %1077 = vmatprep.subr.bf16.mxu0 0
        %1078 = vmatpush1.bf16.msra.mxu0 0
        %1079 = vmatprep.subr.bf16.mxu0 0
        %1080 = vmatpush1.bf16.msra.mxu0 0
        %1081 = vmatprep.subr.bf16.mxu0 0
        %1082 = vmatpush1.bf16.msra.mxu0 0
        %1083 = vmatprep.subr.bf16.mxu0 0
        %1084 = vmatpush1.bf16.msra.mxu0 0
        %1085 = vmatprep.subr.bf16.mxu0 0
        %1086 = vmatpush1.bf16.msra.mxu0 %v979
        %1087 = vmatprep.subr.bf16.mxu0 0
        %1088 = vmatpush2.bf16.msra.mxu0 0
        %1089 = vmatprep.subr.bf16.mxu0 0
        %1090 = vmatpush2.bf16.msra.mxu0 0
        %1091 = vmatprep.subr.bf16.mxu0 0
        %1092 = vmatpush2.bf16.msra.mxu0 0
        %1093 = vmatprep.subr.bf16.mxu0 0
        %1094 = vmatpush2.bf16.msra.mxu0 0
        %1095 = vmatprep.subr.bf16.mxu0 0
        %1096 = vmatpush2.bf16.msra.mxu0 0
        %1097 = vmatprep.subr.bf16.mxu0 0
        %1098 = vmatpush2.bf16.msra.mxu0 0
        %1099 = vmatprep.subr.bf16.mxu0 0
        %1100 = vmatpush2.bf16.msra.mxu0 0
        %1101 = vmatprep.subr.bf16.mxu0 0
        %1102 = vmatpush2.bf16.msra.mxu0 0
        %1103 = vmatprep.mubr.bf16.mxu0 0
        %1104 = vmatmul.mubr.bf16.gmra.mxu0 %v987
        %v1105 = vpop.f32.mrf.mxu0
        %v1106 = vadd.f32 0.0, %v1105
        %v1107 = vpop.f32.mrf.mxu0
        %v1108 = vpop.f32.mrf.mxu0
        %v1109 = vadd.f32 0.0, %v1108
        %v1110 = vpop.f32.mrf.mxu0
        %1111 = vdwg.mxu0
        %1112 = vmatprep.subr.bf16.mxu0 0
        %1113 = vmatpush1.bf16.msra.mxu0 0
        %1114 = vmatprep.subr.bf16.mxu0 0
        %1115 = vmatpush1.bf16.msra.mxu0 0
        %1116 = vmatprep.subr.bf16.mxu0 0
        %1117 = vmatpush1.bf16.msra.mxu0 0
        %1118 = vmatprep.subr.bf16.mxu0 0
        %1119 = vmatpush1.bf16.msra.mxu0 0
        %1120 = vmatprep.subr.bf16.mxu0 0
        %1121 = vmatpush1.bf16.msra.mxu0 0
        %1122 = vmatprep.subr.bf16.mxu0 0
        %1123 = vmatpush1.bf16.msra.mxu0 0
        %1124 = vmatprep.subr.bf16.mxu0 0
        %1125 = vmatpush1.bf16.msra.mxu0 0
        %1126 = vmatprep.subr.bf16.mxu0 0
        %1127 = vmatpush1.bf16.msra.mxu0 %v980
        %1128 = vmatprep.subr.bf16.mxu0 0
        %1129 = vmatpush2.bf16.msra.mxu0 0
        %1130 = vmatprep.subr.bf16.mxu0 0
        %1131 = vmatpush2.bf16.msra.mxu0 0
        %1132 = vmatprep.subr.bf16.mxu0 0
        %1133 = vmatpush2.bf16.msra.mxu0 0
        %1134 = vmatprep.subr.bf16.mxu0 0
        %1135 = vmatpush2.bf16.msra.mxu0 0
        %1136 = vmatprep.subr.bf16.mxu0 0
        %1137 = vmatpush2.bf16.msra.mxu0 0
        %1138 = vmatprep.subr.bf16.mxu0 0
        %1139 = vmatpush2.bf16.msra.mxu0 0
        %1140 = vmatprep.subr.bf16.mxu0 0
        %1141 = vmatpush2.bf16.msra.mxu0 0
        %1142 = vmatprep.subr.bf16.mxu0 0
        %1143 = vmatpush2.bf16.msra.mxu0 0
        %1144 = vmatprep.mubr.bf16.mxu0 0
        %1145 = vmatmul.mubr.bf16.gmra.mxu0 %v987
        %v1146 = vpop.f32.mrf.mxu0
        %v1147 = vadd.f32 0.0, %v1146
        %v1148 = vpop.f32.mrf.mxu0
        %v1149 = vpop.f32.mrf.mxu0
        %v1150 = vadd.f32 0.0, %v1149
        %v1151 = vpop.f32.mrf.mxu0
        %1152 = vdwg.mxu0
        %1153 = vmatprep.subr.bf16.mxu0 0
        %1154 = vmatpush1.bf16.msra.mxu0 0
        %1155 = vmatprep.subr.bf16.mxu0 0
        %1156 = vmatpush1.bf16.msra.mxu0 0
        %1157 = vmatprep.subr.bf16.mxu0 0
        %1158 = vmatpush1.bf16.msra.mxu0 0
        %1159 = vmatprep.subr.bf16.mxu0 0
        %1160 = vmatpush1.bf16.msra.mxu0 0
        %1161 = vmatprep.subr.bf16.mxu0 0
        %1162 = vmatpush1.bf16.msra.mxu0 0
        %1163 = vmatprep.subr.bf16.mxu0 0
        %1164 = vmatpush1.bf16.msra.mxu0 0
        %1165 = vmatprep.subr.bf16.mxu0 0
        %1166 = vmatpush1.bf16.msra.mxu0 0
        %1167 = vmatprep.subr.bf16.mxu0 0
        %1168 = vmatpush1.bf16.msra.mxu0 %v957
        %1169 = vmatprep.subr.bf16.mxu0 0
        %1170 = vmatpush2.bf16.msra.mxu0 0
        %1171 = vmatprep.subr.bf16.mxu0 0
        %1172 = vmatpush2.bf16.msra.mxu0 0
        %1173 = vmatprep.subr.bf16.mxu0 0
        %1174 = vmatpush2.bf16.msra.mxu0 0
        %1175 = vmatprep.subr.bf16.mxu0 0
        %1176 = vmatpush2.bf16.msra.mxu0 0
        %1177 = vmatprep.subr.bf16.mxu0 0
        %1178 = vmatpush2.bf16.msra.mxu0 0
        %1179 = vmatprep.subr.bf16.mxu0 0
        %1180 = vmatpush2.bf16.msra.mxu0 0
        %1181 = vmatprep.subr.bf16.mxu0 0
        %1182 = vmatpush2.bf16.msra.mxu0 0
        %1183 = vmatprep.subr.bf16.mxu0 0
        %1184 = vmatpush2.bf16.msra.mxu0 0
        %1185 = vmatprep.mubr.bf16.mxu0 0
        %1186 = vmatmul.mubr.bf16.gmra.mxu0 %v987
        %v1187 = vpop.f32.mrf.mxu0
        %v1188 = vadd.f32 %v1024, %v1187
        %v1189 = vpop.f32.mrf.mxu0
        %v1190 = vpop.f32.mrf.mxu0
        %v1191 = vadd.f32 %v1027, %v1190
        %v1192 = vpop.f32.mrf.mxu0
        %1193 = vdwg.mxu0
        %1194 = vmatprep.subr.bf16.mxu0 0
        %1195 = vmatpush1.bf16.msra.mxu0 0
        %1196 = vmatprep.subr.bf16.mxu0 0
        %1197 = vmatpush1.bf16.msra.mxu0 0
        %1198 = vmatprep.subr.bf16.mxu0 0
        %1199 = vmatpush1.bf16.msra.mxu0 0
        %1200 = vmatprep.subr.bf16.mxu0 0
        %1201 = vmatpush1.bf16.msra.mxu0 0
        %1202 = vmatprep.subr.bf16.mxu0 0
        %1203 = vmatpush1.bf16.msra.mxu0 0
        %1204 = vmatprep.subr.bf16.mxu0 0
        %1205 = vmatpush1.bf16.msra.mxu0 0
        %1206 = vmatprep.subr.bf16.mxu0 0
        %1207 = vmatpush1.bf16.msra.mxu0 0
        %1208 = vmatprep.subr.bf16.mxu0 0
        %1209 = vmatpush1.bf16.msra.mxu0 %v958
        %1210 = vmatprep.subr.bf16.mxu0 0
        %1211 = vmatpush2.bf16.msra.mxu0 0
        %1212 = vmatprep.subr.bf16.mxu0 0
        %1213 = vmatpush2.bf16.msra.mxu0 0
        %1214 = vmatprep.subr.bf16.mxu0 0
        %1215 = vmatpush2.bf16.msra.mxu0 0
        %1216 = vmatprep.subr.bf16.mxu0 0
        %1217 = vmatpush2.bf16.msra.mxu0 0
        %1218 = vmatprep.subr.bf16.mxu0 0
        %1219 = vmatpush2.bf16.msra.mxu0 0
        %1220 = vmatprep.subr.bf16.mxu0 0
        %1221 = vmatpush2.bf16.msra.mxu0 0
        %1222 = vmatprep.subr.bf16.mxu0 0
        %1223 = vmatpush2.bf16.msra.mxu0 0
        %1224 = vmatprep.subr.bf16.mxu0 0
        %1225 = vmatpush2.bf16.msra.mxu0 0
        %1226 = vmatprep.mubr.bf16.mxu0 0
        %1227 = vmatmul.mubr.bf16.gmra.mxu0 %v987
        %v1228 = vpop.f32.mrf.mxu0
        %v1229 = vadd.f32 %v1065, %v1228
        %v1230 = vpop.f32.mrf.mxu0
        %v1231 = vpop.f32.mrf.mxu0
        %v1232 = vadd.f32 %v1068, %v1231
        %v1233 = vpop.f32.mrf.mxu0
        %1234 = vdwg.mxu0
        %1235 = vmatprep.subr.bf16.mxu0 0
        %1236 = vmatpush1.bf16.msra.mxu0 0
        %1237 = vmatprep.subr.bf16.mxu0 0
        %1238 = vmatpush1.bf16.msra.mxu0 0
        %1239 = vmatprep.subr.bf16.mxu0 0
        %1240 = vmatpush1.bf16.msra.mxu0 0
        %1241 = vmatprep.subr.bf16.mxu0 0
        %1242 = vmatpush1.bf16.msra.mxu0 0
        %1243 = vmatprep.subr.bf16.mxu0 0
        %1244 = vmatpush1.bf16.msra.mxu0 0
        %1245 = vmatprep.subr.bf16.mxu0 0
        %1246 = vmatpush1.bf16.msra.mxu0 0
        %1247 = vmatprep.subr.bf16.mxu0 0
        %1248 = vmatpush1.bf16.msra.mxu0 0
        %1249 = vmatprep.subr.bf16.mxu0 0
        %1250 = vmatpush1.bf16.msra.mxu0 %v959
        %1251 = vmatprep.subr.bf16.mxu0 0
        %1252 = vmatpush2.bf16.msra.mxu0 0
        %1253 = vmatprep.subr.bf16.mxu0 0
        %1254 = vmatpush2.bf16.msra.mxu0 0
        %1255 = vmatprep.subr.bf16.mxu0 0
        %1256 = vmatpush2.bf16.msra.mxu0 0
        %1257 = vmatprep.subr.bf16.mxu0 0
        %1258 = vmatpush2.bf16.msra.mxu0 0
        %1259 = vmatprep.subr.bf16.mxu0 0
        %1260 = vmatpush2.bf16.msra.mxu0 0
        %1261 = vmatprep.subr.bf16.mxu0 0
        %1262 = vmatpush2.bf16.msra.mxu0 0
        %1263 = vmatprep.subr.bf16.mxu0 0
        %1264 = vmatpush2.bf16.msra.mxu0 0
        %1265 = vmatprep.subr.bf16.mxu0 0
        %1266 = vmatpush2.bf16.msra.mxu0 0
        %1267 = vmatprep.mubr.bf16.mxu0 0
        %1268 = vmatmul.mubr.bf16.gmra.mxu0 %v987
        %v1269 = vpop.f32.mrf.mxu0
        %v1270 = vadd.f32 %v1106, %v1269
        %v1271 = vpop.f32.mrf.mxu0
        %v1272 = vpop.f32.mrf.mxu0
        %v1273 = vadd.f32 %v1109, %v1272
        %v1274 = vpop.f32.mrf.mxu0
        %1275 = vdwg.mxu0
        %1276 = vmatprep.subr.bf16.mxu0 0
        %1277 = vmatpush1.bf16.msra.mxu0 0
        %1278 = vmatprep.subr.bf16.mxu0 0
        %1279 = vmatpush1.bf16.msra.mxu0 0
        %1280 = vmatprep.subr.bf16.mxu0 0
        %1281 = vmatpush1.bf16.msra.mxu0 0
        %1282 = vmatprep.subr.bf16.mxu0 0
        %1283 = vmatpush1.bf16.msra.mxu0 0
        %1284 = vmatprep.subr.bf16.mxu0 0
        %1285 = vmatpush1.bf16.msra.mxu0 0
        %1286 = vmatprep.subr.bf16.mxu0 0
        %1287 = vmatpush1.bf16.msra.mxu0 0
        %1288 = vmatprep.subr.bf16.mxu0 0
        %1289 = vmatpush1.bf16.msra.mxu0 0
        %1290 = vmatprep.subr.bf16.mxu0 0
        %1291 = vmatpush1.bf16.msra.mxu0 %v960
        %1292 = vmatprep.subr.bf16.mxu0 0
        %1293 = vmatpush2.bf16.msra.mxu0 0
        %1294 = vmatprep.subr.bf16.mxu0 0
        %1295 = vmatpush2.bf16.msra.mxu0 0
        %1296 = vmatprep.subr.bf16.mxu0 0
        %1297 = vmatpush2.bf16.msra.mxu0 0
        %1298 = vmatprep.subr.bf16.mxu0 0
        %1299 = vmatpush2.bf16.msra.mxu0 0
        %1300 = vmatprep.subr.bf16.mxu0 0
        %1301 = vmatpush2.bf16.msra.mxu0 0
        %1302 = vmatprep.subr.bf16.mxu0 0
        %1303 = vmatpush2.bf16.msra.mxu0 0
        %1304 = vmatprep.subr.bf16.mxu0 0
        %1305 = vmatpush2.bf16.msra.mxu0 0
        %1306 = vmatprep.subr.bf16.mxu0 0
        %1307 = vmatpush2.bf16.msra.mxu0 0
        %1308 = vmatprep.mubr.bf16.mxu0 0
        %1309 = vmatmul.mubr.bf16.gmra.mxu0 %v987
        %v1310 = vpop.f32.mrf.mxu0
        %v1311 = vadd.f32 %v1147, %v1310
        %v1312 = vpop.f32.mrf.mxu0
        %v1313 = vpop.f32.mrf.mxu0
        %v1314 = vadd.f32 %v1150, %v1313
        %v1315 = vpop.f32.mrf.mxu0
        %1316 = vdwg.mxu0
        %v1319 = vunpack.c.l.b16 %v390
        %v1320 = vunpack.c.l.b16 %v391
        %v1321 = vpack.c.b16 %v1320, %v1319
        %v1323 = vsel %vm426, %v1321, 0
        %1325 = vmatprep.subr.bf16.mxu0 0
        %1326 = vmatpush1.bf16.msra.mxu0 0
        %1327 = vmatprep.subr.bf16.mxu0 0
        %1328 = vmatpush1.bf16.msra.mxu0 0
        %1329 = vmatprep.subr.bf16.mxu0 0
        %1330 = vmatpush1.bf16.msra.mxu0 0
        %1331 = vmatprep.subr.bf16.mxu0 0
        %1332 = vmatpush1.bf16.msra.mxu0 0
        %1333 = vmatprep.subr.bf16.mxu0 0
        %1334 = vmatpush1.bf16.msra.mxu0 0
        %1335 = vmatprep.subr.bf16.mxu0 0
        %1336 = vmatpush1.bf16.msra.mxu0 0
        %1337 = vmatprep.subr.bf16.mxu0 0
        %1338 = vmatpush1.bf16.msra.mxu0 0
        %1339 = vmatprep.subr.bf16.mxu0 0
        %1340 = vmatpush1.bf16.msra.mxu0 %v957
        %1341 = vmatprep.subr.bf16.mxu0 0
        %1342 = vmatpush2.bf16.msra.mxu0 0
        %1343 = vmatprep.subr.bf16.mxu0 0
        %1344 = vmatpush2.bf16.msra.mxu0 0
        %1345 = vmatprep.subr.bf16.mxu0 0
        %1346 = vmatpush2.bf16.msra.mxu0 0
        %1347 = vmatprep.subr.bf16.mxu0 0
        %1348 = vmatpush2.bf16.msra.mxu0 0
        %1349 = vmatprep.subr.bf16.mxu0 0
        %1350 = vmatpush2.bf16.msra.mxu0 0
        %1351 = vmatprep.subr.bf16.mxu0 0
        %1352 = vmatpush2.bf16.msra.mxu0 0
        %1353 = vmatprep.subr.bf16.mxu0 0
        %1354 = vmatpush2.bf16.msra.mxu0 0
        %1355 = vmatprep.subr.bf16.mxu0 0
        %1356 = vmatpush2.bf16.msra.mxu0 0
        %1357 = vmatprep.mubr.bf16.mxu0 0
        %1358 = vmatmul.mubr.bf16.gmra.mxu0 %v1323
        %v1359 = vpop.f32.mrf.mxu0
        %v1360 = vadd.f32 0.0, %v1359
        %v1361 = vpop.f32.mrf.mxu0
        %v1362 = vpop.f32.mrf.mxu0
        %v1363 = vadd.f32 0.0, %v1362
        %v1364 = vpop.f32.mrf.mxu0
        %1365 = vdwg.mxu0
        %1366 = vmatprep.subr.bf16.mxu0 0
        %1367 = vmatpush1.bf16.msra.mxu0 0
        %1368 = vmatprep.subr.bf16.mxu0 0
        %1369 = vmatpush1.bf16.msra.mxu0 0
        %1370 = vmatprep.subr.bf16.mxu0 0
        %1371 = vmatpush1.bf16.msra.mxu0 0
        %1372 = vmatprep.subr.bf16.mxu0 0
        %1373 = vmatpush1.bf16.msra.mxu0 0
        %1374 = vmatprep.subr.bf16.mxu0 0
        %1375 = vmatpush1.bf16.msra.mxu0 0
        %1376 = vmatprep.subr.bf16.mxu0 0
        %1377 = vmatpush1.bf16.msra.mxu0 0
        %1378 = vmatprep.subr.bf16.mxu0 0
        %1379 = vmatpush1.bf16.msra.mxu0 0
        %1380 = vmatprep.subr.bf16.mxu0 0
        %1381 = vmatpush1.bf16.msra.mxu0 %v958
        %1382 = vmatprep.subr.bf16.mxu0 0
        %1383 = vmatpush2.bf16.msra.mxu0 0
        %1384 = vmatprep.subr.bf16.mxu0 0
        %1385 = vmatpush2.bf16.msra.mxu0 0
        %1386 = vmatprep.subr.bf16.mxu0 0
        %1387 = vmatpush2.bf16.msra.mxu0 0
        %1388 = vmatprep.subr.bf16.mxu0 0
        %1389 = vmatpush2.bf16.msra.mxu0 0
        %1390 = vmatprep.subr.bf16.mxu0 0
        %1391 = vmatpush2.bf16.msra.mxu0 0
        %1392 = vmatprep.subr.bf16.mxu0 0
        %1393 = vmatpush2.bf16.msra.mxu0 0
        %1394 = vmatprep.subr.bf16.mxu0 0
        %1395 = vmatpush2.bf16.msra.mxu0 0
        %1396 = vmatprep.subr.bf16.mxu0 0
        %1397 = vmatpush2.bf16.msra.mxu0 0
        %1398 = vmatprep.mubr.bf16.mxu0 0
        %1399 = vmatmul.mubr.bf16.gmra.mxu0 %v1323
        %v1400 = vpop.f32.mrf.mxu0
        %v1401 = vadd.f32 0.0, %v1400
        %v1402 = vpop.f32.mrf.mxu0
        %v1403 = vpop.f32.mrf.mxu0
        %v1404 = vadd.f32 0.0, %v1403
        %v1405 = vpop.f32.mrf.mxu0
        %1406 = vdwg.mxu0
        %1407 = vmatprep.subr.bf16.mxu0 0
        %1408 = vmatpush1.bf16.msra.mxu0 0
        %1409 = vmatprep.subr.bf16.mxu0 0
        %1410 = vmatpush1.bf16.msra.mxu0 0
        %1411 = vmatprep.subr.bf16.mxu0 0
        %1412 = vmatpush1.bf16.msra.mxu0 0
        %1413 = vmatprep.subr.bf16.mxu0 0
        %1414 = vmatpush1.bf16.msra.mxu0 0
        %1415 = vmatprep.subr.bf16.mxu0 0
        %1416 = vmatpush1.bf16.msra.mxu0 0
        %1417 = vmatprep.subr.bf16.mxu0 0
        %1418 = vmatpush1.bf16.msra.mxu0 0
        %1419 = vmatprep.subr.bf16.mxu0 0
        %1420 = vmatpush1.bf16.msra.mxu0 0
        %1421 = vmatprep.subr.bf16.mxu0 0
        %1422 = vmatpush1.bf16.msra.mxu0 %v959
        %1423 = vmatprep.subr.bf16.mxu0 0
        %1424 = vmatpush2.bf16.msra.mxu0 0
        %1425 = vmatprep.subr.bf16.mxu0 0
        %1426 = vmatpush2.bf16.msra.mxu0 0
        %1427 = vmatprep.subr.bf16.mxu0 0
        %1428 = vmatpush2.bf16.msra.mxu0 0
        %1429 = vmatprep.subr.bf16.mxu0 0
        %1430 = vmatpush2.bf16.msra.mxu0 0
        %1431 = vmatprep.subr.bf16.mxu0 0
        %1432 = vmatpush2.bf16.msra.mxu0 0
        %1433 = vmatprep.subr.bf16.mxu0 0
        %1434 = vmatpush2.bf16.msra.mxu0 0
        %1435 = vmatprep.subr.bf16.mxu0 0
        %1436 = vmatpush2.bf16.msra.mxu0 0
        %1437 = vmatprep.subr.bf16.mxu0 0
        %1438 = vmatpush2.bf16.msra.mxu0 0
        %1439 = vmatprep.mubr.bf16.mxu0 0
        %1440 = vmatmul.mubr.bf16.gmra.mxu0 %v1323
        %v1441 = vpop.f32.mrf.mxu0
        %v1442 = vadd.f32 0.0, %v1441
        %v1443 = vpop.f32.mrf.mxu0
        %v1444 = vpop.f32.mrf.mxu0
        %v1445 = vadd.f32 0.0, %v1444
        %v1446 = vpop.f32.mrf.mxu0
        %1447 = vdwg.mxu0
        %1448 = vmatprep.subr.bf16.mxu0 0
        %1449 = vmatpush1.bf16.msra.mxu0 0
        %1450 = vmatprep.subr.bf16.mxu0 0
        %1451 = vmatpush1.bf16.msra.mxu0 0
        %1452 = vmatprep.subr.bf16.mxu0 0
        %1453 = vmatpush1.bf16.msra.mxu0 0
        %1454 = vmatprep.subr.bf16.mxu0 0
        %1455 = vmatpush1.bf16.msra.mxu0 0
        %1456 = vmatprep.subr.bf16.mxu0 0
        %1457 = vmatpush1.bf16.msra.mxu0 0
        %1458 = vmatprep.subr.bf16.mxu0 0
        %1459 = vmatpush1.bf16.msra.mxu0 0
        %1460 = vmatprep.subr.bf16.mxu0 0
        %1461 = vmatpush1.bf16.msra.mxu0 0
        %1462 = vmatprep.subr.bf16.mxu0 0
        %1463 = vmatpush1.bf16.msra.mxu0 %v960
        %1464 = vmatprep.subr.bf16.mxu0 0
        %1465 = vmatpush2.bf16.msra.mxu0 0
        %1466 = vmatprep.subr.bf16.mxu0 0
        %1467 = vmatpush2.bf16.msra.mxu0 0
        %1468 = vmatprep.subr.bf16.mxu0 0
        %1469 = vmatpush2.bf16.msra.mxu0 0
        %1470 = vmatprep.subr.bf16.mxu0 0
        %1471 = vmatpush2.bf16.msra.mxu0 0
        %1472 = vmatprep.subr.bf16.mxu0 0
        %1473 = vmatpush2.bf16.msra.mxu0 0
        %1474 = vmatprep.subr.bf16.mxu0 0
        %1475 = vmatpush2.bf16.msra.mxu0 0
        %1476 = vmatprep.subr.bf16.mxu0 0
        %1477 = vmatpush2.bf16.msra.mxu0 0
        %1478 = vmatprep.subr.bf16.mxu0 0
        %1479 = vmatpush2.bf16.msra.mxu0 0
        %1480 = vmatprep.mubr.bf16.mxu0 0
        %1481 = vmatmul.mubr.bf16.gmra.mxu0 %v1323
        %v1482 = vpop.f32.mrf.mxu0
        %v1483 = vadd.f32 0.0, %v1482
        %v1484 = vpop.f32.mrf.mxu0
        %v1485 = vpop.f32.mrf.mxu0
        %v1486 = vadd.f32 0.0, %v1485
        %v1487 = vpop.f32.mrf.mxu0
        %1488 = vdwg.mxu0
        %v1489 = vadd.f32 %v1188, %v1360
        %v1490 = vadd.f32 %v1191, %v1363
        %v1491 = vadd.f32 %v1229, %v1401
        %v1492 = vadd.f32 %v1232, %v1404
        %v1493 = vadd.f32 %v1270, %v1442
        %v1494 = vadd.f32 %v1273, %v1445
        %v1495 = vadd.f32 %v1311, %v1483
        %v1496 = vadd.f32 %v1314, %v1486
        %v1497 = vpack.c.bf16 %v381, %v380
        %v1498 = vpack.c.bf16 %v383, %v382
        %v1499 = vpack.c.bf16 %v385, %v384
        %v1500 = vpack.c.bf16 %v387, %v386
        %v1501 = vunpack.c.l.bf16 %v1497
        %v1502 = vunpack.c.h.bf16 %v1497
        %v1503 = vunpack.c.l.bf16 %v1498
        %v1504 = vunpack.c.h.bf16 %v1498
        %v1505 = vunpack.c.l.bf16 %v1499
        %v1506 = vunpack.c.h.bf16 %v1499
        %v1507 = vunpack.c.l.bf16 %v1500
        %v1508 = vunpack.c.h.bf16 %v1500
        %v1509 = vsub.f32 %v380, %v1501
        %v1510 = vsub.f32 %v381, %v1502
        %v1511 = vsub.f32 %v382, %v1503
        %v1512 = vsub.f32 %v383, %v1504
        %v1513 = vsub.f32 %v384, %v1505
        %v1514 = vsub.f32 %v385, %v1506
        %v1515 = vsub.f32 %v386, %v1507
        %v1516 = vsub.f32 %v387, %v1508
        %v1517 = vpack.c.bf16 %v1510, %v1509
        %v1518 = vpack.c.bf16 %v1512, %v1511
        %v1519 = vpack.c.bf16 %v1514, %v1513
        %v1520 = vpack.c.bf16 %v1516, %v1515
        %v1522 = vsel %vm426, %v1517, 0
        %1524 = vmatprep.subr.bf16.mxu0 0
        %1525 = vmatpush1.bf16.msra.mxu0 0
        %1526 = vmatprep.subr.bf16.mxu0 0
        %1527 = vmatpush1.bf16.msra.mxu0 0
        %1528 = vmatprep.subr.bf16.mxu0 0
        %1529 = vmatpush1.bf16.msra.mxu0 0
        %1530 = vmatprep.subr.bf16.mxu0 0
        %1531 = vmatpush1.bf16.msra.mxu0 0
        %1532 = vmatprep.subr.bf16.mxu0 0
        %1533 = vmatpush1.bf16.msra.mxu0 0
        %1534 = vmatprep.subr.bf16.mxu0 0
        %1535 = vmatpush1.bf16.msra.mxu0 0
        %1536 = vmatprep.subr.bf16.mxu0 0
        %1537 = vmatpush1.bf16.msra.mxu0 0
        %1538 = vmatprep.subr.bf16.mxu0 0
        %1539 = vmatpush1.bf16.msra.mxu0 %v424
        %1540 = vmatprep.subr.bf16.mxu0 0
        %1541 = vmatpush2.bf16.msra.mxu0 0
        %1542 = vmatprep.subr.bf16.mxu0 0
        %1543 = vmatpush2.bf16.msra.mxu0 0
        %1544 = vmatprep.subr.bf16.mxu0 0
        %1545 = vmatpush2.bf16.msra.mxu0 0
        %1546 = vmatprep.subr.bf16.mxu0 0
        %1547 = vmatpush2.bf16.msra.mxu0 0
        %1548 = vmatprep.subr.bf16.mxu0 0
        %1549 = vmatpush2.bf16.msra.mxu0 0
        %1550 = vmatprep.subr.bf16.mxu0 0
        %1551 = vmatpush2.bf16.msra.mxu0 0
        %1552 = vmatprep.subr.bf16.mxu0 0
        %1553 = vmatpush2.bf16.msra.mxu0 0
        %1554 = vmatprep.subr.bf16.mxu0 0
        %1555 = vmatpush2.bf16.msra.mxu0 0
        %1556 = vmatprep.mubr.bf16.mxu0 0
        %1557 = vmatmul.mubr.bf16.gmra.mxu0 %v1522
        %v1558 = vpop.f32.mrf.mxu0
        %v1559 = vadd.f32 0.0, %v1558
        %v1560 = vpop.f32.mrf.mxu0
        %v1561 = vpop.f32.mrf.mxu0
        %v1562 = vadd.f32 0.0, %v1561
        %v1563 = vpop.f32.mrf.mxu0
        %1564 = vdwg.mxu0
        %v1566 = vsel %vm426, %v1518, 0
        %1568 = vmatprep.subr.bf16.mxu0 0
        %1569 = vmatpush1.bf16.msra.mxu0 0
        %1570 = vmatprep.subr.bf16.mxu0 0
        %1571 = vmatpush1.bf16.msra.mxu0 0
        %1572 = vmatprep.subr.bf16.mxu0 0
        %1573 = vmatpush1.bf16.msra.mxu0 0
        %1574 = vmatprep.subr.bf16.mxu0 0
        %1575 = vmatpush1.bf16.msra.mxu0 0
        %1576 = vmatprep.subr.bf16.mxu0 0
        %1577 = vmatpush1.bf16.msra.mxu0 0
        %1578 = vmatprep.subr.bf16.mxu0 0
        %1579 = vmatpush1.bf16.msra.mxu0 0
        %1580 = vmatprep.subr.bf16.mxu0 0
        %1581 = vmatpush1.bf16.msra.mxu0 0
        %1582 = vmatprep.subr.bf16.mxu0 0
        %1583 = vmatpush1.bf16.msra.mxu0 %v424
        %1584 = vmatprep.subr.bf16.mxu0 0
        %1585 = vmatpush2.bf16.msra.mxu0 0
        %1586 = vmatprep.subr.bf16.mxu0 0
        %1587 = vmatpush2.bf16.msra.mxu0 0
        %1588 = vmatprep.subr.bf16.mxu0 0
        %1589 = vmatpush2.bf16.msra.mxu0 0
        %1590 = vmatprep.subr.bf16.mxu0 0
        %1591 = vmatpush2.bf16.msra.mxu0 0
        %1592 = vmatprep.subr.bf16.mxu0 0
        %1593 = vmatpush2.bf16.msra.mxu0 0
        %1594 = vmatprep.subr.bf16.mxu0 0
        %1595 = vmatpush2.bf16.msra.mxu0 0
        %1596 = vmatprep.subr.bf16.mxu0 0
        %1597 = vmatpush2.bf16.msra.mxu0 0
        %1598 = vmatprep.subr.bf16.mxu0 0
        %1599 = vmatpush2.bf16.msra.mxu0 0
        %1600 = vmatprep.mubr.bf16.mxu0 0
        %1601 = vmatmul.mubr.bf16.gmra.mxu0 %v1566
        %v1602 = vpop.f32.mrf.mxu0
        %v1603 = vadd.f32 0.0, %v1602
        %v1604 = vpop.f32.mrf.mxu0
        %v1605 = vpop.f32.mrf.mxu0
        %v1606 = vadd.f32 0.0, %v1605
        %v1607 = vpop.f32.mrf.mxu0
        %1608 = vdwg.mxu0
        %v1610 = vsel %vm426, %v1519, 0
        %1612 = vmatprep.subr.bf16.mxu0 0
        %1613 = vmatpush1.bf16.msra.mxu0 0
        %1614 = vmatprep.subr.bf16.mxu0 0
        %1615 = vmatpush1.bf16.msra.mxu0 0
        %1616 = vmatprep.subr.bf16.mxu0 0
        %1617 = vmatpush1.bf16.msra.mxu0 0
        %1618 = vmatprep.subr.bf16.mxu0 0
        %1619 = vmatpush1.bf16.msra.mxu0 0
        %1620 = vmatprep.subr.bf16.mxu0 0
        %1621 = vmatpush1.bf16.msra.mxu0 0
        %1622 = vmatprep.subr.bf16.mxu0 0
        %1623 = vmatpush1.bf16.msra.mxu0 0
        %1624 = vmatprep.subr.bf16.mxu0 0
        %1625 = vmatpush1.bf16.msra.mxu0 0
        %1626 = vmatprep.subr.bf16.mxu0 0
        %1627 = vmatpush1.bf16.msra.mxu0 %v424
        %1628 = vmatprep.subr.bf16.mxu0 0
        %1629 = vmatpush2.bf16.msra.mxu0 0
        %1630 = vmatprep.subr.bf16.mxu0 0
        %1631 = vmatpush2.bf16.msra.mxu0 0
        %1632 = vmatprep.subr.bf16.mxu0 0
        %1633 = vmatpush2.bf16.msra.mxu0 0
        %1634 = vmatprep.subr.bf16.mxu0 0
        %1635 = vmatpush2.bf16.msra.mxu0 0
        %1636 = vmatprep.subr.bf16.mxu0 0
        %1637 = vmatpush2.bf16.msra.mxu0 0
        %1638 = vmatprep.subr.bf16.mxu0 0
        %1639 = vmatpush2.bf16.msra.mxu0 0
        %1640 = vmatprep.subr.bf16.mxu0 0
        %1641 = vmatpush2.bf16.msra.mxu0 0
        %1642 = vmatprep.subr.bf16.mxu0 0
        %1643 = vmatpush2.bf16.msra.mxu0 0
        %1644 = vmatprep.mubr.bf16.mxu0 0
        %1645 = vmatmul.mubr.bf16.gmra.mxu0 %v1610
        %v1646 = vpop.f32.mrf.mxu0
        %v1647 = vadd.f32 0.0, %v1646
        %v1648 = vpop.f32.mrf.mxu0
        %v1649 = vpop.f32.mrf.mxu0
        %v1650 = vadd.f32 0.0, %v1649
        %v1651 = vpop.f32.mrf.mxu0
        %1652 = vdwg.mxu0
        %v1654 = vsel %vm426, %v1520, 0
        %1656 = vmatprep.subr.bf16.mxu0 0
        %1657 = vmatpush1.bf16.msra.mxu0 0
        %1658 = vmatprep.subr.bf16.mxu0 0
        %1659 = vmatpush1.bf16.msra.mxu0 0
        %1660 = vmatprep.subr.bf16.mxu0 0
        %1661 = vmatpush1.bf16.msra.mxu0 0
        %1662 = vmatprep.subr.bf16.mxu0 0
        %1663 = vmatpush1.bf16.msra.mxu0 0
        %1664 = vmatprep.subr.bf16.mxu0 0
        %1665 = vmatpush1.bf16.msra.mxu0 0
        %1666 = vmatprep.subr.bf16.mxu0 0
        %1667 = vmatpush1.bf16.msra.mxu0 0
        %1668 = vmatprep.subr.bf16.mxu0 0
        %1669 = vmatpush1.bf16.msra.mxu0 0
        %1670 = vmatprep.subr.bf16.mxu0 0
        %1671 = vmatpush1.bf16.msra.mxu0 %v424
        %1672 = vmatprep.subr.bf16.mxu0 0
        %1673 = vmatpush2.bf16.msra.mxu0 0
        %1674 = vmatprep.subr.bf16.mxu0 0
        %1675 = vmatpush2.bf16.msra.mxu0 0
        %1676 = vmatprep.subr.bf16.mxu0 0
        %1677 = vmatpush2.bf16.msra.mxu0 0
        %1678 = vmatprep.subr.bf16.mxu0 0
        %1679 = vmatpush2.bf16.msra.mxu0 0
        %1680 = vmatprep.subr.bf16.mxu0 0
        %1681 = vmatpush2.bf16.msra.mxu0 0
        %1682 = vmatprep.subr.bf16.mxu0 0
        %1683 = vmatpush2.bf16.msra.mxu0 0
        %1684 = vmatprep.subr.bf16.mxu0 0
        %1685 = vmatpush2.bf16.msra.mxu0 0
        %1686 = vmatprep.subr.bf16.mxu0 0
        %1687 = vmatpush2.bf16.msra.mxu0 0
        %1688 = vmatprep.mubr.bf16.mxu0 0
        %1689 = vmatmul.mubr.bf16.gmra.mxu0 %v1654
        %v1690 = vpop.f32.mrf.mxu0
        %v1691 = vadd.f32 0.0, %v1690
        %v1692 = vpop.f32.mrf.mxu0
        %v1693 = vpop.f32.mrf.mxu0
        %v1694 = vadd.f32 0.0, %v1693
        %v1695 = vpop.f32.mrf.mxu0
        %1696 = vdwg.mxu0
        %v1698 = vsel %vm426, %v1497, 0
        %1700 = vmatprep.subr.bf16.mxu0 0
        %1701 = vmatpush1.bf16.msra.mxu0 0
        %1702 = vmatprep.subr.bf16.mxu0 0
        %1703 = vmatpush1.bf16.msra.mxu0 0
        %1704 = vmatprep.subr.bf16.mxu0 0
        %1705 = vmatpush1.bf16.msra.mxu0 0
        %1706 = vmatprep.subr.bf16.mxu0 0
        %1707 = vmatpush1.bf16.msra.mxu0 0
        %1708 = vmatprep.subr.bf16.mxu0 0
        %1709 = vmatpush1.bf16.msra.mxu0 0
        %1710 = vmatprep.subr.bf16.mxu0 0
        %1711 = vmatpush1.bf16.msra.mxu0 0
        %1712 = vmatprep.subr.bf16.mxu0 0
        %1713 = vmatpush1.bf16.msra.mxu0 0
        %1714 = vmatprep.subr.bf16.mxu0 0
        %1715 = vmatpush1.bf16.msra.mxu0 %v424
        %1716 = vmatprep.subr.bf16.mxu0 0
        %1717 = vmatpush2.bf16.msra.mxu0 0
        %1718 = vmatprep.subr.bf16.mxu0 0
        %1719 = vmatpush2.bf16.msra.mxu0 0
        %1720 = vmatprep.subr.bf16.mxu0 0
        %1721 = vmatpush2.bf16.msra.mxu0 0
        %1722 = vmatprep.subr.bf16.mxu0 0
        %1723 = vmatpush2.bf16.msra.mxu0 0
        %1724 = vmatprep.subr.bf16.mxu0 0
        %1725 = vmatpush2.bf16.msra.mxu0 0
        %1726 = vmatprep.subr.bf16.mxu0 0
        %1727 = vmatpush2.bf16.msra.mxu0 0
        %1728 = vmatprep.subr.bf16.mxu0 0
        %1729 = vmatpush2.bf16.msra.mxu0 0
        %1730 = vmatprep.subr.bf16.mxu0 0
        %1731 = vmatpush2.bf16.msra.mxu0 0
        %1732 = vmatprep.mubr.bf16.mxu0 0
        %1733 = vmatmul.mubr.bf16.gmra.mxu0 %v1698
        %v1734 = vpop.f32.mrf.mxu0
        %v1735 = vadd.f32 %v1559, %v1734
        %v1736 = vpop.f32.mrf.mxu0
        %v1737 = vpop.f32.mrf.mxu0
        %v1738 = vadd.f32 %v1562, %v1737
        %v1739 = vpop.f32.mrf.mxu0
        %1740 = vdwg.mxu0
        %v1742 = vsel %vm426, %v1498, 0
        %1744 = vmatprep.subr.bf16.mxu0 0
        %1745 = vmatpush1.bf16.msra.mxu0 0
        %1746 = vmatprep.subr.bf16.mxu0 0
        %1747 = vmatpush1.bf16.msra.mxu0 0
        %1748 = vmatprep.subr.bf16.mxu0 0
        %1749 = vmatpush1.bf16.msra.mxu0 0
        %1750 = vmatprep.subr.bf16.mxu0 0
        %1751 = vmatpush1.bf16.msra.mxu0 0
        %1752 = vmatprep.subr.bf16.mxu0 0
        %1753 = vmatpush1.bf16.msra.mxu0 0
        %1754 = vmatprep.subr.bf16.mxu0 0
        %1755 = vmatpush1.bf16.msra.mxu0 0
        %1756 = vmatprep.subr.bf16.mxu0 0
        %1757 = vmatpush1.bf16.msra.mxu0 0
        %1758 = vmatprep.subr.bf16.mxu0 0
        %1759 = vmatpush1.bf16.msra.mxu0 %v424
        %1760 = vmatprep.subr.bf16.mxu0 0
        %1761 = vmatpush2.bf16.msra.mxu0 0
        %1762 = vmatprep.subr.bf16.mxu0 0
        %1763 = vmatpush2.bf16.msra.mxu0 0
        %1764 = vmatprep.subr.bf16.mxu0 0
        %1765 = vmatpush2.bf16.msra.mxu0 0
        %1766 = vmatprep.subr.bf16.mxu0 0
        %1767 = vmatpush2.bf16.msra.mxu0 0
        %1768 = vmatprep.subr.bf16.mxu0 0
        %1769 = vmatpush2.bf16.msra.mxu0 0
        %1770 = vmatprep.subr.bf16.mxu0 0
        %1771 = vmatpush2.bf16.msra.mxu0 0
        %1772 = vmatprep.subr.bf16.mxu0 0
        %1773 = vmatpush2.bf16.msra.mxu0 0
        %1774 = vmatprep.subr.bf16.mxu0 0
        %1775 = vmatpush2.bf16.msra.mxu0 0
        %1776 = vmatprep.mubr.bf16.mxu0 0
        %1777 = vmatmul.mubr.bf16.gmra.mxu0 %v1742
        %v1778 = vpop.f32.mrf.mxu0
        %v1779 = vadd.f32 %v1603, %v1778
        %v1780 = vpop.f32.mrf.mxu0
        %v1781 = vpop.f32.mrf.mxu0
        %v1782 = vadd.f32 %v1606, %v1781
        %v1783 = vpop.f32.mrf.mxu0
        %1784 = vdwg.mxu0
        %v1786 = vsel %vm426, %v1499, 0
        %1788 = vmatprep.subr.bf16.mxu0 0
        %1789 = vmatpush1.bf16.msra.mxu0 0
        %1790 = vmatprep.subr.bf16.mxu0 0
        %1791 = vmatpush1.bf16.msra.mxu0 0
        %1792 = vmatprep.subr.bf16.mxu0 0
        %1793 = vmatpush1.bf16.msra.mxu0 0
        %1794 = vmatprep.subr.bf16.mxu0 0
        %1795 = vmatpush1.bf16.msra.mxu0 0
        %1796 = vmatprep.subr.bf16.mxu0 0
        %1797 = vmatpush1.bf16.msra.mxu0 0
        %1798 = vmatprep.subr.bf16.mxu0 0
        %1799 = vmatpush1.bf16.msra.mxu0 0
        %1800 = vmatprep.subr.bf16.mxu0 0
        %1801 = vmatpush1.bf16.msra.mxu0 0
        %1802 = vmatprep.subr.bf16.mxu0 0
        %1803 = vmatpush1.bf16.msra.mxu0 %v424
        %1804 = vmatprep.subr.bf16.mxu0 0
        %1805 = vmatpush2.bf16.msra.mxu0 0
        %1806 = vmatprep.subr.bf16.mxu0 0
        %1807 = vmatpush2.bf16.msra.mxu0 0
        %1808 = vmatprep.subr.bf16.mxu0 0
        %1809 = vmatpush2.bf16.msra.mxu0 0
        %1810 = vmatprep.subr.bf16.mxu0 0
        %1811 = vmatpush2.bf16.msra.mxu0 0
        %1812 = vmatprep.subr.bf16.mxu0 0
        %1813 = vmatpush2.bf16.msra.mxu0 0
        %1814 = vmatprep.subr.bf16.mxu0 0
        %1815 = vmatpush2.bf16.msra.mxu0 0
        %1816 = vmatprep.subr.bf16.mxu0 0
        %1817 = vmatpush2.bf16.msra.mxu0 0
        %1818 = vmatprep.subr.bf16.mxu0 0
        %1819 = vmatpush2.bf16.msra.mxu0 0
        %1820 = vmatprep.mubr.bf16.mxu0 0
        %1821 = vmatmul.mubr.bf16.gmra.mxu0 %v1786
        %v1822 = vpop.f32.mrf.mxu0
        %v1823 = vadd.f32 %v1647, %v1822
        %v1824 = vpop.f32.mrf.mxu0
        %v1825 = vpop.f32.mrf.mxu0
        %v1826 = vadd.f32 %v1650, %v1825
        %v1827 = vpop.f32.mrf.mxu0
        %1828 = vdwg.mxu0
        %v1830 = vsel %vm426, %v1500, 0
        %1832 = vmatprep.subr.bf16.mxu0 0
        %1833 = vmatpush1.bf16.msra.mxu0 0
        %1834 = vmatprep.subr.bf16.mxu0 0
        %1835 = vmatpush1.bf16.msra.mxu0 0
        %1836 = vmatprep.subr.bf16.mxu0 0
        %1837 = vmatpush1.bf16.msra.mxu0 0
        %1838 = vmatprep.subr.bf16.mxu0 0
        %1839 = vmatpush1.bf16.msra.mxu0 0
        %1840 = vmatprep.subr.bf16.mxu0 0
        %1841 = vmatpush1.bf16.msra.mxu0 0
        %1842 = vmatprep.subr.bf16.mxu0 0
        %1843 = vmatpush1.bf16.msra.mxu0 0
        %1844 = vmatprep.subr.bf16.mxu0 0
        %1845 = vmatpush1.bf16.msra.mxu0 0
        %1846 = vmatprep.subr.bf16.mxu0 0
        %1847 = vmatpush1.bf16.msra.mxu0 %v424
        %1848 = vmatprep.subr.bf16.mxu0 0
        %1849 = vmatpush2.bf16.msra.mxu0 0
        %1850 = vmatprep.subr.bf16.mxu0 0
        %1851 = vmatpush2.bf16.msra.mxu0 0
        %1852 = vmatprep.subr.bf16.mxu0 0
        %1853 = vmatpush2.bf16.msra.mxu0 0
        %1854 = vmatprep.subr.bf16.mxu0 0
        %1855 = vmatpush2.bf16.msra.mxu0 0
        %1856 = vmatprep.subr.bf16.mxu0 0
        %1857 = vmatpush2.bf16.msra.mxu0 0
        %1858 = vmatprep.subr.bf16.mxu0 0
        %1859 = vmatpush2.bf16.msra.mxu0 0
        %1860 = vmatprep.subr.bf16.mxu0 0
        %1861 = vmatpush2.bf16.msra.mxu0 0
        %1862 = vmatprep.subr.bf16.mxu0 0
        %1863 = vmatpush2.bf16.msra.mxu0 0
        %1864 = vmatprep.mubr.bf16.mxu0 0
        %1865 = vmatmul.mubr.bf16.gmra.mxu0 %v1830
        %v1866 = vpop.f32.mrf.mxu0
        %v1867 = vadd.f32 %v1691, %v1866
        %v1868 = vpop.f32.mrf.mxu0
        %v1869 = vpop.f32.mrf.mxu0
        %v1870 = vadd.f32 %v1694, %v1869
        %v1871 = vpop.f32.mrf.mxu0
        %1872 = vdwg.mxu0
        %1873 = vmatprep.subr.bf16.mxu0 0
        %1874 = vmatpush1.bf16.msra.mxu0 0
        %1875 = vmatprep.subr.bf16.mxu0 0
        %1876 = vmatpush1.bf16.msra.mxu0 0
        %1877 = vmatprep.subr.bf16.mxu0 0
        %1878 = vmatpush1.bf16.msra.mxu0 0
        %1879 = vmatprep.subr.bf16.mxu0 0
        %1880 = vmatpush1.bf16.msra.mxu0 0
        %1881 = vmatprep.subr.bf16.mxu0 0
        %1882 = vmatpush1.bf16.msra.mxu0 0
        %1883 = vmatprep.subr.bf16.mxu0 0
        %1884 = vmatpush1.bf16.msra.mxu0 0
        %1885 = vmatprep.subr.bf16.mxu0 0
        %1886 = vmatpush1.bf16.msra.mxu0 0
        %1887 = vmatprep.subr.bf16.mxu0 0
        %1888 = vmatpush1.bf16.msra.mxu0 %v783
        %1889 = vmatprep.subr.bf16.mxu0 0
        %1890 = vmatpush2.bf16.msra.mxu0 0
        %1891 = vmatprep.subr.bf16.mxu0 0
        %1892 = vmatpush2.bf16.msra.mxu0 0
        %1893 = vmatprep.subr.bf16.mxu0 0
        %1894 = vmatpush2.bf16.msra.mxu0 0
        %1895 = vmatprep.subr.bf16.mxu0 0
        %1896 = vmatpush2.bf16.msra.mxu0 0
        %1897 = vmatprep.subr.bf16.mxu0 0
        %1898 = vmatpush2.bf16.msra.mxu0 0
        %1899 = vmatprep.subr.bf16.mxu0 0
        %1900 = vmatpush2.bf16.msra.mxu0 0
        %1901 = vmatprep.subr.bf16.mxu0 0
        %1902 = vmatpush2.bf16.msra.mxu0 0
        %1903 = vmatprep.subr.bf16.mxu0 0
        %1904 = vmatpush2.bf16.msra.mxu0 0
        %1905 = vmatprep.mubr.bf16.mxu0 0
        %1906 = vmatmul.mubr.bf16.gmra.mxu0 %v1698
        %v1907 = vpop.f32.mrf.mxu0
        %v1908 = vadd.f32 0.0, %v1907
        %v1909 = vpop.f32.mrf.mxu0
        %v1910 = vpop.f32.mrf.mxu0
        %v1911 = vadd.f32 0.0, %v1910
        %v1912 = vpop.f32.mrf.mxu0
        %1913 = vdwg.mxu0
        %1914 = vmatprep.subr.bf16.mxu0 0
        %1915 = vmatpush1.bf16.msra.mxu0 0
        %1916 = vmatprep.subr.bf16.mxu0 0
        %1917 = vmatpush1.bf16.msra.mxu0 0
        %1918 = vmatprep.subr.bf16.mxu0 0
        %1919 = vmatpush1.bf16.msra.mxu0 0
        %1920 = vmatprep.subr.bf16.mxu0 0
        %1921 = vmatpush1.bf16.msra.mxu0 0
        %1922 = vmatprep.subr.bf16.mxu0 0
        %1923 = vmatpush1.bf16.msra.mxu0 0
        %1924 = vmatprep.subr.bf16.mxu0 0
        %1925 = vmatpush1.bf16.msra.mxu0 0
        %1926 = vmatprep.subr.bf16.mxu0 0
        %1927 = vmatpush1.bf16.msra.mxu0 0
        %1928 = vmatprep.subr.bf16.mxu0 0
        %1929 = vmatpush1.bf16.msra.mxu0 %v783
        %1930 = vmatprep.subr.bf16.mxu0 0
        %1931 = vmatpush2.bf16.msra.mxu0 0
        %1932 = vmatprep.subr.bf16.mxu0 0
        %1933 = vmatpush2.bf16.msra.mxu0 0
        %1934 = vmatprep.subr.bf16.mxu0 0
        %1935 = vmatpush2.bf16.msra.mxu0 0
        %1936 = vmatprep.subr.bf16.mxu0 0
        %1937 = vmatpush2.bf16.msra.mxu0 0
        %1938 = vmatprep.subr.bf16.mxu0 0
        %1939 = vmatpush2.bf16.msra.mxu0 0
        %1940 = vmatprep.subr.bf16.mxu0 0
        %1941 = vmatpush2.bf16.msra.mxu0 0
        %1942 = vmatprep.subr.bf16.mxu0 0
        %1943 = vmatpush2.bf16.msra.mxu0 0
        %1944 = vmatprep.subr.bf16.mxu0 0
        %1945 = vmatpush2.bf16.msra.mxu0 0
        %1946 = vmatprep.mubr.bf16.mxu0 0
        %1947 = vmatmul.mubr.bf16.gmra.mxu0 %v1742
        %v1948 = vpop.f32.mrf.mxu0
        %v1949 = vadd.f32 0.0, %v1948
        %v1950 = vpop.f32.mrf.mxu0
        %v1951 = vpop.f32.mrf.mxu0
        %v1952 = vadd.f32 0.0, %v1951
        %v1953 = vpop.f32.mrf.mxu0
        %1954 = vdwg.mxu0
        %1955 = vmatprep.subr.bf16.mxu0 0
        %1956 = vmatpush1.bf16.msra.mxu0 0
        %1957 = vmatprep.subr.bf16.mxu0 0
        %1958 = vmatpush1.bf16.msra.mxu0 0
        %1959 = vmatprep.subr.bf16.mxu0 0
        %1960 = vmatpush1.bf16.msra.mxu0 0
        %1961 = vmatprep.subr.bf16.mxu0 0
        %1962 = vmatpush1.bf16.msra.mxu0 0
        %1963 = vmatprep.subr.bf16.mxu0 0
        %1964 = vmatpush1.bf16.msra.mxu0 0
        %1965 = vmatprep.subr.bf16.mxu0 0
        %1966 = vmatpush1.bf16.msra.mxu0 0
        %1967 = vmatprep.subr.bf16.mxu0 0
        %1968 = vmatpush1.bf16.msra.mxu0 0
        %1969 = vmatprep.subr.bf16.mxu0 0
        %1970 = vmatpush1.bf16.msra.mxu0 %v783
        %1971 = vmatprep.subr.bf16.mxu0 0
        %1972 = vmatpush2.bf16.msra.mxu0 0
        %1973 = vmatprep.subr.bf16.mxu0 0
        %1974 = vmatpush2.bf16.msra.mxu0 0
        %1975 = vmatprep.subr.bf16.mxu0 0
        %1976 = vmatpush2.bf16.msra.mxu0 0
        %1977 = vmatprep.subr.bf16.mxu0 0
        %1978 = vmatpush2.bf16.msra.mxu0 0
        %1979 = vmatprep.subr.bf16.mxu0 0
        %1980 = vmatpush2.bf16.msra.mxu0 0
        %1981 = vmatprep.subr.bf16.mxu0 0
        %1982 = vmatpush2.bf16.msra.mxu0 0
        %1983 = vmatprep.subr.bf16.mxu0 0
        %1984 = vmatpush2.bf16.msra.mxu0 0
        %1985 = vmatprep.subr.bf16.mxu0 0
        %1986 = vmatpush2.bf16.msra.mxu0 0
        %1987 = vmatprep.mubr.bf16.mxu0 0
        %1988 = vmatmul.mubr.bf16.gmra.mxu0 %v1786
        %v1989 = vpop.f32.mrf.mxu0
        %v1990 = vadd.f32 0.0, %v1989
        %v1991 = vpop.f32.mrf.mxu0
        %v1992 = vpop.f32.mrf.mxu0
        %v1993 = vadd.f32 0.0, %v1992
        %v1994 = vpop.f32.mrf.mxu0
        %1995 = vdwg.mxu0
        %1996 = vmatprep.subr.bf16.mxu0 0
        %1997 = vmatpush1.bf16.msra.mxu0 0
        %1998 = vmatprep.subr.bf16.mxu0 0
        %1999 = vmatpush1.bf16.msra.mxu0 0
        %2000 = vmatprep.subr.bf16.mxu0 0
        %2001 = vmatpush1.bf16.msra.mxu0 0
        %2002 = vmatprep.subr.bf16.mxu0 0
        %2003 = vmatpush1.bf16.msra.mxu0 0
        %2004 = vmatprep.subr.bf16.mxu0 0
        %2005 = vmatpush1.bf16.msra.mxu0 0
        %2006 = vmatprep.subr.bf16.mxu0 0
        %2007 = vmatpush1.bf16.msra.mxu0 0
        %2008 = vmatprep.subr.bf16.mxu0 0
        %2009 = vmatpush1.bf16.msra.mxu0 0
        %2010 = vmatprep.subr.bf16.mxu0 0
        %2011 = vmatpush1.bf16.msra.mxu0 %v783
        %2012 = vmatprep.subr.bf16.mxu0 0
        %2013 = vmatpush2.bf16.msra.mxu0 0
        %2014 = vmatprep.subr.bf16.mxu0 0
        %2015 = vmatpush2.bf16.msra.mxu0 0
        %2016 = vmatprep.subr.bf16.mxu0 0
        %2017 = vmatpush2.bf16.msra.mxu0 0
        %2018 = vmatprep.subr.bf16.mxu0 0
        %2019 = vmatpush2.bf16.msra.mxu0 0
        %2020 = vmatprep.subr.bf16.mxu0 0
        %2021 = vmatpush2.bf16.msra.mxu0 0
        %2022 = vmatprep.subr.bf16.mxu0 0
        %2023 = vmatpush2.bf16.msra.mxu0 0
        %2024 = vmatprep.subr.bf16.mxu0 0
        %2025 = vmatpush2.bf16.msra.mxu0 0
        %2026 = vmatprep.subr.bf16.mxu0 0
        %2027 = vmatpush2.bf16.msra.mxu0 0
        %2028 = vmatprep.mubr.bf16.mxu0 0
        %2029 = vmatmul.mubr.bf16.gmra.mxu0 %v1830
        %v2030 = vpop.f32.mrf.mxu0
        %v2031 = vadd.f32 0.0, %v2030
        %v2032 = vpop.f32.mrf.mxu0
        %v2033 = vpop.f32.mrf.mxu0
        %v2034 = vadd.f32 0.0, %v2033
        %v2035 = vpop.f32.mrf.mxu0
        %2036 = vdwg.mxu0
        %v2037 = vadd.f32 %v1735, %v1908
        %v2038 = vadd.f32 %v1738, %v1911
        %v2039 = vadd.f32 %v1779, %v1949
        %v2040 = vadd.f32 %v1782, %v1952
        %v2041 = vadd.f32 %v1823, %v1990
        %v2042 = vadd.f32 %v1826, %v1993
        %v2043 = vadd.f32 %v1867, %v2031
        %v2044 = vadd.f32 %v1870, %v2034
        %v2045 = vpack.c.bf16 %v2038, %v2037
        %v2046 = vpack.c.bf16 %v2040, %v2039
        %v2047 = vpack.c.bf16 %v2042, %v2041
        %v2048 = vpack.c.bf16 %v2044, %v2043
        %v2049 = vunpack.c.l.bf16 %v2045
        %v2050 = vunpack.c.h.bf16 %v2045
        %v2051 = vunpack.c.l.bf16 %v2046
        %v2052 = vunpack.c.h.bf16 %v2046
        %v2053 = vunpack.c.l.bf16 %v2047
        %v2054 = vunpack.c.h.bf16 %v2047
        %v2055 = vunpack.c.l.bf16 %v2048
        %v2056 = vunpack.c.h.bf16 %v2048
        %v2057 = vsub.f32 %v2037, %v2049
        %v2058 = vsub.f32 %v2038, %v2050
        %v2059 = vsub.f32 %v2039, %v2051
        %v2060 = vsub.f32 %v2040, %v2052
        %v2061 = vsub.f32 %v2041, %v2053
        %v2062 = vsub.f32 %v2042, %v2054
        %v2063 = vsub.f32 %v2043, %v2055
        %v2064 = vsub.f32 %v2044, %v2056
        %v2065 = vpack.c.bf16 %v2058, %v2057
        %v2066 = vpack.c.bf16 %v2060, %v2059
        %v2067 = vpack.c.bf16 %v2062, %v2061
        %v2068 = vpack.c.bf16 %v2064, %v2063
        %2069 = vmatprep.subr.bf16.mxu0 0
        %2070 = vmatpush1.bf16.msra.mxu0 0
        %2071 = vmatprep.subr.bf16.mxu0 0
        %2072 = vmatpush1.bf16.msra.mxu0 0
        %2073 = vmatprep.subr.bf16.mxu0 0
        %2074 = vmatpush1.bf16.msra.mxu0 0
        %2075 = vmatprep.subr.bf16.mxu0 0
        %2076 = vmatpush1.bf16.msra.mxu0 0
        %2077 = vmatprep.subr.bf16.mxu0 0
        %2078 = vmatpush1.bf16.msra.mxu0 0
        %2079 = vmatprep.subr.bf16.mxu0 0
        %2080 = vmatpush1.bf16.msra.mxu0 0
        %2081 = vmatprep.subr.bf16.mxu0 0
        %2082 = vmatpush1.bf16.msra.mxu0 0
        %2083 = vmatprep.subr.bf16.mxu0 0
        %2084 = vmatpush1.bf16.msra.mxu0 %v2065
        %2085 = vmatprep.subr.bf16.mxu0 0
        %2086 = vmatpush2.bf16.msra.mxu0 0
        %2087 = vmatprep.subr.bf16.mxu0 0
        %2088 = vmatpush2.bf16.msra.mxu0 0
        %2089 = vmatprep.subr.bf16.mxu0 0
        %2090 = vmatpush2.bf16.msra.mxu0 0
        %2091 = vmatprep.subr.bf16.mxu0 0
        %2092 = vmatpush2.bf16.msra.mxu0 0
        %2093 = vmatprep.subr.bf16.mxu0 0
        %2094 = vmatpush2.bf16.msra.mxu0 0
        %2095 = vmatprep.subr.bf16.mxu0 0
        %2096 = vmatpush2.bf16.msra.mxu0 0
        %2097 = vmatprep.subr.bf16.mxu0 0
        %2098 = vmatpush2.bf16.msra.mxu0 0
        %2099 = vmatprep.subr.bf16.mxu0 0
        %2100 = vmatpush2.bf16.msra.mxu0 0
        %2101 = vmatprep.mubr.bf16.mxu0 0
        %2102 = vmatmul.mubr.bf16.gmra.mxu0 %v987
        %v2103 = vpop.f32.mrf.mxu0
        %v2104 = vadd.f32 0.0, %v2103
        %v2105 = vpop.f32.mrf.mxu0
        %v2106 = vpop.f32.mrf.mxu0
        %v2107 = vadd.f32 0.0, %v2106
        %v2108 = vpop.f32.mrf.mxu0
        %2109 = vdwg.mxu0
        %2110 = vmatprep.subr.bf16.mxu0 0
        %2111 = vmatpush1.bf16.msra.mxu0 0
        %2112 = vmatprep.subr.bf16.mxu0 0
        %2113 = vmatpush1.bf16.msra.mxu0 0
        %2114 = vmatprep.subr.bf16.mxu0 0
        %2115 = vmatpush1.bf16.msra.mxu0 0
        %2116 = vmatprep.subr.bf16.mxu0 0
        %2117 = vmatpush1.bf16.msra.mxu0 0
        %2118 = vmatprep.subr.bf16.mxu0 0
        %2119 = vmatpush1.bf16.msra.mxu0 0
        %2120 = vmatprep.subr.bf16.mxu0 0
        %2121 = vmatpush1.bf16.msra.mxu0 0
        %2122 = vmatprep.subr.bf16.mxu0 0
        %2123 = vmatpush1.bf16.msra.mxu0 0
        %2124 = vmatprep.subr.bf16.mxu0 0
        %2125 = vmatpush1.bf16.msra.mxu0 %v2066
        %2126 = vmatprep.subr.bf16.mxu0 0
        %2127 = vmatpush2.bf16.msra.mxu0 0
        %2128 = vmatprep.subr.bf16.mxu0 0
        %2129 = vmatpush2.bf16.msra.mxu0 0
        %2130 = vmatprep.subr.bf16.mxu0 0
        %2131 = vmatpush2.bf16.msra.mxu0 0
        %2132 = vmatprep.subr.bf16.mxu0 0
        %2133 = vmatpush2.bf16.msra.mxu0 0
        %2134 = vmatprep.subr.bf16.mxu0 0
        %2135 = vmatpush2.bf16.msra.mxu0 0
        %2136 = vmatprep.subr.bf16.mxu0 0
        %2137 = vmatpush2.bf16.msra.mxu0 0
        %2138 = vmatprep.subr.bf16.mxu0 0
        %2139 = vmatpush2.bf16.msra.mxu0 0
        %2140 = vmatprep.subr.bf16.mxu0 0
        %2141 = vmatpush2.bf16.msra.mxu0 0
        %2142 = vmatprep.mubr.bf16.mxu0 0
        %2143 = vmatmul.mubr.bf16.gmra.mxu0 %v987
        %v2144 = vpop.f32.mrf.mxu0
        %v2145 = vadd.f32 0.0, %v2144
        %v2146 = vpop.f32.mrf.mxu0
        %v2147 = vpop.f32.mrf.mxu0
        %v2148 = vadd.f32 0.0, %v2147
        %v2149 = vpop.f32.mrf.mxu0
        %2150 = vdwg.mxu0
        %2151 = vmatprep.subr.bf16.mxu0 0
        %2152 = vmatpush1.bf16.msra.mxu0 0
        %2153 = vmatprep.subr.bf16.mxu0 0
        %2154 = vmatpush1.bf16.msra.mxu0 0
        %2155 = vmatprep.subr.bf16.mxu0 0
        %2156 = vmatpush1.bf16.msra.mxu0 0
        %2157 = vmatprep.subr.bf16.mxu0 0
        %2158 = vmatpush1.bf16.msra.mxu0 0
        %2159 = vmatprep.subr.bf16.mxu0 0
        %2160 = vmatpush1.bf16.msra.mxu0 0
        %2161 = vmatprep.subr.bf16.mxu0 0
        %2162 = vmatpush1.bf16.msra.mxu0 0
        %2163 = vmatprep.subr.bf16.mxu0 0
        %2164 = vmatpush1.bf16.msra.mxu0 0
        %2165 = vmatprep.subr.bf16.mxu0 0
        %2166 = vmatpush1.bf16.msra.mxu0 %v2067
        %2167 = vmatprep.subr.bf16.mxu0 0
        %2168 = vmatpush2.bf16.msra.mxu0 0
        %2169 = vmatprep.subr.bf16.mxu0 0
        %2170 = vmatpush2.bf16.msra.mxu0 0
        %2171 = vmatprep.subr.bf16.mxu0 0
        %2172 = vmatpush2.bf16.msra.mxu0 0
        %2173 = vmatprep.subr.bf16.mxu0 0
        %2174 = vmatpush2.bf16.msra.mxu0 0
        %2175 = vmatprep.subr.bf16.mxu0 0
        %2176 = vmatpush2.bf16.msra.mxu0 0
        %2177 = vmatprep.subr.bf16.mxu0 0
        %2178 = vmatpush2.bf16.msra.mxu0 0
        %2179 = vmatprep.subr.bf16.mxu0 0
        %2180 = vmatpush2.bf16.msra.mxu0 0
        %2181 = vmatprep.subr.bf16.mxu0 0
        %2182 = vmatpush2.bf16.msra.mxu0 0
        %2183 = vmatprep.mubr.bf16.mxu0 0
        %2184 = vmatmul.mubr.bf16.gmra.mxu0 %v987
        %v2185 = vpop.f32.mrf.mxu0
        %v2186 = vadd.f32 0.0, %v2185
        %v2187 = vpop.f32.mrf.mxu0
        %v2188 = vpop.f32.mrf.mxu0
        %v2189 = vadd.f32 0.0, %v2188
        %v2190 = vpop.f32.mrf.mxu0
        %2191 = vdwg.mxu0
        %2192 = vmatprep.subr.bf16.mxu0 0
        %2193 = vmatpush1.bf16.msra.mxu0 0
        %2194 = vmatprep.subr.bf16.mxu0 0
        %2195 = vmatpush1.bf16.msra.mxu0 0
        %2196 = vmatprep.subr.bf16.mxu0 0
        %2197 = vmatpush1.bf16.msra.mxu0 0
        %2198 = vmatprep.subr.bf16.mxu0 0
        %2199 = vmatpush1.bf16.msra.mxu0 0
        %2200 = vmatprep.subr.bf16.mxu0 0
        %2201 = vmatpush1.bf16.msra.mxu0 0
        %2202 = vmatprep.subr.bf16.mxu0 0
        %2203 = vmatpush1.bf16.msra.mxu0 0
        %2204 = vmatprep.subr.bf16.mxu0 0
        %2205 = vmatpush1.bf16.msra.mxu0 0
        %2206 = vmatprep.subr.bf16.mxu0 0
        %2207 = vmatpush1.bf16.msra.mxu0 %v2068
        %2208 = vmatprep.subr.bf16.mxu0 0
        %2209 = vmatpush2.bf16.msra.mxu0 0
        %2210 = vmatprep.subr.bf16.mxu0 0
        %2211 = vmatpush2.bf16.msra.mxu0 0
        %2212 = vmatprep.subr.bf16.mxu0 0
        %2213 = vmatpush2.bf16.msra.mxu0 0
        %2214 = vmatprep.subr.bf16.mxu0 0
        %2215 = vmatpush2.bf16.msra.mxu0 0
        %2216 = vmatprep.subr.bf16.mxu0 0
        %2217 = vmatpush2.bf16.msra.mxu0 0
        %2218 = vmatprep.subr.bf16.mxu0 0
        %2219 = vmatpush2.bf16.msra.mxu0 0
        %2220 = vmatprep.subr.bf16.mxu0 0
        %2221 = vmatpush2.bf16.msra.mxu0 0
        %2222 = vmatprep.subr.bf16.mxu0 0
        %2223 = vmatpush2.bf16.msra.mxu0 0
        %2224 = vmatprep.mubr.bf16.mxu0 0
        %2225 = vmatmul.mubr.bf16.gmra.mxu0 %v987
        %v2226 = vpop.f32.mrf.mxu0
        %v2227 = vadd.f32 0.0, %v2226
        %v2228 = vpop.f32.mrf.mxu0
        %v2229 = vpop.f32.mrf.mxu0
        %v2230 = vadd.f32 0.0, %v2229
        %v2231 = vpop.f32.mrf.mxu0
        %2232 = vdwg.mxu0
        %2233 = vmatprep.subr.bf16.mxu0 0
        %2234 = vmatpush1.bf16.msra.mxu0 0
        %2235 = vmatprep.subr.bf16.mxu0 0
        %2236 = vmatpush1.bf16.msra.mxu0 0
        %2237 = vmatprep.subr.bf16.mxu0 0
        %2238 = vmatpush1.bf16.msra.mxu0 0
        %2239 = vmatprep.subr.bf16.mxu0 0
        %2240 = vmatpush1.bf16.msra.mxu0 0
        %2241 = vmatprep.subr.bf16.mxu0 0
        %2242 = vmatpush1.bf16.msra.mxu0 0
        %2243 = vmatprep.subr.bf16.mxu0 0
        %2244 = vmatpush1.bf16.msra.mxu0 0
        %2245 = vmatprep.subr.bf16.mxu0 0
        %2246 = vmatpush1.bf16.msra.mxu0 0
        %2247 = vmatprep.subr.bf16.mxu0 0
        %2248 = vmatpush1.bf16.msra.mxu0 %v2045
        %2249 = vmatprep.subr.bf16.mxu0 0
        %2250 = vmatpush2.bf16.msra.mxu0 0
        %2251 = vmatprep.subr.bf16.mxu0 0
        %2252 = vmatpush2.bf16.msra.mxu0 0
        %2253 = vmatprep.subr.bf16.mxu0 0
        %2254 = vmatpush2.bf16.msra.mxu0 0
        %2255 = vmatprep.subr.bf16.mxu0 0
        %2256 = vmatpush2.bf16.msra.mxu0 0
        %2257 = vmatprep.subr.bf16.mxu0 0
        %2258 = vmatpush2.bf16.msra.mxu0 0
        %2259 = vmatprep.subr.bf16.mxu0 0
        %2260 = vmatpush2.bf16.msra.mxu0 0
        %2261 = vmatprep.subr.bf16.mxu0 0
        %2262 = vmatpush2.bf16.msra.mxu0 0
        %2263 = vmatprep.subr.bf16.mxu0 0
        %2264 = vmatpush2.bf16.msra.mxu0 0
        %2265 = vmatprep.mubr.bf16.mxu0 0
        %2266 = vmatmul.mubr.bf16.gmra.mxu0 %v987
        %v2267 = vpop.f32.mrf.mxu0
        %v2268 = vadd.f32 %v2104, %v2267
        %v2269 = vpop.f32.mrf.mxu0
        %v2270 = vpop.f32.mrf.mxu0
        %v2271 = vadd.f32 %v2107, %v2270
        %v2272 = vpop.f32.mrf.mxu0
        %2273 = vdwg.mxu0
        %2274 = vmatprep.subr.bf16.mxu0 0
        %2275 = vmatpush1.bf16.msra.mxu0 0
        %2276 = vmatprep.subr.bf16.mxu0 0
        %2277 = vmatpush1.bf16.msra.mxu0 0
        %2278 = vmatprep.subr.bf16.mxu0 0
        %2279 = vmatpush1.bf16.msra.mxu0 0
        %2280 = vmatprep.subr.bf16.mxu0 0
        %2281 = vmatpush1.bf16.msra.mxu0 0
        %2282 = vmatprep.subr.bf16.mxu0 0
        %2283 = vmatpush1.bf16.msra.mxu0 0
        %2284 = vmatprep.subr.bf16.mxu0 0
        %2285 = vmatpush1.bf16.msra.mxu0 0
        %2286 = vmatprep.subr.bf16.mxu0 0
        %2287 = vmatpush1.bf16.msra.mxu0 0
        %2288 = vmatprep.subr.bf16.mxu0 0
        %2289 = vmatpush1.bf16.msra.mxu0 %v2046
        %2290 = vmatprep.subr.bf16.mxu0 0
        %2291 = vmatpush2.bf16.msra.mxu0 0
        %2292 = vmatprep.subr.bf16.mxu0 0
        %2293 = vmatpush2.bf16.msra.mxu0 0
        %2294 = vmatprep.subr.bf16.mxu0 0
        %2295 = vmatpush2.bf16.msra.mxu0 0
        %2296 = vmatprep.subr.bf16.mxu0 0
        %2297 = vmatpush2.bf16.msra.mxu0 0
        %2298 = vmatprep.subr.bf16.mxu0 0
        %2299 = vmatpush2.bf16.msra.mxu0 0
        %2300 = vmatprep.subr.bf16.mxu0 0
        %2301 = vmatpush2.bf16.msra.mxu0 0
        %2302 = vmatprep.subr.bf16.mxu0 0
        %2303 = vmatpush2.bf16.msra.mxu0 0
        %2304 = vmatprep.subr.bf16.mxu0 0
        %2305 = vmatpush2.bf16.msra.mxu0 0
        %2306 = vmatprep.mubr.bf16.mxu0 0
        %2307 = vmatmul.mubr.bf16.gmra.mxu0 %v987
        %v2308 = vpop.f32.mrf.mxu0
        %v2309 = vadd.f32 %v2145, %v2308
        %v2310 = vpop.f32.mrf.mxu0
        %v2311 = vpop.f32.mrf.mxu0
        %v2312 = vadd.f32 %v2148, %v2311
        %v2313 = vpop.f32.mrf.mxu0
        %2314 = vdwg.mxu0
        %2315 = vmatprep.subr.bf16.mxu0 0
        %2316 = vmatpush1.bf16.msra.mxu0 0
        %2317 = vmatprep.subr.bf16.mxu0 0
        %2318 = vmatpush1.bf16.msra.mxu0 0
        %2319 = vmatprep.subr.bf16.mxu0 0
        %2320 = vmatpush1.bf16.msra.mxu0 0
        %2321 = vmatprep.subr.bf16.mxu0 0
        %2322 = vmatpush1.bf16.msra.mxu0 0
        %2323 = vmatprep.subr.bf16.mxu0 0
        %2324 = vmatpush1.bf16.msra.mxu0 0
        %2325 = vmatprep.subr.bf16.mxu0 0
        %2326 = vmatpush1.bf16.msra.mxu0 0
        %2327 = vmatprep.subr.bf16.mxu0 0
        %2328 = vmatpush1.bf16.msra.mxu0 0
        %2329 = vmatprep.subr.bf16.mxu0 0
        %2330 = vmatpush1.bf16.msra.mxu0 %v2047
        %2331 = vmatprep.subr.bf16.mxu0 0
        %2332 = vmatpush2.bf16.msra.mxu0 0
        %2333 = vmatprep.subr.bf16.mxu0 0
        %2334 = vmatpush2.bf16.msra.mxu0 0
        %2335 = vmatprep.subr.bf16.mxu0 0
        %2336 = vmatpush2.bf16.msra.mxu0 0
        %2337 = vmatprep.subr.bf16.mxu0 0
        %2338 = vmatpush2.bf16.msra.mxu0 0
        %2339 = vmatprep.subr.bf16.mxu0 0
        %2340 = vmatpush2.bf16.msra.mxu0 0
        %2341 = vmatprep.subr.bf16.mxu0 0
        %2342 = vmatpush2.bf16.msra.mxu0 0
        %2343 = vmatprep.subr.bf16.mxu0 0
        %2344 = vmatpush2.bf16.msra.mxu0 0
        %2345 = vmatprep.subr.bf16.mxu0 0
        %2346 = vmatpush2.bf16.msra.mxu0 0
        %2347 = vmatprep.mubr.bf16.mxu0 0
        %2348 = vmatmul.mubr.bf16.gmra.mxu0 %v987
        %v2349 = vpop.f32.mrf.mxu0
        %v2350 = vadd.f32 %v2186, %v2349
        %v2351 = vpop.f32.mrf.mxu0
        %v2352 = vpop.f32.mrf.mxu0
        %v2353 = vadd.f32 %v2189, %v2352
        %v2354 = vpop.f32.mrf.mxu0
        %2355 = vdwg.mxu0
        %2356 = vmatprep.subr.bf16.mxu0 0
        %2357 = vmatpush1.bf16.msra.mxu0 0
        %2358 = vmatprep.subr.bf16.mxu0 0
        %2359 = vmatpush1.bf16.msra.mxu0 0
        %2360 = vmatprep.subr.bf16.mxu0 0
        %2361 = vmatpush1.bf16.msra.mxu0 0
        %2362 = vmatprep.subr.bf16.mxu0 0
        %2363 = vmatpush1.bf16.msra.mxu0 0
        %2364 = vmatprep.subr.bf16.mxu0 0
        %2365 = vmatpush1.bf16.msra.mxu0 0
        %2366 = vmatprep.subr.bf16.mxu0 0
        %2367 = vmatpush1.bf16.msra.mxu0 0
        %2368 = vmatprep.subr.bf16.mxu0 0
        %2369 = vmatpush1.bf16.msra.mxu0 0
        %2370 = vmatprep.subr.bf16.mxu0 0
        %2371 = vmatpush1.bf16.msra.mxu0 %v2048
        %2372 = vmatprep.subr.bf16.mxu0 0
        %2373 = vmatpush2.bf16.msra.mxu0 0
        %2374 = vmatprep.subr.bf16.mxu0 0
        %2375 = vmatpush2.bf16.msra.mxu0 0
        %2376 = vmatprep.subr.bf16.mxu0 0
        %2377 = vmatpush2.bf16.msra.mxu0 0
        %2378 = vmatprep.subr.bf16.mxu0 0
        %2379 = vmatpush2.bf16.msra.mxu0 0
        %2380 = vmatprep.subr.bf16.mxu0 0
        %2381 = vmatpush2.bf16.msra.mxu0 0
        %2382 = vmatprep.subr.bf16.mxu0 0
        %2383 = vmatpush2.bf16.msra.mxu0 0
        %2384 = vmatprep.subr.bf16.mxu0 0
        %2385 = vmatpush2.bf16.msra.mxu0 0
        %2386 = vmatprep.subr.bf16.mxu0 0
        %2387 = vmatpush2.bf16.msra.mxu0 0
        %2388 = vmatprep.mubr.bf16.mxu0 0
        %2389 = vmatmul.mubr.bf16.gmra.mxu0 %v987
        %v2390 = vpop.f32.mrf.mxu0
        %v2391 = vadd.f32 %v2227, %v2390
        %v2392 = vpop.f32.mrf.mxu0
        %v2393 = vpop.f32.mrf.mxu0
        %v2394 = vadd.f32 %v2230, %v2393
        %v2395 = vpop.f32.mrf.mxu0
        %2396 = vdwg.mxu0
        %2397 = vmatprep.subr.bf16.mxu0 0
        %2398 = vmatpush1.bf16.msra.mxu0 0
        %2399 = vmatprep.subr.bf16.mxu0 0
        %2400 = vmatpush1.bf16.msra.mxu0 0
        %2401 = vmatprep.subr.bf16.mxu0 0
        %2402 = vmatpush1.bf16.msra.mxu0 0
        %2403 = vmatprep.subr.bf16.mxu0 0
        %2404 = vmatpush1.bf16.msra.mxu0 0
        %2405 = vmatprep.subr.bf16.mxu0 0
        %2406 = vmatpush1.bf16.msra.mxu0 0
        %2407 = vmatprep.subr.bf16.mxu0 0
        %2408 = vmatpush1.bf16.msra.mxu0 0
        %2409 = vmatprep.subr.bf16.mxu0 0
        %2410 = vmatpush1.bf16.msra.mxu0 0
        %2411 = vmatprep.subr.bf16.mxu0 0
        %2412 = vmatpush1.bf16.msra.mxu0 %v2045
        %2413 = vmatprep.subr.bf16.mxu0 0
        %2414 = vmatpush2.bf16.msra.mxu0 0
        %2415 = vmatprep.subr.bf16.mxu0 0
        %2416 = vmatpush2.bf16.msra.mxu0 0
        %2417 = vmatprep.subr.bf16.mxu0 0
        %2418 = vmatpush2.bf16.msra.mxu0 0
        %2419 = vmatprep.subr.bf16.mxu0 0
        %2420 = vmatpush2.bf16.msra.mxu0 0
        %2421 = vmatprep.subr.bf16.mxu0 0
        %2422 = vmatpush2.bf16.msra.mxu0 0
        %2423 = vmatprep.subr.bf16.mxu0 0
        %2424 = vmatpush2.bf16.msra.mxu0 0
        %2425 = vmatprep.subr.bf16.mxu0 0
        %2426 = vmatpush2.bf16.msra.mxu0 0
        %2427 = vmatprep.subr.bf16.mxu0 0
        %2428 = vmatpush2.bf16.msra.mxu0 0
        %2429 = vmatprep.mubr.bf16.mxu0 0
        %2430 = vmatmul.mubr.bf16.gmra.mxu0 %v1323
        %v2431 = vpop.f32.mrf.mxu0
        %v2432 = vadd.f32 0.0, %v2431
        %v2433 = vpop.f32.mrf.mxu0
        %v2434 = vpop.f32.mrf.mxu0
        %v2435 = vadd.f32 0.0, %v2434
        %v2436 = vpop.f32.mrf.mxu0
        %2437 = vdwg.mxu0
        %2438 = vmatprep.subr.bf16.mxu0 0
        %2439 = vmatpush1.bf16.msra.mxu0 0
        %2440 = vmatprep.subr.bf16.mxu0 0
        %2441 = vmatpush1.bf16.msra.mxu0 0
        %2442 = vmatprep.subr.bf16.mxu0 0
        %2443 = vmatpush1.bf16.msra.mxu0 0
        %2444 = vmatprep.subr.bf16.mxu0 0
        %2445 = vmatpush1.bf16.msra.mxu0 0
        %2446 = vmatprep.subr.bf16.mxu0 0
        %2447 = vmatpush1.bf16.msra.mxu0 0
        %2448 = vmatprep.subr.bf16.mxu0 0
        %2449 = vmatpush1.bf16.msra.mxu0 0
        %2450 = vmatprep.subr.bf16.mxu0 0
        %2451 = vmatpush1.bf16.msra.mxu0 0
        %2452 = vmatprep.subr.bf16.mxu0 0
        %2453 = vmatpush1.bf16.msra.mxu0 %v2046
        %2454 = vmatprep.subr.bf16.mxu0 0
        %2455 = vmatpush2.bf16.msra.mxu0 0
        %2456 = vmatprep.subr.bf16.mxu0 0
        %2457 = vmatpush2.bf16.msra.mxu0 0
        %2458 = vmatprep.subr.bf16.mxu0 0
        %2459 = vmatpush2.bf16.msra.mxu0 0
        %2460 = vmatprep.subr.bf16.mxu0 0
        %2461 = vmatpush2.bf16.msra.mxu0 0
        %2462 = vmatprep.subr.bf16.mxu0 0
        %2463 = vmatpush2.bf16.msra.mxu0 0
        %2464 = vmatprep.subr.bf16.mxu0 0
        %2465 = vmatpush2.bf16.msra.mxu0 0
        %2466 = vmatprep.subr.bf16.mxu0 0
        %2467 = vmatpush2.bf16.msra.mxu0 0
        %2468 = vmatprep.subr.bf16.mxu0 0
        %2469 = vmatpush2.bf16.msra.mxu0 0
        %2470 = vmatprep.mubr.bf16.mxu0 0
        %2471 = vmatmul.mubr.bf16.gmra.mxu0 %v1323
        %v2472 = vpop.f32.mrf.mxu0
        %v2473 = vadd.f32 0.0, %v2472
        %v2474 = vpop.f32.mrf.mxu0
        %v2475 = vpop.f32.mrf.mxu0
        %v2476 = vadd.f32 0.0, %v2475
        %v2477 = vpop.f32.mrf.mxu0
        %2478 = vdwg.mxu0
        %2479 = vmatprep.subr.bf16.mxu0 0
        %2480 = vmatpush1.bf16.msra.mxu0 0
        %2481 = vmatprep.subr.bf16.mxu0 0
        %2482 = vmatpush1.bf16.msra.mxu0 0
        %2483 = vmatprep.subr.bf16.mxu0 0
        %2484 = vmatpush1.bf16.msra.mxu0 0
        %2485 = vmatprep.subr.bf16.mxu0 0
        %2486 = vmatpush1.bf16.msra.mxu0 0
        %2487 = vmatprep.subr.bf16.mxu0 0
        %2488 = vmatpush1.bf16.msra.mxu0 0
        %2489 = vmatprep.subr.bf16.mxu0 0
        %2490 = vmatpush1.bf16.msra.mxu0 0
        %2491 = vmatprep.subr.bf16.mxu0 0
        %2492 = vmatpush1.bf16.msra.mxu0 0
        %2493 = vmatprep.subr.bf16.mxu0 0
        %2494 = vmatpush1.bf16.msra.mxu0 %v2047
        %2495 = vmatprep.subr.bf16.mxu0 0
        %2496 = vmatpush2.bf16.msra.mxu0 0
        %2497 = vmatprep.subr.bf16.mxu0 0
        %2498 = vmatpush2.bf16.msra.mxu0 0
        %2499 = vmatprep.subr.bf16.mxu0 0
        %2500 = vmatpush2.bf16.msra.mxu0 0
        %2501 = vmatprep.subr.bf16.mxu0 0
        %2502 = vmatpush2.bf16.msra.mxu0 0
        %2503 = vmatprep.subr.bf16.mxu0 0
        %2504 = vmatpush2.bf16.msra.mxu0 0
        %2505 = vmatprep.subr.bf16.mxu0 0
        %2506 = vmatpush2.bf16.msra.mxu0 0
        %2507 = vmatprep.subr.bf16.mxu0 0
        %2508 = vmatpush2.bf16.msra.mxu0 0
        %2509 = vmatprep.subr.bf16.mxu0 0
        %2510 = vmatpush2.bf16.msra.mxu0 0
        %2511 = vmatprep.mubr.bf16.mxu0 0
        %2512 = vmatmul.mubr.bf16.gmra.mxu0 %v1323
        %v2513 = vpop.f32.mrf.mxu0
        %v2514 = vadd.f32 0.0, %v2513
        %v2515 = vpop.f32.mrf.mxu0
        %v2516 = vpop.f32.mrf.mxu0
        %v2517 = vadd.f32 0.0, %v2516
        %v2518 = vpop.f32.mrf.mxu0
        %2519 = vdwg.mxu0
        %2520 = vmatprep.subr.bf16.mxu0 0
        %2521 = vmatpush1.bf16.msra.mxu0 0
        %2522 = vmatprep.subr.bf16.mxu0 0
        %2523 = vmatpush1.bf16.msra.mxu0 0
        %2524 = vmatprep.subr.bf16.mxu0 0
        %2525 = vmatpush1.bf16.msra.mxu0 0
        %2526 = vmatprep.subr.bf16.mxu0 0
        %2527 = vmatpush1.bf16.msra.mxu0 0
        %2528 = vmatprep.subr.bf16.mxu0 0
        %2529 = vmatpush1.bf16.msra.mxu0 0
        %2530 = vmatprep.subr.bf16.mxu0 0
        %2531 = vmatpush1.bf16.msra.mxu0 0
        %2532 = vmatprep.subr.bf16.mxu0 0
        %2533 = vmatpush1.bf16.msra.mxu0 0
        %2534 = vmatprep.subr.bf16.mxu0 0
        %2535 = vmatpush1.bf16.msra.mxu0 %v2048
        %2536 = vmatprep.subr.bf16.mxu0 0
        %2537 = vmatpush2.bf16.msra.mxu0 0
        %2538 = vmatprep.subr.bf16.mxu0 0
        %2539 = vmatpush2.bf16.msra.mxu0 0
        %2540 = vmatprep.subr.bf16.mxu0 0
        %2541 = vmatpush2.bf16.msra.mxu0 0
        %2542 = vmatprep.subr.bf16.mxu0 0
        %2543 = vmatpush2.bf16.msra.mxu0 0
        %2544 = vmatprep.subr.bf16.mxu0 0
        %2545 = vmatpush2.bf16.msra.mxu0 0
        %2546 = vmatprep.subr.bf16.mxu0 0
        %2547 = vmatpush2.bf16.msra.mxu0 0
        %2548 = vmatprep.subr.bf16.mxu0 0
        %2549 = vmatpush2.bf16.msra.mxu0 0
        %2550 = vmatprep.subr.bf16.mxu0 0
        %2551 = vmatpush2.bf16.msra.mxu0 0
        %2552 = vmatprep.mubr.bf16.mxu0 0
        %2553 = vmatmul.mubr.bf16.gmra.mxu0 %v1323
        %v2554 = vpop.f32.mrf.mxu0
        %v2555 = vadd.f32 0.0, %v2554
        %v2556 = vpop.f32.mrf.mxu0
        %v2557 = vpop.f32.mrf.mxu0
        %v2558 = vadd.f32 0.0, %v2557
        %v2559 = vpop.f32.mrf.mxu0
        %2560 = vdwg.mxu0
        %v2561 = vadd.f32 %v2268, %v2432
        %v2562 = vadd.f32 %v2271, %v2435
        %v2563 = vadd.f32 %v2309, %v2473
        %v2564 = vadd.f32 %v2312, %v2476
        %v2565 = vadd.f32 %v2350, %v2514
        %v2566 = vadd.f32 %v2353, %v2517
        %v2567 = vadd.f32 %v2391, %v2555
        %v2568 = vadd.f32 %v2394, %v2558
        %v2569 = vmul.f32 %v364, %v364
        %v2570 = vmul.f32 %v365, %v365
        %v2571 = vmul.f32 %v366, %v366
        %v2572 = vmul.f32 %v367, %v367
        %v2573 = vmul.f32 %v368, %v368
        %v2574 = vmul.f32 %v369, %v369
        %v2575 = vmul.f32 %v370, %v370
        %v2576 = vmul.f32 %v371, %v371
        %v2577 = vpack.c.bf16 %v2570, %v2569
        %v2578 = vpack.c.bf16 %v2572, %v2571
        %v2579 = vpack.c.bf16 %v2574, %v2573
        %v2580 = vpack.c.bf16 %v2576, %v2575
        %v2581 = vunpack.c.l.bf16 %v2577
        %v2582 = vunpack.c.h.bf16 %v2577
        %v2583 = vunpack.c.l.bf16 %v2578
        %v2584 = vunpack.c.h.bf16 %v2578
        %v2585 = vunpack.c.l.bf16 %v2579
        %v2586 = vunpack.c.h.bf16 %v2579
        %v2587 = vunpack.c.l.bf16 %v2580
        %v2588 = vunpack.c.h.bf16 %v2580
        %v2589 = vsub.f32 %v2569, %v2581
        %v2590 = vsub.f32 %v2570, %v2582
        %v2591 = vsub.f32 %v2571, %v2583
        %v2592 = vsub.f32 %v2572, %v2584
        %v2593 = vsub.f32 %v2573, %v2585
        %v2594 = vsub.f32 %v2574, %v2586
        %v2595 = vsub.f32 %v2575, %v2587
        %v2596 = vsub.f32 %v2576, %v2588
        %v2597 = vpack.c.bf16 %v2590, %v2589
        %v2598 = vpack.c.bf16 %v2592, %v2591
        %v2599 = vpack.c.bf16 %v2594, %v2593
        %v2600 = vpack.c.bf16 %v2596, %v2595
        %v2602 = vsel %vm426, %v2597, 0
        %2604 = vmatprep.subr.bf16.mxu0 0
        %2605 = vmatpush1.bf16.msra.mxu0 0
        %2606 = vmatprep.subr.bf16.mxu0 0
        %2607 = vmatpush1.bf16.msra.mxu0 0
        %2608 = vmatprep.subr.bf16.mxu0 0
        %2609 = vmatpush1.bf16.msra.mxu0 0
        %2610 = vmatprep.subr.bf16.mxu0 0
        %2611 = vmatpush1.bf16.msra.mxu0 0
        %2612 = vmatprep.subr.bf16.mxu0 0
        %2613 = vmatpush1.bf16.msra.mxu0 0
        %2614 = vmatprep.subr.bf16.mxu0 0
        %2615 = vmatpush1.bf16.msra.mxu0 0
        %2616 = vmatprep.subr.bf16.mxu0 0
        %2617 = vmatpush1.bf16.msra.mxu0 0
        %2618 = vmatprep.subr.bf16.mxu0 0
        %2619 = vmatpush1.bf16.msra.mxu0 %v424
        %2620 = vmatprep.subr.bf16.mxu0 0
        %2621 = vmatpush2.bf16.msra.mxu0 0
        %2622 = vmatprep.subr.bf16.mxu0 0
        %2623 = vmatpush2.bf16.msra.mxu0 0
        %2624 = vmatprep.subr.bf16.mxu0 0
        %2625 = vmatpush2.bf16.msra.mxu0 0
        %2626 = vmatprep.subr.bf16.mxu0 0
        %2627 = vmatpush2.bf16.msra.mxu0 0
        %2628 = vmatprep.subr.bf16.mxu0 0
        %2629 = vmatpush2.bf16.msra.mxu0 0
        %2630 = vmatprep.subr.bf16.mxu0 0
        %2631 = vmatpush2.bf16.msra.mxu0 0
        %2632 = vmatprep.subr.bf16.mxu0 0
        %2633 = vmatpush2.bf16.msra.mxu0 0
        %2634 = vmatprep.subr.bf16.mxu0 0
        %2635 = vmatpush2.bf16.msra.mxu0 0
        %2636 = vmatprep.mubr.bf16.mxu0 0
        %2637 = vmatmul.mubr.bf16.gmra.mxu0 %v2602
        %v2638 = vpop.f32.mrf.mxu0
        %v2639 = vadd.f32 0.0, %v2638
        %v2640 = vpop.f32.mrf.mxu0
        %v2641 = vpop.f32.mrf.mxu0
        %v2642 = vadd.f32 0.0, %v2641
        %v2643 = vpop.f32.mrf.mxu0
        %2644 = vdwg.mxu0
        %v2646 = vsel %vm426, %v2598, 0
        %2648 = vmatprep.subr.bf16.mxu0 0
        %2649 = vmatpush1.bf16.msra.mxu0 0
        %2650 = vmatprep.subr.bf16.mxu0 0
        %2651 = vmatpush1.bf16.msra.mxu0 0
        %2652 = vmatprep.subr.bf16.mxu0 0
        %2653 = vmatpush1.bf16.msra.mxu0 0
        %2654 = vmatprep.subr.bf16.mxu0 0
        %2655 = vmatpush1.bf16.msra.mxu0 0
        %2656 = vmatprep.subr.bf16.mxu0 0
        %2657 = vmatpush1.bf16.msra.mxu0 0
        %2658 = vmatprep.subr.bf16.mxu0 0
        %2659 = vmatpush1.bf16.msra.mxu0 0
        %2660 = vmatprep.subr.bf16.mxu0 0
        %2661 = vmatpush1.bf16.msra.mxu0 0
        %2662 = vmatprep.subr.bf16.mxu0 0
        %2663 = vmatpush1.bf16.msra.mxu0 %v424
        %2664 = vmatprep.subr.bf16.mxu0 0
        %2665 = vmatpush2.bf16.msra.mxu0 0
        %2666 = vmatprep.subr.bf16.mxu0 0
        %2667 = vmatpush2.bf16.msra.mxu0 0
        %2668 = vmatprep.subr.bf16.mxu0 0
        %2669 = vmatpush2.bf16.msra.mxu0 0
        %2670 = vmatprep.subr.bf16.mxu0 0
        %2671 = vmatpush2.bf16.msra.mxu0 0
        %2672 = vmatprep.subr.bf16.mxu0 0
        %2673 = vmatpush2.bf16.msra.mxu0 0
        %2674 = vmatprep.subr.bf16.mxu0 0
        %2675 = vmatpush2.bf16.msra.mxu0 0
        %2676 = vmatprep.subr.bf16.mxu0 0
        %2677 = vmatpush2.bf16.msra.mxu0 0
        %2678 = vmatprep.subr.bf16.mxu0 0
        %2679 = vmatpush2.bf16.msra.mxu0 0
        %2680 = vmatprep.mubr.bf16.mxu0 0
        %2681 = vmatmul.mubr.bf16.gmra.mxu0 %v2646
        %v2682 = vpop.f32.mrf.mxu0
        %v2683 = vadd.f32 0.0, %v2682
        %v2684 = vpop.f32.mrf.mxu0
        %v2685 = vpop.f32.mrf.mxu0
        %v2686 = vadd.f32 0.0, %v2685
        %v2687 = vpop.f32.mrf.mxu0
        %2688 = vdwg.mxu0
        %v2690 = vsel %vm426, %v2599, 0
        %2692 = vmatprep.subr.bf16.mxu0 0
        %2693 = vmatpush1.bf16.msra.mxu0 0
        %2694 = vmatprep.subr.bf16.mxu0 0
        %2695 = vmatpush1.bf16.msra.mxu0 0
        %2696 = vmatprep.subr.bf16.mxu0 0
        %2697 = vmatpush1.bf16.msra.mxu0 0
        %2698 = vmatprep.subr.bf16.mxu0 0
        %2699 = vmatpush1.bf16.msra.mxu0 0
        %2700 = vmatprep.subr.bf16.mxu0 0
        %2701 = vmatpush1.bf16.msra.mxu0 0
        %2702 = vmatprep.subr.bf16.mxu0 0
        %2703 = vmatpush1.bf16.msra.mxu0 0
        %2704 = vmatprep.subr.bf16.mxu0 0
        %2705 = vmatpush1.bf16.msra.mxu0 0
        %2706 = vmatprep.subr.bf16.mxu0 0
        %2707 = vmatpush1.bf16.msra.mxu0 %v424
        %2708 = vmatprep.subr.bf16.mxu0 0
        %2709 = vmatpush2.bf16.msra.mxu0 0
        %2710 = vmatprep.subr.bf16.mxu0 0
        %2711 = vmatpush2.bf16.msra.mxu0 0
        %2712 = vmatprep.subr.bf16.mxu0 0
        %2713 = vmatpush2.bf16.msra.mxu0 0
        %2714 = vmatprep.subr.bf16.mxu0 0
        %2715 = vmatpush2.bf16.msra.mxu0 0
        %2716 = vmatprep.subr.bf16.mxu0 0
        %2717 = vmatpush2.bf16.msra.mxu0 0
        %2718 = vmatprep.subr.bf16.mxu0 0
        %2719 = vmatpush2.bf16.msra.mxu0 0
        %2720 = vmatprep.subr.bf16.mxu0 0
        %2721 = vmatpush2.bf16.msra.mxu0 0
        %2722 = vmatprep.subr.bf16.mxu0 0
        %2723 = vmatpush2.bf16.msra.mxu0 0
        %2724 = vmatprep.mubr.bf16.mxu0 0
        %2725 = vmatmul.mubr.bf16.gmra.mxu0 %v2690
        %v2726 = vpop.f32.mrf.mxu0
        %v2727 = vadd.f32 0.0, %v2726
        %v2728 = vpop.f32.mrf.mxu0
        %v2729 = vpop.f32.mrf.mxu0
        %v2730 = vadd.f32 0.0, %v2729
        %v2731 = vpop.f32.mrf.mxu0
        %2732 = vdwg.mxu0
        %v2734 = vsel %vm426, %v2600, 0
        %2736 = vmatprep.subr.bf16.mxu0 0
        %2737 = vmatpush1.bf16.msra.mxu0 0
        %2738 = vmatprep.subr.bf16.mxu0 0
        %2739 = vmatpush1.bf16.msra.mxu0 0
        %2740 = vmatprep.subr.bf16.mxu0 0
        %2741 = vmatpush1.bf16.msra.mxu0 0
        %2742 = vmatprep.subr.bf16.mxu0 0
        %2743 = vmatpush1.bf16.msra.mxu0 0
        %2744 = vmatprep.subr.bf16.mxu0 0
        %2745 = vmatpush1.bf16.msra.mxu0 0
        %2746 = vmatprep.subr.bf16.mxu0 0
        %2747 = vmatpush1.bf16.msra.mxu0 0
        %2748 = vmatprep.subr.bf16.mxu0 0
        %2749 = vmatpush1.bf16.msra.mxu0 0
        %2750 = vmatprep.subr.bf16.mxu0 0
        %2751 = vmatpush1.bf16.msra.mxu0 %v424
        %2752 = vmatprep.subr.bf16.mxu0 0
        %2753 = vmatpush2.bf16.msra.mxu0 0
        %2754 = vmatprep.subr.bf16.mxu0 0
        %2755 = vmatpush2.bf16.msra.mxu0 0
        %2756 = vmatprep.subr.bf16.mxu0 0
        %2757 = vmatpush2.bf16.msra.mxu0 0
        %2758 = vmatprep.subr.bf16.mxu0 0
        %2759 = vmatpush2.bf16.msra.mxu0 0
        %2760 = vmatprep.subr.bf16.mxu0 0
        %2761 = vmatpush2.bf16.msra.mxu0 0
        %2762 = vmatprep.subr.bf16.mxu0 0
        %2763 = vmatpush2.bf16.msra.mxu0 0
        %2764 = vmatprep.subr.bf16.mxu0 0
        %2765 = vmatpush2.bf16.msra.mxu0 0
        %2766 = vmatprep.subr.bf16.mxu0 0
        %2767 = vmatpush2.bf16.msra.mxu0 0
        %2768 = vmatprep.mubr.bf16.mxu0 0
        %2769 = vmatmul.mubr.bf16.gmra.mxu0 %v2734
        %v2770 = vpop.f32.mrf.mxu0
        %v2771 = vadd.f32 0.0, %v2770
        %v2772 = vpop.f32.mrf.mxu0
        %v2773 = vpop.f32.mrf.mxu0
        %v2774 = vadd.f32 0.0, %v2773
        %v2775 = vpop.f32.mrf.mxu0
        %2776 = vdwg.mxu0
        %v2778 = vsel %vm426, %v2577, 0
        %2780 = vmatprep.subr.bf16.mxu0 0
        %2781 = vmatpush1.bf16.msra.mxu0 0
        %2782 = vmatprep.subr.bf16.mxu0 0
        %2783 = vmatpush1.bf16.msra.mxu0 0
        %2784 = vmatprep.subr.bf16.mxu0 0
        %2785 = vmatpush1.bf16.msra.mxu0 0
        %2786 = vmatprep.subr.bf16.mxu0 0
        %2787 = vmatpush1.bf16.msra.mxu0 0
        %2788 = vmatprep.subr.bf16.mxu0 0
        %2789 = vmatpush1.bf16.msra.mxu0 0
        %2790 = vmatprep.subr.bf16.mxu0 0
        %2791 = vmatpush1.bf16.msra.mxu0 0
        %2792 = vmatprep.subr.bf16.mxu0 0
        %2793 = vmatpush1.bf16.msra.mxu0 0
        %2794 = vmatprep.subr.bf16.mxu0 0
        %2795 = vmatpush1.bf16.msra.mxu0 %v424
        %2796 = vmatprep.subr.bf16.mxu0 0
        %2797 = vmatpush2.bf16.msra.mxu0 0
        %2798 = vmatprep.subr.bf16.mxu0 0
        %2799 = vmatpush2.bf16.msra.mxu0 0
        %2800 = vmatprep.subr.bf16.mxu0 0
        %2801 = vmatpush2.bf16.msra.mxu0 0
        %2802 = vmatprep.subr.bf16.mxu0 0
        %2803 = vmatpush2.bf16.msra.mxu0 0
        %2804 = vmatprep.subr.bf16.mxu0 0
        %2805 = vmatpush2.bf16.msra.mxu0 0
        %2806 = vmatprep.subr.bf16.mxu0 0
        %2807 = vmatpush2.bf16.msra.mxu0 0
        %2808 = vmatprep.subr.bf16.mxu0 0
        %2809 = vmatpush2.bf16.msra.mxu0 0
        %2810 = vmatprep.subr.bf16.mxu0 0
        %2811 = vmatpush2.bf16.msra.mxu0 0
        %2812 = vmatprep.mubr.bf16.mxu0 0
        %2813 = vmatmul.mubr.bf16.gmra.mxu0 %v2778
        %v2814 = vpop.f32.mrf.mxu0
        %v2815 = vadd.f32 %v2639, %v2814
        %v2816 = vpop.f32.mrf.mxu0
        %v2817 = vpop.f32.mrf.mxu0
        %v2818 = vadd.f32 %v2642, %v2817
        %v2819 = vpop.f32.mrf.mxu0
        %2820 = vdwg.mxu0
        %v2822 = vsel %vm426, %v2578, 0
        %2824 = vmatprep.subr.bf16.mxu0 0
        %2825 = vmatpush1.bf16.msra.mxu0 0
        %2826 = vmatprep.subr.bf16.mxu0 0
        %2827 = vmatpush1.bf16.msra.mxu0 0
        %2828 = vmatprep.subr.bf16.mxu0 0
        %2829 = vmatpush1.bf16.msra.mxu0 0
        %2830 = vmatprep.subr.bf16.mxu0 0
        %2831 = vmatpush1.bf16.msra.mxu0 0
        %2832 = vmatprep.subr.bf16.mxu0 0
        %2833 = vmatpush1.bf16.msra.mxu0 0
        %2834 = vmatprep.subr.bf16.mxu0 0
        %2835 = vmatpush1.bf16.msra.mxu0 0
        %2836 = vmatprep.subr.bf16.mxu0 0
        %2837 = vmatpush1.bf16.msra.mxu0 0
        %2838 = vmatprep.subr.bf16.mxu0 0
        %2839 = vmatpush1.bf16.msra.mxu0 %v424
        %2840 = vmatprep.subr.bf16.mxu0 0
        %2841 = vmatpush2.bf16.msra.mxu0 0
        %2842 = vmatprep.subr.bf16.mxu0 0
        %2843 = vmatpush2.bf16.msra.mxu0 0
        %2844 = vmatprep.subr.bf16.mxu0 0
        %2845 = vmatpush2.bf16.msra.mxu0 0
        %2846 = vmatprep.subr.bf16.mxu0 0
        %2847 = vmatpush2.bf16.msra.mxu0 0
        %2848 = vmatprep.subr.bf16.mxu0 0
        %2849 = vmatpush2.bf16.msra.mxu0 0
        %2850 = vmatprep.subr.bf16.mxu0 0
        %2851 = vmatpush2.bf16.msra.mxu0 0
        %2852 = vmatprep.subr.bf16.mxu0 0
        %2853 = vmatpush2.bf16.msra.mxu0 0
        %2854 = vmatprep.subr.bf16.mxu0 0
        %2855 = vmatpush2.bf16.msra.mxu0 0
        %2856 = vmatprep.mubr.bf16.mxu0 0
        %2857 = vmatmul.mubr.bf16.gmra.mxu0 %v2822
        %v2858 = vpop.f32.mrf.mxu0
        %v2859 = vadd.f32 %v2683, %v2858
        %v2860 = vpop.f32.mrf.mxu0
        %v2861 = vpop.f32.mrf.mxu0
        %v2862 = vadd.f32 %v2686, %v2861
        %v2863 = vpop.f32.mrf.mxu0
        %2864 = vdwg.mxu0
        %v2866 = vsel %vm426, %v2579, 0
        %2868 = vmatprep.subr.bf16.mxu0 0
        %2869 = vmatpush1.bf16.msra.mxu0 0
        %2870 = vmatprep.subr.bf16.mxu0 0
        %2871 = vmatpush1.bf16.msra.mxu0 0
        %2872 = vmatprep.subr.bf16.mxu0 0
        %2873 = vmatpush1.bf16.msra.mxu0 0
        %2874 = vmatprep.subr.bf16.mxu0 0
        %2875 = vmatpush1.bf16.msra.mxu0 0
        %2876 = vmatprep.subr.bf16.mxu0 0
        %2877 = vmatpush1.bf16.msra.mxu0 0
        %2878 = vmatprep.subr.bf16.mxu0 0
        %2879 = vmatpush1.bf16.msra.mxu0 0
        %2880 = vmatprep.subr.bf16.mxu0 0
        %2881 = vmatpush1.bf16.msra.mxu0 0
        %2882 = vmatprep.subr.bf16.mxu0 0
        %2883 = vmatpush1.bf16.msra.mxu0 %v424
        %2884 = vmatprep.subr.bf16.mxu0 0
        %2885 = vmatpush2.bf16.msra.mxu0 0
        %2886 = vmatprep.subr.bf16.mxu0 0
        %2887 = vmatpush2.bf16.msra.mxu0 0
        %2888 = vmatprep.subr.bf16.mxu0 0
        %2889 = vmatpush2.bf16.msra.mxu0 0
        %2890 = vmatprep.subr.bf16.mxu0 0
        %2891 = vmatpush2.bf16.msra.mxu0 0
        %2892 = vmatprep.subr.bf16.mxu0 0
        %2893 = vmatpush2.bf16.msra.mxu0 0
        %2894 = vmatprep.subr.bf16.mxu0 0
        %2895 = vmatpush2.bf16.msra.mxu0 0
        %2896 = vmatprep.subr.bf16.mxu0 0
        %2897 = vmatpush2.bf16.msra.mxu0 0
        %2898 = vmatprep.subr.bf16.mxu0 0
        %2899 = vmatpush2.bf16.msra.mxu0 0
        %2900 = vmatprep.mubr.bf16.mxu0 0
        %2901 = vmatmul.mubr.bf16.gmra.mxu0 %v2866
        %v2902 = vpop.f32.mrf.mxu0
        %v2903 = vadd.f32 %v2727, %v2902
        %v2904 = vpop.f32.mrf.mxu0
        %v2905 = vpop.f32.mrf.mxu0
        %v2906 = vadd.f32 %v2730, %v2905
        %v2907 = vpop.f32.mrf.mxu0
        %2908 = vdwg.mxu0
        %v2910 = vsel %vm426, %v2580, 0
        %2912 = vmatprep.subr.bf16.mxu0 0
        %2913 = vmatpush1.bf16.msra.mxu0 0
        %2914 = vmatprep.subr.bf16.mxu0 0
        %2915 = vmatpush1.bf16.msra.mxu0 0
        %2916 = vmatprep.subr.bf16.mxu0 0
        %2917 = vmatpush1.bf16.msra.mxu0 0
        %2918 = vmatprep.subr.bf16.mxu0 0
        %2919 = vmatpush1.bf16.msra.mxu0 0
        %2920 = vmatprep.subr.bf16.mxu0 0
        %2921 = vmatpush1.bf16.msra.mxu0 0
        %2922 = vmatprep.subr.bf16.mxu0 0
        %2923 = vmatpush1.bf16.msra.mxu0 0
        %2924 = vmatprep.subr.bf16.mxu0 0
        %2925 = vmatpush1.bf16.msra.mxu0 0
        %2926 = vmatprep.subr.bf16.mxu0 0
        %2927 = vmatpush1.bf16.msra.mxu0 %v424
        %2928 = vmatprep.subr.bf16.mxu0 0
        %2929 = vmatpush2.bf16.msra.mxu0 0
        %2930 = vmatprep.subr.bf16.mxu0 0
        %2931 = vmatpush2.bf16.msra.mxu0 0
        %2932 = vmatprep.subr.bf16.mxu0 0
        %2933 = vmatpush2.bf16.msra.mxu0 0
        %2934 = vmatprep.subr.bf16.mxu0 0
        %2935 = vmatpush2.bf16.msra.mxu0 0
        %2936 = vmatprep.subr.bf16.mxu0 0
        %2937 = vmatpush2.bf16.msra.mxu0 0
        %2938 = vmatprep.subr.bf16.mxu0 0
        %2939 = vmatpush2.bf16.msra.mxu0 0
        %2940 = vmatprep.subr.bf16.mxu0 0
        %2941 = vmatpush2.bf16.msra.mxu0 0
        %2942 = vmatprep.subr.bf16.mxu0 0
        %2943 = vmatpush2.bf16.msra.mxu0 0
        %2944 = vmatprep.mubr.bf16.mxu0 0
        %2945 = vmatmul.mubr.bf16.gmra.mxu0 %v2910
        %v2946 = vpop.f32.mrf.mxu0
        %v2947 = vadd.f32 %v2771, %v2946
        %v2948 = vpop.f32.mrf.mxu0
        %v2949 = vpop.f32.mrf.mxu0
        %v2950 = vadd.f32 %v2774, %v2949
        %v2951 = vpop.f32.mrf.mxu0
        %2952 = vdwg.mxu0
        %2953 = vmatprep.subr.bf16.mxu0 0
        %2954 = vmatpush1.bf16.msra.mxu0 0
        %2955 = vmatprep.subr.bf16.mxu0 0
        %2956 = vmatpush1.bf16.msra.mxu0 0
        %2957 = vmatprep.subr.bf16.mxu0 0
        %2958 = vmatpush1.bf16.msra.mxu0 0
        %2959 = vmatprep.subr.bf16.mxu0 0
        %2960 = vmatpush1.bf16.msra.mxu0 0
        %2961 = vmatprep.subr.bf16.mxu0 0
        %2962 = vmatpush1.bf16.msra.mxu0 0
        %2963 = vmatprep.subr.bf16.mxu0 0
        %2964 = vmatpush1.bf16.msra.mxu0 0
        %2965 = vmatprep.subr.bf16.mxu0 0
        %2966 = vmatpush1.bf16.msra.mxu0 0
        %2967 = vmatprep.subr.bf16.mxu0 0
        %2968 = vmatpush1.bf16.msra.mxu0 %v783
        %2969 = vmatprep.subr.bf16.mxu0 0
        %2970 = vmatpush2.bf16.msra.mxu0 0
        %2971 = vmatprep.subr.bf16.mxu0 0
        %2972 = vmatpush2.bf16.msra.mxu0 0
        %2973 = vmatprep.subr.bf16.mxu0 0
        %2974 = vmatpush2.bf16.msra.mxu0 0
        %2975 = vmatprep.subr.bf16.mxu0 0
        %2976 = vmatpush2.bf16.msra.mxu0 0
        %2977 = vmatprep.subr.bf16.mxu0 0
        %2978 = vmatpush2.bf16.msra.mxu0 0
        %2979 = vmatprep.subr.bf16.mxu0 0
        %2980 = vmatpush2.bf16.msra.mxu0 0
        %2981 = vmatprep.subr.bf16.mxu0 0
        %2982 = vmatpush2.bf16.msra.mxu0 0
        %2983 = vmatprep.subr.bf16.mxu0 0
        %2984 = vmatpush2.bf16.msra.mxu0 0
        %2985 = vmatprep.mubr.bf16.mxu0 0
        %2986 = vmatmul.mubr.bf16.gmra.mxu0 %v2778
        %v2987 = vpop.f32.mrf.mxu0
        %v2988 = vadd.f32 0.0, %v2987
        %v2989 = vpop.f32.mrf.mxu0
        %v2990 = vpop.f32.mrf.mxu0
        %v2991 = vadd.f32 0.0, %v2990
        %v2992 = vpop.f32.mrf.mxu0
        %2993 = vdwg.mxu0
        %2994 = vmatprep.subr.bf16.mxu0 0
        %2995 = vmatpush1.bf16.msra.mxu0 0
        %2996 = vmatprep.subr.bf16.mxu0 0
        %2997 = vmatpush1.bf16.msra.mxu0 0
        %2998 = vmatprep.subr.bf16.mxu0 0
        %2999 = vmatpush1.bf16.msra.mxu0 0
        %3000 = vmatprep.subr.bf16.mxu0 0
        %3001 = vmatpush1.bf16.msra.mxu0 0
        %3002 = vmatprep.subr.bf16.mxu0 0
        %3003 = vmatpush1.bf16.msra.mxu0 0
        %3004 = vmatprep.subr.bf16.mxu0 0
        %3005 = vmatpush1.bf16.msra.mxu0 0
        %3006 = vmatprep.subr.bf16.mxu0 0
        %3007 = vmatpush1.bf16.msra.mxu0 0
        %3008 = vmatprep.subr.bf16.mxu0 0
        %3009 = vmatpush1.bf16.msra.mxu0 %v783
        %3010 = vmatprep.subr.bf16.mxu0 0
        %3011 = vmatpush2.bf16.msra.mxu0 0
        %3012 = vmatprep.subr.bf16.mxu0 0
        %3013 = vmatpush2.bf16.msra.mxu0 0
        %3014 = vmatprep.subr.bf16.mxu0 0
        %3015 = vmatpush2.bf16.msra.mxu0 0
        %3016 = vmatprep.subr.bf16.mxu0 0
        %3017 = vmatpush2.bf16.msra.mxu0 0
        %3018 = vmatprep.subr.bf16.mxu0 0
        %3019 = vmatpush2.bf16.msra.mxu0 0
        %3020 = vmatprep.subr.bf16.mxu0 0
        %3021 = vmatpush2.bf16.msra.mxu0 0
        %3022 = vmatprep.subr.bf16.mxu0 0
        %3023 = vmatpush2.bf16.msra.mxu0 0
        %3024 = vmatprep.subr.bf16.mxu0 0
        %3025 = vmatpush2.bf16.msra.mxu0 0
        %3026 = vmatprep.mubr.bf16.mxu0 0
        %3027 = vmatmul.mubr.bf16.gmra.mxu0 %v2822
        %v3028 = vpop.f32.mrf.mxu0
        %v3029 = vadd.f32 0.0, %v3028
        %v3030 = vpop.f32.mrf.mxu0
        %v3031 = vpop.f32.mrf.mxu0
        %v3032 = vadd.f32 0.0, %v3031
        %v3033 = vpop.f32.mrf.mxu0
        %3034 = vdwg.mxu0
        %3035 = vmatprep.subr.bf16.mxu0 0
        %3036 = vmatpush1.bf16.msra.mxu0 0
        %3037 = vmatprep.subr.bf16.mxu0 0
        %3038 = vmatpush1.bf16.msra.mxu0 0
        %3039 = vmatprep.subr.bf16.mxu0 0
        %3040 = vmatpush1.bf16.msra.mxu0 0
        %3041 = vmatprep.subr.bf16.mxu0 0
        %3042 = vmatpush1.bf16.msra.mxu0 0
        %3043 = vmatprep.subr.bf16.mxu0 0
        %3044 = vmatpush1.bf16.msra.mxu0 0
        %3045 = vmatprep.subr.bf16.mxu0 0
        %3046 = vmatpush1.bf16.msra.mxu0 0
        %3047 = vmatprep.subr.bf16.mxu0 0
        %3048 = vmatpush1.bf16.msra.mxu0 0
        %3049 = vmatprep.subr.bf16.mxu0 0
        %3050 = vmatpush1.bf16.msra.mxu0 %v783
        %3051 = vmatprep.subr.bf16.mxu0 0
        %3052 = vmatpush2.bf16.msra.mxu0 0
        %3053 = vmatprep.subr.bf16.mxu0 0
        %3054 = vmatpush2.bf16.msra.mxu0 0
        %3055 = vmatprep.subr.bf16.mxu0 0
        %3056 = vmatpush2.bf16.msra.mxu0 0
        %3057 = vmatprep.subr.bf16.mxu0 0
        %3058 = vmatpush2.bf16.msra.mxu0 0
        %3059 = vmatprep.subr.bf16.mxu0 0
        %3060 = vmatpush2.bf16.msra.mxu0 0
        %3061 = vmatprep.subr.bf16.mxu0 0
        %3062 = vmatpush2.bf16.msra.mxu0 0
        %3063 = vmatprep.subr.bf16.mxu0 0
        %3064 = vmatpush2.bf16.msra.mxu0 0
        %3065 = vmatprep.subr.bf16.mxu0 0
        %3066 = vmatpush2.bf16.msra.mxu0 0
        %3067 = vmatprep.mubr.bf16.mxu0 0
        %3068 = vmatmul.mubr.bf16.gmra.mxu0 %v2866
        %v3069 = vpop.f32.mrf.mxu0
        %v3070 = vadd.f32 0.0, %v3069
        %v3071 = vpop.f32.mrf.mxu0
        %v3072 = vpop.f32.mrf.mxu0
        %v3073 = vadd.f32 0.0, %v3072
        %v3074 = vpop.f32.mrf.mxu0
        %3075 = vdwg.mxu0
        %3076 = vmatprep.subr.bf16.mxu0 0
        %3077 = vmatpush1.bf16.msra.mxu0 0
        %3078 = vmatprep.subr.bf16.mxu0 0
        %3079 = vmatpush1.bf16.msra.mxu0 0
        %3080 = vmatprep.subr.bf16.mxu0 0
        %3081 = vmatpush1.bf16.msra.mxu0 0
        %3082 = vmatprep.subr.bf16.mxu0 0
        %3083 = vmatpush1.bf16.msra.mxu0 0
        %3084 = vmatprep.subr.bf16.mxu0 0
        %3085 = vmatpush1.bf16.msra.mxu0 0
        %3086 = vmatprep.subr.bf16.mxu0 0
        %3087 = vmatpush1.bf16.msra.mxu0 0
        %3088 = vmatprep.subr.bf16.mxu0 0
        %3089 = vmatpush1.bf16.msra.mxu0 0
        %3090 = vmatprep.subr.bf16.mxu0 0
        %3091 = vmatpush1.bf16.msra.mxu0 %v783
        %3092 = vmatprep.subr.bf16.mxu0 0
        %3093 = vmatpush2.bf16.msra.mxu0 0
        %3094 = vmatprep.subr.bf16.mxu0 0
        %3095 = vmatpush2.bf16.msra.mxu0 0
        %3096 = vmatprep.subr.bf16.mxu0 0
        %3097 = vmatpush2.bf16.msra.mxu0 0
        %3098 = vmatprep.subr.bf16.mxu0 0
        %3099 = vmatpush2.bf16.msra.mxu0 0
        %3100 = vmatprep.subr.bf16.mxu0 0
        %3101 = vmatpush2.bf16.msra.mxu0 0
        %3102 = vmatprep.subr.bf16.mxu0 0
        %3103 = vmatpush2.bf16.msra.mxu0 0
        %3104 = vmatprep.subr.bf16.mxu0 0
        %3105 = vmatpush2.bf16.msra.mxu0 0
        %3106 = vmatprep.subr.bf16.mxu0 0
        %3107 = vmatpush2.bf16.msra.mxu0 0
        %3108 = vmatprep.mubr.bf16.mxu0 0
        %3109 = vmatmul.mubr.bf16.gmra.mxu0 %v2910
        %v3110 = vpop.f32.mrf.mxu0
        %v3111 = vadd.f32 0.0, %v3110
        %v3112 = vpop.f32.mrf.mxu0
        %v3113 = vpop.f32.mrf.mxu0
        %v3114 = vadd.f32 0.0, %v3113
        %v3115 = vpop.f32.mrf.mxu0
        %3116 = vdwg.mxu0
        %v3117 = vadd.f32 %v2815, %v2988
        %v3118 = vadd.f32 %v2818, %v2991
        %v3119 = vadd.f32 %v2859, %v3029
        %v3120 = vadd.f32 %v2862, %v3032
        %v3121 = vadd.f32 %v2903, %v3070
        %v3122 = vadd.f32 %v2906, %v3073
        %v3123 = vadd.f32 %v2947, %v3111
        %v3124 = vadd.f32 %v2950, %v3114
        %v3125 = vpack.c.bf16 %v3118, %v3117
        %v3126 = vpack.c.bf16 %v3120, %v3119
        %v3127 = vpack.c.bf16 %v3122, %v3121
        %v3128 = vpack.c.bf16 %v3124, %v3123
        %v3129 = vunpack.c.l.bf16 %v3125
        %v3130 = vunpack.c.h.bf16 %v3125
        %v3131 = vunpack.c.l.bf16 %v3126
        %v3132 = vunpack.c.h.bf16 %v3126
        %v3133 = vunpack.c.l.bf16 %v3127
        %v3134 = vunpack.c.h.bf16 %v3127
        %v3135 = vunpack.c.l.bf16 %v3128
        %v3136 = vunpack.c.h.bf16 %v3128
        %v3137 = vsub.f32 %v3117, %v3129
        %v3138 = vsub.f32 %v3118, %v3130
        %v3139 = vsub.f32 %v3119, %v3131
        %v3140 = vsub.f32 %v3120, %v3132
        %v3141 = vsub.f32 %v3121, %v3133
        %v3142 = vsub.f32 %v3122, %v3134
        %v3143 = vsub.f32 %v3123, %v3135
        %v3144 = vsub.f32 %v3124, %v3136
        %v3145 = vpack.c.bf16 %v3138, %v3137
        %v3146 = vpack.c.bf16 %v3140, %v3139
        %v3147 = vpack.c.bf16 %v3142, %v3141
        %v3148 = vpack.c.bf16 %v3144, %v3143
        %3149 = vmatprep.subr.bf16.mxu0 0
        %3150 = vmatpush1.bf16.msra.mxu0 0
        %3151 = vmatprep.subr.bf16.mxu0 0
        %3152 = vmatpush1.bf16.msra.mxu0 0
        %3153 = vmatprep.subr.bf16.mxu0 0
        %3154 = vmatpush1.bf16.msra.mxu0 0
        %3155 = vmatprep.subr.bf16.mxu0 0
        %3156 = vmatpush1.bf16.msra.mxu0 0
        %3157 = vmatprep.subr.bf16.mxu0 0
        %3158 = vmatpush1.bf16.msra.mxu0 0
        %3159 = vmatprep.subr.bf16.mxu0 0
        %3160 = vmatpush1.bf16.msra.mxu0 0
        %3161 = vmatprep.subr.bf16.mxu0 0
        %3162 = vmatpush1.bf16.msra.mxu0 0
        %3163 = vmatprep.subr.bf16.mxu0 0
        %3164 = vmatpush1.bf16.msra.mxu0 %v3145
        %3165 = vmatprep.subr.bf16.mxu0 0
        %3166 = vmatpush2.bf16.msra.mxu0 0
        %3167 = vmatprep.subr.bf16.mxu0 0
        %3168 = vmatpush2.bf16.msra.mxu0 0
        %3169 = vmatprep.subr.bf16.mxu0 0
        %3170 = vmatpush2.bf16.msra.mxu0 0
        %3171 = vmatprep.subr.bf16.mxu0 0
        %3172 = vmatpush2.bf16.msra.mxu0 0
        %3173 = vmatprep.subr.bf16.mxu0 0
        %3174 = vmatpush2.bf16.msra.mxu0 0
        %3175 = vmatprep.subr.bf16.mxu0 0
        %3176 = vmatpush2.bf16.msra.mxu0 0
        %3177 = vmatprep.subr.bf16.mxu0 0
        %3178 = vmatpush2.bf16.msra.mxu0 0
        %3179 = vmatprep.subr.bf16.mxu0 0
        %3180 = vmatpush2.bf16.msra.mxu0 0
        %3181 = vmatprep.mubr.bf16.mxu0 0
        %3182 = vmatmul.mubr.bf16.gmra.mxu0 %v987
        %v3183 = vpop.f32.mrf.mxu0
        %v3184 = vadd.f32 0.0, %v3183
        %v3185 = vpop.f32.mrf.mxu0
        %v3186 = vpop.f32.mrf.mxu0
        %v3187 = vadd.f32 0.0, %v3186
        %v3188 = vpop.f32.mrf.mxu0
        %3189 = vdwg.mxu0
        %3190 = vmatprep.subr.bf16.mxu0 0
        %3191 = vmatpush1.bf16.msra.mxu0 0
        %3192 = vmatprep.subr.bf16.mxu0 0
        %3193 = vmatpush1.bf16.msra.mxu0 0
        %3194 = vmatprep.subr.bf16.mxu0 0
        %3195 = vmatpush1.bf16.msra.mxu0 0
        %3196 = vmatprep.subr.bf16.mxu0 0
        %3197 = vmatpush1.bf16.msra.mxu0 0
        %3198 = vmatprep.subr.bf16.mxu0 0
        %3199 = vmatpush1.bf16.msra.mxu0 0
        %3200 = vmatprep.subr.bf16.mxu0 0
        %3201 = vmatpush1.bf16.msra.mxu0 0
        %3202 = vmatprep.subr.bf16.mxu0 0
        %3203 = vmatpush1.bf16.msra.mxu0 0
        %3204 = vmatprep.subr.bf16.mxu0 0
        %3205 = vmatpush1.bf16.msra.mxu0 %v3146
        %3206 = vmatprep.subr.bf16.mxu0 0
        %3207 = vmatpush2.bf16.msra.mxu0 0
        %3208 = vmatprep.subr.bf16.mxu0 0
        %3209 = vmatpush2.bf16.msra.mxu0 0
        %3210 = vmatprep.subr.bf16.mxu0 0
        %3211 = vmatpush2.bf16.msra.mxu0 0
        %3212 = vmatprep.subr.bf16.mxu0 0
        %3213 = vmatpush2.bf16.msra.mxu0 0
        %3214 = vmatprep.subr.bf16.mxu0 0
        %3215 = vmatpush2.bf16.msra.mxu0 0
        %3216 = vmatprep.subr.bf16.mxu0 0
        %3217 = vmatpush2.bf16.msra.mxu0 0
        %3218 = vmatprep.subr.bf16.mxu0 0
        %3219 = vmatpush2.bf16.msra.mxu0 0
        %3220 = vmatprep.subr.bf16.mxu0 0
        %3221 = vmatpush2.bf16.msra.mxu0 0
        %3222 = vmatprep.mubr.bf16.mxu0 0
        %3223 = vmatmul.mubr.bf16.gmra.mxu0 %v987
        %v3224 = vpop.f32.mrf.mxu0
        %v3225 = vadd.f32 0.0, %v3224
        %v3226 = vpop.f32.mrf.mxu0
        %v3227 = vpop.f32.mrf.mxu0
        %v3228 = vadd.f32 0.0, %v3227
        %v3229 = vpop.f32.mrf.mxu0
        %3230 = vdwg.mxu0
        %3231 = vmatprep.subr.bf16.mxu0 0
        %3232 = vmatpush1.bf16.msra.mxu0 0
        %3233 = vmatprep.subr.bf16.mxu0 0
        %3234 = vmatpush1.bf16.msra.mxu0 0
        %3235 = vmatprep.subr.bf16.mxu0 0
        %3236 = vmatpush1.bf16.msra.mxu0 0
        %3237 = vmatprep.subr.bf16.mxu0 0
        %3238 = vmatpush1.bf16.msra.mxu0 0
        %3239 = vmatprep.subr.bf16.mxu0 0
        %3240 = vmatpush1.bf16.msra.mxu0 0
        %3241 = vmatprep.subr.bf16.mxu0 0
        %3242 = vmatpush1.bf16.msra.mxu0 0
        %3243 = vmatprep.subr.bf16.mxu0 0
        %3244 = vmatpush1.bf16.msra.mxu0 0
        %3245 = vmatprep.subr.bf16.mxu0 0
        %3246 = vmatpush1.bf16.msra.mxu0 %v3147
        %3247 = vmatprep.subr.bf16.mxu0 0
        %3248 = vmatpush2.bf16.msra.mxu0 0
        %3249 = vmatprep.subr.bf16.mxu0 0
        %3250 = vmatpush2.bf16.msra.mxu0 0
        %3251 = vmatprep.subr.bf16.mxu0 0
        %3252 = vmatpush2.bf16.msra.mxu0 0
        %3253 = vmatprep.subr.bf16.mxu0 0
        %3254 = vmatpush2.bf16.msra.mxu0 0
        %3255 = vmatprep.subr.bf16.mxu0 0
        %3256 = vmatpush2.bf16.msra.mxu0 0
        %3257 = vmatprep.subr.bf16.mxu0 0
        %3258 = vmatpush2.bf16.msra.mxu0 0
        %3259 = vmatprep.subr.bf16.mxu0 0
        %3260 = vmatpush2.bf16.msra.mxu0 0
        %3261 = vmatprep.subr.bf16.mxu0 0
        %3262 = vmatpush2.bf16.msra.mxu0 0
        %3263 = vmatprep.mubr.bf16.mxu0 0
        %3264 = vmatmul.mubr.bf16.gmra.mxu0 %v987
        %v3265 = vpop.f32.mrf.mxu0
        %v3266 = vadd.f32 0.0, %v3265
        %v3267 = vpop.f32.mrf.mxu0
        %v3268 = vpop.f32.mrf.mxu0
        %v3269 = vadd.f32 0.0, %v3268
        %v3270 = vpop.f32.mrf.mxu0
        %3271 = vdwg.mxu0
        %3272 = vmatprep.subr.bf16.mxu0 0
        %3273 = vmatpush1.bf16.msra.mxu0 0
        %3274 = vmatprep.subr.bf16.mxu0 0
        %3275 = vmatpush1.bf16.msra.mxu0 0
        %3276 = vmatprep.subr.bf16.mxu0 0
        %3277 = vmatpush1.bf16.msra.mxu0 0
        %3278 = vmatprep.subr.bf16.mxu0 0
        %3279 = vmatpush1.bf16.msra.mxu0 0
        %3280 = vmatprep.subr.bf16.mxu0 0
        %3281 = vmatpush1.bf16.msra.mxu0 0
        %3282 = vmatprep.subr.bf16.mxu0 0
        %3283 = vmatpush1.bf16.msra.mxu0 0
        %3284 = vmatprep.subr.bf16.mxu0 0
        %3285 = vmatpush1.bf16.msra.mxu0 0
        %3286 = vmatprep.subr.bf16.mxu0 0
        %3287 = vmatpush1.bf16.msra.mxu0 %v3148
        %3288 = vmatprep.subr.bf16.mxu0 0
        %3289 = vmatpush2.bf16.msra.mxu0 0
        %3290 = vmatprep.subr.bf16.mxu0 0
        %3291 = vmatpush2.bf16.msra.mxu0 0
        %3292 = vmatprep.subr.bf16.mxu0 0
        %3293 = vmatpush2.bf16.msra.mxu0 0
        %3294 = vmatprep.subr.bf16.mxu0 0
        %3295 = vmatpush2.bf16.msra.mxu0 0
        %3296 = vmatprep.subr.bf16.mxu0 0
        %3297 = vmatpush2.bf16.msra.mxu0 0
        %3298 = vmatprep.subr.bf16.mxu0 0
        %3299 = vmatpush2.bf16.msra.mxu0 0
        %3300 = vmatprep.subr.bf16.mxu0 0
        %3301 = vmatpush2.bf16.msra.mxu0 0
        %3302 = vmatprep.subr.bf16.mxu0 0
        %3303 = vmatpush2.bf16.msra.mxu0 0
        %3304 = vmatprep.mubr.bf16.mxu0 0
        %3305 = vmatmul.mubr.bf16.gmra.mxu0 %v987
        %v3306 = vpop.f32.mrf.mxu0
        %v3307 = vadd.f32 0.0, %v3306
        %v3308 = vpop.f32.mrf.mxu0
        %v3309 = vpop.f32.mrf.mxu0
        %v3310 = vadd.f32 0.0, %v3309
        %v3311 = vpop.f32.mrf.mxu0
        %3312 = vdwg.mxu0
        %3313 = vmatprep.subr.bf16.mxu0 0
        %3314 = vmatpush1.bf16.msra.mxu0 0
        %3315 = vmatprep.subr.bf16.mxu0 0
        %3316 = vmatpush1.bf16.msra.mxu0 0
        %3317 = vmatprep.subr.bf16.mxu0 0
        %3318 = vmatpush1.bf16.msra.mxu0 0
        %3319 = vmatprep.subr.bf16.mxu0 0
        %3320 = vmatpush1.bf16.msra.mxu0 0
        %3321 = vmatprep.subr.bf16.mxu0 0
        %3322 = vmatpush1.bf16.msra.mxu0 0
        %3323 = vmatprep.subr.bf16.mxu0 0
        %3324 = vmatpush1.bf16.msra.mxu0 0
        %3325 = vmatprep.subr.bf16.mxu0 0
        %3326 = vmatpush1.bf16.msra.mxu0 0
        %3327 = vmatprep.subr.bf16.mxu0 0
        %3328 = vmatpush1.bf16.msra.mxu0 %v3125
        %3329 = vmatprep.subr.bf16.mxu0 0
        %3330 = vmatpush2.bf16.msra.mxu0 0
        %3331 = vmatprep.subr.bf16.mxu0 0
        %3332 = vmatpush2.bf16.msra.mxu0 0
        %3333 = vmatprep.subr.bf16.mxu0 0
        %3334 = vmatpush2.bf16.msra.mxu0 0
        %3335 = vmatprep.subr.bf16.mxu0 0
        %3336 = vmatpush2.bf16.msra.mxu0 0
        %3337 = vmatprep.subr.bf16.mxu0 0
        %3338 = vmatpush2.bf16.msra.mxu0 0
        %3339 = vmatprep.subr.bf16.mxu0 0
        %3340 = vmatpush2.bf16.msra.mxu0 0
        %3341 = vmatprep.subr.bf16.mxu0 0
        %3342 = vmatpush2.bf16.msra.mxu0 0
        %3343 = vmatprep.subr.bf16.mxu0 0
        %3344 = vmatpush2.bf16.msra.mxu0 0
        %3345 = vmatprep.mubr.bf16.mxu0 0
        %3346 = vmatmul.mubr.bf16.gmra.mxu0 %v987
        %v3347 = vpop.f32.mrf.mxu0
        %v3348 = vadd.f32 %v3184, %v3347
        %v3349 = vpop.f32.mrf.mxu0
        %v3350 = vpop.f32.mrf.mxu0
        %v3351 = vadd.f32 %v3187, %v3350
        %v3352 = vpop.f32.mrf.mxu0
        %3353 = vdwg.mxu0
        %3354 = vmatprep.subr.bf16.mxu0 0
        %3355 = vmatpush1.bf16.msra.mxu0 0
        %3356 = vmatprep.subr.bf16.mxu0 0
        %3357 = vmatpush1.bf16.msra.mxu0 0
        %3358 = vmatprep.subr.bf16.mxu0 0
        %3359 = vmatpush1.bf16.msra.mxu0 0
        %3360 = vmatprep.subr.bf16.mxu0 0
        %3361 = vmatpush1.bf16.msra.mxu0 0
        %3362 = vmatprep.subr.bf16.mxu0 0
        %3363 = vmatpush1.bf16.msra.mxu0 0
        %3364 = vmatprep.subr.bf16.mxu0 0
        %3365 = vmatpush1.bf16.msra.mxu0 0
        %3366 = vmatprep.subr.bf16.mxu0 0
        %3367 = vmatpush1.bf16.msra.mxu0 0
        %3368 = vmatprep.subr.bf16.mxu0 0
        %3369 = vmatpush1.bf16.msra.mxu0 %v3126
        %3370 = vmatprep.subr.bf16.mxu0 0
        %3371 = vmatpush2.bf16.msra.mxu0 0
        %3372 = vmatprep.subr.bf16.mxu0 0
        %3373 = vmatpush2.bf16.msra.mxu0 0
        %3374 = vmatprep.subr.bf16.mxu0 0
        %3375 = vmatpush2.bf16.msra.mxu0 0
        %3376 = vmatprep.subr.bf16.mxu0 0
        %3377 = vmatpush2.bf16.msra.mxu0 0
        %3378 = vmatprep.subr.bf16.mxu0 0
        %3379 = vmatpush2.bf16.msra.mxu0 0
        %3380 = vmatprep.subr.bf16.mxu0 0
        %3381 = vmatpush2.bf16.msra.mxu0 0
        %3382 = vmatprep.subr.bf16.mxu0 0
        %3383 = vmatpush2.bf16.msra.mxu0 0
        %3384 = vmatprep.subr.bf16.mxu0 0
        %3385 = vmatpush2.bf16.msra.mxu0 0
        %3386 = vmatprep.mubr.bf16.mxu0 0
        %3387 = vmatmul.mubr.bf16.gmra.mxu0 %v987
        %v3388 = vpop.f32.mrf.mxu0
        %v3389 = vadd.f32 %v3225, %v3388
        %v3390 = vpop.f32.mrf.mxu0
        %v3391 = vpop.f32.mrf.mxu0
        %v3392 = vadd.f32 %v3228, %v3391
        %v3393 = vpop.f32.mrf.mxu0
        %3394 = vdwg.mxu0
        %3395 = vmatprep.subr.bf16.mxu0 0
        %3396 = vmatpush1.bf16.msra.mxu0 0
        %3397 = vmatprep.subr.bf16.mxu0 0
        %3398 = vmatpush1.bf16.msra.mxu0 0
        %3399 = vmatprep.subr.bf16.mxu0 0
        %3400 = vmatpush1.bf16.msra.mxu0 0
        %3401 = vmatprep.subr.bf16.mxu0 0
        %3402 = vmatpush1.bf16.msra.mxu0 0
        %3403 = vmatprep.subr.bf16.mxu0 0
        %3404 = vmatpush1.bf16.msra.mxu0 0
        %3405 = vmatprep.subr.bf16.mxu0 0
        %3406 = vmatpush1.bf16.msra.mxu0 0
        %3407 = vmatprep.subr.bf16.mxu0 0
        %3408 = vmatpush1.bf16.msra.mxu0 0
        %3409 = vmatprep.subr.bf16.mxu0 0
        %3410 = vmatpush1.bf16.msra.mxu0 %v3127
        %3411 = vmatprep.subr.bf16.mxu0 0
        %3412 = vmatpush2.bf16.msra.mxu0 0
        %3413 = vmatprep.subr.bf16.mxu0 0
        %3414 = vmatpush2.bf16.msra.mxu0 0
        %3415 = vmatprep.subr.bf16.mxu0 0
        %3416 = vmatpush2.bf16.msra.mxu0 0
        %3417 = vmatprep.subr.bf16.mxu0 0
        %3418 = vmatpush2.bf16.msra.mxu0 0
        %3419 = vmatprep.subr.bf16.mxu0 0
        %3420 = vmatpush2.bf16.msra.mxu0 0
        %3421 = vmatprep.subr.bf16.mxu0 0
        %3422 = vmatpush2.bf16.msra.mxu0 0
        %3423 = vmatprep.subr.bf16.mxu0 0
        %3424 = vmatpush2.bf16.msra.mxu0 0
        %3425 = vmatprep.subr.bf16.mxu0 0
        %3426 = vmatpush2.bf16.msra.mxu0 0
        %3427 = vmatprep.mubr.bf16.mxu0 0
        %3428 = vmatmul.mubr.bf16.gmra.mxu0 %v987
        %v3429 = vpop.f32.mrf.mxu0
        %v3430 = vadd.f32 %v3266, %v3429
        %v3431 = vpop.f32.mrf.mxu0
        %v3432 = vpop.f32.mrf.mxu0
        %v3433 = vadd.f32 %v3269, %v3432
        %v3434 = vpop.f32.mrf.mxu0
        %3435 = vdwg.mxu0
        %3436 = vmatprep.subr.bf16.mxu0 0
        %3437 = vmatpush1.bf16.msra.mxu0 0
        %3438 = vmatprep.subr.bf16.mxu0 0
        %3439 = vmatpush1.bf16.msra.mxu0 0
        %3440 = vmatprep.subr.bf16.mxu0 0
        %3441 = vmatpush1.bf16.msra.mxu0 0
        %3442 = vmatprep.subr.bf16.mxu0 0
        %3443 = vmatpush1.bf16.msra.mxu0 0
        %3444 = vmatprep.subr.bf16.mxu0 0
        %3445 = vmatpush1.bf16.msra.mxu0 0
        %3446 = vmatprep.subr.bf16.mxu0 0
        %3447 = vmatpush1.bf16.msra.mxu0 0
        %3448 = vmatprep.subr.bf16.mxu0 0
        %3449 = vmatpush1.bf16.msra.mxu0 0
        %3450 = vmatprep.subr.bf16.mxu0 0
        %3451 = vmatpush1.bf16.msra.mxu0 %v3128
        %3452 = vmatprep.subr.bf16.mxu0 0
        %3453 = vmatpush2.bf16.msra.mxu0 0
        %3454 = vmatprep.subr.bf16.mxu0 0
        %3455 = vmatpush2.bf16.msra.mxu0 0
        %3456 = vmatprep.subr.bf16.mxu0 0
        %3457 = vmatpush2.bf16.msra.mxu0 0
        %3458 = vmatprep.subr.bf16.mxu0 0
        %3459 = vmatpush2.bf16.msra.mxu0 0
        %3460 = vmatprep.subr.bf16.mxu0 0
        %3461 = vmatpush2.bf16.msra.mxu0 0
        %3462 = vmatprep.subr.bf16.mxu0 0
        %3463 = vmatpush2.bf16.msra.mxu0 0
        %3464 = vmatprep.subr.bf16.mxu0 0
        %3465 = vmatpush2.bf16.msra.mxu0 0
        %3466 = vmatprep.subr.bf16.mxu0 0
        %3467 = vmatpush2.bf16.msra.mxu0 0
        %3468 = vmatprep.mubr.bf16.mxu0 0
        %3469 = vmatmul.mubr.bf16.gmra.mxu0 %v987
        %v3470 = vpop.f32.mrf.mxu0
        %v3471 = vadd.f32 %v3307, %v3470
        %v3472 = vpop.f32.mrf.mxu0
        %v3473 = vpop.f32.mrf.mxu0
        %v3474 = vadd.f32 %v3310, %v3473
        %v3475 = vpop.f32.mrf.mxu0
        %3476 = vdwg.mxu0
        %3477 = vmatprep.subr.bf16.mxu0 0
        %3478 = vmatpush1.bf16.msra.mxu0 0
        %3479 = vmatprep.subr.bf16.mxu0 0
        %3480 = vmatpush1.bf16.msra.mxu0 0
        %3481 = vmatprep.subr.bf16.mxu0 0
        %3482 = vmatpush1.bf16.msra.mxu0 0
        %3483 = vmatprep.subr.bf16.mxu0 0
        %3484 = vmatpush1.bf16.msra.mxu0 0
        %3485 = vmatprep.subr.bf16.mxu0 0
        %3486 = vmatpush1.bf16.msra.mxu0 0
        %3487 = vmatprep.subr.bf16.mxu0 0
        %3488 = vmatpush1.bf16.msra.mxu0 0
        %3489 = vmatprep.subr.bf16.mxu0 0
        %3490 = vmatpush1.bf16.msra.mxu0 0
        %3491 = vmatprep.subr.bf16.mxu0 0
        %3492 = vmatpush1.bf16.msra.mxu0 %v3125
        %3493 = vmatprep.subr.bf16.mxu0 0
        %3494 = vmatpush2.bf16.msra.mxu0 0
        %3495 = vmatprep.subr.bf16.mxu0 0
        %3496 = vmatpush2.bf16.msra.mxu0 0
        %3497 = vmatprep.subr.bf16.mxu0 0
        %3498 = vmatpush2.bf16.msra.mxu0 0
        %3499 = vmatprep.subr.bf16.mxu0 0
        %3500 = vmatpush2.bf16.msra.mxu0 0
        %3501 = vmatprep.subr.bf16.mxu0 0
        %3502 = vmatpush2.bf16.msra.mxu0 0
        %3503 = vmatprep.subr.bf16.mxu0 0
        %3504 = vmatpush2.bf16.msra.mxu0 0
        %3505 = vmatprep.subr.bf16.mxu0 0
        %3506 = vmatpush2.bf16.msra.mxu0 0
        %3507 = vmatprep.subr.bf16.mxu0 0
        %3508 = vmatpush2.bf16.msra.mxu0 0
        %3509 = vmatprep.mubr.bf16.mxu0 0
        %3510 = vmatmul.mubr.bf16.gmra.mxu0 %v1323
        %v3511 = vpop.f32.mrf.mxu0
        %v3512 = vadd.f32 0.0, %v3511
        %v3513 = vpop.f32.mrf.mxu0
        %v3514 = vpop.f32.mrf.mxu0
        %v3515 = vadd.f32 0.0, %v3514
        %v3516 = vpop.f32.mrf.mxu0
        %3517 = vdwg.mxu0
        %3518 = vmatprep.subr.bf16.mxu0 0
        %3519 = vmatpush1.bf16.msra.mxu0 0
        %3520 = vmatprep.subr.bf16.mxu0 0
        %3521 = vmatpush1.bf16.msra.mxu0 0
        %3522 = vmatprep.subr.bf16.mxu0 0
        %3523 = vmatpush1.bf16.msra.mxu0 0
        %3524 = vmatprep.subr.bf16.mxu0 0
        %3525 = vmatpush1.bf16.msra.mxu0 0
        %3526 = vmatprep.subr.bf16.mxu0 0
        %3527 = vmatpush1.bf16.msra.mxu0 0
        %3528 = vmatprep.subr.bf16.mxu0 0
        %3529 = vmatpush1.bf16.msra.mxu0 0
        %3530 = vmatprep.subr.bf16.mxu0 0
        %3531 = vmatpush1.bf16.msra.mxu0 0
        %3532 = vmatprep.subr.bf16.mxu0 0
        %3533 = vmatpush1.bf16.msra.mxu0 %v3126
        %3534 = vmatprep.subr.bf16.mxu0 0
        %3535 = vmatpush2.bf16.msra.mxu0 0
        %3536 = vmatprep.subr.bf16.mxu0 0
        %3537 = vmatpush2.bf16.msra.mxu0 0
        %3538 = vmatprep.subr.bf16.mxu0 0
        %3539 = vmatpush2.bf16.msra.mxu0 0
        %3540 = vmatprep.subr.bf16.mxu0 0
        %3541 = vmatpush2.bf16.msra.mxu0 0
        %3542 = vmatprep.subr.bf16.mxu0 0
        %3543 = vmatpush2.bf16.msra.mxu0 0
        %3544 = vmatprep.subr.bf16.mxu0 0
        %3545 = vmatpush2.bf16.msra.mxu0 0
        %3546 = vmatprep.subr.bf16.mxu0 0
        %3547 = vmatpush2.bf16.msra.mxu0 0
        %3548 = vmatprep.subr.bf16.mxu0 0
        %3549 = vmatpush2.bf16.msra.mxu0 0
        %3550 = vmatprep.mubr.bf16.mxu0 0
        %3551 = vmatmul.mubr.bf16.gmra.mxu0 %v1323
        %v3552 = vpop.f32.mrf.mxu0
        %v3553 = vadd.f32 0.0, %v3552
        %v3554 = vpop.f32.mrf.mxu0
        %v3555 = vpop.f32.mrf.mxu0
        %v3556 = vadd.f32 0.0, %v3555
        %v3557 = vpop.f32.mrf.mxu0
        %3558 = vdwg.mxu0
        %3559 = vmatprep.subr.bf16.mxu0 0
        %3560 = vmatpush1.bf16.msra.mxu0 0
        %3561 = vmatprep.subr.bf16.mxu0 0
        %3562 = vmatpush1.bf16.msra.mxu0 0
        %3563 = vmatprep.subr.bf16.mxu0 0
        %3564 = vmatpush1.bf16.msra.mxu0 0
        %3565 = vmatprep.subr.bf16.mxu0 0
        %3566 = vmatpush1.bf16.msra.mxu0 0
        %3567 = vmatprep.subr.bf16.mxu0 0
        %3568 = vmatpush1.bf16.msra.mxu0 0
        %3569 = vmatprep.subr.bf16.mxu0 0
        %3570 = vmatpush1.bf16.msra.mxu0 0
        %3571 = vmatprep.subr.bf16.mxu0 0
        %3572 = vmatpush1.bf16.msra.mxu0 0
        %3573 = vmatprep.subr.bf16.mxu0 0
        %3574 = vmatpush1.bf16.msra.mxu0 %v3127
        %3575 = vmatprep.subr.bf16.mxu0 0
        %3576 = vmatpush2.bf16.msra.mxu0 0
        %3577 = vmatprep.subr.bf16.mxu0 0
        %3578 = vmatpush2.bf16.msra.mxu0 0
        %3579 = vmatprep.subr.bf16.mxu0 0
        %3580 = vmatpush2.bf16.msra.mxu0 0
        %3581 = vmatprep.subr.bf16.mxu0 0
        %3582 = vmatpush2.bf16.msra.mxu0 0
        %3583 = vmatprep.subr.bf16.mxu0 0
        %3584 = vmatpush2.bf16.msra.mxu0 0
        %3585 = vmatprep.subr.bf16.mxu0 0
        %3586 = vmatpush2.bf16.msra.mxu0 0
        %3587 = vmatprep.subr.bf16.mxu0 0
        %3588 = vmatpush2.bf16.msra.mxu0 0
        %3589 = vmatprep.subr.bf16.mxu0 0
        %3590 = vmatpush2.bf16.msra.mxu0 0
        %3591 = vmatprep.mubr.bf16.mxu0 0
        %3592 = vmatmul.mubr.bf16.gmra.mxu0 %v1323
        %v3593 = vpop.f32.mrf.mxu0
        %v3594 = vadd.f32 0.0, %v3593
        %v3595 = vpop.f32.mrf.mxu0
        %v3596 = vpop.f32.mrf.mxu0
        %v3597 = vadd.f32 0.0, %v3596
        %v3598 = vpop.f32.mrf.mxu0
        %3599 = vdwg.mxu0
        %3600 = vmatprep.subr.bf16.mxu0 0
        %3601 = vmatpush1.bf16.msra.mxu0 0
        %3602 = vmatprep.subr.bf16.mxu0 0
        %3603 = vmatpush1.bf16.msra.mxu0 0
        %3604 = vmatprep.subr.bf16.mxu0 0
        %3605 = vmatpush1.bf16.msra.mxu0 0
        %3606 = vmatprep.subr.bf16.mxu0 0
        %3607 = vmatpush1.bf16.msra.mxu0 0
        %3608 = vmatprep.subr.bf16.mxu0 0
        %3609 = vmatpush1.bf16.msra.mxu0 0
        %3610 = vmatprep.subr.bf16.mxu0 0
        %3611 = vmatpush1.bf16.msra.mxu0 0
        %3612 = vmatprep.subr.bf16.mxu0 0
        %3613 = vmatpush1.bf16.msra.mxu0 0
        %3614 = vmatprep.subr.bf16.mxu0 0
        %3615 = vmatpush1.bf16.msra.mxu0 %v3128
        %3616 = vmatprep.subr.bf16.mxu0 0
        %3617 = vmatpush2.bf16.msra.mxu0 0
        %3618 = vmatprep.subr.bf16.mxu0 0
        %3619 = vmatpush2.bf16.msra.mxu0 0
        %3620 = vmatprep.subr.bf16.mxu0 0
        %3621 = vmatpush2.bf16.msra.mxu0 0
        %3622 = vmatprep.subr.bf16.mxu0 0
        %3623 = vmatpush2.bf16.msra.mxu0 0
        %3624 = vmatprep.subr.bf16.mxu0 0
        %3625 = vmatpush2.bf16.msra.mxu0 0
        %3626 = vmatprep.subr.bf16.mxu0 0
        %3627 = vmatpush2.bf16.msra.mxu0 0
        %3628 = vmatprep.subr.bf16.mxu0 0
        %3629 = vmatpush2.bf16.msra.mxu0 0
        %3630 = vmatprep.subr.bf16.mxu0 0
        %3631 = vmatpush2.bf16.msra.mxu0 0
        %3632 = vmatprep.mubr.bf16.mxu0 0
        %3633 = vmatmul.mubr.bf16.gmra.mxu0 %v1323
        %v3634 = vpop.f32.mrf.mxu0
        %v3635 = vadd.f32 0.0, %v3634
        %v3636 = vpop.f32.mrf.mxu0
        %v3637 = vpop.f32.mrf.mxu0
        %v3638 = vadd.f32 0.0, %v3637
        %v3639 = vpop.f32.mrf.mxu0
        %3640 = vdwg.mxu0
        %v3641 = vadd.f32 %v3348, %v3512
        %v3642 = vadd.f32 %v3351, %v3515
        %v3643 = vadd.f32 %v3389, %v3553
        %v3644 = vadd.f32 %v3392, %v3556
        %v3645 = vadd.f32 %v3430, %v3594
        %v3646 = vadd.f32 %v3433, %v3597
        %v3647 = vadd.f32 %v3471, %v3635
        %v3648 = vadd.f32 %v3474, %v3638
        %v3649 = vmul.f32 %v380, %v380
        %v3650 = vmul.f32 %v381, %v381
        %v3651 = vmul.f32 %v382, %v382
        %v3652 = vmul.f32 %v383, %v383
        %v3653 = vmul.f32 %v384, %v384
        %v3654 = vmul.f32 %v385, %v385
        %v3655 = vmul.f32 %v386, %v386
        %v3656 = vmul.f32 %v387, %v387
        %v3657 = vpack.c.bf16 %v3650, %v3649
        %v3658 = vpack.c.bf16 %v3652, %v3651
        %v3659 = vpack.c.bf16 %v3654, %v3653
        %v3660 = vpack.c.bf16 %v3656, %v3655
        %v3661 = vunpack.c.l.bf16 %v3657
        %v3662 = vunpack.c.h.bf16 %v3657
        %v3663 = vunpack.c.l.bf16 %v3658
        %v3664 = vunpack.c.h.bf16 %v3658
        %v3665 = vunpack.c.l.bf16 %v3659
        %v3666 = vunpack.c.h.bf16 %v3659
        %v3667 = vunpack.c.l.bf16 %v3660
        %v3668 = vunpack.c.h.bf16 %v3660
        %v3669 = vsub.f32 %v3649, %v3661
        %v3670 = vsub.f32 %v3650, %v3662
        %v3671 = vsub.f32 %v3651, %v3663
        %v3672 = vsub.f32 %v3652, %v3664
        %v3673 = vsub.f32 %v3653, %v3665
        %v3674 = vsub.f32 %v3654, %v3666
        %v3675 = vsub.f32 %v3655, %v3667
        %v3676 = vsub.f32 %v3656, %v3668
        %v3677 = vpack.c.bf16 %v3670, %v3669
        %v3678 = vpack.c.bf16 %v3672, %v3671
        %v3679 = vpack.c.bf16 %v3674, %v3673
        %v3680 = vpack.c.bf16 %v3676, %v3675
        %v3682 = vsel %vm426, %v3677, 0
        %3684 = vmatprep.subr.bf16.mxu0 0
        %3685 = vmatpush1.bf16.msra.mxu0 0
        %3686 = vmatprep.subr.bf16.mxu0 0
        %3687 = vmatpush1.bf16.msra.mxu0 0
        %3688 = vmatprep.subr.bf16.mxu0 0
        %3689 = vmatpush1.bf16.msra.mxu0 0
        %3690 = vmatprep.subr.bf16.mxu0 0
        %3691 = vmatpush1.bf16.msra.mxu0 0
        %3692 = vmatprep.subr.bf16.mxu0 0
        %3693 = vmatpush1.bf16.msra.mxu0 0
        %3694 = vmatprep.subr.bf16.mxu0 0
        %3695 = vmatpush1.bf16.msra.mxu0 0
        %3696 = vmatprep.subr.bf16.mxu0 0
        %3697 = vmatpush1.bf16.msra.mxu0 0
        %3698 = vmatprep.subr.bf16.mxu0 0
        %3699 = vmatpush1.bf16.msra.mxu0 %v424
        %3700 = vmatprep.subr.bf16.mxu0 0
        %3701 = vmatpush2.bf16.msra.mxu0 0
        %3702 = vmatprep.subr.bf16.mxu0 0
        %3703 = vmatpush2.bf16.msra.mxu0 0
        %3704 = vmatprep.subr.bf16.mxu0 0
        %3705 = vmatpush2.bf16.msra.mxu0 0
        %3706 = vmatprep.subr.bf16.mxu0 0
        %3707 = vmatpush2.bf16.msra.mxu0 0
        %3708 = vmatprep.subr.bf16.mxu0 0
        %3709 = vmatpush2.bf16.msra.mxu0 0
        %3710 = vmatprep.subr.bf16.mxu0 0
        %3711 = vmatpush2.bf16.msra.mxu0 0
        %3712 = vmatprep.subr.bf16.mxu0 0
        %3713 = vmatpush2.bf16.msra.mxu0 0
        %3714 = vmatprep.subr.bf16.mxu0 0
        %3715 = vmatpush2.bf16.msra.mxu0 0
        %3716 = vmatprep.mubr.bf16.mxu0 0
        %3717 = vmatmul.mubr.bf16.gmra.mxu0 %v3682
        %v3718 = vpop.f32.mrf.mxu0
        %v3719 = vadd.f32 0.0, %v3718
        %v3720 = vpop.f32.mrf.mxu0
        %v3721 = vpop.f32.mrf.mxu0
        %v3722 = vadd.f32 0.0, %v3721
        %v3723 = vpop.f32.mrf.mxu0
        %3724 = vdwg.mxu0
        %v3726 = vsel %vm426, %v3678, 0
        %3728 = vmatprep.subr.bf16.mxu0 0
        %3729 = vmatpush1.bf16.msra.mxu0 0
        %3730 = vmatprep.subr.bf16.mxu0 0
        %3731 = vmatpush1.bf16.msra.mxu0 0
        %3732 = vmatprep.subr.bf16.mxu0 0
        %3733 = vmatpush1.bf16.msra.mxu0 0
        %3734 = vmatprep.subr.bf16.mxu0 0
        %3735 = vmatpush1.bf16.msra.mxu0 0
        %3736 = vmatprep.subr.bf16.mxu0 0
        %3737 = vmatpush1.bf16.msra.mxu0 0
        %3738 = vmatprep.subr.bf16.mxu0 0
        %3739 = vmatpush1.bf16.msra.mxu0 0
        %3740 = vmatprep.subr.bf16.mxu0 0
        %3741 = vmatpush1.bf16.msra.mxu0 0
        %3742 = vmatprep.subr.bf16.mxu0 0
        %3743 = vmatpush1.bf16.msra.mxu0 %v424
        %3744 = vmatprep.subr.bf16.mxu0 0
        %3745 = vmatpush2.bf16.msra.mxu0 0
        %3746 = vmatprep.subr.bf16.mxu0 0
        %3747 = vmatpush2.bf16.msra.mxu0 0
        %3748 = vmatprep.subr.bf16.mxu0 0
        %3749 = vmatpush2.bf16.msra.mxu0 0
        %3750 = vmatprep.subr.bf16.mxu0 0
        %3751 = vmatpush2.bf16.msra.mxu0 0
        %3752 = vmatprep.subr.bf16.mxu0 0
        %3753 = vmatpush2.bf16.msra.mxu0 0
        %3754 = vmatprep.subr.bf16.mxu0 0
        %3755 = vmatpush2.bf16.msra.mxu0 0
        %3756 = vmatprep.subr.bf16.mxu0 0
        %3757 = vmatpush2.bf16.msra.mxu0 0
        %3758 = vmatprep.subr.bf16.mxu0 0
        %3759 = vmatpush2.bf16.msra.mxu0 0
        %3760 = vmatprep.mubr.bf16.mxu0 0
        %3761 = vmatmul.mubr.bf16.gmra.mxu0 %v3726
        %v3762 = vpop.f32.mrf.mxu0
        %v3763 = vadd.f32 0.0, %v3762
        %v3764 = vpop.f32.mrf.mxu0
        %v3765 = vpop.f32.mrf.mxu0
        %v3766 = vadd.f32 0.0, %v3765
        %v3767 = vpop.f32.mrf.mxu0
        %3768 = vdwg.mxu0
        %v3770 = vsel %vm426, %v3679, 0
        %3772 = vmatprep.subr.bf16.mxu0 0
        %3773 = vmatpush1.bf16.msra.mxu0 0
        %3774 = vmatprep.subr.bf16.mxu0 0
        %3775 = vmatpush1.bf16.msra.mxu0 0
        %3776 = vmatprep.subr.bf16.mxu0 0
        %3777 = vmatpush1.bf16.msra.mxu0 0
        %3778 = vmatprep.subr.bf16.mxu0 0
        %3779 = vmatpush1.bf16.msra.mxu0 0
        %3780 = vmatprep.subr.bf16.mxu0 0
        %3781 = vmatpush1.bf16.msra.mxu0 0
        %3782 = vmatprep.subr.bf16.mxu0 0
        %3783 = vmatpush1.bf16.msra.mxu0 0
        %3784 = vmatprep.subr.bf16.mxu0 0
        %3785 = vmatpush1.bf16.msra.mxu0 0
        %3786 = vmatprep.subr.bf16.mxu0 0
        %3787 = vmatpush1.bf16.msra.mxu0 %v424
        %3788 = vmatprep.subr.bf16.mxu0 0
        %3789 = vmatpush2.bf16.msra.mxu0 0
        %3790 = vmatprep.subr.bf16.mxu0 0
        %3791 = vmatpush2.bf16.msra.mxu0 0
        %3792 = vmatprep.subr.bf16.mxu0 0
        %3793 = vmatpush2.bf16.msra.mxu0 0
        %3794 = vmatprep.subr.bf16.mxu0 0
        %3795 = vmatpush2.bf16.msra.mxu0 0
        %3796 = vmatprep.subr.bf16.mxu0 0
        %3797 = vmatpush2.bf16.msra.mxu0 0
        %3798 = vmatprep.subr.bf16.mxu0 0
        %3799 = vmatpush2.bf16.msra.mxu0 0
        %3800 = vmatprep.subr.bf16.mxu0 0
        %3801 = vmatpush2.bf16.msra.mxu0 0
        %3802 = vmatprep.subr.bf16.mxu0 0
        %3803 = vmatpush2.bf16.msra.mxu0 0
        %3804 = vmatprep.mubr.bf16.mxu0 0
        %3805 = vmatmul.mubr.bf16.gmra.mxu0 %v3770
        %v3806 = vpop.f32.mrf.mxu0
        %v3807 = vadd.f32 0.0, %v3806
        %v3808 = vpop.f32.mrf.mxu0
        %v3809 = vpop.f32.mrf.mxu0
        %v3810 = vadd.f32 0.0, %v3809
        %v3811 = vpop.f32.mrf.mxu0
        %3812 = vdwg.mxu0
        %v3814 = vsel %vm426, %v3680, 0
        %3816 = vmatprep.subr.bf16.mxu0 0
        %3817 = vmatpush1.bf16.msra.mxu0 0
        %3818 = vmatprep.subr.bf16.mxu0 0
        %3819 = vmatpush1.bf16.msra.mxu0 0
        %3820 = vmatprep.subr.bf16.mxu0 0
        %3821 = vmatpush1.bf16.msra.mxu0 0
        %3822 = vmatprep.subr.bf16.mxu0 0
        %3823 = vmatpush1.bf16.msra.mxu0 0
        %3824 = vmatprep.subr.bf16.mxu0 0
        %3825 = vmatpush1.bf16.msra.mxu0 0
        %3826 = vmatprep.subr.bf16.mxu0 0
        %3827 = vmatpush1.bf16.msra.mxu0 0
        %3828 = vmatprep.subr.bf16.mxu0 0
        %3829 = vmatpush1.bf16.msra.mxu0 0
        %3830 = vmatprep.subr.bf16.mxu0 0
        %3831 = vmatpush1.bf16.msra.mxu0 %v424
        %3832 = vmatprep.subr.bf16.mxu0 0
        %3833 = vmatpush2.bf16.msra.mxu0 0
        %3834 = vmatprep.subr.bf16.mxu0 0
        %3835 = vmatpush2.bf16.msra.mxu0 0
        %3836 = vmatprep.subr.bf16.mxu0 0
        %3837 = vmatpush2.bf16.msra.mxu0 0
        %3838 = vmatprep.subr.bf16.mxu0 0
        %3839 = vmatpush2.bf16.msra.mxu0 0
        %3840 = vmatprep.subr.bf16.mxu0 0
        %3841 = vmatpush2.bf16.msra.mxu0 0
        %3842 = vmatprep.subr.bf16.mxu0 0
        %3843 = vmatpush2.bf16.msra.mxu0 0
        %3844 = vmatprep.subr.bf16.mxu0 0
        %3845 = vmatpush2.bf16.msra.mxu0 0
        %3846 = vmatprep.subr.bf16.mxu0 0
        %3847 = vmatpush2.bf16.msra.mxu0 0
        %3848 = vmatprep.mubr.bf16.mxu0 0
        %3849 = vmatmul.mubr.bf16.gmra.mxu0 %v3814
        %v3850 = vpop.f32.mrf.mxu0
        %v3851 = vadd.f32 0.0, %v3850
        %v3852 = vpop.f32.mrf.mxu0
        %v3853 = vpop.f32.mrf.mxu0
        %v3854 = vadd.f32 0.0, %v3853
        %v3855 = vpop.f32.mrf.mxu0
        %3856 = vdwg.mxu0
        %v3858 = vsel %vm426, %v3657, 0
        %3860 = vmatprep.subr.bf16.mxu0 0
        %3861 = vmatpush1.bf16.msra.mxu0 0
        %3862 = vmatprep.subr.bf16.mxu0 0
        %3863 = vmatpush1.bf16.msra.mxu0 0
        %3864 = vmatprep.subr.bf16.mxu0 0
        %3865 = vmatpush1.bf16.msra.mxu0 0
        %3866 = vmatprep.subr.bf16.mxu0 0
        %3867 = vmatpush1.bf16.msra.mxu0 0
        %3868 = vmatprep.subr.bf16.mxu0 0
        %3869 = vmatpush1.bf16.msra.mxu0 0
        %3870 = vmatprep.subr.bf16.mxu0 0
        %3871 = vmatpush1.bf16.msra.mxu0 0
        %3872 = vmatprep.subr.bf16.mxu0 0
        %3873 = vmatpush1.bf16.msra.mxu0 0
        %3874 = vmatprep.subr.bf16.mxu0 0
        %3875 = vmatpush1.bf16.msra.mxu0 %v424
        %3876 = vmatprep.subr.bf16.mxu0 0
        %3877 = vmatpush2.bf16.msra.mxu0 0
        %3878 = vmatprep.subr.bf16.mxu0 0
        %3879 = vmatpush2.bf16.msra.mxu0 0
        %3880 = vmatprep.subr.bf16.mxu0 0
        %3881 = vmatpush2.bf16.msra.mxu0 0
        %3882 = vmatprep.subr.bf16.mxu0 0
        %3883 = vmatpush2.bf16.msra.mxu0 0
        %3884 = vmatprep.subr.bf16.mxu0 0
        %3885 = vmatpush2.bf16.msra.mxu0 0
        %3886 = vmatprep.subr.bf16.mxu0 0
        %3887 = vmatpush2.bf16.msra.mxu0 0
        %3888 = vmatprep.subr.bf16.mxu0 0
        %3889 = vmatpush2.bf16.msra.mxu0 0
        %3890 = vmatprep.subr.bf16.mxu0 0
        %3891 = vmatpush2.bf16.msra.mxu0 0
        %3892 = vmatprep.mubr.bf16.mxu0 0
        %3893 = vmatmul.mubr.bf16.gmra.mxu0 %v3858
        %v3894 = vpop.f32.mrf.mxu0
        %v3895 = vadd.f32 %v3719, %v3894
        %v3896 = vpop.f32.mrf.mxu0
        %v3897 = vpop.f32.mrf.mxu0
        %v3898 = vadd.f32 %v3722, %v3897
        %v3899 = vpop.f32.mrf.mxu0
        %3900 = vdwg.mxu0
        %v3902 = vsel %vm426, %v3658, 0
        %3904 = vmatprep.subr.bf16.mxu0 0
        %3905 = vmatpush1.bf16.msra.mxu0 0
        %3906 = vmatprep.subr.bf16.mxu0 0
        %3907 = vmatpush1.bf16.msra.mxu0 0
        %3908 = vmatprep.subr.bf16.mxu0 0
        %3909 = vmatpush1.bf16.msra.mxu0 0
        %3910 = vmatprep.subr.bf16.mxu0 0
        %3911 = vmatpush1.bf16.msra.mxu0 0
        %3912 = vmatprep.subr.bf16.mxu0 0
        %3913 = vmatpush1.bf16.msra.mxu0 0
        %3914 = vmatprep.subr.bf16.mxu0 0
        %3915 = vmatpush1.bf16.msra.mxu0 0
        %3916 = vmatprep.subr.bf16.mxu0 0
        %3917 = vmatpush1.bf16.msra.mxu0 0
        %3918 = vmatprep.subr.bf16.mxu0 0
        %3919 = vmatpush1.bf16.msra.mxu0 %v424
        %3920 = vmatprep.subr.bf16.mxu0 0
        %3921 = vmatpush2.bf16.msra.mxu0 0
        %3922 = vmatprep.subr.bf16.mxu0 0
        %3923 = vmatpush2.bf16.msra.mxu0 0
        %3924 = vmatprep.subr.bf16.mxu0 0
        %3925 = vmatpush2.bf16.msra.mxu0 0
        %3926 = vmatprep.subr.bf16.mxu0 0
        %3927 = vmatpush2.bf16.msra.mxu0 0
        %3928 = vmatprep.subr.bf16.mxu0 0
        %3929 = vmatpush2.bf16.msra.mxu0 0
        %3930 = vmatprep.subr.bf16.mxu0 0
        %3931 = vmatpush2.bf16.msra.mxu0 0
        %3932 = vmatprep.subr.bf16.mxu0 0
        %3933 = vmatpush2.bf16.msra.mxu0 0
        %3934 = vmatprep.subr.bf16.mxu0 0
        %3935 = vmatpush2.bf16.msra.mxu0 0
        %3936 = vmatprep.mubr.bf16.mxu0 0
        %3937 = vmatmul.mubr.bf16.gmra.mxu0 %v3902
        %v3938 = vpop.f32.mrf.mxu0
        %v3939 = vadd.f32 %v3763, %v3938
        %v3940 = vpop.f32.mrf.mxu0
        %v3941 = vpop.f32.mrf.mxu0
        %v3942 = vadd.f32 %v3766, %v3941
        %v3943 = vpop.f32.mrf.mxu0
        %3944 = vdwg.mxu0
        %v3946 = vsel %vm426, %v3659, 0
        %3948 = vmatprep.subr.bf16.mxu0 0
        %3949 = vmatpush1.bf16.msra.mxu0 0
        %3950 = vmatprep.subr.bf16.mxu0 0
        %3951 = vmatpush1.bf16.msra.mxu0 0
        %3952 = vmatprep.subr.bf16.mxu0 0
        %3953 = vmatpush1.bf16.msra.mxu0 0
        %3954 = vmatprep.subr.bf16.mxu0 0
        %3955 = vmatpush1.bf16.msra.mxu0 0
        %3956 = vmatprep.subr.bf16.mxu0 0
        %3957 = vmatpush1.bf16.msra.mxu0 0
        %3958 = vmatprep.subr.bf16.mxu0 0
        %3959 = vmatpush1.bf16.msra.mxu0 0
        %3960 = vmatprep.subr.bf16.mxu0 0
        %3961 = vmatpush1.bf16.msra.mxu0 0
        %3962 = vmatprep.subr.bf16.mxu0 0
        %3963 = vmatpush1.bf16.msra.mxu0 %v424
        %3964 = vmatprep.subr.bf16.mxu0 0
        %3965 = vmatpush2.bf16.msra.mxu0 0
        %3966 = vmatprep.subr.bf16.mxu0 0
        %3967 = vmatpush2.bf16.msra.mxu0 0
        %3968 = vmatprep.subr.bf16.mxu0 0
        %3969 = vmatpush2.bf16.msra.mxu0 0
        %3970 = vmatprep.subr.bf16.mxu0 0
        %3971 = vmatpush2.bf16.msra.mxu0 0
        %3972 = vmatprep.subr.bf16.mxu0 0
        %3973 = vmatpush2.bf16.msra.mxu0 0
        %3974 = vmatprep.subr.bf16.mxu0 0
        %3975 = vmatpush2.bf16.msra.mxu0 0
        %3976 = vmatprep.subr.bf16.mxu0 0
        %3977 = vmatpush2.bf16.msra.mxu0 0
        %3978 = vmatprep.subr.bf16.mxu0 0
        %3979 = vmatpush2.bf16.msra.mxu0 0
        %3980 = vmatprep.mubr.bf16.mxu0 0
        %3981 = vmatmul.mubr.bf16.gmra.mxu0 %v3946
        %v3982 = vpop.f32.mrf.mxu0
        %v3983 = vadd.f32 %v3807, %v3982
        %v3984 = vpop.f32.mrf.mxu0
        %v3985 = vpop.f32.mrf.mxu0
        %v3986 = vadd.f32 %v3810, %v3985
        %v3987 = vpop.f32.mrf.mxu0
        %3988 = vdwg.mxu0
        %v3990 = vsel %vm426, %v3660, 0
        %3992 = vmatprep.subr.bf16.mxu0 0
        %3993 = vmatpush1.bf16.msra.mxu0 0
        %3994 = vmatprep.subr.bf16.mxu0 0
        %3995 = vmatpush1.bf16.msra.mxu0 0
        %3996 = vmatprep.subr.bf16.mxu0 0
        %3997 = vmatpush1.bf16.msra.mxu0 0
        %3998 = vmatprep.subr.bf16.mxu0 0
        %3999 = vmatpush1.bf16.msra.mxu0 0
        %4000 = vmatprep.subr.bf16.mxu0 0
        %4001 = vmatpush1.bf16.msra.mxu0 0
        %4002 = vmatprep.subr.bf16.mxu0 0
        %4003 = vmatpush1.bf16.msra.mxu0 0
        %4004 = vmatprep.subr.bf16.mxu0 0
        %4005 = vmatpush1.bf16.msra.mxu0 0
        %4006 = vmatprep.subr.bf16.mxu0 0
        %4007 = vmatpush1.bf16.msra.mxu0 %v424
        %4008 = vmatprep.subr.bf16.mxu0 0
        %4009 = vmatpush2.bf16.msra.mxu0 0
        %4010 = vmatprep.subr.bf16.mxu0 0
        %4011 = vmatpush2.bf16.msra.mxu0 0
        %4012 = vmatprep.subr.bf16.mxu0 0
        %4013 = vmatpush2.bf16.msra.mxu0 0
        %4014 = vmatprep.subr.bf16.mxu0 0
        %4015 = vmatpush2.bf16.msra.mxu0 0
        %4016 = vmatprep.subr.bf16.mxu0 0
        %4017 = vmatpush2.bf16.msra.mxu0 0
        %4018 = vmatprep.subr.bf16.mxu0 0
        %4019 = vmatpush2.bf16.msra.mxu0 0
        %4020 = vmatprep.subr.bf16.mxu0 0
        %4021 = vmatpush2.bf16.msra.mxu0 0
        %4022 = vmatprep.subr.bf16.mxu0 0
        %4023 = vmatpush2.bf16.msra.mxu0 0
        %4024 = vmatprep.mubr.bf16.mxu0 0
        %4025 = vmatmul.mubr.bf16.gmra.mxu0 %v3990
        %v4026 = vpop.f32.mrf.mxu0
        %v4027 = vadd.f32 %v3851, %v4026
        %v4028 = vpop.f32.mrf.mxu0
        %v4029 = vpop.f32.mrf.mxu0
        %v4030 = vadd.f32 %v3854, %v4029
        %v4031 = vpop.f32.mrf.mxu0
        %4032 = vdwg.mxu0
        %4033 = vmatprep.subr.bf16.mxu0 0
        %4034 = vmatpush1.bf16.msra.mxu0 0
        %4035 = vmatprep.subr.bf16.mxu0 0
        %4036 = vmatpush1.bf16.msra.mxu0 0
        %4037 = vmatprep.subr.bf16.mxu0 0
        %4038 = vmatpush1.bf16.msra.mxu0 0
        %4039 = vmatprep.subr.bf16.mxu0 0
        %4040 = vmatpush1.bf16.msra.mxu0 0
        %4041 = vmatprep.subr.bf16.mxu0 0
        %4042 = vmatpush1.bf16.msra.mxu0 0
        %4043 = vmatprep.subr.bf16.mxu0 0
        %4044 = vmatpush1.bf16.msra.mxu0 0
        %4045 = vmatprep.subr.bf16.mxu0 0
        %4046 = vmatpush1.bf16.msra.mxu0 0
        %4047 = vmatprep.subr.bf16.mxu0 0
        %4048 = vmatpush1.bf16.msra.mxu0 %v783
        %4049 = vmatprep.subr.bf16.mxu0 0
        %4050 = vmatpush2.bf16.msra.mxu0 0
        %4051 = vmatprep.subr.bf16.mxu0 0
        %4052 = vmatpush2.bf16.msra.mxu0 0
        %4053 = vmatprep.subr.bf16.mxu0 0
        %4054 = vmatpush2.bf16.msra.mxu0 0
        %4055 = vmatprep.subr.bf16.mxu0 0
        %4056 = vmatpush2.bf16.msra.mxu0 0
        %4057 = vmatprep.subr.bf16.mxu0 0
        %4058 = vmatpush2.bf16.msra.mxu0 0
        %4059 = vmatprep.subr.bf16.mxu0 0
        %4060 = vmatpush2.bf16.msra.mxu0 0
        %4061 = vmatprep.subr.bf16.mxu0 0
        %4062 = vmatpush2.bf16.msra.mxu0 0
        %4063 = vmatprep.subr.bf16.mxu0 0
        %4064 = vmatpush2.bf16.msra.mxu0 0
        %4065 = vmatprep.mubr.bf16.mxu0 0
        %4066 = vmatmul.mubr.bf16.gmra.mxu0 %v3858
        %v4067 = vpop.f32.mrf.mxu0
        %v4068 = vadd.f32 0.0, %v4067
        %v4069 = vpop.f32.mrf.mxu0
        %v4070 = vpop.f32.mrf.mxu0
        %v4071 = vadd.f32 0.0, %v4070
        %v4072 = vpop.f32.mrf.mxu0
        %4073 = vdwg.mxu0
        %4074 = vmatprep.subr.bf16.mxu0 0
        %4075 = vmatpush1.bf16.msra.mxu0 0
        %4076 = vmatprep.subr.bf16.mxu0 0
        %4077 = vmatpush1.bf16.msra.mxu0 0
        %4078 = vmatprep.subr.bf16.mxu0 0
        %4079 = vmatpush1.bf16.msra.mxu0 0
        %4080 = vmatprep.subr.bf16.mxu0 0
        %4081 = vmatpush1.bf16.msra.mxu0 0
        %4082 = vmatprep.subr.bf16.mxu0 0
        %4083 = vmatpush1.bf16.msra.mxu0 0
        %4084 = vmatprep.subr.bf16.mxu0 0
        %4085 = vmatpush1.bf16.msra.mxu0 0
        %4086 = vmatprep.subr.bf16.mxu0 0
        %4087 = vmatpush1.bf16.msra.mxu0 0
        %4088 = vmatprep.subr.bf16.mxu0 0
        %4089 = vmatpush1.bf16.msra.mxu0 %v783
        %4090 = vmatprep.subr.bf16.mxu0 0
        %4091 = vmatpush2.bf16.msra.mxu0 0
        %4092 = vmatprep.subr.bf16.mxu0 0
        %4093 = vmatpush2.bf16.msra.mxu0 0
        %4094 = vmatprep.subr.bf16.mxu0 0
        %4095 = vmatpush2.bf16.msra.mxu0 0
        %4096 = vmatprep.subr.bf16.mxu0 0
        %4097 = vmatpush2.bf16.msra.mxu0 0
        %4098 = vmatprep.subr.bf16.mxu0 0
        %4099 = vmatpush2.bf16.msra.mxu0 0
        %4100 = vmatprep.subr.bf16.mxu0 0
        %4101 = vmatpush2.bf16.msra.mxu0 0
        %4102 = vmatprep.subr.bf16.mxu0 0
        %4103 = vmatpush2.bf16.msra.mxu0 0
        %4104 = vmatprep.subr.bf16.mxu0 0
        %4105 = vmatpush2.bf16.msra.mxu0 0
        %4106 = vmatprep.mubr.bf16.mxu0 0
        %4107 = vmatmul.mubr.bf16.gmra.mxu0 %v3902
        %v4108 = vpop.f32.mrf.mxu0
        %v4109 = vadd.f32 0.0, %v4108
        %v4110 = vpop.f32.mrf.mxu0
        %v4111 = vpop.f32.mrf.mxu0
        %v4112 = vadd.f32 0.0, %v4111
        %v4113 = vpop.f32.mrf.mxu0
        %4114 = vdwg.mxu0
        %4115 = vmatprep.subr.bf16.mxu0 0
        %4116 = vmatpush1.bf16.msra.mxu0 0
        %4117 = vmatprep.subr.bf16.mxu0 0
        %4118 = vmatpush1.bf16.msra.mxu0 0
        %4119 = vmatprep.subr.bf16.mxu0 0
        %4120 = vmatpush1.bf16.msra.mxu0 0
        %4121 = vmatprep.subr.bf16.mxu0 0
        %4122 = vmatpush1.bf16.msra.mxu0 0
        %4123 = vmatprep.subr.bf16.mxu0 0
        %4124 = vmatpush1.bf16.msra.mxu0 0
        %4125 = vmatprep.subr.bf16.mxu0 0
        %4126 = vmatpush1.bf16.msra.mxu0 0
        %4127 = vmatprep.subr.bf16.mxu0 0
        %4128 = vmatpush1.bf16.msra.mxu0 0
        %4129 = vmatprep.subr.bf16.mxu0 0
        %4130 = vmatpush1.bf16.msra.mxu0 %v783
        %4131 = vmatprep.subr.bf16.mxu0 0
        %4132 = vmatpush2.bf16.msra.mxu0 0
        %4133 = vmatprep.subr.bf16.mxu0 0
        %4134 = vmatpush2.bf16.msra.mxu0 0
        %4135 = vmatprep.subr.bf16.mxu0 0
        %4136 = vmatpush2.bf16.msra.mxu0 0
        %4137 = vmatprep.subr.bf16.mxu0 0
        %4138 = vmatpush2.bf16.msra.mxu0 0
        %4139 = vmatprep.subr.bf16.mxu0 0
        %4140 = vmatpush2.bf16.msra.mxu0 0
        %4141 = vmatprep.subr.bf16.mxu0 0
        %4142 = vmatpush2.bf16.msra.mxu0 0
        %4143 = vmatprep.subr.bf16.mxu0 0
        %4144 = vmatpush2.bf16.msra.mxu0 0
        %4145 = vmatprep.subr.bf16.mxu0 0
        %4146 = vmatpush2.bf16.msra.mxu0 0
        %4147 = vmatprep.mubr.bf16.mxu0 0
        %4148 = vmatmul.mubr.bf16.gmra.mxu0 %v3946
        %v4149 = vpop.f32.mrf.mxu0
        %v4150 = vadd.f32 0.0, %v4149
        %v4151 = vpop.f32.mrf.mxu0
        %v4152 = vpop.f32.mrf.mxu0
        %v4153 = vadd.f32 0.0, %v4152
        %v4154 = vpop.f32.mrf.mxu0
        %4155 = vdwg.mxu0
        %4156 = vmatprep.subr.bf16.mxu0 0
        %4157 = vmatpush1.bf16.msra.mxu0 0
        %4158 = vmatprep.subr.bf16.mxu0 0
        %4159 = vmatpush1.bf16.msra.mxu0 0
        %4160 = vmatprep.subr.bf16.mxu0 0
        %4161 = vmatpush1.bf16.msra.mxu0 0
        %4162 = vmatprep.subr.bf16.mxu0 0
        %4163 = vmatpush1.bf16.msra.mxu0 0
        %4164 = vmatprep.subr.bf16.mxu0 0
        %4165 = vmatpush1.bf16.msra.mxu0 0
        %4166 = vmatprep.subr.bf16.mxu0 0
        %4167 = vmatpush1.bf16.msra.mxu0 0
        %4168 = vmatprep.subr.bf16.mxu0 0
        %4169 = vmatpush1.bf16.msra.mxu0 0
        %4170 = vmatprep.subr.bf16.mxu0 0
        %4171 = vmatpush1.bf16.msra.mxu0 %v783
        %4172 = vmatprep.subr.bf16.mxu0 0
        %4173 = vmatpush2.bf16.msra.mxu0 0
        %4174 = vmatprep.subr.bf16.mxu0 0
        %4175 = vmatpush2.bf16.msra.mxu0 0
        %4176 = vmatprep.subr.bf16.mxu0 0
        %4177 = vmatpush2.bf16.msra.mxu0 0
        %4178 = vmatprep.subr.bf16.mxu0 0
        %4179 = vmatpush2.bf16.msra.mxu0 0
        %4180 = vmatprep.subr.bf16.mxu0 0
        %4181 = vmatpush2.bf16.msra.mxu0 0
        %4182 = vmatprep.subr.bf16.mxu0 0
        %4183 = vmatpush2.bf16.msra.mxu0 0
        %4184 = vmatprep.subr.bf16.mxu0 0
        %4185 = vmatpush2.bf16.msra.mxu0 0
        %4186 = vmatprep.subr.bf16.mxu0 0
        %4187 = vmatpush2.bf16.msra.mxu0 0
        %4188 = vmatprep.mubr.bf16.mxu0 0
        %4189 = vmatmul.mubr.bf16.gmra.mxu0 %v3990
        %v4190 = vpop.f32.mrf.mxu0
        %v4191 = vadd.f32 0.0, %v4190
        %v4192 = vpop.f32.mrf.mxu0
        %v4193 = vpop.f32.mrf.mxu0
        %v4194 = vadd.f32 0.0, %v4193
        %v4195 = vpop.f32.mrf.mxu0
        %4196 = vdwg.mxu0
        %v4197 = vadd.f32 %v3895, %v4068
        %v4198 = vadd.f32 %v3898, %v4071
        %v4199 = vadd.f32 %v3939, %v4109
        %v4200 = vadd.f32 %v3942, %v4112
        %v4201 = vadd.f32 %v3983, %v4150
        %v4202 = vadd.f32 %v3986, %v4153
        %v4203 = vadd.f32 %v4027, %v4191
        %v4204 = vadd.f32 %v4030, %v4194
        %v4205 = vpack.c.bf16 %v4198, %v4197
        %v4206 = vpack.c.bf16 %v4200, %v4199
        %v4207 = vpack.c.bf16 %v4202, %v4201
        %v4208 = vpack.c.bf16 %v4204, %v4203
        %v4209 = vunpack.c.l.bf16 %v4205
        %v4210 = vunpack.c.h.bf16 %v4205
        %v4211 = vunpack.c.l.bf16 %v4206
        %v4212 = vunpack.c.h.bf16 %v4206
        %v4213 = vunpack.c.l.bf16 %v4207
        %v4214 = vunpack.c.h.bf16 %v4207
        %v4215 = vunpack.c.l.bf16 %v4208
        %v4216 = vunpack.c.h.bf16 %v4208
        %v4217 = vsub.f32 %v4197, %v4209
        %v4218 = vsub.f32 %v4198, %v4210
        %v4219 = vsub.f32 %v4199, %v4211
        %v4220 = vsub.f32 %v4200, %v4212
        %v4221 = vsub.f32 %v4201, %v4213
        %v4222 = vsub.f32 %v4202, %v4214
        %v4223 = vsub.f32 %v4203, %v4215
        %v4224 = vsub.f32 %v4204, %v4216
        %v4225 = vpack.c.bf16 %v4218, %v4217
        %v4226 = vpack.c.bf16 %v4220, %v4219
        %v4227 = vpack.c.bf16 %v4222, %v4221
        %v4228 = vpack.c.bf16 %v4224, %v4223
        %4229 = vmatprep.subr.bf16.mxu0 0
        %4230 = vmatpush1.bf16.msra.mxu0 0
        %4231 = vmatprep.subr.bf16.mxu0 0
        %4232 = vmatpush1.bf16.msra.mxu0 0
        %4233 = vmatprep.subr.bf16.mxu0 0
        %4234 = vmatpush1.bf16.msra.mxu0 0
        %4235 = vmatprep.subr.bf16.mxu0 0
        %4236 = vmatpush1.bf16.msra.mxu0 0
        %4237 = vmatprep.subr.bf16.mxu0 0
        %4238 = vmatpush1.bf16.msra.mxu0 0
        %4239 = vmatprep.subr.bf16.mxu0 0
        %4240 = vmatpush1.bf16.msra.mxu0 0
        %4241 = vmatprep.subr.bf16.mxu0 0
        %4242 = vmatpush1.bf16.msra.mxu0 0
        %4243 = vmatprep.subr.bf16.mxu0 0
        %4244 = vmatpush1.bf16.msra.mxu0 %v4225
        %4245 = vmatprep.subr.bf16.mxu0 0
        %4246 = vmatpush2.bf16.msra.mxu0 0
        %4247 = vmatprep.subr.bf16.mxu0 0
        %4248 = vmatpush2.bf16.msra.mxu0 0
        %4249 = vmatprep.subr.bf16.mxu0 0
        %4250 = vmatpush2.bf16.msra.mxu0 0
        %4251 = vmatprep.subr.bf16.mxu0 0
        %4252 = vmatpush2.bf16.msra.mxu0 0
        %4253 = vmatprep.subr.bf16.mxu0 0
        %4254 = vmatpush2.bf16.msra.mxu0 0
        %4255 = vmatprep.subr.bf16.mxu0 0
        %4256 = vmatpush2.bf16.msra.mxu0 0
        %4257 = vmatprep.subr.bf16.mxu0 0
        %4258 = vmatpush2.bf16.msra.mxu0 0
        %4259 = vmatprep.subr.bf16.mxu0 0
        %4260 = vmatpush2.bf16.msra.mxu0 0
        %4261 = vmatprep.mubr.bf16.mxu0 0
        %4262 = vmatmul.mubr.bf16.gmra.mxu0 %v987
        %v4263 = vpop.f32.mrf.mxu0
        %v4264 = vadd.f32 0.0, %v4263
        %v4265 = vpop.f32.mrf.mxu0
        %v4266 = vpop.f32.mrf.mxu0
        %v4267 = vadd.f32 0.0, %v4266
        %v4268 = vpop.f32.mrf.mxu0
        %4269 = vdwg.mxu0
        %4270 = vmatprep.subr.bf16.mxu0 0
        %4271 = vmatpush1.bf16.msra.mxu0 0
        %4272 = vmatprep.subr.bf16.mxu0 0
        %4273 = vmatpush1.bf16.msra.mxu0 0
        %4274 = vmatprep.subr.bf16.mxu0 0
        %4275 = vmatpush1.bf16.msra.mxu0 0
        %4276 = vmatprep.subr.bf16.mxu0 0
        %4277 = vmatpush1.bf16.msra.mxu0 0
        %4278 = vmatprep.subr.bf16.mxu0 0
        %4279 = vmatpush1.bf16.msra.mxu0 0
        %4280 = vmatprep.subr.bf16.mxu0 0
        %4281 = vmatpush1.bf16.msra.mxu0 0
        %4282 = vmatprep.subr.bf16.mxu0 0
        %4283 = vmatpush1.bf16.msra.mxu0 0
        %4284 = vmatprep.subr.bf16.mxu0 0
        %4285 = vmatpush1.bf16.msra.mxu0 %v4226
        %4286 = vmatprep.subr.bf16.mxu0 0
        %4287 = vmatpush2.bf16.msra.mxu0 0
        %4288 = vmatprep.subr.bf16.mxu0 0
        %4289 = vmatpush2.bf16.msra.mxu0 0
        %4290 = vmatprep.subr.bf16.mxu0 0
        %4291 = vmatpush2.bf16.msra.mxu0 0
        %4292 = vmatprep.subr.bf16.mxu0 0
        %4293 = vmatpush2.bf16.msra.mxu0 0
        %4294 = vmatprep.subr.bf16.mxu0 0
        %4295 = vmatpush2.bf16.msra.mxu0 0
        %4296 = vmatprep.subr.bf16.mxu0 0
        %4297 = vmatpush2.bf16.msra.mxu0 0
        %4298 = vmatprep.subr.bf16.mxu0 0
        %4299 = vmatpush2.bf16.msra.mxu0 0
        %4300 = vmatprep.subr.bf16.mxu0 0
        %4301 = vmatpush2.bf16.msra.mxu0 0
        %4302 = vmatprep.mubr.bf16.mxu0 0
        %4303 = vmatmul.mubr.bf16.gmra.mxu0 %v987
        %v4304 = vpop.f32.mrf.mxu0
        %v4305 = vadd.f32 0.0, %v4304
        %v4306 = vpop.f32.mrf.mxu0
        %v4307 = vpop.f32.mrf.mxu0
        %v4308 = vadd.f32 0.0, %v4307
        %v4309 = vpop.f32.mrf.mxu0
        %4310 = vdwg.mxu0
        %4311 = vmatprep.subr.bf16.mxu0 0
        %4312 = vmatpush1.bf16.msra.mxu0 0
        %4313 = vmatprep.subr.bf16.mxu0 0
        %4314 = vmatpush1.bf16.msra.mxu0 0
        %4315 = vmatprep.subr.bf16.mxu0 0
        %4316 = vmatpush1.bf16.msra.mxu0 0
        %4317 = vmatprep.subr.bf16.mxu0 0
        %4318 = vmatpush1.bf16.msra.mxu0 0
        %4319 = vmatprep.subr.bf16.mxu0 0
        %4320 = vmatpush1.bf16.msra.mxu0 0
        %4321 = vmatprep.subr.bf16.mxu0 0
        %4322 = vmatpush1.bf16.msra.mxu0 0
        %4323 = vmatprep.subr.bf16.mxu0 0
        %4324 = vmatpush1.bf16.msra.mxu0 0
        %4325 = vmatprep.subr.bf16.mxu0 0
        %4326 = vmatpush1.bf16.msra.mxu0 %v4227
        %4327 = vmatprep.subr.bf16.mxu0 0
        %4328 = vmatpush2.bf16.msra.mxu0 0
        %4329 = vmatprep.subr.bf16.mxu0 0
        %4330 = vmatpush2.bf16.msra.mxu0 0
        %4331 = vmatprep.subr.bf16.mxu0 0
        %4332 = vmatpush2.bf16.msra.mxu0 0
        %4333 = vmatprep.subr.bf16.mxu0 0
        %4334 = vmatpush2.bf16.msra.mxu0 0
        %4335 = vmatprep.subr.bf16.mxu0 0
        %4336 = vmatpush2.bf16.msra.mxu0 0
        %4337 = vmatprep.subr.bf16.mxu0 0
        %4338 = vmatpush2.bf16.msra.mxu0 0
        %4339 = vmatprep.subr.bf16.mxu0 0
        %4340 = vmatpush2.bf16.msra.mxu0 0
        %4341 = vmatprep.subr.bf16.mxu0 0
        %4342 = vmatpush2.bf16.msra.mxu0 0
        %4343 = vmatprep.mubr.bf16.mxu0 0
        %4344 = vmatmul.mubr.bf16.gmra.mxu0 %v987
        %v4345 = vpop.f32.mrf.mxu0
        %v4346 = vadd.f32 0.0, %v4345
        %v4347 = vpop.f32.mrf.mxu0
        %v4348 = vpop.f32.mrf.mxu0
        %v4349 = vadd.f32 0.0, %v4348
        %v4350 = vpop.f32.mrf.mxu0
        %4351 = vdwg.mxu0
        %4352 = vmatprep.subr.bf16.mxu0 0
        %4353 = vmatpush1.bf16.msra.mxu0 0
        %4354 = vmatprep.subr.bf16.mxu0 0
        %4355 = vmatpush1.bf16.msra.mxu0 0
        %4356 = vmatprep.subr.bf16.mxu0 0
        %4357 = vmatpush1.bf16.msra.mxu0 0
        %4358 = vmatprep.subr.bf16.mxu0 0
        %4359 = vmatpush1.bf16.msra.mxu0 0
        %4360 = vmatprep.subr.bf16.mxu0 0
        %4361 = vmatpush1.bf16.msra.mxu0 0
        %4362 = vmatprep.subr.bf16.mxu0 0
        %4363 = vmatpush1.bf16.msra.mxu0 0
        %4364 = vmatprep.subr.bf16.mxu0 0
        %4365 = vmatpush1.bf16.msra.mxu0 0
        %4366 = vmatprep.subr.bf16.mxu0 0
        %4367 = vmatpush1.bf16.msra.mxu0 %v4228
        %4368 = vmatprep.subr.bf16.mxu0 0
        %4369 = vmatpush2.bf16.msra.mxu0 0
        %4370 = vmatprep.subr.bf16.mxu0 0
        %4371 = vmatpush2.bf16.msra.mxu0 0
        %4372 = vmatprep.subr.bf16.mxu0 0
        %4373 = vmatpush2.bf16.msra.mxu0 0
        %4374 = vmatprep.subr.bf16.mxu0 0
        %4375 = vmatpush2.bf16.msra.mxu0 0
        %4376 = vmatprep.subr.bf16.mxu0 0
        %4377 = vmatpush2.bf16.msra.mxu0 0
        %4378 = vmatprep.subr.bf16.mxu0 0
        %4379 = vmatpush2.bf16.msra.mxu0 0
        %4380 = vmatprep.subr.bf16.mxu0 0
        %4381 = vmatpush2.bf16.msra.mxu0 0
        %4382 = vmatprep.subr.bf16.mxu0 0
        %4383 = vmatpush2.bf16.msra.mxu0 0
        %4384 = vmatprep.mubr.bf16.mxu0 0
        %4385 = vmatmul.mubr.bf16.gmra.mxu0 %v987
        %v4386 = vpop.f32.mrf.mxu0
        %v4387 = vadd.f32 0.0, %v4386
        %v4388 = vpop.f32.mrf.mxu0
        %v4389 = vpop.f32.mrf.mxu0
        %v4390 = vadd.f32 0.0, %v4389
        %v4391 = vpop.f32.mrf.mxu0
        %4392 = vdwg.mxu0
        %4393 = vmatprep.subr.bf16.mxu0 0
        %4394 = vmatpush1.bf16.msra.mxu0 0
        %4395 = vmatprep.subr.bf16.mxu0 0
        %4396 = vmatpush1.bf16.msra.mxu0 0
        %4397 = vmatprep.subr.bf16.mxu0 0
        %4398 = vmatpush1.bf16.msra.mxu0 0
        %4399 = vmatprep.subr.bf16.mxu0 0
        %4400 = vmatpush1.bf16.msra.mxu0 0
        %4401 = vmatprep.subr.bf16.mxu0 0
        %4402 = vmatpush1.bf16.msra.mxu0 0
        %4403 = vmatprep.subr.bf16.mxu0 0
        %4404 = vmatpush1.bf16.msra.mxu0 0
        %4405 = vmatprep.subr.bf16.mxu0 0
        %4406 = vmatpush1.bf16.msra.mxu0 0
        %4407 = vmatprep.subr.bf16.mxu0 0
        %4408 = vmatpush1.bf16.msra.mxu0 %v4205
        %4409 = vmatprep.subr.bf16.mxu0 0
        %4410 = vmatpush2.bf16.msra.mxu0 0
        %4411 = vmatprep.subr.bf16.mxu0 0
        %4412 = vmatpush2.bf16.msra.mxu0 0
        %4413 = vmatprep.subr.bf16.mxu0 0
        %4414 = vmatpush2.bf16.msra.mxu0 0
        %4415 = vmatprep.subr.bf16.mxu0 0
        %4416 = vmatpush2.bf16.msra.mxu0 0
        %4417 = vmatprep.subr.bf16.mxu0 0
        %4418 = vmatpush2.bf16.msra.mxu0 0
        %4419 = vmatprep.subr.bf16.mxu0 0
        %4420 = vmatpush2.bf16.msra.mxu0 0
        %4421 = vmatprep.subr.bf16.mxu0 0
        %4422 = vmatpush2.bf16.msra.mxu0 0
        %4423 = vmatprep.subr.bf16.mxu0 0
        %4424 = vmatpush2.bf16.msra.mxu0 0
        %4425 = vmatprep.mubr.bf16.mxu0 0
        %4426 = vmatmul.mubr.bf16.gmra.mxu0 %v987
        %v4427 = vpop.f32.mrf.mxu0
        %v4428 = vadd.f32 %v4264, %v4427
        %v4429 = vpop.f32.mrf.mxu0
        %v4430 = vpop.f32.mrf.mxu0
        %v4431 = vadd.f32 %v4267, %v4430
        %v4432 = vpop.f32.mrf.mxu0
        %4433 = vdwg.mxu0
        %4434 = vmatprep.subr.bf16.mxu0 0
        %4435 = vmatpush1.bf16.msra.mxu0 0
        %4436 = vmatprep.subr.bf16.mxu0 0
        %4437 = vmatpush1.bf16.msra.mxu0 0
        %4438 = vmatprep.subr.bf16.mxu0 0
        %4439 = vmatpush1.bf16.msra.mxu0 0
        %4440 = vmatprep.subr.bf16.mxu0 0
        %4441 = vmatpush1.bf16.msra.mxu0 0
        %4442 = vmatprep.subr.bf16.mxu0 0
        %4443 = vmatpush1.bf16.msra.mxu0 0
        %4444 = vmatprep.subr.bf16.mxu0 0
        %4445 = vmatpush1.bf16.msra.mxu0 0
        %4446 = vmatprep.subr.bf16.mxu0 0
        %4447 = vmatpush1.bf16.msra.mxu0 0
        %4448 = vmatprep.subr.bf16.mxu0 0
        %4449 = vmatpush1.bf16.msra.mxu0 %v4206
        %4450 = vmatprep.subr.bf16.mxu0 0
        %4451 = vmatpush2.bf16.msra.mxu0 0
        %4452 = vmatprep.subr.bf16.mxu0 0
        %4453 = vmatpush2.bf16.msra.mxu0 0
        %4454 = vmatprep.subr.bf16.mxu0 0
        %4455 = vmatpush2.bf16.msra.mxu0 0
        %4456 = vmatprep.subr.bf16.mxu0 0
        %4457 = vmatpush2.bf16.msra.mxu0 0
        %4458 = vmatprep.subr.bf16.mxu0 0
        %4459 = vmatpush2.bf16.msra.mxu0 0
        %4460 = vmatprep.subr.bf16.mxu0 0
        %4461 = vmatpush2.bf16.msra.mxu0 0
        %4462 = vmatprep.subr.bf16.mxu0 0
        %4463 = vmatpush2.bf16.msra.mxu0 0
        %4464 = vmatprep.subr.bf16.mxu0 0
        %4465 = vmatpush2.bf16.msra.mxu0 0
        %4466 = vmatprep.mubr.bf16.mxu0 0
        %4467 = vmatmul.mubr.bf16.gmra.mxu0 %v987
        %v4468 = vpop.f32.mrf.mxu0
        %v4469 = vadd.f32 %v4305, %v4468
        %v4470 = vpop.f32.mrf.mxu0
        %v4471 = vpop.f32.mrf.mxu0
        %v4472 = vadd.f32 %v4308, %v4471
        %v4473 = vpop.f32.mrf.mxu0
        %4474 = vdwg.mxu0
        %4475 = vmatprep.subr.bf16.mxu0 0
        %4476 = vmatpush1.bf16.msra.mxu0 0
        %4477 = vmatprep.subr.bf16.mxu0 0
        %4478 = vmatpush1.bf16.msra.mxu0 0
        %4479 = vmatprep.subr.bf16.mxu0 0
        %4480 = vmatpush1.bf16.msra.mxu0 0
        %4481 = vmatprep.subr.bf16.mxu0 0
        %4482 = vmatpush1.bf16.msra.mxu0 0
        %4483 = vmatprep.subr.bf16.mxu0 0
        %4484 = vmatpush1.bf16.msra.mxu0 0
        %4485 = vmatprep.subr.bf16.mxu0 0
        %4486 = vmatpush1.bf16.msra.mxu0 0
        %4487 = vmatprep.subr.bf16.mxu0 0
        %4488 = vmatpush1.bf16.msra.mxu0 0
        %4489 = vmatprep.subr.bf16.mxu0 0
        %4490 = vmatpush1.bf16.msra.mxu0 %v4207
        %4491 = vmatprep.subr.bf16.mxu0 0
        %4492 = vmatpush2.bf16.msra.mxu0 0
        %4493 = vmatprep.subr.bf16.mxu0 0
        %4494 = vmatpush2.bf16.msra.mxu0 0
        %4495 = vmatprep.subr.bf16.mxu0 0
        %4496 = vmatpush2.bf16.msra.mxu0 0
        %4497 = vmatprep.subr.bf16.mxu0 0
        %4498 = vmatpush2.bf16.msra.mxu0 0
        %4499 = vmatprep.subr.bf16.mxu0 0
        %4500 = vmatpush2.bf16.msra.mxu0 0
        %4501 = vmatprep.subr.bf16.mxu0 0
        %4502 = vmatpush2.bf16.msra.mxu0 0
        %4503 = vmatprep.subr.bf16.mxu0 0
        %4504 = vmatpush2.bf16.msra.mxu0 0
        %4505 = vmatprep.subr.bf16.mxu0 0
        %4506 = vmatpush2.bf16.msra.mxu0 0
        %4507 = vmatprep.mubr.bf16.mxu0 0
        %4508 = vmatmul.mubr.bf16.gmra.mxu0 %v987
        %v4509 = vpop.f32.mrf.mxu0
        %v4510 = vadd.f32 %v4346, %v4509
        %v4511 = vpop.f32.mrf.mxu0
        %v4512 = vpop.f32.mrf.mxu0
        %v4513 = vadd.f32 %v4349, %v4512
        %v4514 = vpop.f32.mrf.mxu0
        %4515 = vdwg.mxu0
        %4516 = vmatprep.subr.bf16.mxu0 0
        %4517 = vmatpush1.bf16.msra.mxu0 0
        %4518 = vmatprep.subr.bf16.mxu0 0
        %4519 = vmatpush1.bf16.msra.mxu0 0
        %4520 = vmatprep.subr.bf16.mxu0 0
        %4521 = vmatpush1.bf16.msra.mxu0 0
        %4522 = vmatprep.subr.bf16.mxu0 0
        %4523 = vmatpush1.bf16.msra.mxu0 0
        %4524 = vmatprep.subr.bf16.mxu0 0
        %4525 = vmatpush1.bf16.msra.mxu0 0
        %4526 = vmatprep.subr.bf16.mxu0 0
        %4527 = vmatpush1.bf16.msra.mxu0 0
        %4528 = vmatprep.subr.bf16.mxu0 0
        %4529 = vmatpush1.bf16.msra.mxu0 0
        %4530 = vmatprep.subr.bf16.mxu0 0
        %4531 = vmatpush1.bf16.msra.mxu0 %v4208
        %4532 = vmatprep.subr.bf16.mxu0 0
        %4533 = vmatpush2.bf16.msra.mxu0 0
        %4534 = vmatprep.subr.bf16.mxu0 0
        %4535 = vmatpush2.bf16.msra.mxu0 0
        %4536 = vmatprep.subr.bf16.mxu0 0
        %4537 = vmatpush2.bf16.msra.mxu0 0
        %4538 = vmatprep.subr.bf16.mxu0 0
        %4539 = vmatpush2.bf16.msra.mxu0 0
        %4540 = vmatprep.subr.bf16.mxu0 0
        %4541 = vmatpush2.bf16.msra.mxu0 0
        %4542 = vmatprep.subr.bf16.mxu0 0
        %4543 = vmatpush2.bf16.msra.mxu0 0
        %4544 = vmatprep.subr.bf16.mxu0 0
        %4545 = vmatpush2.bf16.msra.mxu0 0
        %4546 = vmatprep.subr.bf16.mxu0 0
        %4547 = vmatpush2.bf16.msra.mxu0 0
        %4548 = vmatprep.mubr.bf16.mxu0 0
        %4549 = vmatmul.mubr.bf16.gmra.mxu0 %v987
        %v4550 = vpop.f32.mrf.mxu0
        %v4551 = vadd.f32 %v4387, %v4550
        %v4552 = vpop.f32.mrf.mxu0
        %v4553 = vpop.f32.mrf.mxu0
        %v4554 = vadd.f32 %v4390, %v4553
        %v4555 = vpop.f32.mrf.mxu0
        %4556 = vdwg.mxu0
        %4557 = vmatprep.subr.bf16.mxu0 0
        %4558 = vmatpush1.bf16.msra.mxu0 0
        %4559 = vmatprep.subr.bf16.mxu0 0
        %4560 = vmatpush1.bf16.msra.mxu0 0
        %4561 = vmatprep.subr.bf16.mxu0 0
        %4562 = vmatpush1.bf16.msra.mxu0 0
        %4563 = vmatprep.subr.bf16.mxu0 0
        %4564 = vmatpush1.bf16.msra.mxu0 0
        %4565 = vmatprep.subr.bf16.mxu0 0
        %4566 = vmatpush1.bf16.msra.mxu0 0
        %4567 = vmatprep.subr.bf16.mxu0 0
        %4568 = vmatpush1.bf16.msra.mxu0 0
        %4569 = vmatprep.subr.bf16.mxu0 0
        %4570 = vmatpush1.bf16.msra.mxu0 0
        %4571 = vmatprep.subr.bf16.mxu0 0
        %4572 = vmatpush1.bf16.msra.mxu0 %v4205
        %4573 = vmatprep.subr.bf16.mxu0 0
        %4574 = vmatpush2.bf16.msra.mxu0 0
        %4575 = vmatprep.subr.bf16.mxu0 0
        %4576 = vmatpush2.bf16.msra.mxu0 0
        %4577 = vmatprep.subr.bf16.mxu0 0
        %4578 = vmatpush2.bf16.msra.mxu0 0
        %4579 = vmatprep.subr.bf16.mxu0 0
        %4580 = vmatpush2.bf16.msra.mxu0 0
        %4581 = vmatprep.subr.bf16.mxu0 0
        %4582 = vmatpush2.bf16.msra.mxu0 0
        %4583 = vmatprep.subr.bf16.mxu0 0
        %4584 = vmatpush2.bf16.msra.mxu0 0
        %4585 = vmatprep.subr.bf16.mxu0 0
        %4586 = vmatpush2.bf16.msra.mxu0 0
        %4587 = vmatprep.subr.bf16.mxu0 0
        %4588 = vmatpush2.bf16.msra.mxu0 0
        %4589 = vmatprep.mubr.bf16.mxu0 0
        %4590 = vmatmul.mubr.bf16.gmra.mxu0 %v1323
        %v4591 = vpop.f32.mrf.mxu0
        %v4592 = vadd.f32 0.0, %v4591
        %v4593 = vpop.f32.mrf.mxu0
        %v4594 = vpop.f32.mrf.mxu0
        %v4595 = vadd.f32 0.0, %v4594
        %v4596 = vpop.f32.mrf.mxu0
        %4597 = vdwg.mxu0
        %4598 = vmatprep.subr.bf16.mxu0 0
        %4599 = vmatpush1.bf16.msra.mxu0 0
        %4600 = vmatprep.subr.bf16.mxu0 0
        %4601 = vmatpush1.bf16.msra.mxu0 0
        %4602 = vmatprep.subr.bf16.mxu0 0
        %4603 = vmatpush1.bf16.msra.mxu0 0
        %4604 = vmatprep.subr.bf16.mxu0 0
        %4605 = vmatpush1.bf16.msra.mxu0 0
        %4606 = vmatprep.subr.bf16.mxu0 0
        %4607 = vmatpush1.bf16.msra.mxu0 0
        %4608 = vmatprep.subr.bf16.mxu0 0
        %4609 = vmatpush1.bf16.msra.mxu0 0
        %4610 = vmatprep.subr.bf16.mxu0 0
        %4611 = vmatpush1.bf16.msra.mxu0 0
        %4612 = vmatprep.subr.bf16.mxu0 0
        %4613 = vmatpush1.bf16.msra.mxu0 %v4206
        %4614 = vmatprep.subr.bf16.mxu0 0
        %4615 = vmatpush2.bf16.msra.mxu0 0
        %4616 = vmatprep.subr.bf16.mxu0 0
        %4617 = vmatpush2.bf16.msra.mxu0 0
        %4618 = vmatprep.subr.bf16.mxu0 0
        %4619 = vmatpush2.bf16.msra.mxu0 0
        %4620 = vmatprep.subr.bf16.mxu0 0
        %4621 = vmatpush2.bf16.msra.mxu0 0
        %4622 = vmatprep.subr.bf16.mxu0 0
        %4623 = vmatpush2.bf16.msra.mxu0 0
        %4624 = vmatprep.subr.bf16.mxu0 0
        %4625 = vmatpush2.bf16.msra.mxu0 0
        %4626 = vmatprep.subr.bf16.mxu0 0
        %4627 = vmatpush2.bf16.msra.mxu0 0
        %4628 = vmatprep.subr.bf16.mxu0 0
        %4629 = vmatpush2.bf16.msra.mxu0 0
        %4630 = vmatprep.mubr.bf16.mxu0 0
        %4631 = vmatmul.mubr.bf16.gmra.mxu0 %v1323
        %v4632 = vpop.f32.mrf.mxu0
        %v4633 = vadd.f32 0.0, %v4632
        %v4634 = vpop.f32.mrf.mxu0
        %v4635 = vpop.f32.mrf.mxu0
        %v4636 = vadd.f32 0.0, %v4635
        %v4637 = vpop.f32.mrf.mxu0
        %4638 = vdwg.mxu0
        %4639 = vmatprep.subr.bf16.mxu0 0
        %4640 = vmatpush1.bf16.msra.mxu0 0
        %4641 = vmatprep.subr.bf16.mxu0 0
        %4642 = vmatpush1.bf16.msra.mxu0 0
        %4643 = vmatprep.subr.bf16.mxu0 0
        %4644 = vmatpush1.bf16.msra.mxu0 0
        %4645 = vmatprep.subr.bf16.mxu0 0
        %4646 = vmatpush1.bf16.msra.mxu0 0
        %4647 = vmatprep.subr.bf16.mxu0 0
        %4648 = vmatpush1.bf16.msra.mxu0 0
        %4649 = vmatprep.subr.bf16.mxu0 0
        %4650 = vmatpush1.bf16.msra.mxu0 0
        %4651 = vmatprep.subr.bf16.mxu0 0
        %4652 = vmatpush1.bf16.msra.mxu0 0
        %4653 = vmatprep.subr.bf16.mxu0 0
        %4654 = vmatpush1.bf16.msra.mxu0 %v4207
        %4655 = vmatprep.subr.bf16.mxu0 0
        %4656 = vmatpush2.bf16.msra.mxu0 0
        %4657 = vmatprep.subr.bf16.mxu0 0
        %4658 = vmatpush2.bf16.msra.mxu0 0
        %4659 = vmatprep.subr.bf16.mxu0 0
        %4660 = vmatpush2.bf16.msra.mxu0 0
        %4661 = vmatprep.subr.bf16.mxu0 0
        %4662 = vmatpush2.bf16.msra.mxu0 0
        %4663 = vmatprep.subr.bf16.mxu0 0
        %4664 = vmatpush2.bf16.msra.mxu0 0
        %4665 = vmatprep.subr.bf16.mxu0 0
        %4666 = vmatpush2.bf16.msra.mxu0 0
        %4667 = vmatprep.subr.bf16.mxu0 0
        %4668 = vmatpush2.bf16.msra.mxu0 0
        %4669 = vmatprep.subr.bf16.mxu0 0
        %4670 = vmatpush2.bf16.msra.mxu0 0
        %4671 = vmatprep.mubr.bf16.mxu0 0
        %4672 = vmatmul.mubr.bf16.gmra.mxu0 %v1323
        %v4673 = vpop.f32.mrf.mxu0
        %v4674 = vadd.f32 0.0, %v4673
        %v4675 = vpop.f32.mrf.mxu0
        %v4676 = vpop.f32.mrf.mxu0
        %v4677 = vadd.f32 0.0, %v4676
        %v4678 = vpop.f32.mrf.mxu0
        %4679 = vdwg.mxu0
        %4680 = vmatprep.subr.bf16.mxu0 0
        %4681 = vmatpush1.bf16.msra.mxu0 0
        %4682 = vmatprep.subr.bf16.mxu0 0
        %4683 = vmatpush1.bf16.msra.mxu0 0
        %4684 = vmatprep.subr.bf16.mxu0 0
        %4685 = vmatpush1.bf16.msra.mxu0 0
        %4686 = vmatprep.subr.bf16.mxu0 0
        %4687 = vmatpush1.bf16.msra.mxu0 0
        %4688 = vmatprep.subr.bf16.mxu0 0
        %4689 = vmatpush1.bf16.msra.mxu0 0
        %4690 = vmatprep.subr.bf16.mxu0 0
        %4691 = vmatpush1.bf16.msra.mxu0 0
        %4692 = vmatprep.subr.bf16.mxu0 0
        %4693 = vmatpush1.bf16.msra.mxu0 0
        %4694 = vmatprep.subr.bf16.mxu0 0
        %4695 = vmatpush1.bf16.msra.mxu0 %v4208
        %4696 = vmatprep.subr.bf16.mxu0 0
        %4697 = vmatpush2.bf16.msra.mxu0 0
        %4698 = vmatprep.subr.bf16.mxu0 0
        %4699 = vmatpush2.bf16.msra.mxu0 0
        %4700 = vmatprep.subr.bf16.mxu0 0
        %4701 = vmatpush2.bf16.msra.mxu0 0
        %4702 = vmatprep.subr.bf16.mxu0 0
        %4703 = vmatpush2.bf16.msra.mxu0 0
        %4704 = vmatprep.subr.bf16.mxu0 0
        %4705 = vmatpush2.bf16.msra.mxu0 0
        %4706 = vmatprep.subr.bf16.mxu0 0
        %4707 = vmatpush2.bf16.msra.mxu0 0
        %4708 = vmatprep.subr.bf16.mxu0 0
        %4709 = vmatpush2.bf16.msra.mxu0 0
        %4710 = vmatprep.subr.bf16.mxu0 0
        %4711 = vmatpush2.bf16.msra.mxu0 0
        %4712 = vmatprep.mubr.bf16.mxu0 0
        %4713 = vmatmul.mubr.bf16.gmra.mxu0 %v1323
        %v4714 = vpop.f32.mrf.mxu0
        %v4715 = vadd.f32 0.0, %v4714
        %v4716 = vpop.f32.mrf.mxu0
        %v4717 = vpop.f32.mrf.mxu0
        %v4718 = vadd.f32 0.0, %v4717
        %v4719 = vpop.f32.mrf.mxu0
        %4720 = vdwg.mxu0
        %v4721 = vadd.f32 %v4428, %v4592
        %v4722 = vadd.f32 %v4431, %v4595
        %v4723 = vadd.f32 %v4469, %v4633
        %v4724 = vadd.f32 %v4472, %v4636
        %v4725 = vadd.f32 %v4510, %v4674
        %v4726 = vadd.f32 %v4513, %v4677
        %v4727 = vadd.f32 %v4551, %v4715
        %v4728 = vadd.f32 %v4554, %v4718
        %v4729 = vmul.f32 %v364, %v380
        %v4730 = vmul.f32 %v365, %v381
        %v4731 = vmul.f32 %v366, %v382
        %v4732 = vmul.f32 %v367, %v383
        %v4733 = vmul.f32 %v368, %v384
        %v4734 = vmul.f32 %v369, %v385
        %v4735 = vmul.f32 %v370, %v386
        %v4736 = vmul.f32 %v371, %v387
        %v4737 = vpack.c.bf16 %v4730, %v4729
        %v4738 = vpack.c.bf16 %v4732, %v4731
        %v4739 = vpack.c.bf16 %v4734, %v4733
        %v4740 = vpack.c.bf16 %v4736, %v4735
        %v4741 = vunpack.c.l.bf16 %v4737
        %v4742 = vunpack.c.h.bf16 %v4737
        %v4743 = vunpack.c.l.bf16 %v4738
        %v4744 = vunpack.c.h.bf16 %v4738
        %v4745 = vunpack.c.l.bf16 %v4739
        %v4746 = vunpack.c.h.bf16 %v4739
        %v4747 = vunpack.c.l.bf16 %v4740
        %v4748 = vunpack.c.h.bf16 %v4740
        %v4749 = vsub.f32 %v4729, %v4741
        %v4750 = vsub.f32 %v4730, %v4742
        %v4751 = vsub.f32 %v4731, %v4743
        %v4752 = vsub.f32 %v4732, %v4744
        %v4753 = vsub.f32 %v4733, %v4745
        %v4754 = vsub.f32 %v4734, %v4746
        %v4755 = vsub.f32 %v4735, %v4747
        %v4756 = vsub.f32 %v4736, %v4748
        %v4757 = vpack.c.bf16 %v4750, %v4749
        %v4758 = vpack.c.bf16 %v4752, %v4751
        %v4759 = vpack.c.bf16 %v4754, %v4753
        %v4760 = vpack.c.bf16 %v4756, %v4755
        %v4762 = vsel %vm426, %v4757, 0
        %4764 = vmatprep.subr.bf16.mxu0 0
        %4765 = vmatpush1.bf16.msra.mxu0 0
        %4766 = vmatprep.subr.bf16.mxu0 0
        %4767 = vmatpush1.bf16.msra.mxu0 0
        %4768 = vmatprep.subr.bf16.mxu0 0
        %4769 = vmatpush1.bf16.msra.mxu0 0
        %4770 = vmatprep.subr.bf16.mxu0 0
        %4771 = vmatpush1.bf16.msra.mxu0 0
        %4772 = vmatprep.subr.bf16.mxu0 0
        %4773 = vmatpush1.bf16.msra.mxu0 0
        %4774 = vmatprep.subr.bf16.mxu0 0
        %4775 = vmatpush1.bf16.msra.mxu0 0
        %4776 = vmatprep.subr.bf16.mxu0 0
        %4777 = vmatpush1.bf16.msra.mxu0 0
        %4778 = vmatprep.subr.bf16.mxu0 0
        %4779 = vmatpush1.bf16.msra.mxu0 %v424
        %4780 = vmatprep.subr.bf16.mxu0 0
        %4781 = vmatpush2.bf16.msra.mxu0 0
        %4782 = vmatprep.subr.bf16.mxu0 0
        %4783 = vmatpush2.bf16.msra.mxu0 0
        %4784 = vmatprep.subr.bf16.mxu0 0
        %4785 = vmatpush2.bf16.msra.mxu0 0
        %4786 = vmatprep.subr.bf16.mxu0 0
        %4787 = vmatpush2.bf16.msra.mxu0 0
        %4788 = vmatprep.subr.bf16.mxu0 0
        %4789 = vmatpush2.bf16.msra.mxu0 0
        %4790 = vmatprep.subr.bf16.mxu0 0
        %4791 = vmatpush2.bf16.msra.mxu0 0
        %4792 = vmatprep.subr.bf16.mxu0 0
        %4793 = vmatpush2.bf16.msra.mxu0 0
        %4794 = vmatprep.subr.bf16.mxu0 0
        %4795 = vmatpush2.bf16.msra.mxu0 0
        %4796 = vmatprep.mubr.bf16.mxu0 0
        %4797 = vmatmul.mubr.bf16.gmra.mxu0 %v4762
        %v4798 = vpop.f32.mrf.mxu0
        %v4799 = vadd.f32 0.0, %v4798
        %v4800 = vpop.f32.mrf.mxu0
        %v4801 = vpop.f32.mrf.mxu0
        %v4802 = vadd.f32 0.0, %v4801
        %v4803 = vpop.f32.mrf.mxu0
        %4804 = vdwg.mxu0
        %v4806 = vsel %vm426, %v4758, 0
        %4808 = vmatprep.subr.bf16.mxu0 0
        %4809 = vmatpush1.bf16.msra.mxu0 0
        %4810 = vmatprep.subr.bf16.mxu0 0
        %4811 = vmatpush1.bf16.msra.mxu0 0
        %4812 = vmatprep.subr.bf16.mxu0 0
        %4813 = vmatpush1.bf16.msra.mxu0 0
        %4814 = vmatprep.subr.bf16.mxu0 0
        %4815 = vmatpush1.bf16.msra.mxu0 0
        %4816 = vmatprep.subr.bf16.mxu0 0
        %4817 = vmatpush1.bf16.msra.mxu0 0
        %4818 = vmatprep.subr.bf16.mxu0 0
        %4819 = vmatpush1.bf16.msra.mxu0 0
        %4820 = vmatprep.subr.bf16.mxu0 0
        %4821 = vmatpush1.bf16.msra.mxu0 0
        %4822 = vmatprep.subr.bf16.mxu0 0
        %4823 = vmatpush1.bf16.msra.mxu0 %v424
        %4824 = vmatprep.subr.bf16.mxu0 0
        %4825 = vmatpush2.bf16.msra.mxu0 0
        %4826 = vmatprep.subr.bf16.mxu0 0
        %4827 = vmatpush2.bf16.msra.mxu0 0
        %4828 = vmatprep.subr.bf16.mxu0 0
        %4829 = vmatpush2.bf16.msra.mxu0 0
        %4830 = vmatprep.subr.bf16.mxu0 0
        %4831 = vmatpush2.bf16.msra.mxu0 0
        %4832 = vmatprep.subr.bf16.mxu0 0
        %4833 = vmatpush2.bf16.msra.mxu0 0
        %4834 = vmatprep.subr.bf16.mxu0 0
        %4835 = vmatpush2.bf16.msra.mxu0 0
        %4836 = vmatprep.subr.bf16.mxu0 0
        %4837 = vmatpush2.bf16.msra.mxu0 0
        %4838 = vmatprep.subr.bf16.mxu0 0
        %4839 = vmatpush2.bf16.msra.mxu0 0
        %4840 = vmatprep.mubr.bf16.mxu0 0
        %4841 = vmatmul.mubr.bf16.gmra.mxu0 %v4806
        %v4842 = vpop.f32.mrf.mxu0
        %v4843 = vadd.f32 0.0, %v4842
        %v4844 = vpop.f32.mrf.mxu0
        %v4845 = vpop.f32.mrf.mxu0
        %v4846 = vadd.f32 0.0, %v4845
        %v4847 = vpop.f32.mrf.mxu0
        %4848 = vdwg.mxu0
        %v4850 = vsel %vm426, %v4759, 0
        %4852 = vmatprep.subr.bf16.mxu0 0
        %4853 = vmatpush1.bf16.msra.mxu0 0
        %4854 = vmatprep.subr.bf16.mxu0 0
        %4855 = vmatpush1.bf16.msra.mxu0 0
        %4856 = vmatprep.subr.bf16.mxu0 0
        %4857 = vmatpush1.bf16.msra.mxu0 0
        %4858 = vmatprep.subr.bf16.mxu0 0
        %4859 = vmatpush1.bf16.msra.mxu0 0
        %4860 = vmatprep.subr.bf16.mxu0 0
        %4861 = vmatpush1.bf16.msra.mxu0 0
        %4862 = vmatprep.subr.bf16.mxu0 0
        %4863 = vmatpush1.bf16.msra.mxu0 0
        %4864 = vmatprep.subr.bf16.mxu0 0
        %4865 = vmatpush1.bf16.msra.mxu0 0
        %4866 = vmatprep.subr.bf16.mxu0 0
        %4867 = vmatpush1.bf16.msra.mxu0 %v424
        %4868 = vmatprep.subr.bf16.mxu0 0
        %4869 = vmatpush2.bf16.msra.mxu0 0
        %4870 = vmatprep.subr.bf16.mxu0 0
        %4871 = vmatpush2.bf16.msra.mxu0 0
        %4872 = vmatprep.subr.bf16.mxu0 0
        %4873 = vmatpush2.bf16.msra.mxu0 0
        %4874 = vmatprep.subr.bf16.mxu0 0
        %4875 = vmatpush2.bf16.msra.mxu0 0
        %4876 = vmatprep.subr.bf16.mxu0 0
        %4877 = vmatpush2.bf16.msra.mxu0 0
        %4878 = vmatprep.subr.bf16.mxu0 0
        %4879 = vmatpush2.bf16.msra.mxu0 0
        %4880 = vmatprep.subr.bf16.mxu0 0
        %4881 = vmatpush2.bf16.msra.mxu0 0
        %4882 = vmatprep.subr.bf16.mxu0 0
        %4883 = vmatpush2.bf16.msra.mxu0 0
        %4884 = vmatprep.mubr.bf16.mxu0 0
        %4885 = vmatmul.mubr.bf16.gmra.mxu0 %v4850
        %v4886 = vpop.f32.mrf.mxu0
        %v4887 = vadd.f32 0.0, %v4886
        %v4888 = vpop.f32.mrf.mxu0
        %v4889 = vpop.f32.mrf.mxu0
        %v4890 = vadd.f32 0.0, %v4889
        %v4891 = vpop.f32.mrf.mxu0
        %4892 = vdwg.mxu0
        %v4894 = vsel %vm426, %v4760, 0
        %4896 = vmatprep.subr.bf16.mxu0 0
        %4897 = vmatpush1.bf16.msra.mxu0 0
        %4898 = vmatprep.subr.bf16.mxu0 0
        %4899 = vmatpush1.bf16.msra.mxu0 0
        %4900 = vmatprep.subr.bf16.mxu0 0
        %4901 = vmatpush1.bf16.msra.mxu0 0
        %4902 = vmatprep.subr.bf16.mxu0 0
        %4903 = vmatpush1.bf16.msra.mxu0 0
        %4904 = vmatprep.subr.bf16.mxu0 0
        %4905 = vmatpush1.bf16.msra.mxu0 0
        %4906 = vmatprep.subr.bf16.mxu0 0
        %4907 = vmatpush1.bf16.msra.mxu0 0
        %4908 = vmatprep.subr.bf16.mxu0 0
        %4909 = vmatpush1.bf16.msra.mxu0 0
        %4910 = vmatprep.subr.bf16.mxu0 0
        %4911 = vmatpush1.bf16.msra.mxu0 %v424
        %4912 = vmatprep.subr.bf16.mxu0 0
        %4913 = vmatpush2.bf16.msra.mxu0 0
        %4914 = vmatprep.subr.bf16.mxu0 0
        %4915 = vmatpush2.bf16.msra.mxu0 0
        %4916 = vmatprep.subr.bf16.mxu0 0
        %4917 = vmatpush2.bf16.msra.mxu0 0
        %4918 = vmatprep.subr.bf16.mxu0 0
        %4919 = vmatpush2.bf16.msra.mxu0 0
        %4920 = vmatprep.subr.bf16.mxu0 0
        %4921 = vmatpush2.bf16.msra.mxu0 0
        %4922 = vmatprep.subr.bf16.mxu0 0
        %4923 = vmatpush2.bf16.msra.mxu0 0
        %4924 = vmatprep.subr.bf16.mxu0 0
        %4925 = vmatpush2.bf16.msra.mxu0 0
        %4926 = vmatprep.subr.bf16.mxu0 0
        %4927 = vmatpush2.bf16.msra.mxu0 0
        %4928 = vmatprep.mubr.bf16.mxu0 0
        %4929 = vmatmul.mubr.bf16.gmra.mxu0 %v4894
        %v4930 = vpop.f32.mrf.mxu0
        %v4931 = vadd.f32 0.0, %v4930
        %v4932 = vpop.f32.mrf.mxu0
        %v4933 = vpop.f32.mrf.mxu0
        %v4934 = vadd.f32 0.0, %v4933
        %v4935 = vpop.f32.mrf.mxu0
        %4936 = vdwg.mxu0
        %v4938 = vsel %vm426, %v4737, 0
        %4940 = vmatprep.subr.bf16.mxu0 0
        %4941 = vmatpush1.bf16.msra.mxu0 0
        %4942 = vmatprep.subr.bf16.mxu0 0
        %4943 = vmatpush1.bf16.msra.mxu0 0
        %4944 = vmatprep.subr.bf16.mxu0 0
        %4945 = vmatpush1.bf16.msra.mxu0 0
        %4946 = vmatprep.subr.bf16.mxu0 0
        %4947 = vmatpush1.bf16.msra.mxu0 0
        %4948 = vmatprep.subr.bf16.mxu0 0
        %4949 = vmatpush1.bf16.msra.mxu0 0
        %4950 = vmatprep.subr.bf16.mxu0 0
        %4951 = vmatpush1.bf16.msra.mxu0 0
        %4952 = vmatprep.subr.bf16.mxu0 0
        %4953 = vmatpush1.bf16.msra.mxu0 0
        %4954 = vmatprep.subr.bf16.mxu0 0
        %4955 = vmatpush1.bf16.msra.mxu0 %v424
        %4956 = vmatprep.subr.bf16.mxu0 0
        %4957 = vmatpush2.bf16.msra.mxu0 0
        %4958 = vmatprep.subr.bf16.mxu0 0
        %4959 = vmatpush2.bf16.msra.mxu0 0
        %4960 = vmatprep.subr.bf16.mxu0 0
        %4961 = vmatpush2.bf16.msra.mxu0 0
        %4962 = vmatprep.subr.bf16.mxu0 0
        %4963 = vmatpush2.bf16.msra.mxu0 0
        %4964 = vmatprep.subr.bf16.mxu0 0
        %4965 = vmatpush2.bf16.msra.mxu0 0
        %4966 = vmatprep.subr.bf16.mxu0 0
        %4967 = vmatpush2.bf16.msra.mxu0 0
        %4968 = vmatprep.subr.bf16.mxu0 0
        %4969 = vmatpush2.bf16.msra.mxu0 0
        %4970 = vmatprep.subr.bf16.mxu0 0
        %4971 = vmatpush2.bf16.msra.mxu0 0
        %4972 = vmatprep.mubr.bf16.mxu0 0
        %4973 = vmatmul.mubr.bf16.gmra.mxu0 %v4938
        %v4974 = vpop.f32.mrf.mxu0
        %v4975 = vadd.f32 %v4799, %v4974
        %v4976 = vpop.f32.mrf.mxu0
        %v4977 = vpop.f32.mrf.mxu0
        %v4978 = vadd.f32 %v4802, %v4977
        %v4979 = vpop.f32.mrf.mxu0
        %4980 = vdwg.mxu0
        %v4982 = vsel %vm426, %v4738, 0
        %4984 = vmatprep.subr.bf16.mxu0 0
        %4985 = vmatpush1.bf16.msra.mxu0 0
        %4986 = vmatprep.subr.bf16.mxu0 0
        %4987 = vmatpush1.bf16.msra.mxu0 0
        %4988 = vmatprep.subr.bf16.mxu0 0
        %4989 = vmatpush1.bf16.msra.mxu0 0
        %4990 = vmatprep.subr.bf16.mxu0 0
        %4991 = vmatpush1.bf16.msra.mxu0 0
        %4992 = vmatprep.subr.bf16.mxu0 0
        %4993 = vmatpush1.bf16.msra.mxu0 0
        %4994 = vmatprep.subr.bf16.mxu0 0
        %4995 = vmatpush1.bf16.msra.mxu0 0
        %4996 = vmatprep.subr.bf16.mxu0 0
        %4997 = vmatpush1.bf16.msra.mxu0 0
        %4998 = vmatprep.subr.bf16.mxu0 0
        %4999 = vmatpush1.bf16.msra.mxu0 %v424
        %5000 = vmatprep.subr.bf16.mxu0 0
        %5001 = vmatpush2.bf16.msra.mxu0 0
        %5002 = vmatprep.subr.bf16.mxu0 0
        %5003 = vmatpush2.bf16.msra.mxu0 0
        %5004 = vmatprep.subr.bf16.mxu0 0
        %5005 = vmatpush2.bf16.msra.mxu0 0
        %5006 = vmatprep.subr.bf16.mxu0 0
        %5007 = vmatpush2.bf16.msra.mxu0 0
        %5008 = vmatprep.subr.bf16.mxu0 0
        %5009 = vmatpush2.bf16.msra.mxu0 0
        %5010 = vmatprep.subr.bf16.mxu0 0
        %5011 = vmatpush2.bf16.msra.mxu0 0
        %5012 = vmatprep.subr.bf16.mxu0 0
        %5013 = vmatpush2.bf16.msra.mxu0 0
        %5014 = vmatprep.subr.bf16.mxu0 0
        %5015 = vmatpush2.bf16.msra.mxu0 0
        %5016 = vmatprep.mubr.bf16.mxu0 0
        %5017 = vmatmul.mubr.bf16.gmra.mxu0 %v4982
        %v5018 = vpop.f32.mrf.mxu0
        %v5019 = vadd.f32 %v4843, %v5018
        %v5020 = vpop.f32.mrf.mxu0
        %v5021 = vpop.f32.mrf.mxu0
        %v5022 = vadd.f32 %v4846, %v5021
        %v5023 = vpop.f32.mrf.mxu0
        %5024 = vdwg.mxu0
        %v5026 = vsel %vm426, %v4739, 0
        %5028 = vmatprep.subr.bf16.mxu0 0
        %5029 = vmatpush1.bf16.msra.mxu0 0
        %5030 = vmatprep.subr.bf16.mxu0 0
        %5031 = vmatpush1.bf16.msra.mxu0 0
        %5032 = vmatprep.subr.bf16.mxu0 0
        %5033 = vmatpush1.bf16.msra.mxu0 0
        %5034 = vmatprep.subr.bf16.mxu0 0
        %5035 = vmatpush1.bf16.msra.mxu0 0
        %5036 = vmatprep.subr.bf16.mxu0 0
        %5037 = vmatpush1.bf16.msra.mxu0 0
        %5038 = vmatprep.subr.bf16.mxu0 0
        %5039 = vmatpush1.bf16.msra.mxu0 0
        %5040 = vmatprep.subr.bf16.mxu0 0
        %5041 = vmatpush1.bf16.msra.mxu0 0
        %5042 = vmatprep.subr.bf16.mxu0 0
        %5043 = vmatpush1.bf16.msra.mxu0 %v424
        %5044 = vmatprep.subr.bf16.mxu0 0
        %5045 = vmatpush2.bf16.msra.mxu0 0
        %5046 = vmatprep.subr.bf16.mxu0 0
        %5047 = vmatpush2.bf16.msra.mxu0 0
        %5048 = vmatprep.subr.bf16.mxu0 0
        %5049 = vmatpush2.bf16.msra.mxu0 0
        %5050 = vmatprep.subr.bf16.mxu0 0
        %5051 = vmatpush2.bf16.msra.mxu0 0
        %5052 = vmatprep.subr.bf16.mxu0 0
        %5053 = vmatpush2.bf16.msra.mxu0 0
        %5054 = vmatprep.subr.bf16.mxu0 0
        %5055 = vmatpush2.bf16.msra.mxu0 0
        %5056 = vmatprep.subr.bf16.mxu0 0
        %5057 = vmatpush2.bf16.msra.mxu0 0
        %5058 = vmatprep.subr.bf16.mxu0 0
        %5059 = vmatpush2.bf16.msra.mxu0 0
        %5060 = vmatprep.mubr.bf16.mxu0 0
        %5061 = vmatmul.mubr.bf16.gmra.mxu0 %v5026
        %v5062 = vpop.f32.mrf.mxu0
        %v5063 = vadd.f32 %v4887, %v5062
        %v5064 = vpop.f32.mrf.mxu0
        %v5065 = vpop.f32.mrf.mxu0
        %v5066 = vadd.f32 %v4890, %v5065
        %v5067 = vpop.f32.mrf.mxu0
        %5068 = vdwg.mxu0
        %v5070 = vsel %vm426, %v4740, 0
        %5072 = vmatprep.subr.bf16.mxu0 0
        %5073 = vmatpush1.bf16.msra.mxu0 0
        %5074 = vmatprep.subr.bf16.mxu0 0
        %5075 = vmatpush1.bf16.msra.mxu0 0
        %5076 = vmatprep.subr.bf16.mxu0 0
        %5077 = vmatpush1.bf16.msra.mxu0 0
        %5078 = vmatprep.subr.bf16.mxu0 0
        %5079 = vmatpush1.bf16.msra.mxu0 0
        %5080 = vmatprep.subr.bf16.mxu0 0
        %5081 = vmatpush1.bf16.msra.mxu0 0
        %5082 = vmatprep.subr.bf16.mxu0 0
        %5083 = vmatpush1.bf16.msra.mxu0 0
        %5084 = vmatprep.subr.bf16.mxu0 0
        %5085 = vmatpush1.bf16.msra.mxu0 0
        %5086 = vmatprep.subr.bf16.mxu0 0
        %5087 = vmatpush1.bf16.msra.mxu0 %v424
        %5088 = vmatprep.subr.bf16.mxu0 0
        %5089 = vmatpush2.bf16.msra.mxu0 0
        %5090 = vmatprep.subr.bf16.mxu0 0
        %5091 = vmatpush2.bf16.msra.mxu0 0
        %5092 = vmatprep.subr.bf16.mxu0 0
        %5093 = vmatpush2.bf16.msra.mxu0 0
        %5094 = vmatprep.subr.bf16.mxu0 0
        %5095 = vmatpush2.bf16.msra.mxu0 0
        %5096 = vmatprep.subr.bf16.mxu0 0
        %5097 = vmatpush2.bf16.msra.mxu0 0
        %5098 = vmatprep.subr.bf16.mxu0 0
        %5099 = vmatpush2.bf16.msra.mxu0 0
        %5100 = vmatprep.subr.bf16.mxu0 0
        %5101 = vmatpush2.bf16.msra.mxu0 0
        %5102 = vmatprep.subr.bf16.mxu0 0
        %5103 = vmatpush2.bf16.msra.mxu0 0
        %5104 = vmatprep.mubr.bf16.mxu0 0
        %5105 = vmatmul.mubr.bf16.gmra.mxu0 %v5070
        %v5106 = vpop.f32.mrf.mxu0
        %v5107 = vadd.f32 %v4931, %v5106
        %v5108 = vpop.f32.mrf.mxu0
        %v5109 = vpop.f32.mrf.mxu0
        %v5110 = vadd.f32 %v4934, %v5109
        %v5111 = vpop.f32.mrf.mxu0
        %5112 = vdwg.mxu0
        %5113 = vmatprep.subr.bf16.mxu0 0
        %5114 = vmatpush1.bf16.msra.mxu0 0
        %5115 = vmatprep.subr.bf16.mxu0 0
        %5116 = vmatpush1.bf16.msra.mxu0 0
        %5117 = vmatprep.subr.bf16.mxu0 0
        %5118 = vmatpush1.bf16.msra.mxu0 0
        %5119 = vmatprep.subr.bf16.mxu0 0
        %5120 = vmatpush1.bf16.msra.mxu0 0
        %5121 = vmatprep.subr.bf16.mxu0 0
        %5122 = vmatpush1.bf16.msra.mxu0 0
        %5123 = vmatprep.subr.bf16.mxu0 0
        %5124 = vmatpush1.bf16.msra.mxu0 0
        %5125 = vmatprep.subr.bf16.mxu0 0
        %5126 = vmatpush1.bf16.msra.mxu0 0
        %5127 = vmatprep.subr.bf16.mxu0 0
        %5128 = vmatpush1.bf16.msra.mxu0 %v783
        %5129 = vmatprep.subr.bf16.mxu0 0
        %5130 = vmatpush2.bf16.msra.mxu0 0
        %5131 = vmatprep.subr.bf16.mxu0 0
        %5132 = vmatpush2.bf16.msra.mxu0 0
        %5133 = vmatprep.subr.bf16.mxu0 0
        %5134 = vmatpush2.bf16.msra.mxu0 0
        %5135 = vmatprep.subr.bf16.mxu0 0
        %5136 = vmatpush2.bf16.msra.mxu0 0
        %5137 = vmatprep.subr.bf16.mxu0 0
        %5138 = vmatpush2.bf16.msra.mxu0 0
        %5139 = vmatprep.subr.bf16.mxu0 0
        %5140 = vmatpush2.bf16.msra.mxu0 0
        %5141 = vmatprep.subr.bf16.mxu0 0
        %5142 = vmatpush2.bf16.msra.mxu0 0
        %5143 = vmatprep.subr.bf16.mxu0 0
        %5144 = vmatpush2.bf16.msra.mxu0 0
        %5145 = vmatprep.mubr.bf16.mxu0 0
        %5146 = vmatmul.mubr.bf16.gmra.mxu0 %v4938
        %v5147 = vpop.f32.mrf.mxu0
        %v5148 = vadd.f32 0.0, %v5147
        %v5149 = vpop.f32.mrf.mxu0
        %v5150 = vpop.f32.mrf.mxu0
        %v5151 = vadd.f32 0.0, %v5150
        %v5152 = vpop.f32.mrf.mxu0
        %5153 = vdwg.mxu0
        %5154 = vmatprep.subr.bf16.mxu0 0
        %5155 = vmatpush1.bf16.msra.mxu0 0
        %5156 = vmatprep.subr.bf16.mxu0 0
        %5157 = vmatpush1.bf16.msra.mxu0 0
        %5158 = vmatprep.subr.bf16.mxu0 0
        %5159 = vmatpush1.bf16.msra.mxu0 0
        %5160 = vmatprep.subr.bf16.mxu0 0
        %5161 = vmatpush1.bf16.msra.mxu0 0
        %5162 = vmatprep.subr.bf16.mxu0 0
        %5163 = vmatpush1.bf16.msra.mxu0 0
        %5164 = vmatprep.subr.bf16.mxu0 0
        %5165 = vmatpush1.bf16.msra.mxu0 0
        %5166 = vmatprep.subr.bf16.mxu0 0
        %5167 = vmatpush1.bf16.msra.mxu0 0
        %5168 = vmatprep.subr.bf16.mxu0 0
        %5169 = vmatpush1.bf16.msra.mxu0 %v783
        %5170 = vmatprep.subr.bf16.mxu0 0
        %5171 = vmatpush2.bf16.msra.mxu0 0
        %5172 = vmatprep.subr.bf16.mxu0 0
        %5173 = vmatpush2.bf16.msra.mxu0 0
        %5174 = vmatprep.subr.bf16.mxu0 0
        %5175 = vmatpush2.bf16.msra.mxu0 0
        %5176 = vmatprep.subr.bf16.mxu0 0
        %5177 = vmatpush2.bf16.msra.mxu0 0
        %5178 = vmatprep.subr.bf16.mxu0 0
        %5179 = vmatpush2.bf16.msra.mxu0 0
        %5180 = vmatprep.subr.bf16.mxu0 0
        %5181 = vmatpush2.bf16.msra.mxu0 0
        %5182 = vmatprep.subr.bf16.mxu0 0
        %5183 = vmatpush2.bf16.msra.mxu0 0
        %5184 = vmatprep.subr.bf16.mxu0 0
        %5185 = vmatpush2.bf16.msra.mxu0 0
        %5186 = vmatprep.mubr.bf16.mxu0 0
        %5187 = vmatmul.mubr.bf16.gmra.mxu0 %v4982
        %v5188 = vpop.f32.mrf.mxu0
        %v5189 = vadd.f32 0.0, %v5188
        %v5190 = vpop.f32.mrf.mxu0
        %v5191 = vpop.f32.mrf.mxu0
        %v5192 = vadd.f32 0.0, %v5191
        %v5193 = vpop.f32.mrf.mxu0
        %5194 = vdwg.mxu0
        %5195 = vmatprep.subr.bf16.mxu0 0
        %5196 = vmatpush1.bf16.msra.mxu0 0
        %5197 = vmatprep.subr.bf16.mxu0 0
        %5198 = vmatpush1.bf16.msra.mxu0 0
        %5199 = vmatprep.subr.bf16.mxu0 0
        %5200 = vmatpush1.bf16.msra.mxu0 0
        %5201 = vmatprep.subr.bf16.mxu0 0
        %5202 = vmatpush1.bf16.msra.mxu0 0
        %5203 = vmatprep.subr.bf16.mxu0 0
        %5204 = vmatpush1.bf16.msra.mxu0 0
        %5205 = vmatprep.subr.bf16.mxu0 0
        %5206 = vmatpush1.bf16.msra.mxu0 0
        %5207 = vmatprep.subr.bf16.mxu0 0
        %5208 = vmatpush1.bf16.msra.mxu0 0
        %5209 = vmatprep.subr.bf16.mxu0 0
        %5210 = vmatpush1.bf16.msra.mxu0 %v783
        %5211 = vmatprep.subr.bf16.mxu0 0
        %5212 = vmatpush2.bf16.msra.mxu0 0
        %5213 = vmatprep.subr.bf16.mxu0 0
        %5214 = vmatpush2.bf16.msra.mxu0 0
        %5215 = vmatprep.subr.bf16.mxu0 0
        %5216 = vmatpush2.bf16.msra.mxu0 0
        %5217 = vmatprep.subr.bf16.mxu0 0
        %5218 = vmatpush2.bf16.msra.mxu0 0
        %5219 = vmatprep.subr.bf16.mxu0 0
        %5220 = vmatpush2.bf16.msra.mxu0 0
        %5221 = vmatprep.subr.bf16.mxu0 0
        %5222 = vmatpush2.bf16.msra.mxu0 0
        %5223 = vmatprep.subr.bf16.mxu0 0
        %5224 = vmatpush2.bf16.msra.mxu0 0
        %5225 = vmatprep.subr.bf16.mxu0 0
        %5226 = vmatpush2.bf16.msra.mxu0 0
        %5227 = vmatprep.mubr.bf16.mxu0 0
        %5228 = vmatmul.mubr.bf16.gmra.mxu0 %v5026
        %v5229 = vpop.f32.mrf.mxu0
        %v5230 = vadd.f32 0.0, %v5229
        %v5231 = vpop.f32.mrf.mxu0
        %v5232 = vpop.f32.mrf.mxu0
        %v5233 = vadd.f32 0.0, %v5232
        %v5234 = vpop.f32.mrf.mxu0
        %5235 = vdwg.mxu0
        %5236 = vmatprep.subr.bf16.mxu0 0
        %5237 = vmatpush1.bf16.msra.mxu0 0
        %5238 = vmatprep.subr.bf16.mxu0 0
        %5239 = vmatpush1.bf16.msra.mxu0 0
        %5240 = vmatprep.subr.bf16.mxu0 0
        %5241 = vmatpush1.bf16.msra.mxu0 0
        %5242 = vmatprep.subr.bf16.mxu0 0
        %5243 = vmatpush1.bf16.msra.mxu0 0
        %5244 = vmatprep.subr.bf16.mxu0 0
        %5245 = vmatpush1.bf16.msra.mxu0 0
        %5246 = vmatprep.subr.bf16.mxu0 0
        %5247 = vmatpush1.bf16.msra.mxu0 0
        %5248 = vmatprep.subr.bf16.mxu0 0
        %5249 = vmatpush1.bf16.msra.mxu0 0
        %5250 = vmatprep.subr.bf16.mxu0 0
        %5251 = vmatpush1.bf16.msra.mxu0 %v783
        %5252 = vmatprep.subr.bf16.mxu0 0
        %5253 = vmatpush2.bf16.msra.mxu0 0
        %5254 = vmatprep.subr.bf16.mxu0 0
        %5255 = vmatpush2.bf16.msra.mxu0 0
        %5256 = vmatprep.subr.bf16.mxu0 0
        %5257 = vmatpush2.bf16.msra.mxu0 0
        %5258 = vmatprep.subr.bf16.mxu0 0
        %5259 = vmatpush2.bf16.msra.mxu0 0
        %5260 = vmatprep.subr.bf16.mxu0 0
        %5261 = vmatpush2.bf16.msra.mxu0 0
        %5262 = vmatprep.subr.bf16.mxu0 0
        %5263 = vmatpush2.bf16.msra.mxu0 0
        %5264 = vmatprep.subr.bf16.mxu0 0
        %5265 = vmatpush2.bf16.msra.mxu0 0
        %5266 = vmatprep.subr.bf16.mxu0 0
        %5267 = vmatpush2.bf16.msra.mxu0 0
        %5268 = vmatprep.mubr.bf16.mxu0 0
        %5269 = vmatmul.mubr.bf16.gmra.mxu0 %v5070
        %v5270 = vpop.f32.mrf.mxu0
        %v5271 = vadd.f32 0.0, %v5270
        %v5272 = vpop.f32.mrf.mxu0
        %v5273 = vpop.f32.mrf.mxu0
        %v5274 = vadd.f32 0.0, %v5273
        %v5275 = vpop.f32.mrf.mxu0
        %5276 = vdwg.mxu0
        %v5277 = vadd.f32 %v4975, %v5148
        %v5278 = vadd.f32 %v4978, %v5151
        %v5279 = vadd.f32 %v5019, %v5189
        %v5280 = vadd.f32 %v5022, %v5192
        %v5281 = vadd.f32 %v5063, %v5230
        %v5282 = vadd.f32 %v5066, %v5233
        %v5283 = vadd.f32 %v5107, %v5271
        %v5284 = vadd.f32 %v5110, %v5274
        %v5285 = vpack.c.bf16 %v5278, %v5277
        %v5286 = vpack.c.bf16 %v5280, %v5279
        %v5287 = vpack.c.bf16 %v5282, %v5281
        %v5288 = vpack.c.bf16 %v5284, %v5283
        %v5289 = vunpack.c.l.bf16 %v5285
        %v5290 = vunpack.c.h.bf16 %v5285
        %v5291 = vunpack.c.l.bf16 %v5286
        %v5292 = vunpack.c.h.bf16 %v5286
        %v5293 = vunpack.c.l.bf16 %v5287
        %v5294 = vunpack.c.h.bf16 %v5287
        %v5295 = vunpack.c.l.bf16 %v5288
        %v5296 = vunpack.c.h.bf16 %v5288
        %v5297 = vsub.f32 %v5277, %v5289
        %v5298 = vsub.f32 %v5278, %v5290
        %v5299 = vsub.f32 %v5279, %v5291
        %v5300 = vsub.f32 %v5280, %v5292
        %v5301 = vsub.f32 %v5281, %v5293
        %v5302 = vsub.f32 %v5282, %v5294
        %v5303 = vsub.f32 %v5283, %v5295
        %v5304 = vsub.f32 %v5284, %v5296
        %v5305 = vpack.c.bf16 %v5298, %v5297
        %v5306 = vpack.c.bf16 %v5300, %v5299
        %v5307 = vpack.c.bf16 %v5302, %v5301
        %v5308 = vpack.c.bf16 %v5304, %v5303
        %5309 = vmatprep.subr.bf16.mxu0 0
        %5310 = vmatpush1.bf16.msra.mxu0 0
        %5311 = vmatprep.subr.bf16.mxu0 0
        %5312 = vmatpush1.bf16.msra.mxu0 0
        %5313 = vmatprep.subr.bf16.mxu0 0
        %5314 = vmatpush1.bf16.msra.mxu0 0
        %5315 = vmatprep.subr.bf16.mxu0 0
        %5316 = vmatpush1.bf16.msra.mxu0 0
        %5317 = vmatprep.subr.bf16.mxu0 0
        %5318 = vmatpush1.bf16.msra.mxu0 0
        %5319 = vmatprep.subr.bf16.mxu0 0
        %5320 = vmatpush1.bf16.msra.mxu0 0
        %5321 = vmatprep.subr.bf16.mxu0 0
        %5322 = vmatpush1.bf16.msra.mxu0 0
        %5323 = vmatprep.subr.bf16.mxu0 0
        %5324 = vmatpush1.bf16.msra.mxu0 %v5305
        %5325 = vmatprep.subr.bf16.mxu0 0
        %5326 = vmatpush2.bf16.msra.mxu0 0
        %5327 = vmatprep.subr.bf16.mxu0 0
        %5328 = vmatpush2.bf16.msra.mxu0 0
        %5329 = vmatprep.subr.bf16.mxu0 0
        %5330 = vmatpush2.bf16.msra.mxu0 0
        %5331 = vmatprep.subr.bf16.mxu0 0
        %5332 = vmatpush2.bf16.msra.mxu0 0
        %5333 = vmatprep.subr.bf16.mxu0 0
        %5334 = vmatpush2.bf16.msra.mxu0 0
        %5335 = vmatprep.subr.bf16.mxu0 0
        %5336 = vmatpush2.bf16.msra.mxu0 0
        %5337 = vmatprep.subr.bf16.mxu0 0
        %5338 = vmatpush2.bf16.msra.mxu0 0
        %5339 = vmatprep.subr.bf16.mxu0 0
        %5340 = vmatpush2.bf16.msra.mxu0 0
        %5341 = vmatprep.mubr.bf16.mxu0 0
        %5342 = vmatmul.mubr.bf16.gmra.mxu0 %v987
        %v5343 = vpop.f32.mrf.mxu0
        %v5344 = vadd.f32 0.0, %v5343
        %v5345 = vpop.f32.mrf.mxu0
        %v5346 = vpop.f32.mrf.mxu0
        %v5347 = vadd.f32 0.0, %v5346
        %v5348 = vpop.f32.mrf.mxu0
        %5349 = vdwg.mxu0
        %5350 = vmatprep.subr.bf16.mxu0 0
        %5351 = vmatpush1.bf16.msra.mxu0 0
        %5352 = vmatprep.subr.bf16.mxu0 0
        %5353 = vmatpush1.bf16.msra.mxu0 0
        %5354 = vmatprep.subr.bf16.mxu0 0
        %5355 = vmatpush1.bf16.msra.mxu0 0
        %5356 = vmatprep.subr.bf16.mxu0 0
        %5357 = vmatpush1.bf16.msra.mxu0 0
        %5358 = vmatprep.subr.bf16.mxu0 0
        %5359 = vmatpush1.bf16.msra.mxu0 0
        %5360 = vmatprep.subr.bf16.mxu0 0
        %5361 = vmatpush1.bf16.msra.mxu0 0
        %5362 = vmatprep.subr.bf16.mxu0 0
        %5363 = vmatpush1.bf16.msra.mxu0 0
        %5364 = vmatprep.subr.bf16.mxu0 0
        %5365 = vmatpush1.bf16.msra.mxu0 %v5306
        %5366 = vmatprep.subr.bf16.mxu0 0
        %5367 = vmatpush2.bf16.msra.mxu0 0
        %5368 = vmatprep.subr.bf16.mxu0 0
        %5369 = vmatpush2.bf16.msra.mxu0 0
        %5370 = vmatprep.subr.bf16.mxu0 0
        %5371 = vmatpush2.bf16.msra.mxu0 0
        %5372 = vmatprep.subr.bf16.mxu0 0
        %5373 = vmatpush2.bf16.msra.mxu0 0
        %5374 = vmatprep.subr.bf16.mxu0 0
        %5375 = vmatpush2.bf16.msra.mxu0 0
        %5376 = vmatprep.subr.bf16.mxu0 0
        %5377 = vmatpush2.bf16.msra.mxu0 0
        %5378 = vmatprep.subr.bf16.mxu0 0
        %5379 = vmatpush2.bf16.msra.mxu0 0
        %5380 = vmatprep.subr.bf16.mxu0 0
        %5381 = vmatpush2.bf16.msra.mxu0 0
        %5382 = vmatprep.mubr.bf16.mxu0 0
        %5383 = vmatmul.mubr.bf16.gmra.mxu0 %v987
        %v5384 = vpop.f32.mrf.mxu0
        %v5385 = vadd.f32 0.0, %v5384
        %v5386 = vpop.f32.mrf.mxu0
        %v5387 = vpop.f32.mrf.mxu0
        %v5388 = vadd.f32 0.0, %v5387
        %v5389 = vpop.f32.mrf.mxu0
        %5390 = vdwg.mxu0
        %5391 = vmatprep.subr.bf16.mxu0 0
        %5392 = vmatpush1.bf16.msra.mxu0 0
        %5393 = vmatprep.subr.bf16.mxu0 0
        %5394 = vmatpush1.bf16.msra.mxu0 0
        %5395 = vmatprep.subr.bf16.mxu0 0
        %5396 = vmatpush1.bf16.msra.mxu0 0
        %5397 = vmatprep.subr.bf16.mxu0 0
        %5398 = vmatpush1.bf16.msra.mxu0 0
        %5399 = vmatprep.subr.bf16.mxu0 0
        %5400 = vmatpush1.bf16.msra.mxu0 0
        %5401 = vmatprep.subr.bf16.mxu0 0
        %5402 = vmatpush1.bf16.msra.mxu0 0
        %5403 = vmatprep.subr.bf16.mxu0 0
        %5404 = vmatpush1.bf16.msra.mxu0 0
        %5405 = vmatprep.subr.bf16.mxu0 0
        %5406 = vmatpush1.bf16.msra.mxu0 %v5307
        %5407 = vmatprep.subr.bf16.mxu0 0
        %5408 = vmatpush2.bf16.msra.mxu0 0
        %5409 = vmatprep.subr.bf16.mxu0 0
        %5410 = vmatpush2.bf16.msra.mxu0 0
        %5411 = vmatprep.subr.bf16.mxu0 0
        %5412 = vmatpush2.bf16.msra.mxu0 0
        %5413 = vmatprep.subr.bf16.mxu0 0
        %5414 = vmatpush2.bf16.msra.mxu0 0
        %5415 = vmatprep.subr.bf16.mxu0 0
        %5416 = vmatpush2.bf16.msra.mxu0 0
        %5417 = vmatprep.subr.bf16.mxu0 0
        %5418 = vmatpush2.bf16.msra.mxu0 0
        %5419 = vmatprep.subr.bf16.mxu0 0
        %5420 = vmatpush2.bf16.msra.mxu0 0
        %5421 = vmatprep.subr.bf16.mxu0 0
        %5422 = vmatpush2.bf16.msra.mxu0 0
        %5423 = vmatprep.mubr.bf16.mxu0 0
        %5424 = vmatmul.mubr.bf16.gmra.mxu0 %v987
        %v5425 = vpop.f32.mrf.mxu0
        %v5426 = vadd.f32 0.0, %v5425
        %v5427 = vpop.f32.mrf.mxu0
        %v5428 = vpop.f32.mrf.mxu0
        %v5429 = vadd.f32 0.0, %v5428
        %v5430 = vpop.f32.mrf.mxu0
        %5431 = vdwg.mxu0
        %5432 = vmatprep.subr.bf16.mxu0 0
        %5433 = vmatpush1.bf16.msra.mxu0 0
        %5434 = vmatprep.subr.bf16.mxu0 0
        %5435 = vmatpush1.bf16.msra.mxu0 0
        %5436 = vmatprep.subr.bf16.mxu0 0
        %5437 = vmatpush1.bf16.msra.mxu0 0
        %5438 = vmatprep.subr.bf16.mxu0 0
        %5439 = vmatpush1.bf16.msra.mxu0 0
        %5440 = vmatprep.subr.bf16.mxu0 0
        %5441 = vmatpush1.bf16.msra.mxu0 0
        %5442 = vmatprep.subr.bf16.mxu0 0
        %5443 = vmatpush1.bf16.msra.mxu0 0
        %5444 = vmatprep.subr.bf16.mxu0 0
        %5445 = vmatpush1.bf16.msra.mxu0 0
        %5446 = vmatprep.subr.bf16.mxu0 0
        %5447 = vmatpush1.bf16.msra.mxu0 %v5308
        %5448 = vmatprep.subr.bf16.mxu0 0
        %5449 = vmatpush2.bf16.msra.mxu0 0
        %5450 = vmatprep.subr.bf16.mxu0 0
        %5451 = vmatpush2.bf16.msra.mxu0 0
        %5452 = vmatprep.subr.bf16.mxu0 0
        %5453 = vmatpush2.bf16.msra.mxu0 0
        %5454 = vmatprep.subr.bf16.mxu0 0
        %5455 = vmatpush2.bf16.msra.mxu0 0
        %5456 = vmatprep.subr.bf16.mxu0 0
        %5457 = vmatpush2.bf16.msra.mxu0 0
        %5458 = vmatprep.subr.bf16.mxu0 0
        %5459 = vmatpush2.bf16.msra.mxu0 0
        %5460 = vmatprep.subr.bf16.mxu0 0
        %5461 = vmatpush2.bf16.msra.mxu0 0
        %5462 = vmatprep.subr.bf16.mxu0 0
        %5463 = vmatpush2.bf16.msra.mxu0 0
        %5464 = vmatprep.mubr.bf16.mxu0 0
        %5465 = vmatmul.mubr.bf16.gmra.mxu0 %v987
        %v5466 = vpop.f32.mrf.mxu0
        %v5467 = vadd.f32 0.0, %v5466
        %v5468 = vpop.f32.mrf.mxu0
        %v5469 = vpop.f32.mrf.mxu0
        %v5470 = vadd.f32 0.0, %v5469
        %v5471 = vpop.f32.mrf.mxu0
        %5472 = vdwg.mxu0
        %5473 = vmatprep.subr.bf16.mxu0 0
        %5474 = vmatpush1.bf16.msra.mxu0 0
        %5475 = vmatprep.subr.bf16.mxu0 0
        %5476 = vmatpush1.bf16.msra.mxu0 0
        %5477 = vmatprep.subr.bf16.mxu0 0
        %5478 = vmatpush1.bf16.msra.mxu0 0
        %5479 = vmatprep.subr.bf16.mxu0 0
        %5480 = vmatpush1.bf16.msra.mxu0 0
        %5481 = vmatprep.subr.bf16.mxu0 0
        %5482 = vmatpush1.bf16.msra.mxu0 0
        %5483 = vmatprep.subr.bf16.mxu0 0
        %5484 = vmatpush1.bf16.msra.mxu0 0
        %5485 = vmatprep.subr.bf16.mxu0 0
        %5486 = vmatpush1.bf16.msra.mxu0 0
        %5487 = vmatprep.subr.bf16.mxu0 0
        %5488 = vmatpush1.bf16.msra.mxu0 %v5285
        %5489 = vmatprep.subr.bf16.mxu0 0
        %5490 = vmatpush2.bf16.msra.mxu0 0
        %5491 = vmatprep.subr.bf16.mxu0 0
        %5492 = vmatpush2.bf16.msra.mxu0 0
        %5493 = vmatprep.subr.bf16.mxu0 0
        %5494 = vmatpush2.bf16.msra.mxu0 0
        %5495 = vmatprep.subr.bf16.mxu0 0
        %5496 = vmatpush2.bf16.msra.mxu0 0
        %5497 = vmatprep.subr.bf16.mxu0 0
        %5498 = vmatpush2.bf16.msra.mxu0 0
        %5499 = vmatprep.subr.bf16.mxu0 0
        %5500 = vmatpush2.bf16.msra.mxu0 0
        %5501 = vmatprep.subr.bf16.mxu0 0
        %5502 = vmatpush2.bf16.msra.mxu0 0
        %5503 = vmatprep.subr.bf16.mxu0 0
        %5504 = vmatpush2.bf16.msra.mxu0 0
        %5505 = vmatprep.mubr.bf16.mxu0 0
        %5506 = vmatmul.mubr.bf16.gmra.mxu0 %v987
        %v5507 = vpop.f32.mrf.mxu0
        %v5508 = vadd.f32 %v5344, %v5507
        %v5509 = vpop.f32.mrf.mxu0
        %v5510 = vpop.f32.mrf.mxu0
        %v5511 = vadd.f32 %v5347, %v5510
        %v5512 = vpop.f32.mrf.mxu0
        %5513 = vdwg.mxu0
        %5514 = vmatprep.subr.bf16.mxu0 0
        %5515 = vmatpush1.bf16.msra.mxu0 0
        %5516 = vmatprep.subr.bf16.mxu0 0
        %5517 = vmatpush1.bf16.msra.mxu0 0
        %5518 = vmatprep.subr.bf16.mxu0 0
        %5519 = vmatpush1.bf16.msra.mxu0 0
        %5520 = vmatprep.subr.bf16.mxu0 0
        %5521 = vmatpush1.bf16.msra.mxu0 0
        %5522 = vmatprep.subr.bf16.mxu0 0
        %5523 = vmatpush1.bf16.msra.mxu0 0
        %5524 = vmatprep.subr.bf16.mxu0 0
        %5525 = vmatpush1.bf16.msra.mxu0 0
        %5526 = vmatprep.subr.bf16.mxu0 0
        %5527 = vmatpush1.bf16.msra.mxu0 0
        %5528 = vmatprep.subr.bf16.mxu0 0
        %5529 = vmatpush1.bf16.msra.mxu0 %v5286
        %5530 = vmatprep.subr.bf16.mxu0 0
        %5531 = vmatpush2.bf16.msra.mxu0 0
        %5532 = vmatprep.subr.bf16.mxu0 0
        %5533 = vmatpush2.bf16.msra.mxu0 0
        %5534 = vmatprep.subr.bf16.mxu0 0
        %5535 = vmatpush2.bf16.msra.mxu0 0
        %5536 = vmatprep.subr.bf16.mxu0 0
        %5537 = vmatpush2.bf16.msra.mxu0 0
        %5538 = vmatprep.subr.bf16.mxu0 0
        %5539 = vmatpush2.bf16.msra.mxu0 0
        %5540 = vmatprep.subr.bf16.mxu0 0
        %5541 = vmatpush2.bf16.msra.mxu0 0
        %5542 = vmatprep.subr.bf16.mxu0 0
        %5543 = vmatpush2.bf16.msra.mxu0 0
        %5544 = vmatprep.subr.bf16.mxu0 0
        %5545 = vmatpush2.bf16.msra.mxu0 0
        %5546 = vmatprep.mubr.bf16.mxu0 0
        %5547 = vmatmul.mubr.bf16.gmra.mxu0 %v987
        %v5548 = vpop.f32.mrf.mxu0
        %v5549 = vadd.f32 %v5385, %v5548
        %v5550 = vpop.f32.mrf.mxu0
        %v5551 = vpop.f32.mrf.mxu0
        %v5552 = vadd.f32 %v5388, %v5551
        %v5553 = vpop.f32.mrf.mxu0
        %5554 = vdwg.mxu0
        %5555 = vmatprep.subr.bf16.mxu0 0
        %5556 = vmatpush1.bf16.msra.mxu0 0
        %5557 = vmatprep.subr.bf16.mxu0 0
        %5558 = vmatpush1.bf16.msra.mxu0 0
        %5559 = vmatprep.subr.bf16.mxu0 0
        %5560 = vmatpush1.bf16.msra.mxu0 0
        %5561 = vmatprep.subr.bf16.mxu0 0
        %5562 = vmatpush1.bf16.msra.mxu0 0
        %5563 = vmatprep.subr.bf16.mxu0 0
        %5564 = vmatpush1.bf16.msra.mxu0 0
        %5565 = vmatprep.subr.bf16.mxu0 0
        %5566 = vmatpush1.bf16.msra.mxu0 0
        %5567 = vmatprep.subr.bf16.mxu0 0
        %5568 = vmatpush1.bf16.msra.mxu0 0
        %5569 = vmatprep.subr.bf16.mxu0 0
        %5570 = vmatpush1.bf16.msra.mxu0 %v5287
        %5571 = vmatprep.subr.bf16.mxu0 0
        %5572 = vmatpush2.bf16.msra.mxu0 0
        %5573 = vmatprep.subr.bf16.mxu0 0
        %5574 = vmatpush2.bf16.msra.mxu0 0
        %5575 = vmatprep.subr.bf16.mxu0 0
        %5576 = vmatpush2.bf16.msra.mxu0 0
        %5577 = vmatprep.subr.bf16.mxu0 0
        %5578 = vmatpush2.bf16.msra.mxu0 0
        %5579 = vmatprep.subr.bf16.mxu0 0
        %5580 = vmatpush2.bf16.msra.mxu0 0
        %5581 = vmatprep.subr.bf16.mxu0 0
        %5582 = vmatpush2.bf16.msra.mxu0 0
        %5583 = vmatprep.subr.bf16.mxu0 0
        %5584 = vmatpush2.bf16.msra.mxu0 0
        %5585 = vmatprep.subr.bf16.mxu0 0
        %5586 = vmatpush2.bf16.msra.mxu0 0
        %5587 = vmatprep.mubr.bf16.mxu0 0
        %5588 = vmatmul.mubr.bf16.gmra.mxu0 %v987
        %v5589 = vpop.f32.mrf.mxu0
        %v5590 = vadd.f32 %v5426, %v5589
        %v5591 = vpop.f32.mrf.mxu0
        %v5592 = vpop.f32.mrf.mxu0
        %v5593 = vadd.f32 %v5429, %v5592
        %v5594 = vpop.f32.mrf.mxu0
        %5595 = vdwg.mxu0
        %5596 = vmatprep.subr.bf16.mxu0 0
        %5597 = vmatpush1.bf16.msra.mxu0 0
        %5598 = vmatprep.subr.bf16.mxu0 0
        %5599 = vmatpush1.bf16.msra.mxu0 0
        %5600 = vmatprep.subr.bf16.mxu0 0
        %5601 = vmatpush1.bf16.msra.mxu0 0
        %5602 = vmatprep.subr.bf16.mxu0 0
        %5603 = vmatpush1.bf16.msra.mxu0 0
        %5604 = vmatprep.subr.bf16.mxu0 0
        %5605 = vmatpush1.bf16.msra.mxu0 0
        %5606 = vmatprep.subr.bf16.mxu0 0
        %5607 = vmatpush1.bf16.msra.mxu0 0
        %5608 = vmatprep.subr.bf16.mxu0 0
        %5609 = vmatpush1.bf16.msra.mxu0 0
        %5610 = vmatprep.subr.bf16.mxu0 0
        %5611 = vmatpush1.bf16.msra.mxu0 %v5288
        %5612 = vmatprep.subr.bf16.mxu0 0
        %5613 = vmatpush2.bf16.msra.mxu0 0
        %5614 = vmatprep.subr.bf16.mxu0 0
        %5615 = vmatpush2.bf16.msra.mxu0 0
        %5616 = vmatprep.subr.bf16.mxu0 0
        %5617 = vmatpush2.bf16.msra.mxu0 0
        %5618 = vmatprep.subr.bf16.mxu0 0
        %5619 = vmatpush2.bf16.msra.mxu0 0
        %5620 = vmatprep.subr.bf16.mxu0 0
        %5621 = vmatpush2.bf16.msra.mxu0 0
        %5622 = vmatprep.subr.bf16.mxu0 0
        %5623 = vmatpush2.bf16.msra.mxu0 0
        %5624 = vmatprep.subr.bf16.mxu0 0
        %5625 = vmatpush2.bf16.msra.mxu0 0
        %5626 = vmatprep.subr.bf16.mxu0 0
        %5627 = vmatpush2.bf16.msra.mxu0 0
        %5628 = vmatprep.mubr.bf16.mxu0 0
        %5629 = vmatmul.mubr.bf16.gmra.mxu0 %v987
        %v5630 = vpop.f32.mrf.mxu0
        %v5631 = vadd.f32 %v5467, %v5630
        %v5632 = vpop.f32.mrf.mxu0
        %v5633 = vpop.f32.mrf.mxu0
        %v5634 = vadd.f32 %v5470, %v5633
        %v5635 = vpop.f32.mrf.mxu0
        %5636 = vdwg.mxu0
        %5637 = vmatprep.subr.bf16.mxu0 0
        %5638 = vmatpush1.bf16.msra.mxu0 0
        %5639 = vmatprep.subr.bf16.mxu0 0
        %5640 = vmatpush1.bf16.msra.mxu0 0
        %5641 = vmatprep.subr.bf16.mxu0 0
        %5642 = vmatpush1.bf16.msra.mxu0 0
        %5643 = vmatprep.subr.bf16.mxu0 0
        %5644 = vmatpush1.bf16.msra.mxu0 0
        %5645 = vmatprep.subr.bf16.mxu0 0
        %5646 = vmatpush1.bf16.msra.mxu0 0
        %5647 = vmatprep.subr.bf16.mxu0 0
        %5648 = vmatpush1.bf16.msra.mxu0 0
        %5649 = vmatprep.subr.bf16.mxu0 0
        %5650 = vmatpush1.bf16.msra.mxu0 0
        %5651 = vmatprep.subr.bf16.mxu0 0
        %5652 = vmatpush1.bf16.msra.mxu0 %v5285
        %5653 = vmatprep.subr.bf16.mxu0 0
        %5654 = vmatpush2.bf16.msra.mxu0 0
        %5655 = vmatprep.subr.bf16.mxu0 0
        %5656 = vmatpush2.bf16.msra.mxu0 0
        %5657 = vmatprep.subr.bf16.mxu0 0
        %5658 = vmatpush2.bf16.msra.mxu0 0
        %5659 = vmatprep.subr.bf16.mxu0 0
        %5660 = vmatpush2.bf16.msra.mxu0 0
        %5661 = vmatprep.subr.bf16.mxu0 0
        %5662 = vmatpush2.bf16.msra.mxu0 0
        %5663 = vmatprep.subr.bf16.mxu0 0
        %5664 = vmatpush2.bf16.msra.mxu0 0
        %5665 = vmatprep.subr.bf16.mxu0 0
        %5666 = vmatpush2.bf16.msra.mxu0 0
        %5667 = vmatprep.subr.bf16.mxu0 0
        %5668 = vmatpush2.bf16.msra.mxu0 0
        %5669 = vmatprep.mubr.bf16.mxu0 0
        %5670 = vmatmul.mubr.bf16.gmra.mxu0 %v1323
        %v5671 = vpop.f32.mrf.mxu0
        %v5672 = vadd.f32 0.0, %v5671
        %v5673 = vpop.f32.mrf.mxu0
        %v5674 = vpop.f32.mrf.mxu0
        %v5675 = vadd.f32 0.0, %v5674
        %v5676 = vpop.f32.mrf.mxu0
        %5677 = vdwg.mxu0
        %5678 = vmatprep.subr.bf16.mxu0 0
        %5679 = vmatpush1.bf16.msra.mxu0 0
        %5680 = vmatprep.subr.bf16.mxu0 0
        %5681 = vmatpush1.bf16.msra.mxu0 0
        %5682 = vmatprep.subr.bf16.mxu0 0
        %5683 = vmatpush1.bf16.msra.mxu0 0
        %5684 = vmatprep.subr.bf16.mxu0 0
        %5685 = vmatpush1.bf16.msra.mxu0 0
        %5686 = vmatprep.subr.bf16.mxu0 0
        %5687 = vmatpush1.bf16.msra.mxu0 0
        %5688 = vmatprep.subr.bf16.mxu0 0
        %5689 = vmatpush1.bf16.msra.mxu0 0
        %5690 = vmatprep.subr.bf16.mxu0 0
        %5691 = vmatpush1.bf16.msra.mxu0 0
        %5692 = vmatprep.subr.bf16.mxu0 0
        %5693 = vmatpush1.bf16.msra.mxu0 %v5286
        %5694 = vmatprep.subr.bf16.mxu0 0
        %5695 = vmatpush2.bf16.msra.mxu0 0
        %5696 = vmatprep.subr.bf16.mxu0 0
        %5697 = vmatpush2.bf16.msra.mxu0 0
        %5698 = vmatprep.subr.bf16.mxu0 0
        %5699 = vmatpush2.bf16.msra.mxu0 0
        %5700 = vmatprep.subr.bf16.mxu0 0
        %5701 = vmatpush2.bf16.msra.mxu0 0
        %5702 = vmatprep.subr.bf16.mxu0 0
        %5703 = vmatpush2.bf16.msra.mxu0 0
        %5704 = vmatprep.subr.bf16.mxu0 0
        %5705 = vmatpush2.bf16.msra.mxu0 0
        %5706 = vmatprep.subr.bf16.mxu0 0
        %5707 = vmatpush2.bf16.msra.mxu0 0
        %5708 = vmatprep.subr.bf16.mxu0 0
        %5709 = vmatpush2.bf16.msra.mxu0 0
        %5710 = vmatprep.mubr.bf16.mxu0 0
        %5711 = vmatmul.mubr.bf16.gmra.mxu0 %v1323
        %v5712 = vpop.f32.mrf.mxu0
        %v5713 = vadd.f32 0.0, %v5712
        %v5714 = vpop.f32.mrf.mxu0
        %v5715 = vpop.f32.mrf.mxu0
        %v5716 = vadd.f32 0.0, %v5715
        %v5717 = vpop.f32.mrf.mxu0
        %5718 = vdwg.mxu0
        %5719 = vmatprep.subr.bf16.mxu0 0
        %5720 = vmatpush1.bf16.msra.mxu0 0
        %5721 = vmatprep.subr.bf16.mxu0 0
        %5722 = vmatpush1.bf16.msra.mxu0 0
        %5723 = vmatprep.subr.bf16.mxu0 0
        %5724 = vmatpush1.bf16.msra.mxu0 0
        %5725 = vmatprep.subr.bf16.mxu0 0
        %5726 = vmatpush1.bf16.msra.mxu0 0
        %5727 = vmatprep.subr.bf16.mxu0 0
        %5728 = vmatpush1.bf16.msra.mxu0 0
        %5729 = vmatprep.subr.bf16.mxu0 0
        %5730 = vmatpush1.bf16.msra.mxu0 0
        %5731 = vmatprep.subr.bf16.mxu0 0
        %5732 = vmatpush1.bf16.msra.mxu0 0
        %5733 = vmatprep.subr.bf16.mxu0 0
        %5734 = vmatpush1.bf16.msra.mxu0 %v5287
        %5735 = vmatprep.subr.bf16.mxu0 0
        %5736 = vmatpush2.bf16.msra.mxu0 0
        %5737 = vmatprep.subr.bf16.mxu0 0
        %5738 = vmatpush2.bf16.msra.mxu0 0
        %5739 = vmatprep.subr.bf16.mxu0 0
        %5740 = vmatpush2.bf16.msra.mxu0 0
        %5741 = vmatprep.subr.bf16.mxu0 0
        %5742 = vmatpush2.bf16.msra.mxu0 0
        %5743 = vmatprep.subr.bf16.mxu0 0
        %5744 = vmatpush2.bf16.msra.mxu0 0
        %5745 = vmatprep.subr.bf16.mxu0 0
        %5746 = vmatpush2.bf16.msra.mxu0 0
        %5747 = vmatprep.subr.bf16.mxu0 0
        %5748 = vmatpush2.bf16.msra.mxu0 0
        %5749 = vmatprep.subr.bf16.mxu0 0
        %5750 = vmatpush2.bf16.msra.mxu0 0
        %5751 = vmatprep.mubr.bf16.mxu0 0
        %5752 = vmatmul.mubr.bf16.gmra.mxu0 %v1323
        %v5753 = vpop.f32.mrf.mxu0
        %v5754 = vadd.f32 0.0, %v5753
        %v5755 = vpop.f32.mrf.mxu0
        %v5756 = vpop.f32.mrf.mxu0
        %v5757 = vadd.f32 0.0, %v5756
        %v5758 = vpop.f32.mrf.mxu0
        %5759 = vdwg.mxu0
        %5760 = vmatprep.subr.bf16.mxu0 0
        %5761 = vmatpush1.bf16.msra.mxu0 0
        %5762 = vmatprep.subr.bf16.mxu0 0
        %5763 = vmatpush1.bf16.msra.mxu0 0
        %5764 = vmatprep.subr.bf16.mxu0 0
        %5765 = vmatpush1.bf16.msra.mxu0 0
        %5766 = vmatprep.subr.bf16.mxu0 0
        %5767 = vmatpush1.bf16.msra.mxu0 0
        %5768 = vmatprep.subr.bf16.mxu0 0
        %5769 = vmatpush1.bf16.msra.mxu0 0
        %5770 = vmatprep.subr.bf16.mxu0 0
        %5771 = vmatpush1.bf16.msra.mxu0 0
        %5772 = vmatprep.subr.bf16.mxu0 0
        %5773 = vmatpush1.bf16.msra.mxu0 0
        %5774 = vmatprep.subr.bf16.mxu0 0
        %5775 = vmatpush1.bf16.msra.mxu0 %v5288
        %5776 = vmatprep.subr.bf16.mxu0 0
        %5777 = vmatpush2.bf16.msra.mxu0 0
        %5778 = vmatprep.subr.bf16.mxu0 0
        %5779 = vmatpush2.bf16.msra.mxu0 0
        %5780 = vmatprep.subr.bf16.mxu0 0
        %5781 = vmatpush2.bf16.msra.mxu0 0
        %5782 = vmatprep.subr.bf16.mxu0 0
        %5783 = vmatpush2.bf16.msra.mxu0 0
        %5784 = vmatprep.subr.bf16.mxu0 0
        %5785 = vmatpush2.bf16.msra.mxu0 0
        %5786 = vmatprep.subr.bf16.mxu0 0
        %5787 = vmatpush2.bf16.msra.mxu0 0
        %5788 = vmatprep.subr.bf16.mxu0 0
        %5789 = vmatpush2.bf16.msra.mxu0 0
        %5790 = vmatprep.subr.bf16.mxu0 0
        %5791 = vmatpush2.bf16.msra.mxu0 0
        %5792 = vmatprep.mubr.bf16.mxu0 0
        %5793 = vmatmul.mubr.bf16.gmra.mxu0 %v1323
        %v5794 = vpop.f32.mrf.mxu0
        %v5795 = vadd.f32 0.0, %v5794
        %v5796 = vpop.f32.mrf.mxu0
        %v5797 = vpop.f32.mrf.mxu0
        %v5798 = vadd.f32 0.0, %v5797
        %v5799 = vpop.f32.mrf.mxu0
        %5800 = vdwg.mxu0
        %v5801 = vadd.f32 %v5508, %v5672
        %v5802 = vadd.f32 %v5511, %v5675
        %v5803 = vadd.f32 %v5549, %v5713
        %v5804 = vadd.f32 %v5552, %v5716
        %v5805 = vadd.f32 %v5590, %v5754
        %v5806 = vadd.f32 %v5593, %v5757
        %v5807 = vadd.f32 %v5631, %v5795
        %v5808 = vadd.f32 %v5634, %v5798
        %v5809 = vmul.f32 %v1489, %v1489
        %v5810 = vmul.f32 %v1490, %v1490
        %v5811 = vmul.f32 %v1491, %v1491
        %v5812 = vmul.f32 %v1492, %v1492
        %v5813 = vmul.f32 %v1493, %v1493
        %v5814 = vmul.f32 %v1494, %v1494
        %v5815 = vmul.f32 %v1495, %v1495
        %v5816 = vmul.f32 %v1496, %v1496
        %v5817 = vsub.f32 %v3641, %v5809
        %v5818 = vsub.f32 %v3642, %v5810
        %v5819 = vsub.f32 %v3643, %v5811
        %v5820 = vsub.f32 %v3644, %v5812
        %v5821 = vsub.f32 %v3645, %v5813
        %v5822 = vsub.f32 %v3646, %v5814
        %v5823 = vsub.f32 %v3647, %v5815
        %v5824 = vsub.f32 %v3648, %v5816
        %v5825 = vmul.f32 %v2561, %v2561
        %v5826 = vmul.f32 %v2562, %v2562
        %v5827 = vmul.f32 %v2563, %v2563
        %v5828 = vmul.f32 %v2564, %v2564
        %v5829 = vmul.f32 %v2565, %v2565
        %v5830 = vmul.f32 %v2566, %v2566
        %v5831 = vmul.f32 %v2567, %v2567
        %v5832 = vmul.f32 %v2568, %v2568
        %v5833 = vsub.f32 %v4721, %v5825
        %v5834 = vsub.f32 %v4722, %v5826
        %v5835 = vsub.f32 %v4723, %v5827
        %v5836 = vsub.f32 %v4724, %v5828
        %v5837 = vsub.f32 %v4725, %v5829
        %v5838 = vsub.f32 %v4726, %v5830
        %v5839 = vsub.f32 %v4727, %v5831
        %v5840 = vsub.f32 %v4728, %v5832
        %v5841 = vmul.f32 %v1489, %v2561
        %v5842 = vmul.f32 %v1490, %v2562
        %v5843 = vmul.f32 %v1491, %v2563
        %v5844 = vmul.f32 %v1492, %v2564
        %v5845 = vmul.f32 %v1493, %v2565
        %v5846 = vmul.f32 %v1494, %v2566
        %v5847 = vmul.f32 %v1495, %v2567
        %v5848 = vmul.f32 %v1496, %v2568
        %v5849 = vsub.f32 %v5801, %v5841
        %v5850 = vsub.f32 %v5802, %v5842
        %v5851 = vsub.f32 %v5803, %v5843
        %v5852 = vsub.f32 %v5804, %v5844
        %v5853 = vsub.f32 %v5805, %v5845
        %v5854 = vsub.f32 %v5806, %v5846
        %v5855 = vsub.f32 %v5807, %v5847
        %v5856 = vsub.f32 %v5808, %v5848
        %v5857 = vadd.f32 %v1489, 0.5
        %v5858 = vadd.f32 %v1490, 0.5
        %v5859 = vadd.f32 %v1491, 0.5
        %v5860 = vadd.f32 %v1492, 0.5
        %v5861 = vadd.f32 %v1493, 0.5
        %v5862 = vadd.f32 %v1494, 0.5
        %v5863 = vadd.f32 %v1495, 0.5
        %v5864 = vadd.f32 %v1496, 0.5
        %v5865 = vadd.f32 %v2561, 0.5
        %v5866 = vadd.f32 %v2562, 0.5
        %v5867 = vadd.f32 %v2563, 0.5
        %v5868 = vadd.f32 %v2564, 0.5
        %v5869 = vadd.f32 %v2565, 0.5
        %v5870 = vadd.f32 %v2566, 0.5
        %v5871 = vadd.f32 %v2567, 0.5
        %v5872 = vadd.f32 %v2568, 0.5
        %v5873 = vmul.f32 %v5857, %v5857
        %v5874 = vmul.f32 %v5858, %v5858
        %v5875 = vmul.f32 %v5859, %v5859
        %v5876 = vmul.f32 %v5860, %v5860
        %v5877 = vmul.f32 %v5861, %v5861
        %v5878 = vmul.f32 %v5862, %v5862
        %v5879 = vmul.f32 %v5863, %v5863
        %v5880 = vmul.f32 %v5864, %v5864
        %v5881 = vmul.f32 %v5865, %v5865
        %v5882 = vmul.f32 %v5866, %v5866
        %v5883 = vmul.f32 %v5867, %v5867
        %v5884 = vmul.f32 %v5868, %v5868
        %v5885 = vmul.f32 %v5869, %v5869
        %v5886 = vmul.f32 %v5870, %v5870
        %v5887 = vmul.f32 %v5871, %v5871
        %v5888 = vmul.f32 %v5872, %v5872
        %v5889 = vmul.f32 %v5857, %v5865
        %v5890 = vmul.f32 %v5858, %v5866
        %v5891 = vmul.f32 %v5859, %v5867
        %v5892 = vmul.f32 %v5860, %v5868
        %v5893 = vmul.f32 %v5861, %v5869
        %v5894 = vmul.f32 %v5862, %v5870
        %v5895 = vmul.f32 %v5863, %v5871
        %v5896 = vmul.f32 %v5864, %v5872
        %v5897 = vmul.f32 %v5889, 2.0
        %v5898 = vmul.f32 %v5890, 2.0
        %v5899 = vmul.f32 %v5891, 2.0
        %v5900 = vmul.f32 %v5892, 2.0
        %v5901 = vmul.f32 %v5893, 2.0
        %v5902 = vmul.f32 %v5894, 2.0
        %v5903 = vmul.f32 %v5895, 2.0
        %v5904 = vmul.f32 %v5896, 2.0
        %v5905 = vadd.f32 %v5897, 0.0001
        %v5906 = vadd.f32 %v5898, 0.0001
        %v5907 = vadd.f32 %v5899, 0.0001
        %v5908 = vadd.f32 %v5900, 0.0001
        %v5909 = vadd.f32 %v5901, 0.0001
        %v5910 = vadd.f32 %v5902, 0.0001
        %v5911 = vadd.f32 %v5903, 0.0001
        %v5912 = vadd.f32 %v5904, 0.0001
        %v5913 = vmul.f32 %v5849, 2.0
        %v5914 = vmul.f32 %v5850, 2.0
        %v5915 = vmul.f32 %v5851, 2.0
        %v5916 = vmul.f32 %v5852, 2.0
        %v5917 = vmul.f32 %v5853, 2.0
        %v5918 = vmul.f32 %v5854, 2.0
        %v5919 = vmul.f32 %v5855, 2.0
        %v5920 = vmul.f32 %v5856, 2.0
        %v5921 = vadd.f32 %v5913, 0.0009
        %v5922 = vadd.f32 %v5914, 0.0009
        %v5923 = vadd.f32 %v5915, 0.0009
        %v5924 = vadd.f32 %v5916, 0.0009
        %v5925 = vadd.f32 %v5917, 0.0009
        %v5926 = vadd.f32 %v5918, 0.0009
        %v5927 = vadd.f32 %v5919, 0.0009
        %v5928 = vadd.f32 %v5920, 0.0009
        %v5929 = vmul.f32 %v5905, %v5921
        %v5930 = vmul.f32 %v5906, %v5922
        %v5931 = vmul.f32 %v5907, %v5923
        %v5932 = vmul.f32 %v5908, %v5924
        %v5933 = vmul.f32 %v5909, %v5925
        %v5934 = vmul.f32 %v5910, %v5926
        %v5935 = vmul.f32 %v5911, %v5927
        %v5936 = vmul.f32 %v5912, %v5928
        %v5937 = vadd.f32 %v5873, %v5881
        %v5938 = vadd.f32 %v5874, %v5882
        %v5939 = vadd.f32 %v5875, %v5883
        %v5940 = vadd.f32 %v5876, %v5884
        %v5941 = vadd.f32 %v5877, %v5885
        %v5942 = vadd.f32 %v5878, %v5886
        %v5943 = vadd.f32 %v5879, %v5887
        %v5944 = vadd.f32 %v5880, %v5888
        %v5945 = vadd.f32 %v5937, 0.0001
        %v5946 = vadd.f32 %v5938, 0.0001
        %v5947 = vadd.f32 %v5939, 0.0001
        %v5948 = vadd.f32 %v5940, 0.0001
        %v5949 = vadd.f32 %v5941, 0.0001
        %v5950 = vadd.f32 %v5942, 0.0001
        %v5951 = vadd.f32 %v5943, 0.0001
        %v5952 = vadd.f32 %v5944, 0.0001
        %v5953 = vadd.f32 %v5817, %v5833
        %v5954 = vadd.f32 %v5818, %v5834
        %v5955 = vadd.f32 %v5819, %v5835
        %v5956 = vadd.f32 %v5820, %v5836
        %v5957 = vadd.f32 %v5821, %v5837
        %v5958 = vadd.f32 %v5822, %v5838
        %v5959 = vadd.f32 %v5823, %v5839
        %v5960 = vadd.f32 %v5824, %v5840
        %v5961 = vadd.f32 %v5953, 0.0009
        %v5962 = vadd.f32 %v5954, 0.0009
        %v5963 = vadd.f32 %v5955, 0.0009
        %v5964 = vadd.f32 %v5956, 0.0009
        %v5965 = vadd.f32 %v5957, 0.0009
        %v5966 = vadd.f32 %v5958, 0.0009
        %v5967 = vadd.f32 %v5959, 0.0009
        %v5968 = vadd.f32 %v5960, 0.0009
        %v5969 = vmul.f32 %v5945, %v5961
        %v5970 = vmul.f32 %v5946, %v5962
        %v5971 = vmul.f32 %v5947, %v5963
        %v5972 = vmul.f32 %v5948, %v5964
        %v5973 = vmul.f32 %v5949, %v5965
        %v5974 = vmul.f32 %v5950, %v5966
        %v5975 = vmul.f32 %v5951, %v5967
        %v5976 = vmul.f32 %v5952, %v5968
        %v5977 = vrcp.pop %v5969
        %v5978 = vmul.f32 %v5929, %v5977
        %v5979 = vrcp.pop %v5970
        %v5980 = vmul.f32 %v5930, %v5979
        %v5981 = vrcp.pop %v5971
        %v5982 = vmul.f32 %v5931, %v5981
        %v5983 = vrcp.pop %v5972
        %v5984 = vmul.f32 %v5932, %v5983
        %v5985 = vrcp.pop %v5973
        %v5986 = vmul.f32 %v5933, %v5985
        %v5987 = vrcp.pop %v5974
        %v5988 = vmul.f32 %v5934, %v5987
        %v5989 = vrcp.pop %v5975
        %v5990 = vmul.f32 %v5935, %v5989
        %v5991 = vrcp.pop %v5976
        %v5992 = vmul.f32 %v5936, %v5991
        %v5993 = vsub.f32 1.0, %v5978
        %v5994 = vsub.f32 1.0, %v5980
        %v5995 = vsub.f32 1.0, %v5982
        %v5996 = vsub.f32 1.0, %v5984
        %v5997 = vsub.f32 1.0, %v5986
        %v5998 = vsub.f32 1.0, %v5988
        %v5999 = vsub.f32 1.0, %v5990
        %v6000 = vsub.f32 1.0, %v5992
        %v6001 = vmul.f32 %v5993, 0.5
        %v6002 = vmul.f32 %v5994, 0.5
        %v6003 = vmul.f32 %v5995, 0.5
        %v6004 = vmul.f32 %v5996, 0.5
        %v6005 = vmul.f32 %v5997, 0.5
        %v6006 = vmul.f32 %v5998, 0.5
        %v6007 = vmul.f32 %v5999, 0.5
        %v6008 = vmul.f32 %v6000, 0.5
        %v6009 = vmax.f32 %v6001, 0.0
        %v6010 = vmax.f32 %v6002, 0.0
        %v6011 = vmax.f32 %v6003, 0.0
        %v6012 = vmax.f32 %v6004, 0.0
        %v6013 = vmax.f32 %v6005, 0.0
        %v6014 = vmax.f32 %v6006, 0.0
        %v6015 = vmax.f32 %v6007, 0.0
        %v6016 = vmax.f32 %v6008, 0.0
        %v6017 = vmin.f32 %v6009, 1.0
        %v6018 = vmin.f32 %v6010, 1.0
        %v6019 = vmin.f32 %v6011, 1.0
        %v6020 = vmin.f32 %v6012, 1.0
        %v6021 = vmin.f32 %v6013, 1.0
        %v6022 = vmin.f32 %v6014, 1.0
        %v6023 = vmin.f32 %v6015, 1.0
        %v6024 = vmin.f32 %v6016, 1.0
        %v6025 = vsel %vm426, %v6017, 0.0
        %v6026 = vsel %vm426, %v6018, 0.0
        %v6027 = vadd.f32 %v6025, %v6026
        %v6028 = vsel %vm426, %v6019, 0.0
        %v6029 = vadd.f32 %v6027, %v6028
        %v6030 = vsel %vm426, %v6020, 0.0
        %v6031 = vadd.f32 %v6029, %v6030
        %v6032 = vsel %vm426, %v6021, 0.0
        %v6033 = vadd.f32 %v6031, %v6032
        %v6034 = vsel %vm426, %v6022, 0.0
        %v6035 = vadd.f32 %v6033, %v6034
        %v6036 = vsel %vm426, %v6023, 0.0
        %v6037 = vadd.f32 %v6035, %v6036
        %v6038 = vsel %vm426, %v6024, 0.0
        %v6039 = vadd.f32 %v6037, %v6038
        %6040 = vadd.xlane.f32.xlu0 %v6039
        %v6041 = vpop.xlane.xlu0 %6040
        %v6042 = vrot.slane %v6041, 4
        %v6043 = vadd.f32 %v6041, %v6042
        %v6044 = vrot.slane %v6043, 2
        %v6045 = vadd.f32 %v6043, %v6044
        %v6046 = vrot.slane %v6045, 1
        %v6047 = vadd.f32 %v6045, %v6046
        %s6048 = vtos %v6047
        %v6049 = vstv %s6048
        %vm6050 = vcmask 0
        %6051 = vst.msk [vmem:[%s354] sm:$0x1] %vm6050, %v6049
        %p6052 = scmp.lt.s32.totalorder %s24, 1
        %s6053 = scalar_select %p6052, %s24, 1
        %s6054 = scalar_lea.vmem %s6, %s6053
        // Predicated region
        $region65: #{tpu_custom_call.1} parent=43 // pred_check
          %p6055 = pneg %p178
        $region66: #{tpu_custom_call.1} parent=43 // pred_check_branch
          %6057 = sbr.rel (%p6055) target = $region68
        $region67: #{tpu_custom_call.1} parent=43 // pred_region
          _
        $region68: #{tpu_custom_call.1} parent=43 // pred_fallthru
          _
      $region44: #{tpu_custom_call.1} parent=5 // pred_fallthru
        _
      %p6058 = scmp.le.s32.totalorder 2, %s19
      // Predicated region
      $region69: #{tpu_custom_call.1} parent=5 // pred_check
        %p6059 = pneg %p6058
      $region70: #{tpu_custom_call.1} parent=5 // pred_check_branch
        %6061 = sbr.rel (%p6059) target = $region72
      $region71: #{tpu_custom_call.1} parent=5 // pred_region
        %s6062 = ssub.s32 %s19, 2
        // Predicated region
        $region73: #{tpu_custom_call.1} parent=71 // pred_check
          %p6063 = pneg %p184
        $region74: #{tpu_custom_call.1} parent=71 // pred_check_branch
          %6065 = sbr.rel (%p6063) target = $region76
        $region75: #{tpu_custom_call.1} parent=71 // pred_region
          %p6066 = scmp.lt.s32.totalorder %s25, 1
          %s6067 = scalar_select %p6066, %s25, 1
          %s6068 = scalar_lea.vmem %s6, %s6067
        $region76: #{tpu_custom_call.1} parent=71 // pred_fallthru
          _
      $region72: #{tpu_custom_call.1} parent=5 // pred_fallthru
        _
    $region6: #{tpu_custom_call.1} parent=1 // loop_footer
      %s23 = sadd.s32 1, %s19
    $region7: #{tpu_custom_call.1} parent=1 // loop_footer_branch
      %18 = sbr.rel target = $region3
    $region8: #{tpu_custom_call.1} parent=1 // loop_exit
      _
    %6069 = vsyncpa [#allocation3], 1
    %s6070 = scalar_lea.sflag [#allocation3], 1
    %6071 = vsyncpa %s6070, 1
    %6072 = vsyncpa [#allocation5], 1
    %s6073 = scalar_lea.sflag [#allocation5], 1
    %6074 = vsyncpa %s6073, 1
    %6075 = vsyncpa [#allocation8], 1

</llo_original>
